<compile_context>
chip_gen: v7x
topology: tpu7x:2x2x1
jax: 0.10.0
libtpu: 0.0.40
codegen_flags: <defaults>
</compile_context>

<pallas_src>
import functools

import numpy as np
import jax
import jax.numpy as jnp
from jax import lax
from jax.experimental import pallas as pl
from jax.experimental.pallas import tpu as pltpu

BN_EPS = 1e-5
LN_EPS = 1e-5


# ---------------------------------------------------------------------------
# Fused WilsonCowanConvBlock kernel
# ---------------------------------------------------------------------------

def _conv_block_kernel(*refs):
    # refs = [x,
    #         (row_sel, big_w, shift) x 3   conv_path   (c1, c2, c3),
    #         (row_sel, big_w, shift) x 4   motion_path (m1, m2, m3, m4),
    #         avg_rows, wf_conv, wf_motion, f_bias, ln_g, ln_b,
    #         out]
    x_ref = refs[0]
    conv_refs = refs[1:10]
    mot_refs = refs[10:22]
    avg_ref, wfc_ref, wfm_ref, fb_ref, lng_ref, lnb_ref = refs[22:28]
    o_ref = refs[28]

    x_bf = x_ref[...].astype(jnp.bfloat16)

    def run_path(h, layer_refs, relu_flags):
        for li, relu in enumerate(relu_flags):
            rs_ref, bw_ref, sh_ref = layer_refs[3 * li:3 * li + 3]
            acc = None
            for di in range(rs_ref.shape[0]):            # kh taps, static unroll
                g = jnp.dot(rs_ref[di], h,
                            preferred_element_type=jnp.float32).astype(jnp.bfloat16)
                part = jnp.dot(g, bw_ref[di], preferred_element_type=jnp.float32)
                acc = part if acc is None else acc + part
            y = acc + sh_ref[...]                        # conv bias + BN shift
            if relu:
                y = jnp.maximum(y, 0.0)
            h = y.astype(jnp.bfloat16)
        return h

    cfeat = run_path(x_bf, conv_refs, (True, True, True))         # (fpb*2, 2*128)
    mfeat = run_path(x_bf, mot_refs, (True, True, True, False))   # (fpb*2, 2*64)

    # Per-frame spatial mean: row average via a tiny matmul; column mean is
    # folded into the fusion weights.  Then 1x1 fusion conv + LayerNorm.
    cpool = jnp.dot(avg_ref[...], cfeat, preferred_element_type=jnp.float32)
    mpool = jnp.dot(avg_ref[...], mfeat, preferred_element_type=jnp.float32)
    fused = (jnp.dot(cpool.astype(jnp.bfloat16), wfc_ref[...],
                     preferred_element_type=jnp.float32)
             + jnp.dot(mpool.astype(jnp.bfloat16), wfm_ref[...],
                       preferred_element_type=jnp.float32)
             + fb_ref[...])
    mu = jnp.mean(fused, axis=-1, keepdims=True)
    var = jnp.mean((fused - mu) ** 2, axis=-1, keepdims=True)
    o_ref[0] = (fused - mu) * lax.rsqrt(var + LN_EPS) * lng_ref[...] + lnb_ref[...]


# ---------------------------------------------------------------------------
# Host-side (trace-time) constant construction for the fused conv block
# ---------------------------------------------------------------------------

def _bn_fold(b, bn):
    if bn is None:
        return jnp.ones_like(b), b
    gamma, beta, mean, var = bn
    s = gamma * lax.rsqrt(var + BN_EPS)
    return s, beta - mean * s + b * s


def _col_select(kw, wi, wo, stride, pad):
    sel = np.zeros((kw, wi, wo), np.float32)
    for dj in range(kw):
        for j in range(wo):
            w_in = stride * j + dj - pad
            if 0 <= w_in < wi:
                sel[dj, w_in, j] = 1.0
    return sel


def _row_select(kh, hi, ho, stride, pad, fpb):
    sel = np.zeros((kh, fpb * ho, fpb * hi), np.float32)
    for di in range(kh):
        for f in range(fpb):
            for i in range(ho):
                r = stride * i + di - pad
                if 0 <= r < hi:
                    sel[di, f * ho + i, f * hi + r] = 1.0
    return sel


def _layer_consts(w, b, bn, stride, pad, hi, wi, fpb):
    """Constants for one conv layer in the row-packed matmul formulation."""
    cout, cin, kh, kw = w.shape
    ho = (hi + 2 * pad - kh) // stride + 1
    wo = (wi + 2 * pad - kw) // stride + 1
    scale, shift = _bn_fold(b, bn)
    ws = w * scale[:, None, None, None]                        # fold BN scale
    csel = jnp.asarray(_col_select(kw, wi, wo, stride, pad))   # (kw, wi, wo)
    bigw = jnp.einsum('dwj,ockd->kwcjo', csel, ws)             # (kh,wi,cin,wo,cout)
    bigw = bigw.reshape(kh, wi * cin, wo * cout).astype(jnp.bfloat16)
    rsel = jnp.asarray(_row_select(kh, hi, ho, stride, pad, fpb), jnp.bfloat16)
    shift_t = jnp.tile(shift, wo).reshape(1, wo * cout).astype(jnp.float32)
    return [rsel, bigw, shift_t], ho, wo


def _fold_time_conv(p):
    """Fold the 1x1 time_conv into the first conv of each path (exact algebra)."""
    wtc = p["tc_w"][:, :, 0, 0]                                # (16, 4)
    btc = p["tc_b"]                                            # (16,)
    c1w = jnp.einsum('ocij,cd->odij', p["c1_w"], wtc)          # (32, 4, 5, 5)
    c1b = p["c1_b"] + jnp.einsum('ocij,c->o', p["c1_w"], btc)
    # grouped (groups=4) m1 on the 16-ch time_conv output -> dense (16,4,3,3)
    wm1 = p["m1_w"].reshape(4, 4, 4, 3, 3)                     # (g, o_loc, c_loc, kh, kw)
    wtc_g = wtc.reshape(4, 4, 4)                               # (g, c_loc, cin)
    btc_g = btc.reshape(4, 4)
    m1w = jnp.einsum('golij,glc->gocij', wm1, wtc_g).reshape(16, 4, 3, 3)
    m1b = p["m1_b"] + jnp.einsum('golij,gl->go', wm1, btc_g).reshape(16)
    return (c1w, c1b), (m1w, m1b)


def _const_spec(a):
    zeros = (0,) * a.ndim
    return pl.BlockSpec(a.shape, lambda i, _z=zeros: _z)


def conv_block_forward(x_nhwc, p, *, fpb=None):
    """x_nhwc: (Nf, H, W, 4)  ->  (Nf, 128) LayerNorm'd features."""
    nf, h, w, cin = x_nhwc.shape
    if fpb is None:
        fpb = nf // 2 if nf % 2 == 0 else nf    # >=2 parallel blocks for v7x
    assert nf % fpb == 0
    nblk = nf // fpb

    (c1w, c1b), (m1w, m1b) = _fold_time_conv(p)

    conv_layers = [(c1w, c1b, p["bn1"], 2, 2),
                   (p["c2_w"], p["c2_b"], p["bn2"], 2, 1),
                   (p["c3_w"], p["c3_b"], p["bn3"], 2, 1)]
    mot_layers = [(m1w, m1b, None, 1, 1),
                  (p["m2_w"], p["m2_b"], p["mbn2"], 2, 1),
                  (p["m3_w"], p["m3_b"], p["mbn3"], 2, 1),
                  (p["m4_w"], p["m4_b"], None, 2, 1)]

    conv_ops, hi, wi = [], h, w
    for (lw, lb, bn, s, pd) in conv_layers:
        ops, hi, wi = _layer_consts(lw, lb, bn, s, pd, hi, wi, fpb)
        conv_ops += ops
    hc, wc = hi, wi                              # conv-path output spatial (2, 2)

    mot_ops, hi, wi = [], h, w
    for (lw, lb, bn, s, pd) in mot_layers:
        ops, hi, wi = _layer_consts(lw, lb, bn, s, pd, hi, wi, fpb)
        mot_ops += ops                           # motion path also ends at (2, 2)

    # Per-frame row-averaging matrix (block-diagonal over the fpb frames).
    avg = np.zeros((fpb, fpb * hc), np.float32)
    for f in range(fpb):
        avg[f, f * hc:(f + 1) * hc] = 1.0 / hc
    avg = jnp.asarray(avg, jnp.bfloat16)

    # Fusion 1x1 conv split over the concat (conv_path channels first), with
    # the column (W) mean folded into the stacked weights.
    c3_cout = conv_layers[-1][0].shape[0]
    wf = p["f_w"][:, :, 0, 0]                    # (128, 192)
    wf_c = wf[:, :c3_cout].T                     # (128, 128)
    wf_m = wf[:, c3_cout:].T                     # (64, 128)
    wf_c = (jnp.concatenate([wf_c] * wc, axis=0) / wc).astype(jnp.bfloat16)
    wf_m = (jnp.concatenate([wf_m] * wc, axis=0) / wc).astype(jnp.bfloat16)
    fb = p["f_b"].reshape(1, -1).astype(jnp.float32)
    lng = p["ln_g"].reshape(1, -1).astype(jnp.float32)
    lnb = p["ln_b"].reshape(1, -1).astype(jnp.float32)

    x_rows = x_nhwc.reshape(nf * h, w * cin)     # row-packed NHWC (free reshape)

    inputs = [x_rows] + conv_ops + mot_ops + [avg, wf_c, wf_m, fb, lng, lnb]
    in_specs = [pl.BlockSpec((fpb * h, w * cin), lambda i: (i, 0))]
    in_specs += [_const_spec(a) for a in inputs[1:]]

    dout = wf.shape[0]
    out = pl.pallas_call(
        _conv_block_kernel,
        out_shape=jax.ShapeDtypeStruct((nblk, fpb, dout), jnp.float32),
        grid=(nblk,),
        in_specs=in_specs,
        out_specs=pl.BlockSpec((1, fpb, dout), lambda i: (i, 0, 0)),
        compiler_params=pltpu.CompilerParams(dimension_semantics=("parallel",)),
    )(*inputs)
    return out.reshape(nf, dout)


# ---------------------------------------------------------------------------
# Wilson-Cowan recurrent cell
# ---------------------------------------------------------------------------

def _wc_kernel(x_ref, h0_ref, w_in_ref, b_ref, w_rec_ref, inv_tau_ref,
               w_out_ref, b_out_ref, y_ref, h_ref, hs_ref, *, dt, T, B):
    w_rec = w_rec_ref[...]                       # bf16 (H, H)
    inv_tau = inv_tau_ref[...]                   # f32 (1, H)
    # Hoisted input projection: one (T*B, D) @ (D, H) matmul.
    u_all = (jnp.dot(x_ref[...].astype(jnp.bfloat16), w_in_ref[...],
                     preferred_element_type=jnp.float32) + b_ref[...])
    h = h0_ref[...]                              # f32 (B, H)
    # Static Python unroll: serial recurrence, T is small.
    # TODO(synk): for large T / hidden size switch to lax.fori_loop(unroll=True).
    for t in range(T):
        u = u_all[t * B:(t + 1) * B, :]

        def f(hh):
            z = u + jnp.dot(hh.astype(jnp.bfloat16), w_rec,
                            preferred_element_type=jnp.float32)
            return (-hh + jax.nn.sigmoid(z)) * inv_tau

        k1 = f(h)                                # RK4 (use_rk4=True)
        k2 = f(h + 0.5 * dt * k1)
        k3 = f(h + 0.5 * dt * k2)
        k4 = f(h + dt * k3)
        h = h + (dt / 6.0) * (k1 + 2.0 * k2 + 2.0 * k3 + k4)
        hs_ref[t * B:(t + 1) * B, :] = h
    h_ref[...] = h
    # Batched readout: one (T*B, H) @ (H, A) matmul after the recurrence.
    y_ref[...] = (jnp.dot(hs_ref[...].astype(jnp.bfloat16), w_out_ref[...],
                          preferred_element_type=jnp.float32) + b_out_ref[...])


def wc_cell_forward(x, h0, p, *, dt):
    """x: (B, T, D) features -> (y: (B, T, A), h_final: (B, H))."""
    # TODO(synk): WilsonCowanCell source was not provided; this implements the
    # standard Wilson-Cowan recurrent ODE (sigmoid rate, sparse random W_rec,
    # RK4 step of size dt, linear readout) matching the ctor signature.
    B, T, D = x.shape
    H = p["w_rec"].shape[0]
    A = p["w_out"].shape[1]
    xt = x.transpose(1, 0, 2).reshape(T * B, D)              # time-major rows
    inv_tau = (1.0 / p["tau"]).reshape(1, H).astype(jnp.float32)
    ins = [xt, h0,
           p["w_in"].astype(jnp.bfloat16),
           p["b"].reshape(1, H).astype(jnp.float32),
           p["w_rec"].astype(jnp.bfloat16),
           inv_tau,
           p["w_out"].astype(jnp.bfloat16),
           p["b_out"].reshape(1, A).astype(jnp.float32)]
    y, h_final = pl.pallas_call(
        functools.partial(_wc_kernel, dt=dt, T=T, B=B),
        out_shape=(jax.ShapeDtypeStruct((T * B, A), jnp.float32),
                   jax.ShapeDtypeStruct((B, H), jnp.float32)),
        grid=(1,),   # serial recurrence; batch is tiny, so no core split
        in_specs=[_const_spec(a) for a in ins],
        out_specs=(pl.BlockSpec((T * B, A), lambda i: (0, 0)),
                   pl.BlockSpec((B, H), lambda i: (0, 0))),
        scratch_shapes=[pltpu.VMEM((T * B, H), jnp.float32)],
    )(*ins)
    return y.reshape(T, B, A).transpose(1, 0, 2), h_final


# ---------------------------------------------------------------------------
# Model
# ---------------------------------------------------------------------------

def conv3_wilson_cowan_random(x, params, hx=None, *, dt=0.1):
    # x: (B, T, C, H, W) — PyTorch NCHW input convention.
    B, T = x.shape[0], x.shape[1]
    xf = x.reshape(B * T, *x.shape[2:]).transpose(0, 2, 3, 1)   # -> NHWC, once
    feats = conv_block_forward(xf, params["conv"])              # (B*T, 128)
    feats = feats.reshape(B, T, feats.shape[-1])
    if hx is None:
        hx = jnp.zeros((B, params["wc"]["w_rec"].shape[0]), jnp.float32)
    y, h = wc_cell_forward(feats, hx, params["wc"], dt=dt)
    return y, h


def init_params(key, *, n_actions=6, hidden=64, sparsity=0.5):
    keys = iter(jax.random.split(key, 48))

    def conv_p(cout, cin_g, kh, kw):
        w = jax.random.normal(next(keys), (cout, cin_g, kh, kw), jnp.float32) * 0.05
        b = jax.random.normal(next(keys), (cout,), jnp.float32) * 0.05
        return w, b

    def bn_p(c):  # (gamma, beta, running_mean, running_var) — PyTorch defaults
        return (jnp.ones((c,), jnp.float32), jnp.zeros((c,), jnp.float32),
                jnp.zeros((c,), jnp.float32), jnp.ones((c,), jnp.float32))

    conv = {}
    conv["tc_w"], conv["tc_b"] = conv_p(16, 4, 1, 1)
    conv["c1_w"], conv["c1_b"] = conv_p(32, 16, 5, 5)
    conv["c2_w"], conv["c2_b"] = conv_p(64, 32, 3, 3)
    conv["c3_w"], conv["c3_b"] = conv_p(128, 64, 3, 3)
    conv["bn1"], conv["bn2"], conv["bn3"] = bn_p(32), bn_p(64), bn_p(128)
    conv["m1_w"], conv["m1_b"] = conv_p(16, 4, 3, 3)          # groups=4
    conv["m2_w"], conv["m2_b"] = conv_p(32, 16, 3, 3)
    conv["m3_w"], conv["m3_b"] = conv_p(64, 32, 3, 3)
    conv["m4_w"], conv["m4_b"] = conv_p(64, 64, 3, 3)
    conv["mbn2"], conv["mbn3"] = bn_p(32), bn_p(64)
    conv["f_w"], conv["f_b"] = conv_p(128, 192, 1, 1)
    conv["ln_g"] = jnp.ones((128,), jnp.float32)
    conv["ln_b"] = jnp.zeros((128,), jnp.float32)

    w_in = jax.random.normal(next(keys), (128, hidden), jnp.float32) * 0.1
    w_rec_raw = jax.random.normal(next(keys), (hidden, hidden), jnp.float32) * 0.1
    mask = (jax.random.uniform(next(keys), (hidden, hidden)) > sparsity).astype(jnp.float32)
    w_out = jax.random.normal(next(keys), (hidden, n_actions), jnp.float32) * 0.1
    wc = {
        "w_in": w_in,
        "b": jnp.zeros((hidden,), jnp.float32),
        "w_rec": w_rec_raw * mask,        # 'random' connectivity with given sparsity
        "tau": jnp.ones((hidden,), jnp.float32),
        "w_out": w_out,
        "b_out": jnp.zeros((n_actions,), jnp.float32),
    }
    return {"conv": conv, "wc": wc}


if __name__ == "__main__":
    key = jax.random.PRNGKey(0)
    pkey, xkey = jax.random.split(key)
    n_actions, hidden = 6, 64
    params = init_params(pkey, n_actions=n_actions, hidden=hidden, sparsity=0.5)

    B, T, C, H, W = 2, 4, 4, 16, 16
    x = jax.random.normal(xkey, (B, T, C, H, W), jnp.float32)

    fwd = jax.jit(functools.partial(conv3_wilson_cowan_random, dt=0.1))
    y, h = fwd(x, params)
    jax.block_until_ready((y, h))

    assert y.shape == (B, T, n_actions), y.shape
    assert h.shape == (B, hidden), h.shape
    assert bool(jnp.all(jnp.isfinite(y))) and bool(jnp.all(jnp.isfinite(h)))
    print("KERNEL_OK")
</pallas_src>

<mosaic_0001>
module attributes {stable_mosaic.version = 11 : i64} {
  func.func @_conv_block_kernel(%arg0: i32, %arg1: memref<64x64xf32, #tpu.memory_space<vmem>>, %arg2: memref<5x32x64xbf16, #tpu.memory_space<vmem>>, %arg3: memref<5x64x256xbf16, #tpu.memory_space<vmem>>, %arg4: memref<1x256xf32, #tpu.memory_space<vmem>>, %arg5: memref<3x16x32xbf16, #tpu.memory_space<vmem>>, %arg6: memref<3x256x256xbf16, #tpu.memory_space<vmem>>, %arg7: memref<1x256xf32, #tpu.memory_space<vmem>>, %arg8: memref<3x8x16xbf16, #tpu.memory_space<vmem>>, %arg9: memref<3x256x256xbf16, #tpu.memory_space<vmem>>, %arg10: memref<1x256xf32, #tpu.memory_space<vmem>>, %arg11: memref<3x64x64xbf16, #tpu.memory_space<vmem>>, %arg12: memref<3x64x256xbf16, #tpu.memory_space<vmem>>, %arg13: memref<1x256xf32, #tpu.memory_space<vmem>>, %arg14: memref<3x32x64xbf16, #tpu.memory_space<vmem>>, %arg15: memref<3x256x256xbf16, #tpu.memory_space<vmem>>, %arg16: memref<1x256xf32, #tpu.memory_space<vmem>>, %arg17: memref<3x16x32xbf16, #tpu.memory_space<vmem>>, %arg18: memref<3x256x256xbf16, #tpu.memory_space<vmem>>, %arg19: memref<1x256xf32, #tpu.memory_space<vmem>>, %arg20: memref<3x8x16xbf16, #tpu.memory_space<vmem>>, %arg21: memref<3x256x128xbf16, #tpu.memory_space<vmem>>, %arg22: memref<1x128xf32, #tpu.memory_space<vmem>>, %arg23: memref<4x8xbf16, #tpu.memory_space<vmem>>, %arg24: memref<256x128xbf16, #tpu.memory_space<vmem>>, %arg25: memref<128x128xbf16, #tpu.memory_space<vmem>>, %arg26: memref<1x128xf32, #tpu.memory_space<vmem>>, %arg27: memref<1x128xf32, #tpu.memory_space<vmem>>, %arg28: memref<1x128xf32, #tpu.memory_space<vmem>>, %arg29: memref<1x4x128xf32, #tpu.memory_space<vmem>>) attributes {dimension_semantics = [#tpu.dimension_semantics<parallel>], iteration_bounds = array<i64: 2>, scalar_prefetch = 0 : i64, scratch_operands = 0 : i64, tpu.core_type = #tpu.core_type<tc>, window_params = [{transform_indices = @transform_0, window_bounds = array<i64: 64, 64>}, {pipeline_mode = #tpu.pipeline_mode<synchronous>, transform_indices = @transform_1, window_bounds = array<i64: 5, 32, 64>}, {pipeline_mode = #tpu.pipeline_mode<synchronous>, transform_indices = @transform_2, window_bounds = array<i64: 5, 64, 256>}, {pipeline_mode = #tpu.pipeline_mode<synchronous>, transform_indices = @transform_3, window_bounds = array<i64: 1, 256>}, {pipeline_mode = #tpu.pipeline_mode<synchronous>, transform_indices = @transform_4, window_bounds = array<i64: 3, 16, 32>}, {pipeline_mode = #tpu.pipeline_mode<synchronous>, transform_indices = @transform_5, window_bounds = array<i64: 3, 256, 256>}, {pipeline_mode = #tpu.pipeline_mode<synchronous>, transform_indices = @transform_6, window_bounds = array<i64: 1, 256>}, {pipeline_mode = #tpu.pipeline_mode<synchronous>, transform_indices = @transform_7, window_bounds = array<i64: 3, 8, 16>}, {pipeline_mode = #tpu.pipeline_mode<synchronous>, transform_indices = @transform_8, window_bounds = array<i64: 3, 256, 256>}, {pipeline_mode = #tpu.pipeline_mode<synchronous>, transform_indices = @transform_9, window_bounds = array<i64: 1, 256>}, {pipeline_mode = #tpu.pipeline_mode<synchronous>, transform_indices = @transform_10, window_bounds = array<i64: 3, 64, 64>}, {pipeline_mode = #tpu.pipeline_mode<synchronous>, transform_indices = @transform_11, window_bounds = array<i64: 3, 64, 256>}, {pipeline_mode = #tpu.pipeline_mode<synchronous>, transform_indices = @transform_12, window_bounds = array<i64: 1, 256>}, {pipeline_mode = #tpu.pipeline_mode<synchronous>, transform_indices = @transform_13, window_bounds = array<i64: 3, 32, 64>}, {pipeline_mode = #tpu.pipeline_mode<synchronous>, transform_indices = @transform_14, window_bounds = array<i64: 3, 256, 256>}, {pipeline_mode = #tpu.pipeline_mode<synchronous>, transform_indices = @transform_15, window_bounds = array<i64: 1, 256>}, {pipeline_mode = #tpu.pipeline_mode<synchronous>, transform_indices = @transform_16, window_bounds = array<i64: 3, 16, 32>}, {pipeline_mode = #tpu.pipeline_mode<synchronous>, transform_indices = @transform_17, window_bounds = array<i64: 3, 256, 256>}, {pipeline_mode = #tpu.pipeline_mode<synchronous>, transform_indices = @transform_18, window_bounds = array<i64: 1, 256>}, {pipeline_mode = #tpu.pipeline_mode<synchronous>, transform_indices = @transform_19, window_bounds = array<i64: 3, 8, 16>}, {pipeline_mode = #tpu.pipeline_mode<synchronous>, transform_indices = @transform_20, window_bounds = array<i64: 3, 256, 128>}, {pipeline_mode = #tpu.pipeline_mode<synchronous>, transform_indices = @transform_21, window_bounds = array<i64: 1, 128>}, {pipeline_mode = #tpu.pipeline_mode<synchronous>, transform_indices = @transform_22, window_bounds = array<i64: 4, 8>}, {pipeline_mode = #tpu.pipeline_mode<synchronous>, transform_indices = @transform_23, window_bounds = array<i64: 256, 128>}, {pipeline_mode = #tpu.pipeline_mode<synchronous>, transform_indices = @transform_24, window_bounds = array<i64: 128, 128>}, {pipeline_mode = #tpu.pipeline_mode<synchronous>, transform_indices = @transform_25, window_bounds = array<i64: 1, 128>}, {pipeline_mode = #tpu.pipeline_mode<synchronous>, transform_indices = @transform_26, window_bounds = array<i64: 1, 128>}, {pipeline_mode = #tpu.pipeline_mode<synchronous>, transform_indices = @transform_27, window_bounds = array<i64: 1, 128>}, {transform_indices = @transform_28, window_bounds = array<i64: 1, 4, 128>}]} {
    %c0 = arith.constant 0 : index
    %c0_0 = arith.constant 0 : index
    %0 = vector.load %arg1[%c0, %c0_0] : memref<64x64xf32, #tpu.memory_space<vmem>>, vector<64x64xf32>
    %1 = arith.truncf %0 : vector<64x64xf32> to vector<64x64xbf16>
    %c0_1 = arith.constant 0 : index
    %c0_2 = arith.constant 0 : index
    %c0_3 = arith.constant 0 : index
    %2 = vector.load %arg2[%c0_1, %c0_2, %c0_3] : memref<5x32x64xbf16, #tpu.memory_space<vmem>>, vector<1x32x64xbf16>
    %3 = vector.shape_cast %2 : vector<1x32x64xbf16> to vector<32x64xbf16>
    %cst = arith.constant dense<0.000000e+00> : vector<32x64xf32>
    %4 = tpu.matmul %3, %1, %cst {dimension_numbers = #tpu.dot_dimension_numbers<[1], [0], [0], [1], [0, 0, 1, 1], [], []>} : vector<32x64xbf16>, vector<64x64xbf16>, vector<32x64xf32> -> vector<32x64xf32>
    %5 = arith.truncf %4 : vector<32x64xf32> to vector<32x64xbf16>
    %c0_4 = arith.constant 0 : index
    %c0_5 = arith.constant 0 : index
    %c0_6 = arith.constant 0 : index
    %6 = vector.load %arg3[%c0_4, %c0_5, %c0_6] : memref<5x64x256xbf16, #tpu.memory_space<vmem>>, vector<1x64x256xbf16>
    %7 = vector.shape_cast %6 : vector<1x64x256xbf16> to vector<64x256xbf16>
    %cst_7 = arith.constant dense<0.000000e+00> : vector<32x256xf32>
    %8 = tpu.matmul %5, %7, %cst_7 {dimension_numbers = #tpu.dot_dimension_numbers<[1], [0], [0], [1], [0, 0, 1, 1], [], []>} : vector<32x64xbf16>, vector<64x256xbf16>, vector<32x256xf32> -> vector<32x256xf32>
    %c1 = arith.constant 1 : index
    %c0_8 = arith.constant 0 : index
    %c0_9 = arith.constant 0 : index
    %9 = vector.load %arg2[%c1, %c0_8, %c0_9] : memref<5x32x64xbf16, #tpu.memory_space<vmem>>, vector<1x32x64xbf16>
    %10 = vector.shape_cast %9 : vector<1x32x64xbf16> to vector<32x64xbf16>
    %cst_10 = arith.constant dense<0.000000e+00> : vector<32x64xf32>
    %11 = tpu.matmul %10, %1, %cst_10 {dimension_numbers = #tpu.dot_dimension_numbers<[1], [0], [0], [1], [0, 0, 1, 1], [], []>} : vector<32x64xbf16>, vector<64x64xbf16>, vector<32x64xf32> -> vector<32x64xf32>
    %12 = arith.truncf %11 : vector<32x64xf32> to vector<32x64xbf16>
    %c1_11 = arith.constant 1 : index
    %c0_12 = arith.constant 0 : index
    %c0_13 = arith.constant 0 : index
    %13 = vector.load %arg3[%c1_11, %c0_12, %c0_13] : memref<5x64x256xbf16, #tpu.memory_space<vmem>>, vector<1x64x256xbf16>
    %14 = vector.shape_cast %13 : vector<1x64x256xbf16> to vector<64x256xbf16>
    %cst_14 = arith.constant dense<0.000000e+00> : vector<32x256xf32>
    %15 = tpu.matmul %12, %14, %cst_14 {dimension_numbers = #tpu.dot_dimension_numbers<[1], [0], [0], [1], [0, 0, 1, 1], [], []>} : vector<32x64xbf16>, vector<64x256xbf16>, vector<32x256xf32> -> vector<32x256xf32>
    %16 = arith.addf %8, %15 : vector<32x256xf32>
    %c2 = arith.constant 2 : index
    %c0_15 = arith.constant 0 : index
    %c0_16 = arith.constant 0 : index
    %17 = vector.load %arg2[%c2, %c0_15, %c0_16] : memref<5x32x64xbf16, #tpu.memory_space<vmem>>, vector<1x32x64xbf16>
    %18 = vector.shape_cast %17 : vector<1x32x64xbf16> to vector<32x64xbf16>
    %cst_17 = arith.constant dense<0.000000e+00> : vector<32x64xf32>
    %19 = tpu.matmul %18, %1, %cst_17 {dimension_numbers = #tpu.dot_dimension_numbers<[1], [0], [0], [1], [0, 0, 1, 1], [], []>} : vector<32x64xbf16>, vector<64x64xbf16>, vector<32x64xf32> -> vector<32x64xf32>
    %20 = arith.truncf %19 : vector<32x64xf32> to vector<32x64xbf16>
    %c2_18 = arith.constant 2 : index
    %c0_19 = arith.constant 0 : index
    %c0_20 = arith.constant 0 : index
    %21 = vector.load %arg3[%c2_18, %c0_19, %c0_20] : memref<5x64x256xbf16, #tpu.memory_space<vmem>>, vector<1x64x256xbf16>
    %22 = vector.shape_cast %21 : vector<1x64x256xbf16> to vector<64x256xbf16>
    %cst_21 = arith.constant dense<0.000000e+00> : vector<32x256xf32>
    %23 = tpu.matmul %20, %22, %cst_21 {dimension_numbers = #tpu.dot_dimension_numbers<[1], [0], [0], [1], [0, 0, 1, 1], [], []>} : vector<32x64xbf16>, vector<64x256xbf16>, vector<32x256xf32> -> vector<32x256xf32>
    %24 = arith.addf %16, %23 : vector<32x256xf32>
    %c3 = arith.constant 3 : index
    %c0_22 = arith.constant 0 : index
    %c0_23 = arith.constant 0 : index
    %25 = vector.load %arg2[%c3, %c0_22, %c0_23] : memref<5x32x64xbf16, #tpu.memory_space<vmem>>, vector<1x32x64xbf16>
    %26 = vector.shape_cast %25 : vector<1x32x64xbf16> to vector<32x64xbf16>
    %cst_24 = arith.constant dense<0.000000e+00> : vector<32x64xf32>
    %27 = tpu.matmul %26, %1, %cst_24 {dimension_numbers = #tpu.dot_dimension_numbers<[1], [0], [0], [1], [0, 0, 1, 1], [], []>} : vector<32x64xbf16>, vector<64x64xbf16>, vector<32x64xf32> -> vector<32x64xf32>
    %28 = arith.truncf %27 : vector<32x64xf32> to vector<32x64xbf16>
    %c3_25 = arith.constant 3 : index
    %c0_26 = arith.constant 0 : index
    %c0_27 = arith.constant 0 : index
    %29 = vector.load %arg3[%c3_25, %c0_26, %c0_27] : memref<5x64x256xbf16, #tpu.memory_space<vmem>>, vector<1x64x256xbf16>
    %30 = vector.shape_cast %29 : vector<1x64x256xbf16> to vector<64x256xbf16>
    %cst_28 = arith.constant dense<0.000000e+00> : vector<32x256xf32>
    %31 = tpu.matmul %28, %30, %cst_28 {dimension_numbers = #tpu.dot_dimension_numbers<[1], [0], [0], [1], [0, 0, 1, 1], [], []>} : vector<32x64xbf16>, vector<64x256xbf16>, vector<32x256xf32> -> vector<32x256xf32>
    %32 = arith.addf %24, %31 : vector<32x256xf32>
    %c4 = arith.constant 4 : index
    %c0_29 = arith.constant 0 : index
    %c0_30 = arith.constant 0 : index
    %33 = vector.load %arg2[%c4, %c0_29, %c0_30] : memref<5x32x64xbf16, #tpu.memory_space<vmem>>, vector<1x32x64xbf16>
    %34 = vector.shape_cast %33 : vector<1x32x64xbf16> to vector<32x64xbf16>
    %cst_31 = arith.constant dense<0.000000e+00> : vector<32x64xf32>
    %35 = tpu.matmul %34, %1, %cst_31 {dimension_numbers = #tpu.dot_dimension_numbers<[1], [0], [0], [1], [0, 0, 1, 1], [], []>} : vector<32x64xbf16>, vector<64x64xbf16>, vector<32x64xf32> -> vector<32x64xf32>
    %36 = arith.truncf %35 : vector<32x64xf32> to vector<32x64xbf16>
    %c4_32 = arith.constant 4 : index
    %c0_33 = arith.constant 0 : index
    %c0_34 = arith.constant 0 : index
    %37 = vector.load %arg3[%c4_32, %c0_33, %c0_34] : memref<5x64x256xbf16, #tpu.memory_space<vmem>>, vector<1x64x256xbf16>
    %38 = vector.shape_cast %37 : vector<1x64x256xbf16> to vector<64x256xbf16>
    %cst_35 = arith.constant dense<0.000000e+00> : vector<32x256xf32>
    %39 = tpu.matmul %36, %38, %cst_35 {dimension_numbers = #tpu.dot_dimension_numbers<[1], [0], [0], [1], [0, 0, 1, 1], [], []>} : vector<32x64xbf16>, vector<64x256xbf16>, vector<32x256xf32> -> vector<32x256xf32>
    %40 = arith.addf %32, %39 : vector<32x256xf32>
    %c0_36 = arith.constant 0 : index
    %c0_37 = arith.constant 0 : index
    %41 = vector.load %arg4[%c0_36, %c0_37] : memref<1x256xf32, #tpu.memory_space<vmem>>, vector<1x256xf32>
    %42 = vector.broadcast %41 : vector<1x256xf32> to vector<32x256xf32>
    %43 = arith.addf %40, %42 : vector<32x256xf32>
    %cst_38 = arith.constant 0.000000e+00 : f32
    %44 = vector.broadcast %cst_38 : f32 to vector<32x256xf32>
    %45 = arith.maximumf %43, %44 : vector<32x256xf32>
    %46 = arith.truncf %45 : vector<32x256xf32> to vector<32x256xbf16>
    %c0_39 = arith.constant 0 : index
    %c0_40 = arith.constant 0 : index
    %c0_41 = arith.constant 0 : index
    %47 = vector.load %arg5[%c0_39, %c0_40, %c0_41] : memref<3x16x32xbf16, #tpu.memory_space<vmem>>, vector<1x16x32xbf16>
    %48 = vector.shape_cast %47 : vector<1x16x32xbf16> to vector<16x32xbf16>
    %cst_42 = arith.constant dense<0.000000e+00> : vector<16x256xf32>
    %49 = tpu.matmul %48, %46, %cst_42 {dimension_numbers = #tpu.dot_dimension_numbers<[1], [0], [0], [1], [0, 0, 1, 1], [], []>} : vector<16x32xbf16>, vector<32x256xbf16>, vector<16x256xf32> -> vector<16x256xf32>
    %50 = arith.truncf %49 : vector<16x256xf32> to vector<16x256xbf16>
    %c0_43 = arith.constant 0 : index
    %c0_44 = arith.constant 0 : index
    %c0_45 = arith.constant 0 : index
    %51 = vector.load %arg6[%c0_43, %c0_44, %c0_45] : memref<3x256x256xbf16, #tpu.memory_space<vmem>>, vector<1x256x256xbf16>
    %52 = vector.shape_cast %51 : vector<1x256x256xbf16> to vector<256x256xbf16>
    %cst_46 = arith.constant dense<0.000000e+00> : vector<16x256xf32>
    %53 = tpu.matmul %50, %52, %cst_46 {dimension_numbers = #tpu.dot_dimension_numbers<[1], [0], [0], [1], [0, 0, 1, 1], [], []>} : vector<16x256xbf16>, vector<256x256xbf16>, vector<16x256xf32> -> vector<16x256xf32>
    %c1_47 = arith.constant 1 : index
    %c0_48 = arith.constant 0 : index
    %c0_49 = arith.constant 0 : index
    %54 = vector.load %arg5[%c1_47, %c0_48, %c0_49] : memref<3x16x32xbf16, #tpu.memory_space<vmem>>, vector<1x16x32xbf16>
    %55 = vector.shape_cast %54 : vector<1x16x32xbf16> to vector<16x32xbf16>
    %cst_50 = arith.constant dense<0.000000e+00> : vector<16x256xf32>
    %56 = tpu.matmul %55, %46, %cst_50 {dimension_numbers = #tpu.dot_dimension_numbers<[1], [0], [0], [1], [0, 0, 1, 1], [], []>} : vector<16x32xbf16>, vector<32x256xbf16>, vector<16x256xf32> -> vector<16x256xf32>
    %57 = arith.truncf %56 : vector<16x256xf32> to vector<16x256xbf16>
    %c1_51 = arith.constant 1 : index
    %c0_52 = arith.constant 0 : index
    %c0_53 = arith.constant 0 : index
    %58 = vector.load %arg6[%c1_51, %c0_52, %c0_53] : memref<3x256x256xbf16, #tpu.memory_space<vmem>>, vector<1x256x256xbf16>
    %59 = vector.shape_cast %58 : vector<1x256x256xbf16> to vector<256x256xbf16>
    %cst_54 = arith.constant dense<0.000000e+00> : vector<16x256xf32>
    %60 = tpu.matmul %57, %59, %cst_54 {dimension_numbers = #tpu.dot_dimension_numbers<[1], [0], [0], [1], [0, 0, 1, 1], [], []>} : vector<16x256xbf16>, vector<256x256xbf16>, vector<16x256xf32> -> vector<16x256xf32>
    %61 = arith.addf %53, %60 : vector<16x256xf32>
    %c2_55 = arith.constant 2 : index
    %c0_56 = arith.constant 0 : index
    %c0_57 = arith.constant 0 : index
    %62 = vector.load %arg5[%c2_55, %c0_56, %c0_57] : memref<3x16x32xbf16, #tpu.memory_space<vmem>>, vector<1x16x32xbf16>
    %63 = vector.shape_cast %62 : vector<1x16x32xbf16> to vector<16x32xbf16>
    %cst_58 = arith.constant dense<0.000000e+00> : vector<16x256xf32>
    %64 = tpu.matmul %63, %46, %cst_58 {dimension_numbers = #tpu.dot_dimension_numbers<[1], [0], [0], [1], [0, 0, 1, 1], [], []>} : vector<16x32xbf16>, vector<32x256xbf16>, vector<16x256xf32> -> vector<16x256xf32>
    %65 = arith.truncf %64 : vector<16x256xf32> to vector<16x256xbf16>
    %c2_59 = arith.constant 2 : index
    %c0_60 = arith.constant 0 : index
    %c0_61 = arith.constant 0 : index
    %66 = vector.load %arg6[%c2_59, %c0_60, %c0_61] : memref<3x256x256xbf16, #tpu.memory_space<vmem>>, vector<1x256x256xbf16>
    %67 = vector.shape_cast %66 : vector<1x256x256xbf16> to vector<256x256xbf16>
    %cst_62 = arith.constant dense<0.000000e+00> : vector<16x256xf32>
    %68 = tpu.matmul %65, %67, %cst_62 {dimension_numbers = #tpu.dot_dimension_numbers<[1], [0], [0], [1], [0, 0, 1, 1], [], []>} : vector<16x256xbf16>, vector<256x256xbf16>, vector<16x256xf32> -> vector<16x256xf32>
    %69 = arith.addf %61, %68 : vector<16x256xf32>
    %c0_63 = arith.constant 0 : index
    %c0_64 = arith.constant 0 : index
    %70 = vector.load %arg7[%c0_63, %c0_64] : memref<1x256xf32, #tpu.memory_space<vmem>>, vector<1x256xf32>
    %71 = vector.broadcast %70 : vector<1x256xf32> to vector<16x256xf32>
    %72 = arith.addf %69, %71 : vector<16x256xf32>
    %cst_65 = arith.constant 0.000000e+00 : f32
    %73 = vector.broadcast %cst_65 : f32 to vector<16x256xf32>
    %74 = arith.maximumf %72, %73 : vector<16x256xf32>
    %75 = arith.truncf %74 : vector<16x256xf32> to vector<16x256xbf16>
    %c0_66 = arith.constant 0 : index
    %c0_67 = arith.constant 0 : index
    %c0_68 = arith.constant 0 : index
    %76 = vector.load %arg8[%c0_66, %c0_67, %c0_68] : memref<3x8x16xbf16, #tpu.memory_space<vmem>>, vector<1x8x16xbf16>
    %77 = vector.shape_cast %76 : vector<1x8x16xbf16> to vector<8x16xbf16>
    %cst_69 = arith.constant dense<0.000000e+00> : vector<8x256xf32>
    %78 = tpu.matmul %77, %75, %cst_69 {dimension_numbers = #tpu.dot_dimension_numbers<[1], [0], [0], [1], [0, 0, 1, 1], [], []>} : vector<8x16xbf16>, vector<16x256xbf16>, vector<8x256xf32> -> vector<8x256xf32>
    %79 = arith.truncf %78 : vector<8x256xf32> to vector<8x256xbf16>
    %c0_70 = arith.constant 0 : index
    %c0_71 = arith.constant 0 : index
    %c0_72 = arith.constant 0 : index
    %80 = vector.load %arg9[%c0_70, %c0_71, %c0_72] : memref<3x256x256xbf16, #tpu.memory_space<vmem>>, vector<1x256x256xbf16>
    %81 = vector.shape_cast %80 : vector<1x256x256xbf16> to vector<256x256xbf16>
    %cst_73 = arith.constant dense<0.000000e+00> : vector<8x256xf32>
    %82 = tpu.matmul %79, %81, %cst_73 {dimension_numbers = #tpu.dot_dimension_numbers<[1], [0], [0], [1], [0, 0, 1, 1], [], []>} : vector<8x256xbf16>, vector<256x256xbf16>, vector<8x256xf32> -> vector<8x256xf32>
    %c1_74 = arith.constant 1 : index
    %c0_75 = arith.constant 0 : index
    %c0_76 = arith.constant 0 : index
    %83 = vector.load %arg8[%c1_74, %c0_75, %c0_76] : memref<3x8x16xbf16, #tpu.memory_space<vmem>>, vector<1x8x16xbf16>
    %84 = vector.shape_cast %83 : vector<1x8x16xbf16> to vector<8x16xbf16>
    %cst_77 = arith.constant dense<0.000000e+00> : vector<8x256xf32>
    %85 = tpu.matmul %84, %75, %cst_77 {dimension_numbers = #tpu.dot_dimension_numbers<[1], [0], [0], [1], [0, 0, 1, 1], [], []>} : vector<8x16xbf16>, vector<16x256xbf16>, vector<8x256xf32> -> vector<8x256xf32>
    %86 = arith.truncf %85 : vector<8x256xf32> to vector<8x256xbf16>
    %c1_78 = arith.constant 1 : index
    %c0_79 = arith.constant 0 : index
    %c0_80 = arith.constant 0 : index
    %87 = vector.load %arg9[%c1_78, %c0_79, %c0_80] : memref<3x256x256xbf16, #tpu.memory_space<vmem>>, vector<1x256x256xbf16>
    %88 = vector.shape_cast %87 : vector<1x256x256xbf16> to vector<256x256xbf16>
    %cst_81 = arith.constant dense<0.000000e+00> : vector<8x256xf32>
    %89 = tpu.matmul %86, %88, %cst_81 {dimension_numbers = #tpu.dot_dimension_numbers<[1], [0], [0], [1], [0, 0, 1, 1], [], []>} : vector<8x256xbf16>, vector<256x256xbf16>, vector<8x256xf32> -> vector<8x256xf32>
    %90 = arith.addf %82, %89 : vector<8x256xf32>
    %c2_82 = arith.constant 2 : index
    %c0_83 = arith.constant 0 : index
    %c0_84 = arith.constant 0 : index
    %91 = vector.load %arg8[%c2_82, %c0_83, %c0_84] : memref<3x8x16xbf16, #tpu.memory_space<vmem>>, vector<1x8x16xbf16>
    %92 = vector.shape_cast %91 : vector<1x8x16xbf16> to vector<8x16xbf16>
    %cst_85 = arith.constant dense<0.000000e+00> : vector<8x256xf32>
    %93 = tpu.matmul %92, %75, %cst_85 {dimension_numbers = #tpu.dot_dimension_numbers<[1], [0], [0], [1], [0, 0, 1, 1], [], []>} : vector<8x16xbf16>, vector<16x256xbf16>, vector<8x256xf32> -> vector<8x256xf32>
    %94 = arith.truncf %93 : vector<8x256xf32> to vector<8x256xbf16>
    %c2_86 = arith.constant 2 : index
    %c0_87 = arith.constant 0 : index
    %c0_88 = arith.constant 0 : index
    %95 = vector.load %arg9[%c2_86, %c0_87, %c0_88] : memref<3x256x256xbf16, #tpu.memory_space<vmem>>, vector<1x256x256xbf16>
    %96 = vector.shape_cast %95 : vector<1x256x256xbf16> to vector<256x256xbf16>
    %cst_89 = arith.constant dense<0.000000e+00> : vector<8x256xf32>
    %97 = tpu.matmul %94, %96, %cst_89 {dimension_numbers = #tpu.dot_dimension_numbers<[1], [0], [0], [1], [0, 0, 1, 1], [], []>} : vector<8x256xbf16>, vector<256x256xbf16>, vector<8x256xf32> -> vector<8x256xf32>
    %98 = arith.addf %90, %97 : vector<8x256xf32>
    %c0_90 = arith.constant 0 : index
    %c0_91 = arith.constant 0 : index
    %99 = vector.load %arg10[%c0_90, %c0_91] : memref<1x256xf32, #tpu.memory_space<vmem>>, vector<1x256xf32>
    %100 = vector.broadcast %99 : vector<1x256xf32> to vector<8x256xf32>
    %101 = arith.addf %98, %100 : vector<8x256xf32>
    %cst_92 = arith.constant 0.000000e+00 : f32
    %102 = vector.broadcast %cst_92 : f32 to vector<8x256xf32>
    %103 = arith.maximumf %101, %102 : vector<8x256xf32>
    %104 = arith.truncf %103 : vector<8x256xf32> to vector<8x256xbf16>
    %c0_93 = arith.constant 0 : index
    %c0_94 = arith.constant 0 : index
    %c0_95 = arith.constant 0 : index
    %105 = vector.load %arg11[%c0_93, %c0_94, %c0_95] : memref<3x64x64xbf16, #tpu.memory_space<vmem>>, vector<1x64x64xbf16>
    %106 = vector.shape_cast %105 : vector<1x64x64xbf16> to vector<64x64xbf16>
    %cst_96 = arith.constant dense<0.000000e+00> : vector<64x64xf32>
    %107 = tpu.matmul %106, %1, %cst_96 {dimension_numbers = #tpu.dot_dimension_numbers<[1], [0], [0], [1], [0, 0, 1, 1], [], []>} : vector<64x64xbf16>, vector<64x64xbf16>, vector<64x64xf32> -> vector<64x64xf32>
    %108 = arith.truncf %107 : vector<64x64xf32> to vector<64x64xbf16>
    %c0_97 = arith.constant 0 : index
    %c0_98 = arith.constant 0 : index
    %c0_99 = arith.constant 0 : index
    %109 = vector.load %arg12[%c0_97, %c0_98, %c0_99] : memref<3x64x256xbf16, #tpu.memory_space<vmem>>, vector<1x64x256xbf16>
    %110 = vector.shape_cast %109 : vector<1x64x256xbf16> to vector<64x256xbf16>
    %cst_100 = arith.constant dense<0.000000e+00> : vector<64x256xf32>
    %111 = tpu.matmul %108, %110, %cst_100 {dimension_numbers = #tpu.dot_dimension_numbers<[1], [0], [0], [1], [0, 0, 1, 1], [], []>} : vector<64x64xbf16>, vector<64x256xbf16>, vector<64x256xf32> -> vector<64x256xf32>
    %c1_101 = arith.constant 1 : index
    %c0_102 = arith.constant 0 : index
    %c0_103 = arith.constant 0 : index
    %112 = vector.load %arg11[%c1_101, %c0_102, %c0_103] : memref<3x64x64xbf16, #tpu.memory_space<vmem>>, vector<1x64x64xbf16>
    %113 = vector.shape_cast %112 : vector<1x64x64xbf16> to vector<64x64xbf16>
    %cst_104 = arith.constant dense<0.000000e+00> : vector<64x64xf32>
    %114 = tpu.matmul %113, %1, %cst_104 {dimension_numbers = #tpu.dot_dimension_numbers<[1], [0], [0], [1], [0, 0, 1, 1], [], []>} : vector<64x64xbf16>, vector<64x64xbf16>, vector<64x64xf32> -> vector<64x64xf32>
    %115 = arith.truncf %114 : vector<64x64xf32> to vector<64x64xbf16>
    %c1_105 = arith.constant 1 : index
    %c0_106 = arith.constant 0 : index
    %c0_107 = arith.constant 0 : index
    %116 = vector.load %arg12[%c1_105, %c0_106, %c0_107] : memref<3x64x256xbf16, #tpu.memory_space<vmem>>, vector<1x64x256xbf16>
    %117 = vector.shape_cast %116 : vector<1x64x256xbf16> to vector<64x256xbf16>
    %cst_108 = arith.constant dense<0.000000e+00> : vector<64x256xf32>
    %118 = tpu.matmul %115, %117, %cst_108 {dimension_numbers = #tpu.dot_dimension_numbers<[1], [0], [0], [1], [0, 0, 1, 1], [], []>} : vector<64x64xbf16>, vector<64x256xbf16>, vector<64x256xf32> -> vector<64x256xf32>
    %119 = arith.addf %111, %118 : vector<64x256xf32>
    %c2_109 = arith.constant 2 : index
    %c0_110 = arith.constant 0 : index
    %c0_111 = arith.constant 0 : index
    %120 = vector.load %arg11[%c2_109, %c0_110, %c0_111] : memref<3x64x64xbf16, #tpu.memory_space<vmem>>, vector<1x64x64xbf16>
    %121 = vector.shape_cast %120 : vector<1x64x64xbf16> to vector<64x64xbf16>
    %cst_112 = arith.constant dense<0.000000e+00> : vector<64x64xf32>
    %122 = tpu.matmul %121, %1, %cst_112 {dimension_numbers = #tpu.dot_dimension_numbers<[1], [0], [0], [1], [0, 0, 1, 1], [], []>} : vector<64x64xbf16>, vector<64x64xbf16>, vector<64x64xf32> -> vector<64x64xf32>
    %123 = arith.truncf %122 : vector<64x64xf32> to vector<64x64xbf16>
    %c2_113 = arith.constant 2 : index
    %c0_114 = arith.constant 0 : index
    %c0_115 = arith.constant 0 : index
    %124 = vector.load %arg12[%c2_113, %c0_114, %c0_115] : memref<3x64x256xbf16, #tpu.memory_space<vmem>>, vector<1x64x256xbf16>
    %125 = vector.shape_cast %124 : vector<1x64x256xbf16> to vector<64x256xbf16>
    %cst_116 = arith.constant dense<0.000000e+00> : vector<64x256xf32>
    %126 = tpu.matmul %123, %125, %cst_116 {dimension_numbers = #tpu.dot_dimension_numbers<[1], [0], [0], [1], [0, 0, 1, 1], [], []>} : vector<64x64xbf16>, vector<64x256xbf16>, vector<64x256xf32> -> vector<64x256xf32>
    %127 = arith.addf %119, %126 : vector<64x256xf32>
    %c0_117 = arith.constant 0 : index
    %c0_118 = arith.constant 0 : index
    %128 = vector.load %arg13[%c0_117, %c0_118] : memref<1x256xf32, #tpu.memory_space<vmem>>, vector<1x256xf32>
    %129 = vector.broadcast %128 : vector<1x256xf32> to vector<64x256xf32>
    %130 = arith.addf %127, %129 : vector<64x256xf32>
    %cst_119 = arith.constant 0.000000e+00 : f32
    %131 = vector.broadcast %cst_119 : f32 to vector<64x256xf32>
    %132 = arith.maximumf %130, %131 : vector<64x256xf32>
    %133 = arith.truncf %132 : vector<64x256xf32> to vector<64x256xbf16>
    %c0_120 = arith.constant 0 : index
    %c0_121 = arith.constant 0 : index
    %c0_122 = arith.constant 0 : index
    %134 = vector.load %arg14[%c0_120, %c0_121, %c0_122] : memref<3x32x64xbf16, #tpu.memory_space<vmem>>, vector<1x32x64xbf16>
    %135 = vector.shape_cast %134 : vector<1x32x64xbf16> to vector<32x64xbf16>
    %cst_123 = arith.constant dense<0.000000e+00> : vector<32x256xf32>
    %136 = tpu.matmul %135, %133, %cst_123 {dimension_numbers = #tpu.dot_dimension_numbers<[1], [0], [0], [1], [0, 0, 1, 1], [], []>} : vector<32x64xbf16>, vector<64x256xbf16>, vector<32x256xf32> -> vector<32x256xf32>
    %137 = arith.truncf %136 : vector<32x256xf32> to vector<32x256xbf16>
    %c0_124 = arith.constant 0 : index
    %c0_125 = arith.constant 0 : index
    %c0_126 = arith.constant 0 : index
    %138 = vector.load %arg15[%c0_124, %c0_125, %c0_126] : memref<3x256x256xbf16, #tpu.memory_space<vmem>>, vector<1x256x256xbf16>
    %139 = vector.shape_cast %138 : vector<1x256x256xbf16> to vector<256x256xbf16>
    %cst_127 = arith.constant dense<0.000000e+00> : vector<32x256xf32>
    %140 = tpu.matmul %137, %139, %cst_127 {dimension_numbers = #tpu.dot_dimension_numbers<[1], [0], [0], [1], [0, 0, 1, 1], [], []>} : vector<32x256xbf16>, vector<256x256xbf16>, vector<32x256xf32> -> vector<32x256xf32>
    %c1_128 = arith.constant 1 : index
    %c0_129 = arith.constant 0 : index
    %c0_130 = arith.constant 0 : index
    %141 = vector.load %arg14[%c1_128, %c0_129, %c0_130] : memref<3x32x64xbf16, #tpu.memory_space<vmem>>, vector<1x32x64xbf16>
    %142 = vector.shape_cast %141 : vector<1x32x64xbf16> to vector<32x64xbf16>
    %cst_131 = arith.constant dense<0.000000e+00> : vector<32x256xf32>
    %143 = tpu.matmul %142, %133, %cst_131 {dimension_numbers = #tpu.dot_dimension_numbers<[1], [0], [0], [1], [0, 0, 1, 1], [], []>} : vector<32x64xbf16>, vector<64x256xbf16>, vector<32x256xf32> -> vector<32x256xf32>
    %144 = arith.truncf %143 : vector<32x256xf32> to vector<32x256xbf16>
    %c1_132 = arith.constant 1 : index
    %c0_133 = arith.constant 0 : index
    %c0_134 = arith.constant 0 : index
    %145 = vector.load %arg15[%c1_132, %c0_133, %c0_134] : memref<3x256x256xbf16, #tpu.memory_space<vmem>>, vector<1x256x256xbf16>
    %146 = vector.shape_cast %145 : vector<1x256x256xbf16> to vector<256x256xbf16>
    %cst_135 = arith.constant dense<0.000000e+00> : vector<32x256xf32>
    %147 = tpu.matmul %144, %146, %cst_135 {dimension_numbers = #tpu.dot_dimension_numbers<[1], [0], [0], [1], [0, 0, 1, 1], [], []>} : vector<32x256xbf16>, vector<256x256xbf16>, vector<32x256xf32> -> vector<32x256xf32>
    %148 = arith.addf %140, %147 : vector<32x256xf32>
    %c2_136 = arith.constant 2 : index
    %c0_137 = arith.constant 0 : index
    %c0_138 = arith.constant 0 : index
    %149 = vector.load %arg14[%c2_136, %c0_137, %c0_138] : memref<3x32x64xbf16, #tpu.memory_space<vmem>>, vector<1x32x64xbf16>
    %150 = vector.shape_cast %149 : vector<1x32x64xbf16> to vector<32x64xbf16>
    %cst_139 = arith.constant dense<0.000000e+00> : vector<32x256xf32>
    %151 = tpu.matmul %150, %133, %cst_139 {dimension_numbers = #tpu.dot_dimension_numbers<[1], [0], [0], [1], [0, 0, 1, 1], [], []>} : vector<32x64xbf16>, vector<64x256xbf16>, vector<32x256xf32> -> vector<32x256xf32>
    %152 = arith.truncf %151 : vector<32x256xf32> to vector<32x256xbf16>
    %c2_140 = arith.constant 2 : index
    %c0_141 = arith.constant 0 : index
    %c0_142 = arith.constant 0 : index
    %153 = vector.load %arg15[%c2_140, %c0_141, %c0_142] : memref<3x256x256xbf16, #tpu.memory_space<vmem>>, vector<1x256x256xbf16>
    %154 = vector.shape_cast %153 : vector<1x256x256xbf16> to vector<256x256xbf16>
    %cst_143 = arith.constant dense<0.000000e+00> : vector<32x256xf32>
    %155 = tpu.matmul %152, %154, %cst_143 {dimension_numbers = #tpu.dot_dimension_numbers<[1], [0], [0], [1], [0, 0, 1, 1], [], []>} : vector<32x256xbf16>, vector<256x256xbf16>, vector<32x256xf32> -> vector<32x256xf32>
    %156 = arith.addf %148, %155 : vector<32x256xf32>
    %c0_144 = arith.constant 0 : index
    %c0_145 = arith.constant 0 : index
    %157 = vector.load %arg16[%c0_144, %c0_145] : memref<1x256xf32, #tpu.memory_space<vmem>>, vector<1x256xf32>
    %158 = vector.broadcast %157 : vector<1x256xf32> to vector<32x256xf32>
    %159 = arith.addf %156, %158 : vector<32x256xf32>
    %cst_146 = arith.constant 0.000000e+00 : f32
    %160 = vector.broadcast %cst_146 : f32 to vector<32x256xf32>
    %161 = arith.maximumf %159, %160 : vector<32x256xf32>
    %162 = arith.truncf %161 : vector<32x256xf32> to vector<32x256xbf16>
    %c0_147 = arith.constant 0 : index
    %c0_148 = arith.constant 0 : index
    %c0_149 = arith.constant 0 : index
    %163 = vector.load %arg17[%c0_147, %c0_148, %c0_149] : memref<3x16x32xbf16, #tpu.memory_space<vmem>>, vector<1x16x32xbf16>
    %164 = vector.shape_cast %163 : vector<1x16x32xbf16> to vector<16x32xbf16>
    %cst_150 = arith.constant dense<0.000000e+00> : vector<16x256xf32>
    %165 = tpu.matmul %164, %162, %cst_150 {dimension_numbers = #tpu.dot_dimension_numbers<[1], [0], [0], [1], [0, 0, 1, 1], [], []>} : vector<16x32xbf16>, vector<32x256xbf16>, vector<16x256xf32> -> vector<16x256xf32>
    %166 = arith.truncf %165 : vector<16x256xf32> to vector<16x256xbf16>
    %c0_151 = arith.constant 0 : index
    %c0_152 = arith.constant 0 : index
    %c0_153 = arith.constant 0 : index
    %167 = vector.load %arg18[%c0_151, %c0_152, %c0_153] : memref<3x256x256xbf16, #tpu.memory_space<vmem>>, vector<1x256x256xbf16>
    %168 = vector.shape_cast %167 : vector<1x256x256xbf16> to vector<256x256xbf16>
    %cst_154 = arith.constant dense<0.000000e+00> : vector<16x256xf32>
    %169 = tpu.matmul %166, %168, %cst_154 {dimension_numbers = #tpu.dot_dimension_numbers<[1], [0], [0], [1], [0, 0, 1, 1], [], []>} : vector<16x256xbf16>, vector<256x256xbf16>, vector<16x256xf32> -> vector<16x256xf32>
    %c1_155 = arith.constant 1 : index
    %c0_156 = arith.constant 0 : index
    %c0_157 = arith.constant 0 : index
    %170 = vector.load %arg17[%c1_155, %c0_156, %c0_157] : memref<3x16x32xbf16, #tpu.memory_space<vmem>>, vector<1x16x32xbf16>
    %171 = vector.shape_cast %170 : vector<1x16x32xbf16> to vector<16x32xbf16>
    %cst_158 = arith.constant dense<0.000000e+00> : vector<16x256xf32>
    %172 = tpu.matmul %171, %162, %cst_158 {dimension_numbers = #tpu.dot_dimension_numbers<[1], [0], [0], [1], [0, 0, 1, 1], [], []>} : vector<16x32xbf16>, vector<32x256xbf16>, vector<16x256xf32> -> vector<16x256xf32>
    %173 = arith.truncf %172 : vector<16x256xf32> to vector<16x256xbf16>
    %c1_159 = arith.constant 1 : index
    %c0_160 = arith.constant 0 : index
    %c0_161 = arith.constant 0 : index
    %174 = vector.load %arg18[%c1_159, %c0_160, %c0_161] : memref<3x256x256xbf16, #tpu.memory_space<vmem>>, vector<1x256x256xbf16>
    %175 = vector.shape_cast %174 : vector<1x256x256xbf16> to vector<256x256xbf16>
    %cst_162 = arith.constant dense<0.000000e+00> : vector<16x256xf32>
    %176 = tpu.matmul %173, %175, %cst_162 {dimension_numbers = #tpu.dot_dimension_numbers<[1], [0], [0], [1], [0, 0, 1, 1], [], []>} : vector<16x256xbf16>, vector<256x256xbf16>, vector<16x256xf32> -> vector<16x256xf32>
    %177 = arith.addf %169, %176 : vector<16x256xf32>
    %c2_163 = arith.constant 2 : index
    %c0_164 = arith.constant 0 : index
    %c0_165 = arith.constant 0 : index
    %178 = vector.load %arg17[%c2_163, %c0_164, %c0_165] : memref<3x16x32xbf16, #tpu.memory_space<vmem>>, vector<1x16x32xbf16>
    %179 = vector.shape_cast %178 : vector<1x16x32xbf16> to vector<16x32xbf16>
    %cst_166 = arith.constant dense<0.000000e+00> : vector<16x256xf32>
    %180 = tpu.matmul %179, %162, %cst_166 {dimension_numbers = #tpu.dot_dimension_numbers<[1], [0], [0], [1], [0, 0, 1, 1], [], []>} : vector<16x32xbf16>, vector<32x256xbf16>, vector<16x256xf32> -> vector<16x256xf32>
    %181 = arith.truncf %180 : vector<16x256xf32> to vector<16x256xbf16>
    %c2_167 = arith.constant 2 : index
    %c0_168 = arith.constant 0 : index
    %c0_169 = arith.constant 0 : index
    %182 = vector.load %arg18[%c2_167, %c0_168, %c0_169] : memref<3x256x256xbf16, #tpu.memory_space<vmem>>, vector<1x256x256xbf16>
    %183 = vector.shape_cast %182 : vector<1x256x256xbf16> to vector<256x256xbf16>
    %cst_170 = arith.constant dense<0.000000e+00> : vector<16x256xf32>
    %184 = tpu.matmul %181, %183, %cst_170 {dimension_numbers = #tpu.dot_dimension_numbers<[1], [0], [0], [1], [0, 0, 1, 1], [], []>} : vector<16x256xbf16>, vector<256x256xbf16>, vector<16x256xf32> -> vector<16x256xf32>
    %185 = arith.addf %177, %184 : vector<16x256xf32>
    %c0_171 = arith.constant 0 : index
    %c0_172 = arith.constant 0 : index
    %186 = vector.load %arg19[%c0_171, %c0_172] : memref<1x256xf32, #tpu.memory_space<vmem>>, vector<1x256xf32>
    %187 = vector.broadcast %186 : vector<1x256xf32> to vector<16x256xf32>
    %188 = arith.addf %185, %187 : vector<16x256xf32>
    %cst_173 = arith.constant 0.000000e+00 : f32
    %189 = vector.broadcast %cst_173 : f32 to vector<16x256xf32>
    %190 = arith.maximumf %188, %189 : vector<16x256xf32>
    %191 = arith.truncf %190 : vector<16x256xf32> to vector<16x256xbf16>
    %c0_174 = arith.constant 0 : index
    %c0_175 = arith.constant 0 : index
    %c0_176 = arith.constant 0 : index
    %192 = vector.load %arg20[%c0_174, %c0_175, %c0_176] : memref<3x8x16xbf16, #tpu.memory_space<vmem>>, vector<1x8x16xbf16>
    %193 = vector.shape_cast %192 : vector<1x8x16xbf16> to vector<8x16xbf16>
    %cst_177 = arith.constant dense<0.000000e+00> : vector<8x256xf32>
    %194 = tpu.matmul %193, %191, %cst_177 {dimension_numbers = #tpu.dot_dimension_numbers<[1], [0], [0], [1], [0, 0, 1, 1], [], []>} : vector<8x16xbf16>, vector<16x256xbf16>, vector<8x256xf32> -> vector<8x256xf32>
    %195 = arith.truncf %194 : vector<8x256xf32> to vector<8x256xbf16>
    %c0_178 = arith.constant 0 : index
    %c0_179 = arith.constant 0 : index
    %c0_180 = arith.constant 0 : index
    %196 = vector.load %arg21[%c0_178, %c0_179, %c0_180] : memref<3x256x128xbf16, #tpu.memory_space<vmem>>, vector<1x256x128xbf16>
    %197 = vector.shape_cast %196 : vector<1x256x128xbf16> to vector<256x128xbf16>
    %cst_181 = arith.constant dense<0.000000e+00> : vector<8x128xf32>
    %198 = tpu.matmul %195, %197, %cst_181 {dimension_numbers = #tpu.dot_dimension_numbers<[1], [0], [0], [1], [0, 0, 1, 1], [], []>} : vector<8x256xbf16>, vector<256x128xbf16>, vector<8x128xf32> -> vector<8x128xf32>
    %c1_182 = arith.constant 1 : index
    %c0_183 = arith.constant 0 : index
    %c0_184 = arith.constant 0 : index
    %199 = vector.load %arg20[%c1_182, %c0_183, %c0_184] : memref<3x8x16xbf16, #tpu.memory_space<vmem>>, vector<1x8x16xbf16>
    %200 = vector.shape_cast %199 : vector<1x8x16xbf16> to vector<8x16xbf16>
    %cst_185 = arith.constant dense<0.000000e+00> : vector<8x256xf32>
    %201 = tpu.matmul %200, %191, %cst_185 {dimension_numbers = #tpu.dot_dimension_numbers<[1], [0], [0], [1], [0, 0, 1, 1], [], []>} : vector<8x16xbf16>, vector<16x256xbf16>, vector<8x256xf32> -> vector<8x256xf32>
    %202 = arith.truncf %201 : vector<8x256xf32> to vector<8x256xbf16>
    %c1_186 = arith.constant 1 : index
    %c0_187 = arith.constant 0 : index
    %c0_188 = arith.constant 0 : index
    %203 = vector.load %arg21[%c1_186, %c0_187, %c0_188] : memref<3x256x128xbf16, #tpu.memory_space<vmem>>, vector<1x256x128xbf16>
    %204 = vector.shape_cast %203 : vector<1x256x128xbf16> to vector<256x128xbf16>
    %cst_189 = arith.constant dense<0.000000e+00> : vector<8x128xf32>
    %205 = tpu.matmul %202, %204, %cst_189 {dimension_numbers = #tpu.dot_dimension_numbers<[1], [0], [0], [1], [0, 0, 1, 1], [], []>} : vector<8x256xbf16>, vector<256x128xbf16>, vector<8x128xf32> -> vector<8x128xf32>
    %206 = arith.addf %198, %205 : vector<8x128xf32>
    %c2_190 = arith.constant 2 : index
    %c0_191 = arith.constant 0 : index
    %c0_192 = arith.constant 0 : index
    %207 = vector.load %arg20[%c2_190, %c0_191, %c0_192] : memref<3x8x16xbf16, #tpu.memory_space<vmem>>, vector<1x8x16xbf16>
    %208 = vector.shape_cast %207 : vector<1x8x16xbf16> to vector<8x16xbf16>
    %cst_193 = arith.constant dense<0.000000e+00> : vector<8x256xf32>
    %209 = tpu.matmul %208, %191, %cst_193 {dimension_numbers = #tpu.dot_dimension_numbers<[1], [0], [0], [1], [0, 0, 1, 1], [], []>} : vector<8x16xbf16>, vector<16x256xbf16>, vector<8x256xf32> -> vector<8x256xf32>
    %210 = arith.truncf %209 : vector<8x256xf32> to vector<8x256xbf16>
    %c2_194 = arith.constant 2 : index
    %c0_195 = arith.constant 0 : index
    %c0_196 = arith.constant 0 : index
    %211 = vector.load %arg21[%c2_194, %c0_195, %c0_196] : memref<3x256x128xbf16, #tpu.memory_space<vmem>>, vector<1x256x128xbf16>
    %212 = vector.shape_cast %211 : vector<1x256x128xbf16> to vector<256x128xbf16>
    %cst_197 = arith.constant dense<0.000000e+00> : vector<8x128xf32>
    %213 = tpu.matmul %210, %212, %cst_197 {dimension_numbers = #tpu.dot_dimension_numbers<[1], [0], [0], [1], [0, 0, 1, 1], [], []>} : vector<8x256xbf16>, vector<256x128xbf16>, vector<8x128xf32> -> vector<8x128xf32>
    %214 = arith.addf %206, %213 : vector<8x128xf32>
    %c0_198 = arith.constant 0 : index
    %c0_199 = arith.constant 0 : index
    %215 = vector.load %arg22[%c0_198, %c0_199] : memref<1x128xf32, #tpu.memory_space<vmem>>, vector<1x128xf32>
    %216 = vector.broadcast %215 : vector<1x128xf32> to vector<8x128xf32>
    %217 = arith.addf %214, %216 : vector<8x128xf32>
    %218 = arith.truncf %217 : vector<8x128xf32> to vector<8x128xbf16>
    %c0_200 = arith.constant 0 : index
    %c0_201 = arith.constant 0 : index
    %219 = vector.load %arg23[%c0_200, %c0_201] : memref<4x8xbf16, #tpu.memory_space<vmem>>, vector<4x8xbf16>
    %cst_202 = arith.constant dense<0.000000e+00> : vector<4x256xf32>
    %220 = tpu.matmul %219, %104, %cst_202 {dimension_numbers = #tpu.dot_dimension_numbers<[1], [0], [0], [1], [0, 0, 1, 1], [], []>} : vector<4x8xbf16>, vector<8x256xbf16>, vector<4x256xf32> -> vector<4x256xf32>
    %c0_203 = arith.constant 0 : index
    %c0_204 = arith.constant 0 : index
    %221 = vector.load %arg23[%c0_203, %c0_204] : memref<4x8xbf16, #tpu.memory_space<vmem>>, vector<4x8xbf16>
    %cst_205 = arith.constant dense<0.000000e+00> : vector<4x128xf32>
    %222 = tpu.matmul %221, %218, %cst_205 {dimension_numbers = #tpu.dot_dimension_numbers<[1], [0], [0], [1], [0, 0, 1, 1], [], []>} : vector<4x8xbf16>, vector<8x128xbf16>, vector<4x128xf32> -> vector<4x128xf32>
    %223 = arith.truncf %220 : vector<4x256xf32> to vector<4x256xbf16>
    %c0_206 = arith.constant 0 : index
    %c0_207 = arith.constant 0 : index
    %224 = vector.load %arg24[%c0_206, %c0_207] : memref<256x128xbf16, #tpu.memory_space<vmem>>, vector<256x128xbf16>
    %cst_208 = arith.constant dense<0.000000e+00> : vector<4x128xf32>
    %225 = tpu.matmul %223, %224, %cst_208 {dimension_numbers = #tpu.dot_dimension_numbers<[1], [0], [0], [1], [0, 0, 1, 1], [], []>} : vector<4x256xbf16>, vector<256x128xbf16>, vector<4x128xf32> -> vector<4x128xf32>
    %226 = arith.truncf %222 : vector<4x128xf32> to vector<4x128xbf16>
    %c0_209 = arith.constant 0 : index
    %c0_210 = arith.constant 0 : index
    %227 = vector.load %arg25[%c0_209, %c0_210] : memref<128x128xbf16, #tpu.memory_space<vmem>>, vector<128x128xbf16>
    %cst_211 = arith.constant dense<0.000000e+00> : vector<4x128xf32>
    %228 = tpu.matmul %226, %227, %cst_211 {dimension_numbers = #tpu.dot_dimension_numbers<[1], [0], [0], [1], [0, 0, 1, 1], [], []>} : vector<4x128xbf16>, vector<128x128xbf16>, vector<4x128xf32> -> vector<4x128xf32>
    %229 = arith.addf %225, %228 : vector<4x128xf32>
    %c0_212 = arith.constant 0 : index
    %c0_213 = arith.constant 0 : index
    %230 = vector.load %arg26[%c0_212, %c0_213] : memref<1x128xf32, #tpu.memory_space<vmem>>, vector<1x128xf32>
    %231 = vector.broadcast %230 : vector<1x128xf32> to vector<4x128xf32>
    %232 = arith.addf %229, %231 : vector<4x128xf32>
    %cst_214 = arith.constant dense<0.000000e+00> : vector<4xf32>
    %233 = vector.multi_reduction <add>, %232, %cst_214 [1] : vector<4x128xf32> to vector<4xf32>
    %234 = vector.shape_cast %233 : vector<4xf32> to vector<4x1xf32>
    %cst_215 = arith.constant 1.280000e+02 : f32
    %235 = vector.broadcast %cst_215 : f32 to vector<4x1xf32>
    %236 = arith.divf %234, %235 : vector<4x1xf32>
    %237 = vector.broadcast %236 : vector<4x1xf32> to vector<4x128xf32>
    %238 = arith.subf %232, %237 : vector<4x128xf32>
    %239 = arith.mulf %238, %238 : vector<4x128xf32>
    %cst_216 = arith.constant dense<0.000000e+00> : vector<4xf32>
    %240 = vector.multi_reduction <add>, %239, %cst_216 [1] : vector<4x128xf32> to vector<4xf32>
    %241 = vector.shape_cast %240 : vector<4xf32> to vector<4x1xf32>
    %cst_217 = arith.constant 1.280000e+02 : f32
    %242 = vector.broadcast %cst_217 : f32 to vector<4x1xf32>
    %243 = arith.divf %241, %242 : vector<4x1xf32>
    %244 = vector.broadcast %236 : vector<4x1xf32> to vector<4x128xf32>
    %245 = arith.subf %232, %244 : vector<4x128xf32>
    %cst_218 = arith.constant 9.99999974E-6 : f32
    %246 = vector.broadcast %cst_218 : f32 to vector<4x1xf32>
    %247 = arith.addf %243, %246 : vector<4x1xf32>
    %248 = math.rsqrt %247 : vector<4x1xf32>
    %249 = vector.broadcast %248 : vector<4x1xf32> to vector<4x128xf32>
    %250 = arith.mulf %245, %249 : vector<4x128xf32>
    %c0_219 = arith.constant 0 : index
    %c0_220 = arith.constant 0 : index
    %251 = vector.load %arg27[%c0_219, %c0_220] : memref<1x128xf32, #tpu.memory_space<vmem>>, vector<1x128xf32>
    %252 = vector.broadcast %251 : vector<1x128xf32> to vector<4x128xf32>
    %253 = arith.mulf %250, %252 : vector<4x128xf32>
    %c0_221 = arith.constant 0 : index
    %c0_222 = arith.constant 0 : index
    %254 = vector.load %arg28[%c0_221, %c0_222] : memref<1x128xf32, #tpu.memory_space<vmem>>, vector<1x128xf32>
    %255 = vector.broadcast %254 : vector<1x128xf32> to vector<4x128xf32>
    %256 = arith.addf %253, %255 : vector<4x128xf32>
    %c0_223 = arith.constant 0 : index
    %c0_224 = arith.constant 0 : index
    %c0_225 = arith.constant 0 : index
    %257 = vector.load %arg29[%c0_223, %c0_224, %c0_225] : memref<1x4x128xf32, #tpu.memory_space<vmem>>, vector<1x4x128xf32>
    %258 = vector.shape_cast %257 : vector<1x4x128xf32> to vector<4x128xf32>
    %259 = vector.shape_cast %256 : vector<4x128xf32> to vector<1x4x128xf32>
    tpu.vector_store %arg29[%c0_223, %c0_224, %c0_225], %259 {strides = array<i32>} : memref<1x4x128xf32, #tpu.memory_space<vmem>>, vector<1x4x128xf32>,
    return
  }
  func.func @transform_0(%arg0: i32) -> (i32, i32) {
    %c0_i32 = arith.constant 0 : i32
    %c0_i32_0 = arith.constant 0 : i32
    return %arg0, %c0_i32 : i32, i32
  }
  func.func @transform_1(%arg0: i32) -> (i32, i32, i32) {
    %c0_i32 = arith.constant 0 : i32
    %c0_i32_0 = arith.constant 0 : i32
    %c0_i32_1 = arith.constant 0 : i32
    %c0_i32_2 = arith.constant 0 : i32
    return %c0_i32, %c0_i32_0, %c0_i32_1 : i32, i32, i32
  }
  func.func @transform_2(%arg0: i32) -> (i32, i32, i32) {
    %c0_i32 = arith.constant 0 : i32
    %c0_i32_0 = arith.constant 0 : i32
    %c0_i32_1 = arith.constant 0 : i32
    %c0_i32_2 = arith.constant 0 : i32
    return %c0_i32, %c0_i32_0, %c0_i32_1 : i32, i32, i32
  }
  func.func @transform_3(%arg0: i32) -> (i32, i32) {
    %c0_i32 = arith.constant 0 : i32
    %c0_i32_0 = arith.constant 0 : i32
    %c0_i32_1 = arith.constant 0 : i32
    return %c0_i32, %c0_i32_0 : i32, i32
  }
  func.func @transform_4(%arg0: i32) -> (i32, i32, i32) {
    %c0_i32 = arith.constant 0 : i32
    %c0_i32_0 = arith.constant 0 : i32
    %c0_i32_1 = arith.constant 0 : i32
    %c0_i32_2 = arith.constant 0 : i32
    return %c0_i32, %c0_i32_0, %c0_i32_1 : i32, i32, i32
  }
  func.func @transform_5(%arg0: i32) -> (i32, i32, i32) {
    %c0_i32 = arith.constant 0 : i32
    %c0_i32_0 = arith.constant 0 : i32
    %c0_i32_1 = arith.constant 0 : i32
    %c0_i32_2 = arith.constant 0 : i32
    return %c0_i32, %c0_i32_0, %c0_i32_1 : i32, i32, i32
  }
  func.func @transform_6(%arg0: i32) -> (i32, i32) {
    %c0_i32 = arith.constant 0 : i32
    %c0_i32_0 = arith.constant 0 : i32
    %c0_i32_1 = arith.constant 0 : i32
    return %c0_i32, %c0_i32_0 : i32, i32
  }
  func.func @transform_7(%arg0: i32) -> (i32, i32, i32) {
    %c0_i32 = arith.constant 0 : i32
    %c0_i32_0 = arith.constant 0 : i32
    %c0_i32_1 = arith.constant 0 : i32
    %c0_i32_2 = arith.constant 0 : i32
    return %c0_i32, %c0_i32_0, %c0_i32_1 : i32, i32, i32
  }
  func.func @transform_8(%arg0: i32) -> (i32, i32, i32) {
    %c0_i32 = arith.constant 0 : i32
    %c0_i32_0 = arith.constant 0 : i32
    %c0_i32_1 = arith.constant 0 : i32
    %c0_i32_2 = arith.constant 0 : i32
    return %c0_i32, %c0_i32_0, %c0_i32_1 : i32, i32, i32
  }
  func.func @transform_9(%arg0: i32) -> (i32, i32) {
    %c0_i32 = arith.constant 0 : i32
    %c0_i32_0 = arith.constant 0 : i32
    %c0_i32_1 = arith.constant 0 : i32
    return %c0_i32, %c0_i32_0 : i32, i32
  }
  func.func @transform_10(%arg0: i32) -> (i32, i32, i32) {
    %c0_i32 = arith.constant 0 : i32
    %c0_i32_0 = arith.constant 0 : i32
    %c0_i32_1 = arith.constant 0 : i32
    %c0_i32_2 = arith.constant 0 : i32
    return %c0_i32, %c0_i32_0, %c0_i32_1 : i32, i32, i32
  }
  func.func @transform_11(%arg0: i32) -> (i32, i32, i32) {
    %c0_i32 = arith.constant 0 : i32
    %c0_i32_0 = arith.constant 0 : i32
    %c0_i32_1 = arith.constant 0 : i32
    %c0_i32_2 = arith.constant 0 : i32
    return %c0_i32, %c0_i32_0, %c0_i32_1 : i32, i32, i32
  }
  func.func @transform_12(%arg0: i32) -> (i32, i32) {
    %c0_i32 = arith.constant 0 : i32
    %c0_i32_0 = arith.constant 0 : i32
    %c0_i32_1 = arith.constant 0 : i32
    return %c0_i32, %c0_i32_0 : i32, i32
  }
  func.func @transform_13(%arg0: i32) -> (i32, i32, i32) {
    %c0_i32 = arith.constant 0 : i32
    %c0_i32_0 = arith.constant 0 : i32
    %c0_i32_1 = arith.constant 0 : i32
    %c0_i32_2 = arith.constant 0 : i32
    return %c0_i32, %c0_i32_0, %c0_i32_1 : i32, i32, i32
  }
  func.func @transform_14(%arg0: i32) -> (i32, i32, i32) {
    %c0_i32 = arith.constant 0 : i32
    %c0_i32_0 = arith.constant 0 : i32
    %c0_i32_1 = arith.constant 0 : i32
    %c0_i32_2 = arith.constant 0 : i32
    return %c0_i32, %c0_i32_0, %c0_i32_1 : i32, i32, i32
  }
  func.func @transform_15(%arg0: i32) -> (i32, i32) {
    %c0_i32 = arith.constant 0 : i32
    %c0_i32_0 = arith.constant 0 : i32
    %c0_i32_1 = arith.constant 0 : i32
    return %c0_i32, %c0_i32_0 : i32, i32
  }
  func.func @transform_16(%arg0: i32) -> (i32, i32, i32) {
    %c0_i32 = arith.constant 0 : i32
    %c0_i32_0 = arith.constant 0 : i32
    %c0_i32_1 = arith.constant 0 : i32
    %c0_i32_2 = arith.constant 0 : i32
    return %c0_i32, %c0_i32_0, %c0_i32_1 : i32, i32, i32
  }
  func.func @transform_17(%arg0: i32) -> (i32, i32, i32) {
    %c0_i32 = arith.constant 0 : i32
    %c0_i32_0 = arith.constant 0 : i32
    %c0_i32_1 = arith.constant 0 : i32
    %c0_i32_2 = arith.constant 0 : i32
    return %c0_i32, %c0_i32_0, %c0_i32_1 : i32, i32, i32
  }
  func.func @transform_18(%arg0: i32) -> (i32, i32) {
    %c0_i32 = arith.constant 0 : i32
    %c0_i32_0 = arith.constant 0 : i32
    %c0_i32_1 = arith.constant 0 : i32
    return %c0_i32, %c0_i32_0 : i32, i32
  }
  func.func @transform_19(%arg0: i32) -> (i32, i32, i32) {
    %c0_i32 = arith.constant 0 : i32
    %c0_i32_0 = arith.constant 0 : i32
    %c0_i32_1 = arith.constant 0 : i32
    %c0_i32_2 = arith.constant 0 : i32
    return %c0_i32, %c0_i32_0, %c0_i32_1 : i32, i32, i32
  }
  func.func @transform_20(%arg0: i32) -> (i32, i32, i32) {
    %c0_i32 = arith.constant 0 : i32
    %c0_i32_0 = arith.constant 0 : i32
    %c0_i32_1 = arith.constant 0 : i32
    %c0_i32_2 = arith.constant 0 : i32
    return %c0_i32, %c0_i32_0, %c0_i32_1 : i32, i32, i32
  }
  func.func @transform_21(%arg0: i32) -> (i32, i32) {
    %c0_i32 = arith.constant 0 : i32
    %c0_i32_0 = arith.constant 0 : i32
    %c0_i32_1 = arith.constant 0 : i32
    return %c0_i32, %c0_i32_0 : i32, i32
  }
  func.func @transform_22(%arg0: i32) -> (i32, i32) {
    %c0_i32 = arith.constant 0 : i32
    %c0_i32_0 = arith.constant 0 : i32
    %c0_i32_1 = arith.constant 0 : i32
    return %c0_i32, %c0_i32_0 : i32, i32
  }
  func.func @transform_23(%arg0: i32) -> (i32, i32) {
    %c0_i32 = arith.constant 0 : i32
    %c0_i32_0 = arith.constant 0 : i32
    %c0_i32_1 = arith.constant 0 : i32
    return %c0_i32, %c0_i32_0 : i32, i32
  }
  func.func @transform_24(%arg0: i32) -> (i32, i32) {
    %c0_i32 = arith.constant 0 : i32
    %c0_i32_0 = arith.constant 0 : i32
    %c0_i32_1 = arith.constant 0 : i32
    return %c0_i32, %c0_i32_0 : i32, i32
  }
  func.func @transform_25(%arg0: i32) -> (i32, i32) {
    %c0_i32 = arith.constant 0 : i32
    %c0_i32_0 = arith.constant 0 : i32
    %c0_i32_1 = arith.constant 0 : i32
    return %c0_i32, %c0_i32_0 : i32, i32
  }
  func.func @transform_26(%arg0: i32) -> (i32, i32) {
    %c0_i32 = arith.constant 0 : i32
    %c0_i32_0 = arith.constant 0 : i32
    %c0_i32_1 = arith.constant 0 : i32
    return %c0_i32, %c0_i32_0 : i32, i32
  }
  func.func @transform_27(%arg0: i32) -> (i32, i32) {
    %c0_i32 = arith.constant 0 : i32
    %c0_i32_0 = arith.constant 0 : i32
    %c0_i32_1 = arith.constant 0 : i32
    return %c0_i32, %c0_i32_0 : i32, i32
  }
  func.func @transform_28(%arg0: i32) -> (i32, i32, i32) {
    %c0_i32 = arith.constant 0 : i32
    %c0_i32_0 = arith.constant 0 : i32
    %c0_i32_1 = arith.constant 0 : i32
    return %arg0, %c0_i32, %c0_i32_0 : i32, i32, i32
  }
}

module attributes {stable_mosaic.version = 11 : i64} {
  func.func @_wc_kernel(%arg0: i32, %arg1: memref<8x128xf32, #tpu.memory_space<vmem>>, %arg2: memref<2x64xf32, #tpu.memory_space<vmem>>, %arg3: memref<128x64xbf16, #tpu.memory_space<vmem>>, %arg4: memref<1x64xf32, #tpu.memory_space<vmem>>, %arg5: memref<64x64xbf16, #tpu.memory_space<vmem>>, %arg6: memref<1x64xf32, #tpu.memory_space<vmem>>, %arg7: memref<64x6xbf16, #tpu.memory_space<vmem>>, %arg8: memref<1x6xf32, #tpu.memory_space<vmem>>, %arg9: memref<8x6xf32, #tpu.memory_space<vmem>>, %arg10: memref<2x64xf32, #tpu.memory_space<vmem>>, %arg11: memref<8x64xf32, #tpu.memory_space<vmem>>) attributes {dimension_semantics = [#tpu.dimension_semantics<arbitrary>], iteration_bounds = array<i64: 1>, scalar_prefetch = 0 : i64, scratch_operands = 1 : i64, tpu.core_type = #tpu.core_type<tc>, window_params = [{pipeline_mode = #tpu.pipeline_mode<synchronous>, transform_indices = @transform_0, window_bounds = array<i64: 8, 128>}, {pipeline_mode = #tpu.pipeline_mode<synchronous>, transform_indices = @transform_1, window_bounds = array<i64: 2, 64>}, {pipeline_mode = #tpu.pipeline_mode<synchronous>, transform_indices = @transform_2, window_bounds = array<i64: 128, 64>}, {pipeline_mode = #tpu.pipeline_mode<synchronous>, transform_indices = @transform_3, window_bounds = array<i64: 1, 64>}, {pipeline_mode = #tpu.pipeline_mode<synchronous>, transform_indices = @transform_4, window_bounds = array<i64: 64, 64>}, {pipeline_mode = #tpu.pipeline_mode<synchronous>, transform_indices = @transform_5, window_bounds = array<i64: 1, 64>}, {pipeline_mode = #tpu.pipeline_mode<synchronous>, transform_indices = @transform_6, window_bounds = array<i64: 64, 6>}, {pipeline_mode = #tpu.pipeline_mode<synchronous>, transform_indices = @transform_7, window_bounds = array<i64: 1, 6>}, {pipeline_mode = #tpu.pipeline_mode<synchronous>, transform_indices = @transform_8, window_bounds = array<i64: 8, 6>}, {pipeline_mode = #tpu.pipeline_mode<synchronous>, transform_indices = @transform_9, window_bounds = array<i64: 2, 64>}]} {
    %c0 = arith.constant 0 : index
    %c0_0 = arith.constant 0 : index
    %0 = vector.load %arg5[%c0, %c0_0] : memref<64x64xbf16, #tpu.memory_space<vmem>>, vector<64x64xbf16>
    %c0_1 = arith.constant 0 : index
    %c0_2 = arith.constant 0 : index
    %1 = vector.load %arg6[%c0_1, %c0_2] : memref<1x64xf32, #tpu.memory_space<vmem>>, vector<1x64xf32>
    %c0_3 = arith.constant 0 : index
    %c0_4 = arith.constant 0 : index
    %2 = vector.load %arg1[%c0_3, %c0_4] : memref<8x128xf32, #tpu.memory_space<vmem>>, vector<8x128xf32>
    %3 = arith.truncf %2 : vector<8x128xf32> to vector<8x128xbf16>
    %c0_5 = arith.constant 0 : index
    %c0_6 = arith.constant 0 : index
    %4 = vector.load %arg3[%c0_5, %c0_6] : memref<128x64xbf16, #tpu.memory_space<vmem>>, vector<128x64xbf16>
    %cst = arith.constant dense<0.000000e+00> : vector<8x64xf32>
    %5 = tpu.matmul %3, %4, %cst {dimension_numbers = #tpu.dot_dimension_numbers<[1], [0], [0], [1], [0, 0, 1, 1], [], []>} : vector<8x128xbf16>, vector<128x64xbf16>, vector<8x64xf32> -> vector<8x64xf32>
    %c0_7 = arith.constant 0 : index
    %c0_8 = arith.constant 0 : index
    %6 = vector.load %arg4[%c0_7, %c0_8] : memref<1x64xf32, #tpu.memory_space<vmem>>, vector<1x64xf32>
    %7 = vector.broadcast %6 : vector<1x64xf32> to vector<8x64xf32>
    %8 = arith.addf %5, %7 : vector<8x64xf32>
    %c0_9 = arith.constant 0 : index
    %c0_10 = arith.constant 0 : index
    %9 = vector.load %arg2[%c0_9, %c0_10] : memref<2x64xf32, #tpu.memory_space<vmem>>, vector<2x64xf32>
    %10 = vector.extract_strided_slice %8 {offsets = [0, 0], sizes = [2, 64], strides = [1, 1]} : vector<8x64xf32> to vector<2x64xf32>
    %11 = arith.truncf %9 : vector<2x64xf32> to vector<2x64xbf16>
    %cst_11 = arith.constant dense<0.000000e+00> : vector<2x64xf32>
    %12 = tpu.matmul %11, %0, %cst_11 {dimension_numbers = #tpu.dot_dimension_numbers<[1], [0], [0], [1], [0, 0, 1, 1], [], []>} : vector<2x64xbf16>, vector<64x64xbf16>, vector<2x64xf32> -> vector<2x64xf32>
    %13 = arith.addf %10, %12 : vector<2x64xf32>
    %cst_12 = arith.constant 0.000000e+00 : f32
    %14 = vector.broadcast %cst_12 : f32 to vector<2x64xf32>
    %15 = arith.subf %14, %9 : vector<2x64xf32>
    %16 = arith.negf %13 : vector<2x64xf32>
    %17 = math.exp %16 : vector<2x64xf32>
    %cst_13 = arith.constant 1.000000e+00 : f32
    %18 = vector.broadcast %cst_13 : f32 to vector<2x64xf32>
    %19 = arith.addf %18, %17 : vector<2x64xf32>
    %20 = arith.divf %18, %19 : vector<2x64xf32>
    %21 = arith.addf %15, %20 : vector<2x64xf32>
    %22 = vector.broadcast %1 : vector<1x64xf32> to vector<2x64xf32>
    %23 = arith.mulf %21, %22 : vector<2x64xf32>
    %cst_14 = arith.constant 5.000000e-02 : f32
    %24 = vector.broadcast %cst_14 : f32 to vector<2x64xf32>
    %25 = arith.mulf %24, %23 : vector<2x64xf32>
    %26 = arith.addf %9, %25 : vector<2x64xf32>
    %27 = arith.truncf %26 : vector<2x64xf32> to vector<2x64xbf16>
    %cst_15 = arith.constant dense<0.000000e+00> : vector<2x64xf32>
    %28 = tpu.matmul %27, %0, %cst_15 {dimension_numbers = #tpu.dot_dimension_numbers<[1], [0], [0], [1], [0, 0, 1, 1], [], []>} : vector<2x64xbf16>, vector<64x64xbf16>, vector<2x64xf32> -> vector<2x64xf32>
    %29 = arith.addf %10, %28 : vector<2x64xf32>
    %cst_16 = arith.constant 0.000000e+00 : f32
    %30 = vector.broadcast %cst_16 : f32 to vector<2x64xf32>
    %31 = arith.subf %30, %26 : vector<2x64xf32>
    %32 = arith.negf %29 : vector<2x64xf32>
    %33 = math.exp %32 : vector<2x64xf32>
    %cst_17 = arith.constant 1.000000e+00 : f32
    %34 = vector.broadcast %cst_17 : f32 to vector<2x64xf32>
    %35 = arith.addf %34, %33 : vector<2x64xf32>
    %36 = arith.divf %34, %35 : vector<2x64xf32>
    %37 = arith.addf %31, %36 : vector<2x64xf32>
    %38 = vector.broadcast %1 : vector<1x64xf32> to vector<2x64xf32>
    %39 = arith.mulf %37, %38 : vector<2x64xf32>
    %cst_18 = arith.constant 5.000000e-02 : f32
    %40 = vector.broadcast %cst_18 : f32 to vector<2x64xf32>
    %41 = arith.mulf %40, %39 : vector<2x64xf32>
    %42 = arith.addf %9, %41 : vector<2x64xf32>
    %43 = arith.truncf %42 : vector<2x64xf32> to vector<2x64xbf16>
    %cst_19 = arith.constant dense<0.000000e+00> : vector<2x64xf32>
    %44 = tpu.matmul %43, %0, %cst_19 {dimension_numbers = #tpu.dot_dimension_numbers<[1], [0], [0], [1], [0, 0, 1, 1], [], []>} : vector<2x64xbf16>, vector<64x64xbf16>, vector<2x64xf32> -> vector<2x64xf32>
    %45 = arith.addf %10, %44 : vector<2x64xf32>
    %cst_20 = arith.constant 0.000000e+00 : f32
    %46 = vector.broadcast %cst_20 : f32 to vector<2x64xf32>
    %47 = arith.subf %46, %42 : vector<2x64xf32>
    %48 = arith.negf %45 : vector<2x64xf32>
    %49 = math.exp %48 : vector<2x64xf32>
    %cst_21 = arith.constant 1.000000e+00 : f32
    %50 = vector.broadcast %cst_21 : f32 to vector<2x64xf32>
    %51 = arith.addf %50, %49 : vector<2x64xf32>
    %52 = arith.divf %50, %51 : vector<2x64xf32>
    %53 = arith.addf %47, %52 : vector<2x64xf32>
    %54 = vector.broadcast %1 : vector<1x64xf32> to vector<2x64xf32>
    %55 = arith.mulf %53, %54 : vector<2x64xf32>
    %cst_22 = arith.constant 1.000000e-01 : f32
    %56 = vector.broadcast %cst_22 : f32 to vector<2x64xf32>
    %57 = arith.mulf %56, %55 : vector<2x64xf32>
    %58 = arith.addf %9, %57 : vector<2x64xf32>
    %59 = arith.truncf %58 : vector<2x64xf32> to vector<2x64xbf16>
    %cst_23 = arith.constant dense<0.000000e+00> : vector<2x64xf32>
    %60 = tpu.matmul %59, %0, %cst_23 {dimension_numbers = #tpu.dot_dimension_numbers<[1], [0], [0], [1], [0, 0, 1, 1], [], []>} : vector<2x64xbf16>, vector<64x64xbf16>, vector<2x64xf32> -> vector<2x64xf32>
    %61 = arith.addf %10, %60 : vector<2x64xf32>
    %cst_24 = arith.constant 0.000000e+00 : f32
    %62 = vector.broadcast %cst_24 : f32 to vector<2x64xf32>
    %63 = arith.subf %62, %58 : vector<2x64xf32>
    %64 = arith.negf %61 : vector<2x64xf32>
    %65 = math.exp %64 : vector<2x64xf32>
    %cst_25 = arith.constant 1.000000e+00 : f32
    %66 = vector.broadcast %cst_25 : f32 to vector<2x64xf32>
    %67 = arith.addf %66, %65 : vector<2x64xf32>
    %68 = arith.divf %66, %67 : vector<2x64xf32>
    %69 = arith.addf %63, %68 : vector<2x64xf32>
    %70 = vector.broadcast %1 : vector<1x64xf32> to vector<2x64xf32>
    %71 = arith.mulf %69, %70 : vector<2x64xf32>
    %cst_26 = arith.constant 2.000000e+00 : f32
    %72 = vector.broadcast %cst_26 : f32 to vector<2x64xf32>
    %73 = arith.mulf %72, %39 : vector<2x64xf32>
    %74 = arith.addf %23, %73 : vector<2x64xf32>
    %cst_27 = arith.constant 2.000000e+00 : f32
    %75 = vector.broadcast %cst_27 : f32 to vector<2x64xf32>
    %76 = arith.mulf %75, %55 : vector<2x64xf32>
    %77 = arith.addf %74, %76 : vector<2x64xf32>
    %78 = arith.addf %77, %71 : vector<2x64xf32>
    %cst_28 = arith.constant 0.0166666675 : f32
    %79 = vector.broadcast %cst_28 : f32 to vector<2x64xf32>
    %80 = arith.mulf %79, %78 : vector<2x64xf32>
    %81 = arith.addf %9, %80 : vector<2x64xf32>
    %c0_29 = arith.constant 0 : index
    %c0_30 = arith.constant 0 : index
    %82 = vector.load %arg11[%c0_29, %c0_30] : memref<8x64xf32, #tpu.memory_space<vmem>>, vector<2x64xf32>
    tpu.vector_store %arg11[%c0_29, %c0_30], %81 {strides = array<i32>} : memref<8x64xf32, #tpu.memory_space<vmem>>, vector<2x64xf32>,
    %83 = vector.extract_strided_slice %8 {offsets = [2, 0], sizes = [2, 64], strides = [1, 1]} : vector<8x64xf32> to vector<2x64xf32>
    %84 = arith.truncf %81 : vector<2x64xf32> to vector<2x64xbf16>
    %cst_31 = arith.constant dense<0.000000e+00> : vector<2x64xf32>
    %85 = tpu.matmul %84, %0, %cst_31 {dimension_numbers = #tpu.dot_dimension_numbers<[1], [0], [0], [1], [0, 0, 1, 1], [], []>} : vector<2x64xbf16>, vector<64x64xbf16>, vector<2x64xf32> -> vector<2x64xf32>
    %86 = arith.addf %83, %85 : vector<2x64xf32>
    %cst_32 = arith.constant 0.000000e+00 : f32
    %87 = vector.broadcast %cst_32 : f32 to vector<2x64xf32>
    %88 = arith.subf %87, %81 : vector<2x64xf32>
    %89 = arith.negf %86 : vector<2x64xf32>
    %90 = math.exp %89 : vector<2x64xf32>
    %cst_33 = arith.constant 1.000000e+00 : f32
    %91 = vector.broadcast %cst_33 : f32 to vector<2x64xf32>
    %92 = arith.addf %91, %90 : vector<2x64xf32>
    %93 = arith.divf %91, %92 : vector<2x64xf32>
    %94 = arith.addf %88, %93 : vector<2x64xf32>
    %95 = vector.broadcast %1 : vector<1x64xf32> to vector<2x64xf32>
    %96 = arith.mulf %94, %95 : vector<2x64xf32>
    %cst_34 = arith.constant 5.000000e-02 : f32
    %97 = vector.broadcast %cst_34 : f32 to vector<2x64xf32>
    %98 = arith.mulf %97, %96 : vector<2x64xf32>
    %99 = arith.addf %81, %98 : vector<2x64xf32>
    %100 = arith.truncf %99 : vector<2x64xf32> to vector<2x64xbf16>
    %cst_35 = arith.constant dense<0.000000e+00> : vector<2x64xf32>
    %101 = tpu.matmul %100, %0, %cst_35 {dimension_numbers = #tpu.dot_dimension_numbers<[1], [0], [0], [1], [0, 0, 1, 1], [], []>} : vector<2x64xbf16>, vector<64x64xbf16>, vector<2x64xf32> -> vector<2x64xf32>
    %102 = arith.addf %83, %101 : vector<2x64xf32>
    %cst_36 = arith.constant 0.000000e+00 : f32
    %103 = vector.broadcast %cst_36 : f32 to vector<2x64xf32>
    %104 = arith.subf %103, %99 : vector<2x64xf32>
    %105 = arith.negf %102 : vector<2x64xf32>
    %106 = math.exp %105 : vector<2x64xf32>
    %cst_37 = arith.constant 1.000000e+00 : f32
    %107 = vector.broadcast %cst_37 : f32 to vector<2x64xf32>
    %108 = arith.addf %107, %106 : vector<2x64xf32>
    %109 = arith.divf %107, %108 : vector<2x64xf32>
    %110 = arith.addf %104, %109 : vector<2x64xf32>
    %111 = vector.broadcast %1 : vector<1x64xf32> to vector<2x64xf32>
    %112 = arith.mulf %110, %111 : vector<2x64xf32>
    %cst_38 = arith.constant 5.000000e-02 : f32
    %113 = vector.broadcast %cst_38 : f32 to vector<2x64xf32>
    %114 = arith.mulf %113, %112 : vector<2x64xf32>
    %115 = arith.addf %81, %114 : vector<2x64xf32>
    %116 = arith.truncf %115 : vector<2x64xf32> to vector<2x64xbf16>
    %cst_39 = arith.constant dense<0.000000e+00> : vector<2x64xf32>
    %117 = tpu.matmul %116, %0, %cst_39 {dimension_numbers = #tpu.dot_dimension_numbers<[1], [0], [0], [1], [0, 0, 1, 1], [], []>} : vector<2x64xbf16>, vector<64x64xbf16>, vector<2x64xf32> -> vector<2x64xf32>
    %118 = arith.addf %83, %117 : vector<2x64xf32>
    %cst_40 = arith.constant 0.000000e+00 : f32
    %119 = vector.broadcast %cst_40 : f32 to vector<2x64xf32>
    %120 = arith.subf %119, %115 : vector<2x64xf32>
    %121 = arith.negf %118 : vector<2x64xf32>
    %122 = math.exp %121 : vector<2x64xf32>
    %cst_41 = arith.constant 1.000000e+00 : f32
    %123 = vector.broadcast %cst_41 : f32 to vector<2x64xf32>
    %124 = arith.addf %123, %122 : vector<2x64xf32>
    %125 = arith.divf %123, %124 : vector<2x64xf32>
    %126 = arith.addf %120, %125 : vector<2x64xf32>
    %127 = vector.broadcast %1 : vector<1x64xf32> to vector<2x64xf32>
    %128 = arith.mulf %126, %127 : vector<2x64xf32>
    %cst_42 = arith.constant 1.000000e-01 : f32
    %129 = vector.broadcast %cst_42 : f32 to vector<2x64xf32>
    %130 = arith.mulf %129, %128 : vector<2x64xf32>
    %131 = arith.addf %81, %130 : vector<2x64xf32>
    %132 = arith.truncf %131 : vector<2x64xf32> to vector<2x64xbf16>
    %cst_43 = arith.constant dense<0.000000e+00> : vector<2x64xf32>
    %133 = tpu.matmul %132, %0, %cst_43 {dimension_numbers = #tpu.dot_dimension_numbers<[1], [0], [0], [1], [0, 0, 1, 1], [], []>} : vector<2x64xbf16>, vector<64x64xbf16>, vector<2x64xf32> -> vector<2x64xf32>
    %134 = arith.addf %83, %133 : vector<2x64xf32>
    %cst_44 = arith.constant 0.000000e+00 : f32
    %135 = vector.broadcast %cst_44 : f32 to vector<2x64xf32>
    %136 = arith.subf %135, %131 : vector<2x64xf32>
    %137 = arith.negf %134 : vector<2x64xf32>
    %138 = math.exp %137 : vector<2x64xf32>
    %cst_45 = arith.constant 1.000000e+00 : f32
    %139 = vector.broadcast %cst_45 : f32 to vector<2x64xf32>
    %140 = arith.addf %139, %138 : vector<2x64xf32>
    %141 = arith.divf %139, %140 : vector<2x64xf32>
    %142 = arith.addf %136, %141 : vector<2x64xf32>
    %143 = vector.broadcast %1 : vector<1x64xf32> to vector<2x64xf32>
    %144 = arith.mulf %142, %143 : vector<2x64xf32>
    %cst_46 = arith.constant 2.000000e+00 : f32
    %145 = vector.broadcast %cst_46 : f32 to vector<2x64xf32>
    %146 = arith.mulf %145, %112 : vector<2x64xf32>
    %147 = arith.addf %96, %146 : vector<2x64xf32>
    %cst_47 = arith.constant 2.000000e+00 : f32
    %148 = vector.broadcast %cst_47 : f32 to vector<2x64xf32>
    %149 = arith.mulf %148, %128 : vector<2x64xf32>
    %150 = arith.addf %147, %149 : vector<2x64xf32>
    %151 = arith.addf %150, %144 : vector<2x64xf32>
    %cst_48 = arith.constant 0.0166666675 : f32
    %152 = vector.broadcast %cst_48 : f32 to vector<2x64xf32>
    %153 = arith.mulf %152, %151 : vector<2x64xf32>
    %154 = arith.addf %81, %153 : vector<2x64xf32>
    %c2 = arith.constant 2 : index
    %c0_49 = arith.constant 0 : index
    %155 = vector.load %arg11[%c2, %c0_49] : memref<8x64xf32, #tpu.memory_space<vmem>>, vector<2x64xf32>
    tpu.vector_store %arg11[%c2, %c0_49], %154 {strides = array<i32>} : memref<8x64xf32, #tpu.memory_space<vmem>>, vector<2x64xf32>,
    %156 = vector.extract_strided_slice %8 {offsets = [4, 0], sizes = [2, 64], strides = [1, 1]} : vector<8x64xf32> to vector<2x64xf32>
    %157 = arith.truncf %154 : vector<2x64xf32> to vector<2x64xbf16>
    %cst_50 = arith.constant dense<0.000000e+00> : vector<2x64xf32>
    %158 = tpu.matmul %157, %0, %cst_50 {dimension_numbers = #tpu.dot_dimension_numbers<[1], [0], [0], [1], [0, 0, 1, 1], [], []>} : vector<2x64xbf16>, vector<64x64xbf16>, vector<2x64xf32> -> vector<2x64xf32>
    %159 = arith.addf %156, %158 : vector<2x64xf32>
    %cst_51 = arith.constant 0.000000e+00 : f32
    %160 = vector.broadcast %cst_51 : f32 to vector<2x64xf32>
    %161 = arith.subf %160, %154 : vector<2x64xf32>
    %162 = arith.negf %159 : vector<2x64xf32>
    %163 = math.exp %162 : vector<2x64xf32>
    %cst_52 = arith.constant 1.000000e+00 : f32
    %164 = vector.broadcast %cst_52 : f32 to vector<2x64xf32>
    %165 = arith.addf %164, %163 : vector<2x64xf32>
    %166 = arith.divf %164, %165 : vector<2x64xf32>
    %167 = arith.addf %161, %166 : vector<2x64xf32>
    %168 = vector.broadcast %1 : vector<1x64xf32> to vector<2x64xf32>
    %169 = arith.mulf %167, %168 : vector<2x64xf32>
    %cst_53 = arith.constant 5.000000e-02 : f32
    %170 = vector.broadcast %cst_53 : f32 to vector<2x64xf32>
    %171 = arith.mulf %170, %169 : vector<2x64xf32>
    %172 = arith.addf %154, %171 : vector<2x64xf32>
    %173 = arith.truncf %172 : vector<2x64xf32> to vector<2x64xbf16>
    %cst_54 = arith.constant dense<0.000000e+00> : vector<2x64xf32>
    %174 = tpu.matmul %173, %0, %cst_54 {dimension_numbers = #tpu.dot_dimension_numbers<[1], [0], [0], [1], [0, 0, 1, 1], [], []>} : vector<2x64xbf16>, vector<64x64xbf16>, vector<2x64xf32> -> vector<2x64xf32>
    %175 = arith.addf %156, %174 : vector<2x64xf32>
    %cst_55 = arith.constant 0.000000e+00 : f32
    %176 = vector.broadcast %cst_55 : f32 to vector<2x64xf32>
    %177 = arith.subf %176, %172 : vector<2x64xf32>
    %178 = arith.negf %175 : vector<2x64xf32>
    %179 = math.exp %178 : vector<2x64xf32>
    %cst_56 = arith.constant 1.000000e+00 : f32
    %180 = vector.broadcast %cst_56 : f32 to vector<2x64xf32>
    %181 = arith.addf %180, %179 : vector<2x64xf32>
    %182 = arith.divf %180, %181 : vector<2x64xf32>
    %183 = arith.addf %177, %182 : vector<2x64xf32>
    %184 = vector.broadcast %1 : vector<1x64xf32> to vector<2x64xf32>
    %185 = arith.mulf %183, %184 : vector<2x64xf32>
    %cst_57 = arith.constant 5.000000e-02 : f32
    %186 = vector.broadcast %cst_57 : f32 to vector<2x64xf32>
    %187 = arith.mulf %186, %185 : vector<2x64xf32>
    %188 = arith.addf %154, %187 : vector<2x64xf32>
    %189 = arith.truncf %188 : vector<2x64xf32> to vector<2x64xbf16>
    %cst_58 = arith.constant dense<0.000000e+00> : vector<2x64xf32>
    %190 = tpu.matmul %189, %0, %cst_58 {dimension_numbers = #tpu.dot_dimension_numbers<[1], [0], [0], [1], [0, 0, 1, 1], [], []>} : vector<2x64xbf16>, vector<64x64xbf16>, vector<2x64xf32> -> vector<2x64xf32>
    %191 = arith.addf %156, %190 : vector<2x64xf32>
    %cst_59 = arith.constant 0.000000e+00 : f32
    %192 = vector.broadcast %cst_59 : f32 to vector<2x64xf32>
    %193 = arith.subf %192, %188 : vector<2x64xf32>
    %194 = arith.negf %191 : vector<2x64xf32>
    %195 = math.exp %194 : vector<2x64xf32>
    %cst_60 = arith.constant 1.000000e+00 : f32
    %196 = vector.broadcast %cst_60 : f32 to vector<2x64xf32>
    %197 = arith.addf %196, %195 : vector<2x64xf32>
    %198 = arith.divf %196, %197 : vector<2x64xf32>
    %199 = arith.addf %193, %198 : vector<2x64xf32>
    %200 = vector.broadcast %1 : vector<1x64xf32> to vector<2x64xf32>
    %201 = arith.mulf %199, %200 : vector<2x64xf32>
    %cst_61 = arith.constant 1.000000e-01 : f32
    %202 = vector.broadcast %cst_61 : f32 to vector<2x64xf32>
    %203 = arith.mulf %202, %201 : vector<2x64xf32>
    %204 = arith.addf %154, %203 : vector<2x64xf32>
    %205 = arith.truncf %204 : vector<2x64xf32> to vector<2x64xbf16>
    %cst_62 = arith.constant dense<0.000000e+00> : vector<2x64xf32>
    %206 = tpu.matmul %205, %0, %cst_62 {dimension_numbers = #tpu.dot_dimension_numbers<[1], [0], [0], [1], [0, 0, 1, 1], [], []>} : vector<2x64xbf16>, vector<64x64xbf16>, vector<2x64xf32> -> vector<2x64xf32>
    %207 = arith.addf %156, %206 : vector<2x64xf32>
    %cst_63 = arith.constant 0.000000e+00 : f32
    %208 = vector.broadcast %cst_63 : f32 to vector<2x64xf32>
    %209 = arith.subf %208, %204 : vector<2x64xf32>
    %210 = arith.negf %207 : vector<2x64xf32>
    %211 = math.exp %210 : vector<2x64xf32>
    %cst_64 = arith.constant 1.000000e+00 : f32
    %212 = vector.broadcast %cst_64 : f32 to vector<2x64xf32>
    %213 = arith.addf %212, %211 : vector<2x64xf32>
    %214 = arith.divf %212, %213 : vector<2x64xf32>
    %215 = arith.addf %209, %214 : vector<2x64xf32>
    %216 = vector.broadcast %1 : vector<1x64xf32> to vector<2x64xf32>
    %217 = arith.mulf %215, %216 : vector<2x64xf32>
    %cst_65 = arith.constant 2.000000e+00 : f32
    %218 = vector.broadcast %cst_65 : f32 to vector<2x64xf32>
    %219 = arith.mulf %218, %185 : vector<2x64xf32>
    %220 = arith.addf %169, %219 : vector<2x64xf32>
    %cst_66 = arith.constant 2.000000e+00 : f32
    %221 = vector.broadcast %cst_66 : f32 to vector<2x64xf32>
    %222 = arith.mulf %221, %201 : vector<2x64xf32>
    %223 = arith.addf %220, %222 : vector<2x64xf32>
    %224 = arith.addf %223, %217 : vector<2x64xf32>
    %cst_67 = arith.constant 0.0166666675 : f32
    %225 = vector.broadcast %cst_67 : f32 to vector<2x64xf32>
    %226 = arith.mulf %225, %224 : vector<2x64xf32>
    %227 = arith.addf %154, %226 : vector<2x64xf32>
    %c4 = arith.constant 4 : index
    %c0_68 = arith.constant 0 : index
    %228 = vector.load %arg11[%c4, %c0_68] : memref<8x64xf32, #tpu.memory_space<vmem>>, vector<2x64xf32>
    tpu.vector_store %arg11[%c4, %c0_68], %227 {strides = array<i32>} : memref<8x64xf32, #tpu.memory_space<vmem>>, vector<2x64xf32>,
    %229 = vector.extract_strided_slice %8 {offsets = [6, 0], sizes = [2, 64], strides = [1, 1]} : vector<8x64xf32> to vector<2x64xf32>
    %230 = arith.truncf %227 : vector<2x64xf32> to vector<2x64xbf16>
    %cst_69 = arith.constant dense<0.000000e+00> : vector<2x64xf32>
    %231 = tpu.matmul %230, %0, %cst_69 {dimension_numbers = #tpu.dot_dimension_numbers<[1], [0], [0], [1], [0, 0, 1, 1], [], []>} : vector<2x64xbf16>, vector<64x64xbf16>, vector<2x64xf32> -> vector<2x64xf32>
    %232 = arith.addf %229, %231 : vector<2x64xf32>
    %cst_70 = arith.constant 0.000000e+00 : f32
    %233 = vector.broadcast %cst_70 : f32 to vector<2x64xf32>
    %234 = arith.subf %233, %227 : vector<2x64xf32>
    %235 = arith.negf %232 : vector<2x64xf32>
    %236 = math.exp %235 : vector<2x64xf32>
    %cst_71 = arith.constant 1.000000e+00 : f32
    %237 = vector.broadcast %cst_71 : f32 to vector<2x64xf32>
    %238 = arith.addf %237, %236 : vector<2x64xf32>
    %239 = arith.divf %237, %238 : vector<2x64xf32>
    %240 = arith.addf %234, %239 : vector<2x64xf32>
    %241 = vector.broadcast %1 : vector<1x64xf32> to vector<2x64xf32>
    %242 = arith.mulf %240, %241 : vector<2x64xf32>
    %cst_72 = arith.constant 5.000000e-02 : f32
    %243 = vector.broadcast %cst_72 : f32 to vector<2x64xf32>
    %244 = arith.mulf %243, %242 : vector<2x64xf32>
    %245 = arith.addf %227, %244 : vector<2x64xf32>
    %246 = arith.truncf %245 : vector<2x64xf32> to vector<2x64xbf16>
    %cst_73 = arith.constant dense<0.000000e+00> : vector<2x64xf32>
    %247 = tpu.matmul %246, %0, %cst_73 {dimension_numbers = #tpu.dot_dimension_numbers<[1], [0], [0], [1], [0, 0, 1, 1], [], []>} : vector<2x64xbf16>, vector<64x64xbf16>, vector<2x64xf32> -> vector<2x64xf32>
    %248 = arith.addf %229, %247 : vector<2x64xf32>
    %cst_74 = arith.constant 0.000000e+00 : f32
    %249 = vector.broadcast %cst_74 : f32 to vector<2x64xf32>
    %250 = arith.subf %249, %245 : vector<2x64xf32>
    %251 = arith.negf %248 : vector<2x64xf32>
    %252 = math.exp %251 : vector<2x64xf32>
    %cst_75 = arith.constant 1.000000e+00 : f32
    %253 = vector.broadcast %cst_75 : f32 to vector<2x64xf32>
    %254 = arith.addf %253, %252 : vector<2x64xf32>
    %255 = arith.divf %253, %254 : vector<2x64xf32>
    %256 = arith.addf %250, %255 : vector<2x64xf32>
    %257 = vector.broadcast %1 : vector<1x64xf32> to vector<2x64xf32>
    %258 = arith.mulf %256, %257 : vector<2x64xf32>
    %cst_76 = arith.constant 5.000000e-02 : f32
    %259 = vector.broadcast %cst_76 : f32 to vector<2x64xf32>
    %260 = arith.mulf %259, %258 : vector<2x64xf32>
    %261 = arith.addf %227, %260 : vector<2x64xf32>
    %262 = arith.truncf %261 : vector<2x64xf32> to vector<2x64xbf16>
    %cst_77 = arith.constant dense<0.000000e+00> : vector<2x64xf32>
    %263 = tpu.matmul %262, %0, %cst_77 {dimension_numbers = #tpu.dot_dimension_numbers<[1], [0], [0], [1], [0, 0, 1, 1], [], []>} : vector<2x64xbf16>, vector<64x64xbf16>, vector<2x64xf32> -> vector<2x64xf32>
    %264 = arith.addf %229, %263 : vector<2x64xf32>
    %cst_78 = arith.constant 0.000000e+00 : f32
    %265 = vector.broadcast %cst_78 : f32 to vector<2x64xf32>
    %266 = arith.subf %265, %261 : vector<2x64xf32>
    %267 = arith.negf %264 : vector<2x64xf32>
    %268 = math.exp %267 : vector<2x64xf32>
    %cst_79 = arith.constant 1.000000e+00 : f32
    %269 = vector.broadcast %cst_79 : f32 to vector<2x64xf32>
    %270 = arith.addf %269, %268 : vector<2x64xf32>
    %271 = arith.divf %269, %270 : vector<2x64xf32>
    %272 = arith.addf %266, %271 : vector<2x64xf32>
    %273 = vector.broadcast %1 : vector<1x64xf32> to vector<2x64xf32>
    %274 = arith.mulf %272, %273 : vector<2x64xf32>
    %cst_80 = arith.constant 1.000000e-01 : f32
    %275 = vector.broadcast %cst_80 : f32 to vector<2x64xf32>
    %276 = arith.mulf %275, %274 : vector<2x64xf32>
    %277 = arith.addf %227, %276 : vector<2x64xf32>
    %278 = arith.truncf %277 : vector<2x64xf32> to vector<2x64xbf16>
    %cst_81 = arith.constant dense<0.000000e+00> : vector<2x64xf32>
    %279 = tpu.matmul %278, %0, %cst_81 {dimension_numbers = #tpu.dot_dimension_numbers<[1], [0], [0], [1], [0, 0, 1, 1], [], []>} : vector<2x64xbf16>, vector<64x64xbf16>, vector<2x64xf32> -> vector<2x64xf32>
    %280 = arith.addf %229, %279 : vector<2x64xf32>
    %cst_82 = arith.constant 0.000000e+00 : f32
    %281 = vector.broadcast %cst_82 : f32 to vector<2x64xf32>
    %282 = arith.subf %281, %277 : vector<2x64xf32>
    %283 = arith.negf %280 : vector<2x64xf32>
    %284 = math.exp %283 : vector<2x64xf32>
    %cst_83 = arith.constant 1.000000e+00 : f32
    %285 = vector.broadcast %cst_83 : f32 to vector<2x64xf32>
    %286 = arith.addf %285, %284 : vector<2x64xf32>
    %287 = arith.divf %285, %286 : vector<2x64xf32>
    %288 = arith.addf %282, %287 : vector<2x64xf32>
    %289 = vector.broadcast %1 : vector<1x64xf32> to vector<2x64xf32>
    %290 = arith.mulf %288, %289 : vector<2x64xf32>
    %cst_84 = arith.constant 2.000000e+00 : f32
    %291 = vector.broadcast %cst_84 : f32 to vector<2x64xf32>
    %292 = arith.mulf %291, %258 : vector<2x64xf32>
    %293 = arith.addf %242, %292 : vector<2x64xf32>
    %cst_85 = arith.constant 2.000000e+00 : f32
    %294 = vector.broadcast %cst_85 : f32 to vector<2x64xf32>
    %295 = arith.mulf %294, %274 : vector<2x64xf32>
    %296 = arith.addf %293, %295 : vector<2x64xf32>
    %297 = arith.addf %296, %290 : vector<2x64xf32>
    %cst_86 = arith.constant 0.0166666675 : f32
    %298 = vector.broadcast %cst_86 : f32 to vector<2x64xf32>
    %299 = arith.mulf %298, %297 : vector<2x64xf32>
    %300 = arith.addf %227, %299 : vector<2x64xf32>
    %c6 = arith.constant 6 : index
    %c0_87 = arith.constant 0 : index
    %301 = vector.load %arg11[%c6, %c0_87] : memref<8x64xf32, #tpu.memory_space<vmem>>, vector<2x64xf32>
    tpu.vector_store %arg11[%c6, %c0_87], %300 {strides = array<i32>} : memref<8x64xf32, #tpu.memory_space<vmem>>, vector<2x64xf32>,
    %c0_88 = arith.constant 0 : index
    %c0_89 = arith.constant 0 : index
    %302 = vector.load %arg10[%c0_88, %c0_89] : memref<2x64xf32, #tpu.memory_space<vmem>>, vector<2x64xf32>
    tpu.vector_store %arg10[%c0_88, %c0_89], %300 {strides = array<i32>} : memref<2x64xf32, #tpu.memory_space<vmem>>, vector<2x64xf32>,
    %c0_90 = arith.constant 0 : index
    %c0_91 = arith.constant 0 : index
    %303 = vector.load %arg11[%c0_90, %c0_91] : memref<8x64xf32, #tpu.memory_space<vmem>>, vector<8x64xf32>
    %304 = arith.truncf %303 : vector<8x64xf32> to vector<8x64xbf16>
    %c0_92 = arith.constant 0 : index
    %c0_93 = arith.constant 0 : index
    %305 = vector.load %arg7[%c0_92, %c0_93] : memref<64x6xbf16, #tpu.memory_space<vmem>>, vector<64x6xbf16>
    %cst_94 = arith.constant dense<0.000000e+00> : vector<8x6xf32>
    %306 = tpu.matmul %304, %305, %cst_94 {dimension_numbers = #tpu.dot_dimension_numbers<[1], [0], [0], [1], [0, 0, 1, 1], [], []>} : vector<8x64xbf16>, vector<64x6xbf16>, vector<8x6xf32> -> vector<8x6xf32>
    %c0_95 = arith.constant 0 : index
    %c0_96 = arith.constant 0 : index
    %307 = vector.load %arg8[%c0_95, %c0_96] : memref<1x6xf32, #tpu.memory_space<vmem>>, vector<1x6xf32>
    %308 = vector.broadcast %307 : vector<1x6xf32> to vector<8x6xf32>
    %309 = arith.addf %306, %308 : vector<8x6xf32>
    %c0_97 = arith.constant 0 : index
    %c0_98 = arith.constant 0 : index
    %310 = vector.load %arg9[%c0_97, %c0_98] : memref<8x6xf32, #tpu.memory_space<vmem>>, vector<8x6xf32>
    tpu.vector_store %arg9[%c0_97, %c0_98], %309 {strides = array<i32>} : memref<8x6xf32, #tpu.memory_space<vmem>>, vector<8x6xf32>,
    return
  }
  func.func @transform_0(%arg0: i32) -> (i32, i32) {
    %c0_i32 = arith.constant 0 : i32
    %c0_i32_0 = arith.constant 0 : i32
    %c0_i32_1 = arith.constant 0 : i32
    return %c0_i32, %c0_i32_0 : i32, i32
  }
  func.func @transform_1(%arg0: i32) -> (i32, i32) {
    %c0_i32 = arith.constant 0 : i32
    %c0_i32_0 = arith.constant 0 : i32
    %c0_i32_1 = arith.constant 0 : i32
    return %c0_i32, %c0_i32_0 : i32, i32
  }
  func.func @transform_2(%arg0: i32) -> (i32, i32) {
    %c0_i32 = arith.constant 0 : i32
    %c0_i32_0 = arith.constant 0 : i32
    %c0_i32_1 = arith.constant 0 : i32
    return %c0_i32, %c0_i32_0 : i32, i32
  }
  func.func @transform_3(%arg0: i32) -> (i32, i32) {
    %c0_i32 = arith.constant 0 : i32
    %c0_i32_0 = arith.constant 0 : i32
    %c0_i32_1 = arith.constant 0 : i32
    return %c0_i32, %c0_i32_0 : i32, i32
  }
  func.func @transform_4(%arg0: i32) -> (i32, i32) {
    %c0_i32 = arith.constant 0 : i32
    %c0_i32_0 = arith.constant 0 : i32
    %c0_i32_1 = arith.constant 0 : i32
    return %c0_i32, %c0_i32_0 : i32, i32
  }
  func.func @transform_5(%arg0: i32) -> (i32, i32) {
    %c0_i32 = arith.constant 0 : i32
    %c0_i32_0 = arith.constant 0 : i32
    %c0_i32_1 = arith.constant 0 : i32
    return %c0_i32, %c0_i32_0 : i32, i32
  }
  func.func @transform_6(%arg0: i32) -> (i32, i32) {
    %c0_i32 = arith.constant 0 : i32
    %c0_i32_0 = arith.constant 0 : i32
    %c0_i32_1 = arith.constant 0 : i32
    return %c0_i32, %c0_i32_0 : i32, i32
  }
  func.func @transform_7(%arg0: i32) -> (i32, i32) {
    %c0_i32 = arith.constant 0 : i32
    %c0_i32_0 = arith.constant 0 : i32
    %c0_i32_1 = arith.constant 0 : i32
    return %c0_i32, %c0_i32_0 : i32, i32
  }
  func.func @transform_8(%arg0: i32) -> (i32, i32) {
    %c0_i32 = arith.constant 0 : i32
    %c0_i32_0 = arith.constant 0 : i32
    %c0_i32_1 = arith.constant 0 : i32
    return %c0_i32, %c0_i32_0 : i32, i32
  }
  func.func @transform_9(%arg0: i32) -> (i32, i32) {
    %c0_i32 = arith.constant 0 : i32
    %c0_i32_0 = arith.constant 0 : i32
    %c0_i32_1 = arith.constant 0 : i32
    return %c0_i32, %c0_i32_0 : i32, i32
  }
}

</mosaic_0001>

<llo_original>
// kernel: tile.38
$region0: #{tile.38}
  #allocation0 [shape = 's32[1]{0}', space=sflag, size = 0x4, scoped, tag = 'scoped memory for tile.38']
  %s0 = inlined_call_operand.vmem [shape: f32[32], index: 0, kind: input, shape index: {}]
  %s1 = inlined_call_operand.vmem [shape: f32[8,32], index: 1, kind: output, shape index: {}]
  // Predicated region
  $region2: #{tile.38} parent=0 // pred_check
    _
  $region3: #{tile.38} parent=0 // pred_check_branch
    %3 = sbr.rel (0) target = $region5
  $region4: #{tile.38} parent=0 // pred_region
    _
  $region5: #{tile.38} parent=0 // pred_fallthru
    _
  %v4 = vld [vmem:[%s0] ss:$0 sm:$0xff]
  %5 = vst [vmem:[%s1] sm:$0xff] %v4

// kernel: tile.39
$region0: #{tile.39}
  %s0 = inlined_call_operand.vmem [shape: f32[8,32], index: 0, kind: input, shape index: {}]
  %s1 = inlined_call_operand.vmem [shape: f32[1,256], index: 1, kind: output, shape index: {}]
  $region1: #{tile.39} parent=0
    #allocation0 [shape = 'u8[8192]{0}', space=vmem, size = 0x2000, scoped, tag = 'scoped mem for output reshape']
    %s2 = smov 3
    %v3 = vld [vmem:[%s0] ss:$4 sm:%s2]
    %vm4 = vcmask 261120
    %5 = vst.msk [vmem:[#allocation0] ss:$8 sm:$0x3] %vm4, %v3
    %s6 = scalar_lea.vmem %s0, 3
    %s7 = smov 3
    %v8 = vld [vmem:[%s6] ss:$4 sm:%s7]
    %9 = vrot.lane.b32.xlu0 %v8, 96
    %v10 = vpop.permute.xlu0 %9
    %vm11 = vcmask 1048320
    %12 = vst.msk [vmem:[#allocation0] ss:$8 sm:$0x3] %vm11, %v10
    %s13 = scalar_lea.vmem %s0, 2
    %s14 = smov 3
    %v15 = vld [vmem:[%s13] ss:$4 sm:%s14]
    %16 = vrot.lane.b32.xlu0 %v15, 64
    %v17 = vpop.permute.xlu0 %16
    %vm18 = vcmask 785920
    %19 = vst.msk [vmem:[#allocation0] ss:$8 sm:$0x3] %vm18, %v17
    %s20 = scalar_lea.vmem %s0, 1
    %s21 = smov 3
    %v22 = vld [vmem:[%s20] ss:$4 sm:%s21]
    %23 = vrot.lane.b32.xlu0 %v22, 32
    %v24 = vpop.permute.xlu0 %23
    %vm25 = vcmask 523520
    %26 = vst.msk [vmem:[#allocation0] ss:$8 sm:$0x3] %vm25, %v24
    %s28 = sshllo.u32 0, 1
    %v30 = vld [vmem:[#allocation0] sm:%s28]
    %s31 = sshllo.u32 0, 1
    %32 = vst [vmem:[%s1] sm:%s31] %v30
    %s33 = scalar_lea.vmem [#allocation0], 8
    %v34 = vld [vmem:[%s33] sm:%s28]
    %s35 = sshllo.u32 0, 1
    %s36 = scalar_lea.vmem %s1, 1
    %37 = vst [vmem:[%s36] sm:%s35] %v34

// kernel: tile.43
$region0: #{tile.43}
  #allocation0 [shape = 's32[1]{0}', space=sflag, size = 0x4, scoped, tag = 'scoped memory for tile.43']
  %s0 = inlined_call_operand.vmem [shape: f32[64], index: 0, kind: input, shape index: {}]
  %s1 = inlined_call_operand.vmem [shape: f32[4,64], index: 1, kind: output, shape index: {}]
  // Predicated region
  $region2: #{tile.43} parent=0 // pred_check
    _
  $region3: #{tile.43} parent=0 // pred_check_branch
    %3 = sbr.rel (0) target = $region5
  $region4: #{tile.43} parent=0 // pred_region
    _
  $region5: #{tile.43} parent=0 // pred_fallthru
    _
  %v4 = vld [vmem:[%s0] ss:$0 sm:$0xff]
  %5 = vst [vmem:[%s1] sm:$0xf] %v4

// kernel: tile.44
$region0: #{tile.44}
  %s0 = inlined_call_operand.vmem [shape: f32[4,64], index: 0, kind: input, shape index: {}]
  %s1 = inlined_call_operand.vmem [shape: f32[1,256], index: 1, kind: output, shape index: {}]
  $region1: #{tile.44} parent=0
    #allocation0 [shape = 'u8[8192]{0}', space=vmem, size = 0x2000, scoped, tag = 'scoped mem for output reshape']
    #allocation1 [shape = 'u8[4096]{0}', space=vmem, size = 0x1000, scoped, tag = 'scoped mem for input reshape']
    %s3 = sshllo.u32 0, 4
    %v4 = vld [vmem:[%s0] sm:%s3]
    %5 = vst [vmem:[#allocation1] sm:%s3] %v4
    %s6 = smov 3
    %v7 = vld [vmem:[#allocation1] ss:$2 sm:%s6]
    %vm8 = vcmask 523264
    %9 = vst.msk [vmem:[#allocation0] ss:$8 sm:$0x3] %vm8, %v7
    %s10 = scalar_lea.vmem [#allocation1], 1
    %s11 = smov 3
    %v12 = vld [vmem:[%s10] ss:$2 sm:%s11]
    %13 = vrot.lane.b32.xlu0 %v12, 64
    %v14 = vpop.permute.xlu0 %13
    %vm15 = vcmask 1048064
    %16 = vst.msk [vmem:[#allocation0] ss:$8 sm:$0x3] %vm15, %v14
    %s18 = sshllo.u32 0, 1
    %v20 = vld [vmem:[#allocation0] sm:%s18]
    %s21 = sshllo.u32 0, 1
    %22 = vst [vmem:[%s1] sm:%s21] %v20
    %s23 = scalar_lea.vmem [#allocation0], 8
    %v24 = vld [vmem:[%s23] sm:%s18]
    %s25 = sshllo.u32 0, 1
    %s26 = scalar_lea.vmem %s1, 1
    %27 = vst [vmem:[%s26] sm:%s25] %v24

// kernel: tile.48
$region0: #{tile.48}
  #allocation0 [shape = 's32[1]{0}', space=sflag, size = 0x4, scoped, tag = 'scoped memory for tile.48']
  %s0 = inlined_call_operand.vmem [shape: f32[128], index: 0, kind: input, shape index: {}]
  %s1 = inlined_call_operand.vmem [shape: f32[2,128], index: 1, kind: output, shape index: {}]
  // Predicated region
  $region2: #{tile.48} parent=0 // pred_check
    _
  $region3: #{tile.48} parent=0 // pred_check_branch
    %3 = sbr.rel (0) target = $region5
  $region4: #{tile.48} parent=0 // pred_region
    _
  $region5: #{tile.48} parent=0 // pred_fallthru
    _
  %v4 = vld [vmem:[%s0] ss:$0 sm:$0xff]
  %5 = vst [vmem:[%s1] sm:$0x3] %v4

// kernel: squeeze.4
$region0: #{squeeze.4}
  %s0 = inlined_call_operand.vmem [shape: bf16[16,4], index: 0, kind: input, shape index: {}]
  %s1 = inlined_call_operand.vmem [shape: bf16[4,4,4], index: 1, kind: output, shape index: {}]
  $region1: #{squeeze.4} parent=0
    #allocation0 [shape = 'u8[16384]{0}', space=vmem, size = 0x4000, scoped, tag = 'scoped mem for output reshape']
    #allocation1 [shape = 'u8[4096]{0}', space=vmem, size = 0x1000, scoped, tag = 'scoped mem for input reshape']
    %s3 = smul.u32 2, 2
    %s4 = sshllo.u32 0, %s3
    %s5 = sshrl.u32 %s4, 1
    %s6 = sor.u32 %s4, %s5
    %s7 = sand.u32 %s6, 85
    %s8 = sshrl.u32 %s7, 1
    %s9 = sor.u32 %s7, %s8
    %s10 = sand.u32 51, %s9
    %s11 = sshrl.u32 %s10, 2
    %s12 = sor.u32 %s10, %s11
    %s13 = sand.u32 15, %s12
    %v14 = vld [vmem:[%s0] sm:%s13]
    %v15 = vunpack.c.l.bf16 %v14
    %v16 = vunpack.c.h.bf16 %v14
    %17 = vst [vmem:[#allocation1] sm:%s4] %v15
    %v18 = vld [vmem:[#allocation1] sm:$0xf]
    %vm19 = vcmask 31744
    %20 = vst.msk [vmem:[#allocation0] ss:$8 sm:$0xf] %vm19, %v18
    %v21 = vld [vmem:[#allocation1] sm:$0xf]
    %22 = vrot.lane.b32.xlu0 %v21, 124
    %v23 = vpop.permute.xlu0 %22
    %vm24 = vcmask 31744
    %s25 = scalar_lea.vmem [#allocation0], 1
    %26 = vst.msk [vmem:[%s25] ss:$8 sm:$0xf] %vm24, %v23
    %v27 = vld [vmem:[#allocation1] sm:$0xf]
    %28 = vrot.lane.b32.xlu0 %v27, 120
    %v29 = vpop.permute.xlu0 %28
    %vm30 = vcmask 31744
    %s31 = scalar_lea.vmem [#allocation0], 2
    %32 = vst.msk [vmem:[%s31] ss:$8 sm:$0xf] %vm30, %v29
    %v33 = vld [vmem:[#allocation1] sm:$0xf]
    %34 = vrot.lane.b32.xlu0 %v33, 116
    %v35 = vpop.permute.xlu0 %34
    %vm36 = vcmask 31744
    %s37 = scalar_lea.vmem [#allocation0], 3
    %38 = vst.msk [vmem:[%s37] ss:$8 sm:$0xf] %vm36, %v35
    %s40 = smul.u32 2, 2
    %s41 = sshllo.u32 0, %s40
    %s42 = sshrl.u32 %s40, 1
    %v43 = vld [vmem:[#allocation0] sm:%s41]
    %v44 = vpack.c.bf16 0.0, %v43
    %s45 = sshllo.u32 0, %s42
    %46 = vst [vmem:[%s1] sm:%s45] %v44
    %s47 = scalar_lea.vmem [#allocation0], 8
    %v48 = vld [vmem:[%s47] sm:%s41]
    %v49 = vpack.c.bf16 0.0, %v48
    %s50 = sshllo.u32 0, %s42
    %s51 = scalar_lea.vmem %s1, 2
    %52 = vst [vmem:[%s51] sm:%s50] %v49
    %s53 = scalar_lea.vmem [#allocation0], 16
    %v54 = vld [vmem:[%s53] sm:%s41]
    %v55 = vpack.c.bf16 0.0, %v54
    %s56 = sshllo.u32 0, %s42
    %s57 = smul.addr 2, 2
    %s58 = scalar_lea.vmem %s1, %s57
    %59 = vst [vmem:[%s58] sm:%s56] %v55
    %s60 = scalar_lea.vmem [#allocation0], 24
    %v61 = vld [vmem:[%s60] sm:%s41]
    %v62 = vpack.c.bf16 0.0, %v61
    %s63 = sshllo.u32 0, %s42
    %s64 = smul.addr 2, 3
    %s65 = scalar_lea.vmem %s1, %s64
    %66 = vst [vmem:[%s65] sm:%s63] %v62

// kernel: tile.53
$region0: #{tile.53}
  #allocation0 [shape = 's32[1]{0}', space=sflag, size = 0x4, scoped, tag = 'scoped memory for tile.53']
  %s0 = inlined_call_operand.vmem [shape: f32[16], index: 0, kind: input, shape index: {}]
  %s1 = inlined_call_operand.vmem [shape: f32[16,16], index: 1, kind: output, shape index: {}]
  // Predicated region
  $region2: #{tile.53} parent=0 // pred_check
    _
  $region3: #{tile.53} parent=0 // pred_check_branch
    %3 = sbr.rel (0) target = $region5
  $region4: #{tile.53} parent=0 // pred_region
    _
  $region5: #{tile.53} parent=0 // pred_fallthru
    _
  %v4 = vld [vmem:[%s0] ss:$0 sm:$0xff]
  %5 = vst [vmem:[%s1] sm:$0xff] %v4
  %s6 = scalar_lea.vmem %s1, 8
  %7 = vst [vmem:[%s6] sm:$0xff] %v4

// kernel: tile.54
$region0: #{tile.54}
  %s0 = inlined_call_operand.vmem [shape: f32[16,16], index: 0, kind: input, shape index: {}]
  %s1 = inlined_call_operand.vmem [shape: f32[1,256], index: 1, kind: output, shape index: {}]
  $region1: #{tile.54} parent=0
    #allocation0 [shape = 'u8[8192]{0}', space=vmem, size = 0x2000, scoped, tag = 'scoped mem for output reshape']
    %s2 = smov 3
    %v3 = vld [vmem:[%s0] ss:$8 sm:%s2]
    %vm4 = vcmask 130048
    %5 = vst.msk [vmem:[#allocation0] ss:$8 sm:$0x3] %vm4, %v3
    %s6 = scalar_lea.vmem %s0, 7
    %s7 = smov 3
    %v8 = vld [vmem:[%s6] ss:$8 sm:%s7]
    %9 = vrot.lane.b32.xlu0 %v8, 112
    %v10 = vpop.permute.xlu0 %9
    %vm11 = vcmask 1048448
    %12 = vst.msk [vmem:[#allocation0] ss:$8 sm:$0x3] %vm11, %v10
    %s13 = scalar_lea.vmem %s0, 6
    %s14 = smov 3
    %v15 = vld [vmem:[%s13] ss:$8 sm:%s14]
    %16 = vrot.lane.b32.xlu0 %v15, 96
    %v17 = vpop.permute.xlu0 %16
    %vm18 = vcmask 917248
    %19 = vst.msk [vmem:[#allocation0] ss:$8 sm:$0x3] %vm18, %v17
    %s20 = scalar_lea.vmem %s0, 5
    %s21 = smov 3
    %v22 = vld [vmem:[%s20] ss:$8 sm:%s21]
    %23 = vrot.lane.b32.xlu0 %v22, 80
    %v24 = vpop.permute.xlu0 %23
    %vm25 = vcmask 786048
    %26 = vst.msk [vmem:[#allocation0] ss:$8 sm:$0x3] %vm25, %v24
    %s27 = scalar_lea.vmem %s0, 4
    %s28 = smov 3
    %v29 = vld [vmem:[%s27] ss:$8 sm:%s28]
    %30 = vrot.lane.b32.xlu0 %v29, 64
    %v31 = vpop.permute.xlu0 %30
    %vm32 = vcmask 654848
    %33 = vst.msk [vmem:[#allocation0] ss:$8 sm:$0x3] %vm32, %v31
    %s34 = scalar_lea.vmem %s0, 3
    %s35 = smov 3
    %v36 = vld [vmem:[%s34] ss:$8 sm:%s35]
    %37 = vrot.lane.b32.xlu0 %v36, 48
    %v38 = vpop.permute.xlu0 %37
    %vm39 = vcmask 523648
    %40 = vst.msk [vmem:[#allocation0] ss:$8 sm:$0x3] %vm39, %v38
    %s41 = scalar_lea.vmem %s0, 2
    %s42 = smov 3
    %v43 = vld [vmem:[%s41] ss:$8 sm:%s42]
    %44 = vrot.lane.b32.xlu0 %v43, 32
    %v45 = vpop.permute.xlu0 %44
    %vm46 = vcmask 392448
    %47 = vst.msk [vmem:[#allocation0] ss:$8 sm:$0x3] %vm46, %v45
    %s48 = scalar_lea.vmem %s0, 1
    %s49 = smov 3
    %v50 = vld [vmem:[%s48] ss:$8 sm:%s49]
    %51 = vrot.lane.b32.xlu0 %v50, 16
    %v52 = vpop.permute.xlu0 %51
    %vm53 = vcmask 261248
    %54 = vst.msk [vmem:[#allocation0] ss:$8 sm:$0x3] %vm53, %v52
    %s56 = sshllo.u32 0, 1
    %v58 = vld [vmem:[#allocation0] sm:%s56]
    %s59 = sshllo.u32 0, 1
    %60 = vst [vmem:[%s1] sm:%s59] %v58
    %s61 = scalar_lea.vmem [#allocation0], 8
    %v62 = vld [vmem:[%s61] sm:%s56]
    %s63 = sshllo.u32 0, 1
    %s64 = scalar_lea.vmem %s1, 1
    %65 = vst [vmem:[%s64] sm:%s63] %v62

// kernel: tile.68
$region0: #{tile.68}
  #allocation0 [shape = 's32[1]{0}', space=sflag, size = 0x4, scoped, tag = 'scoped memory for tile.68']
  %s0 = inlined_call_operand.vmem [shape: f32[64], index: 0, kind: input, shape index: {}]
  %s1 = inlined_call_operand.vmem [shape: f32[2,64], index: 1, kind: output, shape index: {}]
  // Predicated region
  $region2: #{tile.68} parent=0 // pred_check
    _
  $region3: #{tile.68} parent=0 // pred_check_branch
    %3 = sbr.rel (0) target = $region5
  $region4: #{tile.68} parent=0 // pred_region
    _
  $region5: #{tile.68} parent=0 // pred_fallthru
    _
  %v4 = vld [vmem:[%s0] ss:$0 sm:$0xff]
  %5 = vst [vmem:[%s1] sm:$0x3] %v4

// kernel: tile.69
$region0: #{tile.69}
  %s0 = inlined_call_operand.vmem [shape: f32[2,64], index: 0, kind: input, shape index: {}]
  %s1 = inlined_call_operand.vmem [shape: f32[1,128], index: 1, kind: output, shape index: {}]
  $region1: #{tile.69} parent=0
    #allocation0 [shape = 'u8[4096]{0}', space=vmem, size = 0x1000, scoped, tag = 'scoped mem for output reshape']
    #allocation1 [shape = 'u8[4096]{0}', space=vmem, size = 0x1000, scoped, tag = 'scoped mem for input reshape']
    %s3 = sshllo.u32 0, 2
    %v4 = vld [vmem:[%s0] sm:%s3]
    %5 = vst [vmem:[#allocation1] sm:%s3] %v4
    %v6 = vld [vmem:[#allocation1] sm:$0x1]
    %vm7 = vcmask 523264
    %8 = vst.msk [vmem:[#allocation0] sm:$0x1] %vm7, %v6
    %s9 = scalar_lea.vmem [#allocation1], 1
    %v10 = vld [vmem:[%s9] sm:$0x1]
    %11 = vrot.lane.b32.xlu0 %v10, 64
    %v12 = vpop.permute.xlu0 %11
    %vm13 = vcmask 1048064
    %14 = vst.msk [vmem:[#allocation0] sm:$0x1] %vm13, %v12
    %s16 = sshllo.u32 0, 1
    %v18 = vld [vmem:[#allocation0] sm:%s16]
    %s19 = sshllo.u32 0, 1
    %20 = vst [vmem:[%s1] sm:%s19] %v18

// kernel: conv3_wilson_cowan_random.3
$region0: #{conv3_wilson_cowan_random.3}
  #allocation0 [shape = 'u32[]', space=smem, size = 0x4, offset = 0x4, fixed_abs, tag = 'smem constant byte address 0x4 - core index']
  #allocation1 [shape = 'u32[144,128]{1,0:T(1,128)}', space=vmem, size = 0x12000, scoped, tag = 'internal scratch']
  #allocation2 [shape = 'f32[8,64]{1,0:T(8,128)}', space=vmem, size = 0x1000, scoped, tag = 'scratch operand']
  %s0 = inlined_call_operand.vmem [shape: f32[8,128], index: 0, kind: input, shape index: {}]
  %s1 = inlined_call_operand.vmem [shape: f32[2,64], index: 1, kind: input, shape index: {}]
  %s2 = inlined_call_operand.vmem [shape: bf16[128,64], index: 2, kind: input, shape index: {}]
  %s3 = inlined_call_operand.vmem [shape: f32[1,64], index: 3, kind: input, shape index: {}]
  %s4 = inlined_call_operand.vmem [shape: bf16[64,64], index: 4, kind: input, shape index: {}]
  %s5 = inlined_call_operand.vmem [shape: f32[1,64], index: 5, kind: input, shape index: {}]
  %s6 = inlined_call_operand.vmem [shape: bf16[64,6], index: 6, kind: input, shape index: {}]
  %s7 = inlined_call_operand.vmem [shape: f32[1,6], index: 7, kind: input, shape index: {}]
  %s8 = inlined_call_operand.vmem [shape: f32[8,6], index: 8, kind: output, shape index: {0}]
  %s9 = inlined_call_operand.hbm [shape: f32[2,64], index: 9, kind: output, shape index: {1}]
  %10 = xla_tuple %s8, %s9
  %s11 = sld [smem:[#allocation0]]
  $region50: #{conv3_wilson_cowan_random.3} parent=0
    _
  %s13 = ssub.s32 1, %s11
  %s14 = scalar_select 0, %s13, %s11
  $region1: #{conv3_wilson_cowan_random.3} parent=0
    #allocation3 [shape = 'u8[1024]{0}', space=vmem, size = 0x400, scoped, tag = 'output window, operand 1, single buffered']
    #allocation4 [shape = 's32[1]{0}', space=sflag, size = 0x4, scoped, tag = 'scoped memory for conv3_wilson_cowan_random.3']
    %15 = vsyncpa [#allocation4], 0
    // Predicated region
    $region2: #{conv3_wilson_cowan_random.3} parent=1 // pred_check
      _
    $region3: #{conv3_wilson_cowan_random.3} parent=1 // pred_check_branch
      %17 = sbr.rel (0) target = $region5
    $region4: #{conv3_wilson_cowan_random.3} parent=1 // pred_region
      _
    $region5: #{conv3_wilson_cowan_random.3} parent=1 // pred_fallthru
      _
    // Predicated region
    $region6: #{conv3_wilson_cowan_random.3} parent=1 // pred_check
      _
    $region7: #{conv3_wilson_cowan_random.3} parent=1 // pred_check_branch
      %19 = sbr.rel (0) target = $region9
    $region8: #{conv3_wilson_cowan_random.3} parent=1 // pred_region
      _
    $region9: #{conv3_wilson_cowan_random.3} parent=1 // pred_fallthru
      _
    // Predicated region
    $region10: #{conv3_wilson_cowan_random.3} parent=1 // pred_check
      _
    $region11: #{conv3_wilson_cowan_random.3} parent=1 // pred_check_branch
      %21 = sbr.rel (0) target = $region13
    $region12: #{conv3_wilson_cowan_random.3} parent=1 // pred_region
      _
    $region13: #{conv3_wilson_cowan_random.3} parent=1 // pred_fallthru
      _
    // Predicated region
    $region14: #{conv3_wilson_cowan_random.3} parent=1 // pred_check
      _
    $region15: #{conv3_wilson_cowan_random.3} parent=1 // pred_check_branch
      %23 = sbr.rel (0) target = $region17
    $region16: #{conv3_wilson_cowan_random.3} parent=1 // pred_region
      _
    $region17: #{conv3_wilson_cowan_random.3} parent=1 // pred_fallthru
      _
    // Predicated region
    $region18: #{conv3_wilson_cowan_random.3} parent=1 // pred_check
      _
    $region19: #{conv3_wilson_cowan_random.3} parent=1 // pred_check_branch
      %25 = sbr.rel (0) target = $region21
    $region20: #{conv3_wilson_cowan_random.3} parent=1 // pred_region
      _
    $region21: #{conv3_wilson_cowan_random.3} parent=1 // pred_fallthru
      _
    // Predicated region
    $region22: #{conv3_wilson_cowan_random.3} parent=1 // pred_check
      _
    $region23: #{conv3_wilson_cowan_random.3} parent=1 // pred_check_branch
      %27 = sbr.rel (0) target = $region25
    $region24: #{conv3_wilson_cowan_random.3} parent=1 // pred_region
      _
    $region25: #{conv3_wilson_cowan_random.3} parent=1 // pred_fallthru
      _
    // Predicated region
    $region26: #{conv3_wilson_cowan_random.3} parent=1 // pred_check
      _
    $region27: #{conv3_wilson_cowan_random.3} parent=1 // pred_check_branch
      %29 = sbr.rel (0) target = $region29
    $region28: #{conv3_wilson_cowan_random.3} parent=1 // pred_region
      _
    $region29: #{conv3_wilson_cowan_random.3} parent=1 // pred_fallthru
      _
    // Predicated region
    $region30: #{conv3_wilson_cowan_random.3} parent=1 // pred_check
      _
    $region31: #{conv3_wilson_cowan_random.3} parent=1 // pred_check_branch
      %31 = sbr.rel (0) target = $region33
    $region32: #{conv3_wilson_cowan_random.3} parent=1 // pred_region
      _
    $region33: #{conv3_wilson_cowan_random.3} parent=1 // pred_fallthru
      _
    %v33 = vld [vmem:[%s4] sm:$0xf]
    %v34 = vld [vmem:[%s4 + $0x4] sm:$0xf]
    %v35 = vld [vmem:[%s4 + $0x8] sm:$0xf]
    %v36 = vld [vmem:[%s4 + $0xc] sm:$0xf]
    %v37 = vld [vmem:[%s4 + $0x10] sm:$0xf]
    %v38 = vld [vmem:[%s4 + $0x14] sm:$0xf]
    %v39 = vld [vmem:[%s4 + $0x18] sm:$0xf]
    %v40 = vld [vmem:[%s4 + $0x1c] sm:$0xf]
    %v41 = vld [vmem:[%s5] sm:$0x1]
    %v42 = vld [vmem:[%s0] sm:$0xff]
    %v43 = vpack.c.bf16 %v42, %v42
    %v44 = vld [vmem:[%s2] sm:$0xf]
    %v45 = vld [vmem:[%s2 + $0x4] sm:$0xf]
    %v46 = vld [vmem:[%s2 + $0x8] sm:$0xf]
    %v47 = vld [vmem:[%s2 + $0xc] sm:$0xf]
    %v48 = vld [vmem:[%s2 + $0x10] sm:$0xf]
    %v49 = vld [vmem:[%s2 + $0x14] sm:$0xf]
    %v50 = vld [vmem:[%s2 + $0x18] sm:$0xf]
    %v51 = vld [vmem:[%s2 + $0x1c] sm:$0xf]
    %v52 = vld [vmem:[%s2 + $0x20] sm:$0xf]
    %v53 = vld [vmem:[%s2 + $0x24] sm:$0xf]
    %v54 = vld [vmem:[%s2 + $0x28] sm:$0xf]
    %v55 = vld [vmem:[%s2 + $0x2c] sm:$0xf]
    %v56 = vld [vmem:[%s2 + $0x30] sm:$0xf]
    %v57 = vld [vmem:[%s2 + $0x34] sm:$0xf]
    %v58 = vld [vmem:[%s2 + $0x38] sm:$0xf]
    %v59 = vld [vmem:[%s2 + $0x3c] sm:$0xf]
    %v60 = vld [vmem:[%s3] sm:$0x1]
    %v62 = vlaneseq
    %v63 = vshrl.u32 %v62, 7
    %v64 = vsub.s32 0, %v63
    %v65 = vrot.slane %v60, %v64
    %v83 = vunpack.c.l.b16 %v44
    %v84 = vunpack.c.l.b16 %v45
    %v85 = vunpack.c.l.b16 %v46
    %v86 = vunpack.c.l.b16 %v47
    %v87 = vunpack.c.l.b16 %v48
    %v88 = vunpack.c.l.b16 %v49
    %v89 = vunpack.c.l.b16 %v50
    %v90 = vunpack.c.l.b16 %v51
    %v91 = vunpack.c.l.b16 %v52
    %v92 = vunpack.c.l.b16 %v53
    %v93 = vunpack.c.l.b16 %v54
    %v94 = vunpack.c.l.b16 %v55
    %v95 = vunpack.c.l.b16 %v56
    %v96 = vunpack.c.l.b16 %v57
    %v97 = vunpack.c.l.b16 %v58
    %v98 = vunpack.c.l.b16 %v59
    %v99 = vpack.c.b16 %v84, %v83
    %v100 = vpack.c.b16 %v86, %v85
    %v101 = vpack.c.b16 %v88, %v87
    %v102 = vpack.c.b16 %v90, %v89
    %v103 = vpack.c.b16 %v92, %v91
    %v104 = vpack.c.b16 %v94, %v93
    %v105 = vpack.c.b16 %v96, %v95
    %v106 = vpack.c.b16 %v98, %v97
    %115 = vmatprep.subr.bf16.mxu0 0
    %116 = vmatpush1.bf16.msra.mxu0 %v99
    %117 = vmatprep.subr.bf16.mxu0 0
    %118 = vmatpush1.bf16.msra.mxu0 %v100
    %119 = vmatprep.subr.bf16.mxu0 0
    %120 = vmatpush1.bf16.msra.mxu0 %v101
    %121 = vmatprep.subr.bf16.mxu0 0
    %122 = vmatpush1.bf16.msra.mxu0 %v102
    %123 = vmatprep.subr.bf16.mxu0 0
    %124 = vmatpush1.bf16.msra.mxu0 %v103
    %125 = vmatprep.subr.bf16.mxu0 0
    %126 = vmatpush1.bf16.msra.mxu0 %v104
    %127 = vmatprep.subr.bf16.mxu0 0
    %128 = vmatpush1.bf16.msra.mxu0 %v105
    %129 = vmatprep.subr.bf16.mxu0 0
    %130 = vmatpush1.bf16.msra.mxu0 %v106
    %131 = vmatprep.subr.bf16.mxu0 0
    %132 = vmatpush1.bf16.msra.mxu0 0
    %133 = vmatprep.subr.bf16.mxu0 0
    %134 = vmatpush1.bf16.msra.mxu0 0
    %135 = vmatprep.subr.bf16.mxu0 0
    %136 = vmatpush1.bf16.msra.mxu0 0
    %137 = vmatprep.subr.bf16.mxu0 0
    %138 = vmatpush1.bf16.msra.mxu0 0
    %139 = vmatprep.subr.bf16.mxu0 0
    %140 = vmatpush1.bf16.msra.mxu0 0
    %141 = vmatprep.subr.bf16.mxu0 0
    %142 = vmatpush1.bf16.msra.mxu0 0
    %143 = vmatprep.subr.bf16.mxu0 0
    %144 = vmatpush1.bf16.msra.mxu0 0
    %145 = vmatprep.subr.bf16.mxu0 0
    %146 = vmatpush1.bf16.msra.mxu0 0
    %147 = vmatprep.mubr.bf16.mxu0 0
    %148 = vmatmul.mubr.bf16.gmra.mrb[0].mxu0 %v43
    %v149 = vpop.f32.mrb[0].mxu0
    %v150 = vadd.f32 %v65, %v149
    %v151 = vpop.f32.mrb[0].mxu0
    %v152 = vpop.f32.mrb[0].mxu0
    %v153 = vpop.f32.mrb[0].mxu0
    %154 = vdwg.mxu0
    %v155 = vld [vmem:[%s1] sm:$0x3]
    %v156 = vpack.c.bf16 %v155, %v155
    %v165 = vunpack.c.l.b16 %v33
    %v166 = vunpack.c.l.b16 %v34
    %v167 = vunpack.c.l.b16 %v35
    %v168 = vunpack.c.l.b16 %v36
    %v169 = vunpack.c.l.b16 %v37
    %v170 = vunpack.c.l.b16 %v38
    %v171 = vunpack.c.l.b16 %v39
    %v172 = vunpack.c.l.b16 %v40
    %v173 = vpack.c.b16 %v166, %v165
    %v174 = vpack.c.b16 %v168, %v167
    %v175 = vpack.c.b16 %v170, %v169
    %v176 = vpack.c.b16 %v172, %v171
    %vm181 = vcmask 523264
    %v183 = vsel %vm181, %v156, 0
    %185 = vmatprep.subr.bf16.mxu0 0
    %186 = vmatpush1.bf16.msra.mxu0 %v173
    %187 = vmatprep.subr.bf16.mxu0 0
    %188 = vmatpush1.bf16.msra.mxu0 %v174
    %189 = vmatprep.subr.bf16.mxu0 0
    %190 = vmatpush1.bf16.msra.mxu0 %v175
    %191 = vmatprep.subr.bf16.mxu0 0
    %192 = vmatpush1.bf16.msra.mxu0 %v176
    %193 = vmatprep.subr.bf16.mxu0 0
    %194 = vmatpush1.bf16.msra.mxu0 0
    %195 = vmatprep.subr.bf16.mxu0 0
    %196 = vmatpush1.bf16.msra.mxu0 0
    %197 = vmatprep.subr.bf16.mxu0 0
    %198 = vmatpush1.bf16.msra.mxu0 0
    %199 = vmatprep.subr.bf16.mxu0 0
    %200 = vmatpush1.bf16.msra.mxu0 0
    %201 = vmatprep.subr.bf16.mxu0 0
    %202 = vmatpush1.bf16.msra.mxu0 0
    %203 = vmatprep.subr.bf16.mxu0 0
    %204 = vmatpush1.bf16.msra.mxu0 0
    %205 = vmatprep.subr.bf16.mxu0 0
    %206 = vmatpush1.bf16.msra.mxu0 0
    %207 = vmatprep.subr.bf16.mxu0 0
    %208 = vmatpush1.bf16.msra.mxu0 0
    %209 = vmatprep.subr.bf16.mxu0 0
    %210 = vmatpush1.bf16.msra.mxu0 0
    %211 = vmatprep.subr.bf16.mxu0 0
    %212 = vmatpush1.bf16.msra.mxu0 0
    %213 = vmatprep.subr.bf16.mxu0 0
    %214 = vmatpush1.bf16.msra.mxu0 0
    %215 = vmatprep.subr.bf16.mxu0 0
    %216 = vmatpush1.bf16.msra.mxu0 0
    %217 = vmatprep.mubr.bf16.mxu0 0
    %218 = vmatmul.mubr.bf16.gmra.mrb[0].mxu0 %v183
    %v219 = vpop.f32.mrb[0].mxu0
    %v220 = vadd.f32 0.0, %v219
    %v221 = vpop.f32.mrb[0].mxu0
    %v222 = vpop.f32.mrb[0].mxu0
    %v223 = vpop.f32.mrb[0].mxu0
    %224 = vdwg.mxu0
    %v225 = vadd.f32 %v150, %v220
    %v226 = vsub.f32 0.0, %v155
    %v227 = vxor.u32 %v225, 2147483648
    %v228 = vmul.f32 %v227, 1.442695
    %v229 = vpow.pop %v228
    %v230 = vadd.f32 %v229, 1.0
    %v231 = vrcp.pop %v230
    %v232 = vmul.f32 1.0, %v231
    %v233 = vadd.f32 %v226, %v232
    %v235 = vlaneseq
    %v236 = vshrl.u32 %v235, 7
    %v237 = vsub.s32 0, %v236
    %v238 = vrot.slane %v41, %v237
    %v240 = vmul.f32 %v233, %v238
    %v241 = vmul.f32 %v240, 0.05
    %v242 = vadd.f32 %v155, %v241
    %v243 = vpack.c.bf16 %v242, %v242
    %v245 = vsel %vm181, %v243, 0
    %247 = vmatprep.subr.bf16.mxu0 0
    %248 = vmatpush1.bf16.msra.mxu0 %v173
    %249 = vmatprep.subr.bf16.mxu0 0
    %250 = vmatpush1.bf16.msra.mxu0 %v174
    %251 = vmatprep.subr.bf16.mxu0 0
    %252 = vmatpush1.bf16.msra.mxu0 %v175
    %253 = vmatprep.subr.bf16.mxu0 0
    %254 = vmatpush1.bf16.msra.mxu0 %v176
    %255 = vmatprep.subr.bf16.mxu0 0
    %256 = vmatpush1.bf16.msra.mxu0 0
    %257 = vmatprep.subr.bf16.mxu0 0
    %258 = vmatpush1.bf16.msra.mxu0 0
    %259 = vmatprep.subr.bf16.mxu0 0
    %260 = vmatpush1.bf16.msra.mxu0 0
    %261 = vmatprep.subr.bf16.mxu0 0
    %262 = vmatpush1.bf16.msra.mxu0 0
    %263 = vmatprep.subr.bf16.mxu0 0
    %264 = vmatpush1.bf16.msra.mxu0 0
    %265 = vmatprep.subr.bf16.mxu0 0
    %266 = vmatpush1.bf16.msra.mxu0 0
    %267 = vmatprep.subr.bf16.mxu0 0
    %268 = vmatpush1.bf16.msra.mxu0 0
    %269 = vmatprep.subr.bf16.mxu0 0
    %270 = vmatpush1.bf16.msra.mxu0 0
    %271 = vmatprep.subr.bf16.mxu0 0
    %272 = vmatpush1.bf16.msra.mxu0 0
    %273 = vmatprep.subr.bf16.mxu0 0
    %274 = vmatpush1.bf16.msra.mxu0 0
    %275 = vmatprep.subr.bf16.mxu0 0
    %276 = vmatpush1.bf16.msra.mxu0 0
    %277 = vmatprep.subr.bf16.mxu0 0
    %278 = vmatpush1.bf16.msra.mxu0 0
    %279 = vmatprep.mubr.bf16.mxu0 0
    %280 = vmatmul.mubr.bf16.gmra.mrb[0].mxu0 %v245
    %v281 = vpop.f32.mrb[0].mxu0
    %v282 = vadd.f32 0.0, %v281
    %v283 = vpop.f32.mrb[0].mxu0
    %v284 = vpop.f32.mrb[0].mxu0
    %v285 = vpop.f32.mrb[0].mxu0
    %286 = vdwg.mxu0
    %v287 = vadd.f32 %v150, %v282
    %v288 = vsub.f32 0.0, %v242
    %v289 = vxor.u32 %v287, 2147483648
    %v290 = vmul.f32 %v289, 1.442695
    %v291 = vpow.pop %v290
    %v292 = vadd.f32 %v291, 1.0
    %v293 = vrcp.pop %v292
    %v294 = vmul.f32 1.0, %v293
    %v295 = vadd.f32 %v288, %v294
    %v296 = vmul.f32 %v295, %v238
    %v297 = vmul.f32 %v296, 0.05
    %v298 = vadd.f32 %v155, %v297
    %v299 = vpack.c.bf16 %v298, %v298
    %v301 = vsel %vm181, %v299, 0
    %303 = vmatprep.subr.bf16.mxu0 0
    %304 = vmatpush1.bf16.msra.mxu0 %v173
    %305 = vmatprep.subr.bf16.mxu0 0
    %306 = vmatpush1.bf16.msra.mxu0 %v174
    %307 = vmatprep.subr.bf16.mxu0 0
    %308 = vmatpush1.bf16.msra.mxu0 %v175
    %309 = vmatprep.subr.bf16.mxu0 0
    %310 = vmatpush1.bf16.msra.mxu0 %v176
    %311 = vmatprep.subr.bf16.mxu0 0
    %312 = vmatpush1.bf16.msra.mxu0 0
    %313 = vmatprep.subr.bf16.mxu0 0
    %314 = vmatpush1.bf16.msra.mxu0 0
    %315 = vmatprep.subr.bf16.mxu0 0
    %316 = vmatpush1.bf16.msra.mxu0 0
    %317 = vmatprep.subr.bf16.mxu0 0
    %318 = vmatpush1.bf16.msra.mxu0 0
    %319 = vmatprep.subr.bf16.mxu0 0
    %320 = vmatpush1.bf16.msra.mxu0 0
    %321 = vmatprep.subr.bf16.mxu0 0
    %322 = vmatpush1.bf16.msra.mxu0 0
    %323 = vmatprep.subr.bf16.mxu0 0
    %324 = vmatpush1.bf16.msra.mxu0 0
    %325 = vmatprep.subr.bf16.mxu0 0
    %326 = vmatpush1.bf16.msra.mxu0 0
    %327 = vmatprep.subr.bf16.mxu0 0
    %328 = vmatpush1.bf16.msra.mxu0 0
    %329 = vmatprep.subr.bf16.mxu0 0
    %330 = vmatpush1.bf16.msra.mxu0 0
    %331 = vmatprep.subr.bf16.mxu0 0
    %332 = vmatpush1.bf16.msra.mxu0 0
    %333 = vmatprep.subr.bf16.mxu0 0
    %334 = vmatpush1.bf16.msra.mxu0 0
    %335 = vmatprep.mubr.bf16.mxu0 0
    %336 = vmatmul.mubr.bf16.gmra.mrb[0].mxu0 %v301
    %v337 = vpop.f32.mrb[0].mxu0
    %v338 = vadd.f32 0.0, %v337
    %v339 = vpop.f32.mrb[0].mxu0
    %v340 = vpop.f32.mrb[0].mxu0
    %v341 = vpop.f32.mrb[0].mxu0
    %342 = vdwg.mxu0
    %v343 = vadd.f32 %v150, %v338
    %v344 = vsub.f32 0.0, %v298
    %v345 = vxor.u32 %v343, 2147483648
    %v346 = vmul.f32 %v345, 1.442695
    %v347 = vpow.pop %v346
    %v348 = vadd.f32 %v347, 1.0
    %v349 = vrcp.pop %v348
    %v350 = vmul.f32 1.0, %v349
    %v351 = vadd.f32 %v344, %v350
    %v352 = vmul.f32 %v351, %v238
    %v353 = vmul.f32 %v352, 0.1
    %v354 = vadd.f32 %v155, %v353
    %v355 = vpack.c.bf16 %v354, %v354
    %v357 = vsel %vm181, %v355, 0
    %359 = vmatprep.subr.bf16.mxu0 0
    %360 = vmatpush1.bf16.msra.mxu0 %v173
    %361 = vmatprep.subr.bf16.mxu0 0
    %362 = vmatpush1.bf16.msra.mxu0 %v174
    %363 = vmatprep.subr.bf16.mxu0 0
    %364 = vmatpush1.bf16.msra.mxu0 %v175
    %365 = vmatprep.subr.bf16.mxu0 0
    %366 = vmatpush1.bf16.msra.mxu0 %v176
    %367 = vmatprep.subr.bf16.mxu0 0
    %368 = vmatpush1.bf16.msra.mxu0 0
    %369 = vmatprep.subr.bf16.mxu0 0
    %370 = vmatpush1.bf16.msra.mxu0 0
    %371 = vmatprep.subr.bf16.mxu0 0
    %372 = vmatpush1.bf16.msra.mxu0 0
    %373 = vmatprep.subr.bf16.mxu0 0
    %374 = vmatpush1.bf16.msra.mxu0 0
    %375 = vmatprep.subr.bf16.mxu0 0
    %376 = vmatpush1.bf16.msra.mxu0 0
    %377 = vmatprep.subr.bf16.mxu0 0
    %378 = vmatpush1.bf16.msra.mxu0 0
    %379 = vmatprep.subr.bf16.mxu0 0
    %380 = vmatpush1.bf16.msra.mxu0 0
    %381 = vmatprep.subr.bf16.mxu0 0
    %382 = vmatpush1.bf16.msra.mxu0 0
    %383 = vmatprep.subr.bf16.mxu0 0
    %384 = vmatpush1.bf16.msra.mxu0 0
    %385 = vmatprep.subr.bf16.mxu0 0
    %386 = vmatpush1.bf16.msra.mxu0 0
    %387 = vmatprep.subr.bf16.mxu0 0
    %388 = vmatpush1.bf16.msra.mxu0 0
    %389 = vmatprep.subr.bf16.mxu0 0
    %390 = vmatpush1.bf16.msra.mxu0 0
    %391 = vmatprep.mubr.bf16.mxu0 0
    %392 = vmatmul.mubr.bf16.gmra.mrb[0].mxu0 %v357
    %v393 = vpop.f32.mrb[0].mxu0
    %v394 = vadd.f32 0.0, %v393
    %v395 = vpop.f32.mrb[0].mxu0
    %v396 = vpop.f32.mrb[0].mxu0
    %v397 = vpop.f32.mrb[0].mxu0
    %398 = vdwg.mxu0
    %v399 = vadd.f32 %v150, %v394
    %v400 = vsub.f32 0.0, %v354
    %v401 = vxor.u32 %v399, 2147483648
    %v402 = vmul.f32 %v401, 1.442695
    %v403 = vpow.pop %v402
    %v404 = vadd.f32 %v403, 1.0
    %v405 = vrcp.pop %v404
    %v406 = vmul.f32 1.0, %v405
    %v407 = vadd.f32 %v400, %v406
    %v408 = vmul.f32 %v407, %v238
    %v409 = vmul.f32 %v296, 2.0
    %v410 = vadd.f32 %v240, %v409
    %v411 = vmul.f32 %v352, 2.0
    %v412 = vadd.f32 %v410, %v411
    %v413 = vadd.f32 %v412, %v408
    %v414 = vmul.f32 %v413, 0.016666668
    %v415 = vadd.f32 %v155, %v414
    %vm416 = vcmask 517120
    %417 = vst.msk [vmem:[#allocation2] sm:$0x3] %vm416, %v415
    %v418 = vpack.c.bf16 %v415, %v415
    %v420 = vsel %vm181, %v418, 0
    %422 = vmatprep.subr.bf16.mxu0 0
    %423 = vmatpush1.bf16.msra.mxu0 %v173
    %424 = vmatprep.subr.bf16.mxu0 0
    %425 = vmatpush1.bf16.msra.mxu0 %v174
    %426 = vmatprep.subr.bf16.mxu0 0
    %427 = vmatpush1.bf16.msra.mxu0 %v175
    %428 = vmatprep.subr.bf16.mxu0 0
    %429 = vmatpush1.bf16.msra.mxu0 %v176
    %430 = vmatprep.subr.bf16.mxu0 0
    %431 = vmatpush1.bf16.msra.mxu0 0
    %432 = vmatprep.subr.bf16.mxu0 0
    %433 = vmatpush1.bf16.msra.mxu0 0
    %434 = vmatprep.subr.bf16.mxu0 0
    %435 = vmatpush1.bf16.msra.mxu0 0
    %436 = vmatprep.subr.bf16.mxu0 0
    %437 = vmatpush1.bf16.msra.mxu0 0
    %438 = vmatprep.subr.bf16.mxu0 0
    %439 = vmatpush1.bf16.msra.mxu0 0
    %440 = vmatprep.subr.bf16.mxu0 0
    %441 = vmatpush1.bf16.msra.mxu0 0
    %442 = vmatprep.subr.bf16.mxu0 0
    %443 = vmatpush1.bf16.msra.mxu0 0
    %444 = vmatprep.subr.bf16.mxu0 0
    %445 = vmatpush1.bf16.msra.mxu0 0
    %446 = vmatprep.subr.bf16.mxu0 0
    %447 = vmatpush1.bf16.msra.mxu0 0
    %448 = vmatprep.subr.bf16.mxu0 0
    %449 = vmatpush1.bf16.msra.mxu0 0
    %450 = vmatprep.subr.bf16.mxu0 0
    %451 = vmatpush1.bf16.msra.mxu0 0
    %452 = vmatprep.subr.bf16.mxu0 0
    %453 = vmatpush1.bf16.msra.mxu0 0
    %454 = vmatprep.mubr.bf16.mxu0 0
    %455 = vmatmul.mubr.bf16.gmra.mrb[0].mxu0 %v420
    %v456 = vpop.f32.mrb[0].mxu0
    %v457 = vadd.f32 0.0, %v456
    %v458 = vpop.f32.mrb[0].mxu0
    %v459 = vpop.f32.mrb[0].mxu0
    %v460 = vpop.f32.mrb[0].mxu0
    %461 = vdwg.mxu0
    %v463 = vrot.slane %v457, 6
    %v465 = vadd.f32 %v150, %v463
    %v466 = vsub.f32 0.0, %v415
    %v467 = vxor.u32 %v465, 2147483648
    %v468 = vmul.f32 %v467, 1.442695
    %v469 = vpow.pop %v468
    %v470 = vadd.f32 %v469, 1.0
    %v471 = vrcp.pop %v470
    %v472 = vmul.f32 1.0, %v471
    %v474 = vrot.slane %v472, 2
    %v476 = vadd.f32 %v466, %v474
    %v477 = vmul.f32 %v476, %v238
    %v478 = vmul.f32 %v477, 0.05
    %v479 = vadd.f32 %v415, %v478
    %v480 = vpack.c.bf16 %v479, %v479
    %v482 = vsel %vm181, %v480, 0
    %484 = vmatprep.subr.bf16.mxu0 0
    %485 = vmatpush1.bf16.msra.mxu0 %v173
    %486 = vmatprep.subr.bf16.mxu0 0
    %487 = vmatpush1.bf16.msra.mxu0 %v174
    %488 = vmatprep.subr.bf16.mxu0 0
    %489 = vmatpush1.bf16.msra.mxu0 %v175
    %490 = vmatprep.subr.bf16.mxu0 0
    %491 = vmatpush1.bf16.msra.mxu0 %v176
    %492 = vmatprep.subr.bf16.mxu0 0
    %493 = vmatpush1.bf16.msra.mxu0 0
    %494 = vmatprep.subr.bf16.mxu0 0
    %495 = vmatpush1.bf16.msra.mxu0 0
    %496 = vmatprep.subr.bf16.mxu0 0
    %497 = vmatpush1.bf16.msra.mxu0 0
    %498 = vmatprep.subr.bf16.mxu0 0
    %499 = vmatpush1.bf16.msra.mxu0 0
    %500 = vmatprep.subr.bf16.mxu0 0
    %501 = vmatpush1.bf16.msra.mxu0 0
    %502 = vmatprep.subr.bf16.mxu0 0
    %503 = vmatpush1.bf16.msra.mxu0 0
    %504 = vmatprep.subr.bf16.mxu0 0
    %505 = vmatpush1.bf16.msra.mxu0 0
    %506 = vmatprep.subr.bf16.mxu0 0
    %507 = vmatpush1.bf16.msra.mxu0 0
    %508 = vmatprep.subr.bf16.mxu0 0
    %509 = vmatpush1.bf16.msra.mxu0 0
    %510 = vmatprep.subr.bf16.mxu0 0
    %511 = vmatpush1.bf16.msra.mxu0 0
    %512 = vmatprep.subr.bf16.mxu0 0
    %513 = vmatpush1.bf16.msra.mxu0 0
    %514 = vmatprep.subr.bf16.mxu0 0
    %515 = vmatpush1.bf16.msra.mxu0 0
    %516 = vmatprep.mubr.bf16.mxu0 0
    %517 = vmatmul.mubr.bf16.gmra.mrb[0].mxu0 %v482
    %v518 = vpop.f32.mrb[0].mxu0
    %v519 = vadd.f32 0.0, %v518
    %v520 = vpop.f32.mrb[0].mxu0
    %v521 = vpop.f32.mrb[0].mxu0
    %v522 = vpop.f32.mrb[0].mxu0
    %523 = vdwg.mxu0
    %v525 = vrot.slane %v519, 6
    %v527 = vadd.f32 %v150, %v525
    %v528 = vsub.f32 0.0, %v479
    %v529 = vxor.u32 %v527, 2147483648
    %v530 = vmul.f32 %v529, 1.442695
    %v531 = vpow.pop %v530
    %v532 = vadd.f32 %v531, 1.0
    %v533 = vrcp.pop %v532
    %v534 = vmul.f32 1.0, %v533
    %v536 = vrot.slane %v534, 2
    %v538 = vadd.f32 %v528, %v536
    %v539 = vmul.f32 %v538, %v238
    %v540 = vmul.f32 %v539, 0.05
    %v541 = vadd.f32 %v415, %v540
    %v542 = vpack.c.bf16 %v541, %v541
    %v544 = vsel %vm181, %v542, 0
    %546 = vmatprep.subr.bf16.mxu0 0
    %547 = vmatpush1.bf16.msra.mxu0 %v173
    %548 = vmatprep.subr.bf16.mxu0 0
    %549 = vmatpush1.bf16.msra.mxu0 %v174
    %550 = vmatprep.subr.bf16.mxu0 0
    %551 = vmatpush1.bf16.msra.mxu0 %v175
    %552 = vmatprep.subr.bf16.mxu0 0
    %553 = vmatpush1.bf16.msra.mxu0 %v176
    %554 = vmatprep.subr.bf16.mxu0 0
    %555 = vmatpush1.bf16.msra.mxu0 0
    %556 = vmatprep.subr.bf16.mxu0 0
    %557 = vmatpush1.bf16.msra.mxu0 0
    %558 = vmatprep.subr.bf16.mxu0 0
    %559 = vmatpush1.bf16.msra.mxu0 0
    %560 = vmatprep.subr.bf16.mxu0 0
    %561 = vmatpush1.bf16.msra.mxu0 0
    %562 = vmatprep.subr.bf16.mxu0 0
    %563 = vmatpush1.bf16.msra.mxu0 0
    %564 = vmatprep.subr.bf16.mxu0 0
    %565 = vmatpush1.bf16.msra.mxu0 0
    %566 = vmatprep.subr.bf16.mxu0 0
    %567 = vmatpush1.bf16.msra.mxu0 0
    %568 = vmatprep.subr.bf16.mxu0 0
    %569 = vmatpush1.bf16.msra.mxu0 0
    %570 = vmatprep.subr.bf16.mxu0 0
    %571 = vmatpush1.bf16.msra.mxu0 0
    %572 = vmatprep.subr.bf16.mxu0 0
    %573 = vmatpush1.bf16.msra.mxu0 0
    %574 = vmatprep.subr.bf16.mxu0 0
    %575 = vmatpush1.bf16.msra.mxu0 0
    %576 = vmatprep.subr.bf16.mxu0 0
    %577 = vmatpush1.bf16.msra.mxu0 0
    %578 = vmatprep.mubr.bf16.mxu0 0
    %579 = vmatmul.mubr.bf16.gmra.mrb[0].mxu0 %v544
    %v580 = vpop.f32.mrb[0].mxu0
    %v581 = vadd.f32 0.0, %v580
    %v582 = vpop.f32.mrb[0].mxu0
    %v583 = vpop.f32.mrb[0].mxu0
    %v584 = vpop.f32.mrb[0].mxu0
    %585 = vdwg.mxu0
    %v587 = vrot.slane %v581, 6
    %v589 = vadd.f32 %v150, %v587
    %v590 = vsub.f32 0.0, %v541
    %v591 = vxor.u32 %v589, 2147483648
    %v592 = vmul.f32 %v591, 1.442695
    %v593 = vpow.pop %v592
    %v594 = vadd.f32 %v593, 1.0
    %v595 = vrcp.pop %v594
    %v596 = vmul.f32 1.0, %v595
    %v598 = vrot.slane %v596, 2
    %v600 = vadd.f32 %v590, %v598
    %v601 = vmul.f32 %v600, %v238
    %v602 = vmul.f32 %v601, 0.1
    %v603 = vadd.f32 %v415, %v602
    %v604 = vpack.c.bf16 %v603, %v603
    %v606 = vsel %vm181, %v604, 0
    %608 = vmatprep.subr.bf16.mxu0 0
    %609 = vmatpush1.bf16.msra.mxu0 %v173
    %610 = vmatprep.subr.bf16.mxu0 0
    %611 = vmatpush1.bf16.msra.mxu0 %v174
    %612 = vmatprep.subr.bf16.mxu0 0
    %613 = vmatpush1.bf16.msra.mxu0 %v175
    %614 = vmatprep.subr.bf16.mxu0 0
    %615 = vmatpush1.bf16.msra.mxu0 %v176
    %616 = vmatprep.subr.bf16.mxu0 0
    %617 = vmatpush1.bf16.msra.mxu0 0
    %618 = vmatprep.subr.bf16.mxu0 0
    %619 = vmatpush1.bf16.msra.mxu0 0
    %620 = vmatprep.subr.bf16.mxu0 0
    %621 = vmatpush1.bf16.msra.mxu0 0
    %622 = vmatprep.subr.bf16.mxu0 0
    %623 = vmatpush1.bf16.msra.mxu0 0
    %624 = vmatprep.subr.bf16.mxu0 0
    %625 = vmatpush1.bf16.msra.mxu0 0
    %626 = vmatprep.subr.bf16.mxu0 0
    %627 = vmatpush1.bf16.msra.mxu0 0
    %628 = vmatprep.subr.bf16.mxu0 0
    %629 = vmatpush1.bf16.msra.mxu0 0
    %630 = vmatprep.subr.bf16.mxu0 0
    %631 = vmatpush1.bf16.msra.mxu0 0
    %632 = vmatprep.subr.bf16.mxu0 0
    %633 = vmatpush1.bf16.msra.mxu0 0
    %634 = vmatprep.subr.bf16.mxu0 0
    %635 = vmatpush1.bf16.msra.mxu0 0
    %636 = vmatprep.subr.bf16.mxu0 0
    %637 = vmatpush1.bf16.msra.mxu0 0
    %638 = vmatprep.subr.bf16.mxu0 0
    %639 = vmatpush1.bf16.msra.mxu0 0
    %640 = vmatprep.mubr.bf16.mxu0 0
    %641 = vmatmul.mubr.bf16.gmra.mrb[0].mxu0 %v606
    %v642 = vpop.f32.mrb[0].mxu0
    %v643 = vadd.f32 0.0, %v642
    %v644 = vpop.f32.mrb[0].mxu0
    %v645 = vpop.f32.mrb[0].mxu0
    %v646 = vpop.f32.mrb[0].mxu0
    %647 = vdwg.mxu0
    %v649 = vrot.slane %v643, 6
    %v651 = vadd.f32 %v150, %v649
    %v652 = vsub.f32 0.0, %v603
    %v653 = vxor.u32 %v651, 2147483648
    %v654 = vmul.f32 %v653, 1.442695
    %v655 = vpow.pop %v654
    %v656 = vadd.f32 %v655, 1.0
    %v657 = vrcp.pop %v656
    %v658 = vmul.f32 1.0, %v657
    %v660 = vrot.slane %v658, 2
    %v662 = vadd.f32 %v652, %v660
    %v663 = vmul.f32 %v662, %v238
    %v664 = vmul.f32 %v539, 2.0
    %v665 = vadd.f32 %v477, %v664
    %v666 = vmul.f32 %v601, 2.0
    %v667 = vadd.f32 %v665, %v666
    %v668 = vadd.f32 %v667, %v663
    %v669 = vmul.f32 %v668, 0.016666668
    %v670 = vadd.f32 %v415, %v669
    %671 = vst.msk [vmem:[#allocation2 + $0x2] sm:$0x3] %vm416, %v670
    %v672 = vpack.c.bf16 %v670, %v670
    %v674 = vsel %vm181, %v672, 0
    %676 = vmatprep.subr.bf16.mxu0 0
    %677 = vmatpush1.bf16.msra.mxu0 %v173
    %678 = vmatprep.subr.bf16.mxu0 0
    %679 = vmatpush1.bf16.msra.mxu0 %v174
    %680 = vmatprep.subr.bf16.mxu0 0
    %681 = vmatpush1.bf16.msra.mxu0 %v175
    %682 = vmatprep.subr.bf16.mxu0 0
    %683 = vmatpush1.bf16.msra.mxu0 %v176
    %684 = vmatprep.subr.bf16.mxu0 0
    %685 = vmatpush1.bf16.msra.mxu0 0
    %686 = vmatprep.subr.bf16.mxu0 0
    %687 = vmatpush1.bf16.msra.mxu0 0
    %688 = vmatprep.subr.bf16.mxu0 0
    %689 = vmatpush1.bf16.msra.mxu0 0
    %690 = vmatprep.subr.bf16.mxu0 0
    %691 = vmatpush1.bf16.msra.mxu0 0
    %692 = vmatprep.subr.bf16.mxu0 0
    %693 = vmatpush1.bf16.msra.mxu0 0
    %694 = vmatprep.subr.bf16.mxu0 0
    %695 = vmatpush1.bf16.msra.mxu0 0
    %696 = vmatprep.subr.bf16.mxu0 0
    %697 = vmatpush1.bf16.msra.mxu0 0
    %698 = vmatprep.subr.bf16.mxu0 0
    %699 = vmatpush1.bf16.msra.mxu0 0
    %700 = vmatprep.subr.bf16.mxu0 0
    %701 = vmatpush1.bf16.msra.mxu0 0
    %702 = vmatprep.subr.bf16.mxu0 0
    %703 = vmatpush1.bf16.msra.mxu0 0
    %704 = vmatprep.subr.bf16.mxu0 0
    %705 = vmatpush1.bf16.msra.mxu0 0
    %706 = vmatprep.subr.bf16.mxu0 0
    %707 = vmatpush1.bf16.msra.mxu0 0
    %708 = vmatprep.mubr.bf16.mxu0 0
    %709 = vmatmul.mubr.bf16.gmra.mrb[0].mxu0 %v674
    %v710 = vpop.f32.mrb[0].mxu0
    %v711 = vadd.f32 0.0, %v710
    %v712 = vpop.f32.mrb[0].mxu0
    %v713 = vpop.f32.mrb[0].mxu0
    %v714 = vpop.f32.mrb[0].mxu0
    %715 = vdwg.mxu0
    %v717 = vrot.slane %v711, 4
    %v719 = vadd.f32 %v150, %v717
    %v720 = vsub.f32 0.0, %v670
    %v721 = vxor.u32 %v719, 2147483648
    %v722 = vmul.f32 %v721, 1.442695
    %v723 = vpow.pop %v722
    %v724 = vadd.f32 %v723, 1.0
    %v725 = vrcp.pop %v724
    %v726 = vmul.f32 1.0, %v725
    %v728 = vrot.slane %v726, 4
    %v730 = vadd.f32 %v720, %v728
    %v731 = vmul.f32 %v730, %v238
    %v732 = vmul.f32 %v731, 0.05
    %v733 = vadd.f32 %v670, %v732
    %v734 = vpack.c.bf16 %v733, %v733
    %v736 = vsel %vm181, %v734, 0
    %738 = vmatprep.subr.bf16.mxu0 0
    %739 = vmatpush1.bf16.msra.mxu0 %v173
    %740 = vmatprep.subr.bf16.mxu0 0
    %741 = vmatpush1.bf16.msra.mxu0 %v174
    %742 = vmatprep.subr.bf16.mxu0 0
    %743 = vmatpush1.bf16.msra.mxu0 %v175
    %744 = vmatprep.subr.bf16.mxu0 0
    %745 = vmatpush1.bf16.msra.mxu0 %v176
    %746 = vmatprep.subr.bf16.mxu0 0
    %747 = vmatpush1.bf16.msra.mxu0 0
    %748 = vmatprep.subr.bf16.mxu0 0
    %749 = vmatpush1.bf16.msra.mxu0 0
    %750 = vmatprep.subr.bf16.mxu0 0
    %751 = vmatpush1.bf16.msra.mxu0 0
    %752 = vmatprep.subr.bf16.mxu0 0
    %753 = vmatpush1.bf16.msra.mxu0 0
    %754 = vmatprep.subr.bf16.mxu0 0
    %755 = vmatpush1.bf16.msra.mxu0 0
    %756 = vmatprep.subr.bf16.mxu0 0
    %757 = vmatpush1.bf16.msra.mxu0 0
    %758 = vmatprep.subr.bf16.mxu0 0
    %759 = vmatpush1.bf16.msra.mxu0 0
    %760 = vmatprep.subr.bf16.mxu0 0
    %761 = vmatpush1.bf16.msra.mxu0 0
    %762 = vmatprep.subr.bf16.mxu0 0
    %763 = vmatpush1.bf16.msra.mxu0 0
    %764 = vmatprep.subr.bf16.mxu0 0
    %765 = vmatpush1.bf16.msra.mxu0 0
    %766 = vmatprep.subr.bf16.mxu0 0
    %767 = vmatpush1.bf16.msra.mxu0 0
    %768 = vmatprep.subr.bf16.mxu0 0
    %769 = vmatpush1.bf16.msra.mxu0 0
    %770 = vmatprep.mubr.bf16.mxu0 0
    %771 = vmatmul.mubr.bf16.gmra.mrb[0].mxu0 %v736
    %v772 = vpop.f32.mrb[0].mxu0
    %v773 = vadd.f32 0.0, %v772
    %v774 = vpop.f32.mrb[0].mxu0
    %v775 = vpop.f32.mrb[0].mxu0
    %v776 = vpop.f32.mrb[0].mxu0
    %777 = vdwg.mxu0
    %v779 = vrot.slane %v773, 4
    %v781 = vadd.f32 %v150, %v779
    %v782 = vsub.f32 0.0, %v733
    %v783 = vxor.u32 %v781, 2147483648
    %v784 = vmul.f32 %v783, 1.442695
    %v785 = vpow.pop %v784
    %v786 = vadd.f32 %v785, 1.0
    %v787 = vrcp.pop %v786
    %v788 = vmul.f32 1.0, %v787
    %v790 = vrot.slane %v788, 4
    %v792 = vadd.f32 %v782, %v790
    %v793 = vmul.f32 %v792, %v238
    %v794 = vmul.f32 %v793, 0.05
    %v795 = vadd.f32 %v670, %v794
    %v796 = vpack.c.bf16 %v795, %v795
    %v798 = vsel %vm181, %v796, 0
    %800 = vmatprep.subr.bf16.mxu0 0
    %801 = vmatpush1.bf16.msra.mxu0 %v173
    %802 = vmatprep.subr.bf16.mxu0 0
    %803 = vmatpush1.bf16.msra.mxu0 %v174
    %804 = vmatprep.subr.bf16.mxu0 0
    %805 = vmatpush1.bf16.msra.mxu0 %v175
    %806 = vmatprep.subr.bf16.mxu0 0
    %807 = vmatpush1.bf16.msra.mxu0 %v176
    %808 = vmatprep.subr.bf16.mxu0 0
    %809 = vmatpush1.bf16.msra.mxu0 0
    %810 = vmatprep.subr.bf16.mxu0 0
    %811 = vmatpush1.bf16.msra.mxu0 0
    %812 = vmatprep.subr.bf16.mxu0 0
    %813 = vmatpush1.bf16.msra.mxu0 0
    %814 = vmatprep.subr.bf16.mxu0 0
    %815 = vmatpush1.bf16.msra.mxu0 0
    %816 = vmatprep.subr.bf16.mxu0 0
    %817 = vmatpush1.bf16.msra.mxu0 0
    %818 = vmatprep.subr.bf16.mxu0 0
    %819 = vmatpush1.bf16.msra.mxu0 0
    %820 = vmatprep.subr.bf16.mxu0 0
    %821 = vmatpush1.bf16.msra.mxu0 0
    %822 = vmatprep.subr.bf16.mxu0 0
    %823 = vmatpush1.bf16.msra.mxu0 0
    %824 = vmatprep.subr.bf16.mxu0 0
    %825 = vmatpush1.bf16.msra.mxu0 0
    %826 = vmatprep.subr.bf16.mxu0 0
    %827 = vmatpush1.bf16.msra.mxu0 0
    %828 = vmatprep.subr.bf16.mxu0 0
    %829 = vmatpush1.bf16.msra.mxu0 0
    %830 = vmatprep.subr.bf16.mxu0 0
    %831 = vmatpush1.bf16.msra.mxu0 0
    %832 = vmatprep.mubr.bf16.mxu0 0
    %833 = vmatmul.mubr.bf16.gmra.mrb[0].mxu0 %v798
    %v834 = vpop.f32.mrb[0].mxu0
    %v835 = vadd.f32 0.0, %v834
    %v836 = vpop.f32.mrb[0].mxu0
    %v837 = vpop.f32.mrb[0].mxu0
    %v838 = vpop.f32.mrb[0].mxu0
    %839 = vdwg.mxu0
    %v841 = vrot.slane %v835, 4
    %v843 = vadd.f32 %v150, %v841
    %v844 = vsub.f32 0.0, %v795
    %v845 = vxor.u32 %v843, 2147483648
    %v846 = vmul.f32 %v845, 1.442695
    %v847 = vpow.pop %v846
    %v848 = vadd.f32 %v847, 1.0
    %v849 = vrcp.pop %v848
    %v850 = vmul.f32 1.0, %v849
    %v852 = vrot.slane %v850, 4
    %v854 = vadd.f32 %v844, %v852
    %v855 = vmul.f32 %v854, %v238
    %v856 = vmul.f32 %v855, 0.1
    %v857 = vadd.f32 %v670, %v856
    %v858 = vpack.c.bf16 %v857, %v857
    %v860 = vsel %vm181, %v858, 0
    %862 = vmatprep.subr.bf16.mxu0 0
    %863 = vmatpush1.bf16.msra.mxu0 %v173
    %864 = vmatprep.subr.bf16.mxu0 0
    %865 = vmatpush1.bf16.msra.mxu0 %v174
    %866 = vmatprep.subr.bf16.mxu0 0
    %867 = vmatpush1.bf16.msra.mxu0 %v175
    %868 = vmatprep.subr.bf16.mxu0 0
    %869 = vmatpush1.bf16.msra.mxu0 %v176
    %870 = vmatprep.subr.bf16.mxu0 0
    %871 = vmatpush1.bf16.msra.mxu0 0
    %872 = vmatprep.subr.bf16.mxu0 0
    %873 = vmatpush1.bf16.msra.mxu0 0
    %874 = vmatprep.subr.bf16.mxu0 0
    %875 = vmatpush1.bf16.msra.mxu0 0
    %876 = vmatprep.subr.bf16.mxu0 0
    %877 = vmatpush1.bf16.msra.mxu0 0
    %878 = vmatprep.subr.bf16.mxu0 0
    %879 = vmatpush1.bf16.msra.mxu0 0
    %880 = vmatprep.subr.bf16.mxu0 0
    %881 = vmatpush1.bf16.msra.mxu0 0
    %882 = vmatprep.subr.bf16.mxu0 0
    %883 = vmatpush1.bf16.msra.mxu0 0
    %884 = vmatprep.subr.bf16.mxu0 0
    %885 = vmatpush1.bf16.msra.mxu0 0
    %886 = vmatprep.subr.bf16.mxu0 0
    %887 = vmatpush1.bf16.msra.mxu0 0
    %888 = vmatprep.subr.bf16.mxu0 0
    %889 = vmatpush1.bf16.msra.mxu0 0
    %890 = vmatprep.subr.bf16.mxu0 0
    %891 = vmatpush1.bf16.msra.mxu0 0
    %892 = vmatprep.subr.bf16.mxu0 0
    %893 = vmatpush1.bf16.msra.mxu0 0
    %894 = vmatprep.mubr.bf16.mxu0 0
    %895 = vmatmul.mubr.bf16.gmra.mrb[0].mxu0 %v860
    %v896 = vpop.f32.mrb[0].mxu0
    %v897 = vadd.f32 0.0, %v896
    %v898 = vpop.f32.mrb[0].mxu0
    %v899 = vpop.f32.mrb[0].mxu0
    %v900 = vpop.f32.mrb[0].mxu0
    %901 = vdwg.mxu0
    %v903 = vrot.slane %v897, 4
    %v905 = vadd.f32 %v150, %v903
    %v906 = vsub.f32 0.0, %v857
    %v907 = vxor.u32 %v905, 2147483648
    %v908 = vmul.f32 %v907, 1.442695
    %v909 = vpow.pop %v908
    %v910 = vadd.f32 %v909, 1.0
    %v911 = vrcp.pop %v910
    %v912 = vmul.f32 1.0, %v911
    %v914 = vrot.slane %v912, 4
    %v916 = vadd.f32 %v906, %v914
    %v917 = vmul.f32 %v916, %v238
    %v918 = vmul.f32 %v793, 2.0
    %v919 = vadd.f32 %v731, %v918
    %v920 = vmul.f32 %v855, 2.0
    %v921 = vadd.f32 %v919, %v920
    %v922 = vadd.f32 %v921, %v917
    %v923 = vmul.f32 %v922, 0.016666668
    %v924 = vadd.f32 %v670, %v923
    %925 = vst.msk [vmem:[#allocation2 + $0x4] sm:$0x3] %vm416, %v924
    %v926 = vpack.c.bf16 %v924, %v924
    %v928 = vsel %vm181, %v926, 0
    %930 = vmatprep.subr.bf16.mxu0 0
    %931 = vmatpush1.bf16.msra.mxu0 %v173
    %932 = vmatprep.subr.bf16.mxu0 0
    %933 = vmatpush1.bf16.msra.mxu0 %v174
    %934 = vmatprep.subr.bf16.mxu0 0
    %935 = vmatpush1.bf16.msra.mxu0 %v175
    %936 = vmatprep.subr.bf16.mxu0 0
    %937 = vmatpush1.bf16.msra.mxu0 %v176
    %938 = vmatprep.subr.bf16.mxu0 0
    %939 = vmatpush1.bf16.msra.mxu0 0
    %940 = vmatprep.subr.bf16.mxu0 0
    %941 = vmatpush1.bf16.msra.mxu0 0
    %942 = vmatprep.subr.bf16.mxu0 0
    %943 = vmatpush1.bf16.msra.mxu0 0
    %944 = vmatprep.subr.bf16.mxu0 0
    %945 = vmatpush1.bf16.msra.mxu0 0
    %946 = vmatprep.subr.bf16.mxu0 0
    %947 = vmatpush1.bf16.msra.mxu0 0
    %948 = vmatprep.subr.bf16.mxu0 0
    %949 = vmatpush1.bf16.msra.mxu0 0
    %950 = vmatprep.subr.bf16.mxu0 0
    %951 = vmatpush1.bf16.msra.mxu0 0
    %952 = vmatprep.subr.bf16.mxu0 0
    %953 = vmatpush1.bf16.msra.mxu0 0
    %954 = vmatprep.subr.bf16.mxu0 0
    %955 = vmatpush1.bf16.msra.mxu0 0
    %956 = vmatprep.subr.bf16.mxu0 0
    %957 = vmatpush1.bf16.msra.mxu0 0
    %958 = vmatprep.subr.bf16.mxu0 0
    %959 = vmatpush1.bf16.msra.mxu0 0
    %960 = vmatprep.subr.bf16.mxu0 0
    %961 = vmatpush1.bf16.msra.mxu0 0
    %962 = vmatprep.mubr.bf16.mxu0 0
    %963 = vmatmul.mubr.bf16.gmra.mrb[0].mxu0 %v928
    %v964 = vpop.f32.mrb[0].mxu0
    %v965 = vadd.f32 0.0, %v964
    %v966 = vpop.f32.mrb[0].mxu0
    %v967 = vpop.f32.mrb[0].mxu0
    %v968 = vpop.f32.mrb[0].mxu0
    %969 = vdwg.mxu0
    %v971 = vrot.slane %v965, 2
    %v973 = vadd.f32 %v150, %v971
    %v974 = vsub.f32 0.0, %v924
    %v975 = vxor.u32 %v973, 2147483648
    %v976 = vmul.f32 %v975, 1.442695
    %v977 = vpow.pop %v976
    %v978 = vadd.f32 %v977, 1.0
    %v979 = vrcp.pop %v978
    %v980 = vmul.f32 1.0, %v979
    %v982 = vrot.slane %v980, 6
    %v984 = vadd.f32 %v974, %v982
    %v985 = vmul.f32 %v984, %v238
    %v986 = vmul.f32 %v985, 0.05
    %v987 = vadd.f32 %v924, %v986
    %v988 = vpack.c.bf16 %v987, %v987
    %v990 = vsel %vm181, %v988, 0
    %992 = vmatprep.subr.bf16.mxu0 0
    %993 = vmatpush1.bf16.msra.mxu0 %v173
    %994 = vmatprep.subr.bf16.mxu0 0
    %995 = vmatpush1.bf16.msra.mxu0 %v174
    %996 = vmatprep.subr.bf16.mxu0 0
    %997 = vmatpush1.bf16.msra.mxu0 %v175
    %998 = vmatprep.subr.bf16.mxu0 0
    %999 = vmatpush1.bf16.msra.mxu0 %v176
    %1000 = vmatprep.subr.bf16.mxu0 0
    %1001 = vmatpush1.bf16.msra.mxu0 0
    %1002 = vmatprep.subr.bf16.mxu0 0
    %1003 = vmatpush1.bf16.msra.mxu0 0
    %1004 = vmatprep.subr.bf16.mxu0 0
    %1005 = vmatpush1.bf16.msra.mxu0 0
    %1006 = vmatprep.subr.bf16.mxu0 0
    %1007 = vmatpush1.bf16.msra.mxu0 0
    %1008 = vmatprep.subr.bf16.mxu0 0
    %1009 = vmatpush1.bf16.msra.mxu0 0
    %1010 = vmatprep.subr.bf16.mxu0 0
    %1011 = vmatpush1.bf16.msra.mxu0 0
    %1012 = vmatprep.subr.bf16.mxu0 0
    %1013 = vmatpush1.bf16.msra.mxu0 0
    %1014 = vmatprep.subr.bf16.mxu0 0
    %1015 = vmatpush1.bf16.msra.mxu0 0
    %1016 = vmatprep.subr.bf16.mxu0 0
    %1017 = vmatpush1.bf16.msra.mxu0 0
    %1018 = vmatprep.subr.bf16.mxu0 0
    %1019 = vmatpush1.bf16.msra.mxu0 0
    %1020 = vmatprep.subr.bf16.mxu0 0
    %1021 = vmatpush1.bf16.msra.mxu0 0
    %1022 = vmatprep.subr.bf16.mxu0 0
    %1023 = vmatpush1.bf16.msra.mxu0 0
    %1024 = vmatprep.mubr.bf16.mxu0 0
    %1025 = vmatmul.mubr.bf16.gmra.mrb[0].mxu0 %v990
    %v1026 = vpop.f32.mrb[0].mxu0
    %v1027 = vadd.f32 0.0, %v1026
    %v1028 = vpop.f32.mrb[0].mxu0
    %v1029 = vpop.f32.mrb[0].mxu0
    %v1030 = vpop.f32.mrb[0].mxu0
    %1031 = vdwg.mxu0
    %v1033 = vrot.slane %v1027, 2
    %v1035 = vadd.f32 %v150, %v1033
    %v1036 = vsub.f32 0.0, %v987
    %v1037 = vxor.u32 %v1035, 2147483648
    %v1038 = vmul.f32 %v1037, 1.442695
    %v1039 = vpow.pop %v1038
    %v1040 = vadd.f32 %v1039, 1.0
    %v1041 = vrcp.pop %v1040
    %v1042 = vmul.f32 1.0, %v1041
    %v1044 = vrot.slane %v1042, 6
    %v1046 = vadd.f32 %v1036, %v1044
    %v1047 = vmul.f32 %v1046, %v238
    %v1048 = vmul.f32 %v1047, 0.05
    %v1049 = vadd.f32 %v924, %v1048
    %v1050 = vpack.c.bf16 %v1049, %v1049
    %v1052 = vsel %vm181, %v1050, 0
    %1054 = vmatprep.subr.bf16.mxu0 0
    %1055 = vmatpush1.bf16.msra.mxu0 %v173
    %1056 = vmatprep.subr.bf16.mxu0 0
    %1057 = vmatpush1.bf16.msra.mxu0 %v174
    %1058 = vmatprep.subr.bf16.mxu0 0
    %1059 = vmatpush1.bf16.msra.mxu0 %v175
    %1060 = vmatprep.subr.bf16.mxu0 0
    %1061 = vmatpush1.bf16.msra.mxu0 %v176
    %1062 = vmatprep.subr.bf16.mxu0 0
    %1063 = vmatpush1.bf16.msra.mxu0 0
    %1064 = vmatprep.subr.bf16.mxu0 0
    %1065 = vmatpush1.bf16.msra.mxu0 0
    %1066 = vmatprep.subr.bf16.mxu0 0
    %1067 = vmatpush1.bf16.msra.mxu0 0
    %1068 = vmatprep.subr.bf16.mxu0 0
    %1069 = vmatpush1.bf16.msra.mxu0 0
    %1070 = vmatprep.subr.bf16.mxu0 0
    %1071 = vmatpush1.bf16.msra.mxu0 0
    %1072 = vmatprep.subr.bf16.mxu0 0
    %1073 = vmatpush1.bf16.msra.mxu0 0
    %1074 = vmatprep.subr.bf16.mxu0 0
    %1075 = vmatpush1.bf16.msra.mxu0 0
    %1076 = vmatprep.subr.bf16.mxu0 0
    %1077 = vmatpush1.bf16.msra.mxu0 0
    %1078 = vmatprep.subr.bf16.mxu0 0
    %1079 = vmatpush1.bf16.msra.mxu0 0
    %1080 = vmatprep.subr.bf16.mxu0 0
    %1081 = vmatpush1.bf16.msra.mxu0 0
    %1082 = vmatprep.subr.bf16.mxu0 0
    %1083 = vmatpush1.bf16.msra.mxu0 0
    %1084 = vmatprep.subr.bf16.mxu0 0
    %1085 = vmatpush1.bf16.msra.mxu0 0
    %1086 = vmatprep.mubr.bf16.mxu0 0
    %1087 = vmatmul.mubr.bf16.gmra.mrb[0].mxu0 %v1052
    %v1088 = vpop.f32.mrb[0].mxu0
    %v1089 = vadd.f32 0.0, %v1088
    %v1090 = vpop.f32.mrb[0].mxu0
    %v1091 = vpop.f32.mrb[0].mxu0
    %v1092 = vpop.f32.mrb[0].mxu0
    %1093 = vdwg.mxu0
    %v1095 = vrot.slane %v1089, 2
    %v1097 = vadd.f32 %v150, %v1095
    %v1098 = vsub.f32 0.0, %v1049
    %v1099 = vxor.u32 %v1097, 2147483648
    %v1100 = vmul.f32 %v1099, 1.442695
    %v1101 = vpow.pop %v1100
    %v1102 = vadd.f32 %v1101, 1.0
    %v1103 = vrcp.pop %v1102
    %v1104 = vmul.f32 1.0, %v1103
    %v1106 = vrot.slane %v1104, 6
    %v1108 = vadd.f32 %v1098, %v1106
    %v1109 = vmul.f32 %v1108, %v238
    %v1110 = vmul.f32 %v1109, 0.1
    %v1111 = vadd.f32 %v924, %v1110
    %v1112 = vpack.c.bf16 %v1111, %v1111
    %v1114 = vsel %vm181, %v1112, 0
    %1116 = vmatprep.subr.bf16.mxu0 0
    %1117 = vmatpush1.bf16.msra.mxu0 %v173
    %1118 = vmatprep.subr.bf16.mxu0 0
    %1119 = vmatpush1.bf16.msra.mxu0 %v174
    %1120 = vmatprep.subr.bf16.mxu0 0
    %1121 = vmatpush1.bf16.msra.mxu0 %v175
    %1122 = vmatprep.subr.bf16.mxu0 0
    %1123 = vmatpush1.bf16.msra.mxu0 %v176
    %1124 = vmatprep.subr.bf16.mxu0 0
    %1125 = vmatpush1.bf16.msra.mxu0 0
    %1126 = vmatprep.subr.bf16.mxu0 0
    %1127 = vmatpush1.bf16.msra.mxu0 0
    %1128 = vmatprep.subr.bf16.mxu0 0
    %1129 = vmatpush1.bf16.msra.mxu0 0
    %1130 = vmatprep.subr.bf16.mxu0 0
    %1131 = vmatpush1.bf16.msra.mxu0 0
    %1132 = vmatprep.subr.bf16.mxu0 0
    %1133 = vmatpush1.bf16.msra.mxu0 0
    %1134 = vmatprep.subr.bf16.mxu0 0
    %1135 = vmatpush1.bf16.msra.mxu0 0
    %1136 = vmatprep.subr.bf16.mxu0 0
    %1137 = vmatpush1.bf16.msra.mxu0 0
    %1138 = vmatprep.subr.bf16.mxu0 0
    %1139 = vmatpush1.bf16.msra.mxu0 0
    %1140 = vmatprep.subr.bf16.mxu0 0
    %1141 = vmatpush1.bf16.msra.mxu0 0
    %1142 = vmatprep.subr.bf16.mxu0 0
    %1143 = vmatpush1.bf16.msra.mxu0 0
    %1144 = vmatprep.subr.bf16.mxu0 0
    %1145 = vmatpush1.bf16.msra.mxu0 0
    %1146 = vmatprep.subr.bf16.mxu0 0
    %1147 = vmatpush1.bf16.msra.mxu0 0
    %1148 = vmatprep.mubr.bf16.mxu0 0
    %1149 = vmatmul.mubr.bf16.gmra.mrb[0].mxu0 %v1114
    %v1150 = vpop.f32.mrb[0].mxu0
    %v1151 = vadd.f32 0.0, %v1150
    %v1152 = vpop.f32.mrb[0].mxu0
    %v1153 = vpop.f32.mrb[0].mxu0
    %v1154 = vpop.f32.mrb[0].mxu0
    %1155 = vdwg.mxu0
    %v1157 = vrot.slane %v1151, 2
    %v1159 = vadd.f32 %v150, %v1157
    %v1160 = vsub.f32 0.0, %v1111
    %v1161 = vxor.u32 %v1159, 2147483648
    %v1162 = vmul.f32 %v1161, 1.442695
    %v1163 = vpow.pop %v1162
    %v1164 = vadd.f32 %v1163, 1.0
    %v1165 = vrcp.pop %v1164
    %v1166 = vmul.f32 1.0, %v1165
    %v1168 = vrot.slane %v1166, 6
    %v1170 = vadd.f32 %v1160, %v1168
    %v1171 = vmul.f32 %v1170, %v238
    %v1172 = vmul.f32 %v1047, 2.0
    %v1173 = vadd.f32 %v985, %v1172
    %v1174 = vmul.f32 %v1109, 2.0
    %v1175 = vadd.f32 %v1173, %v1174
    %v1176 = vadd.f32 %v1175, %v1171
    %v1177 = vmul.f32 %v1176, 0.016666668
    %v1178 = vadd.f32 %v924, %v1177
    %1179 = vst.msk [vmem:[#allocation2 + $0x6] sm:$0x3] %vm416, %v1178
    %1180 = vst.msk [vmem:[#allocation3] sm:$0x3] %vm416, %v1178
    %v1181 = vld [vmem:[#allocation2] sm:$0xff]
    %v1182 = vpack.c.bf16 %v1181, %v1181
    %v1183 = vld [vmem:[%s6] sm:$0xf]
    %v1184 = vld [vmem:[%s6 + $0x4] sm:$0xf]
    %v1185 = vld [vmem:[%s6 + $0x8] sm:$0xf]
    %v1186 = vld [vmem:[%s6 + $0xc] sm:$0xf]
    %v1187 = vld [vmem:[%s6 + $0x10] sm:$0xf]
    %v1188 = vld [vmem:[%s6 + $0x14] sm:$0xf]
    %v1189 = vld [vmem:[%s6 + $0x18] sm:$0xf]
    %v1190 = vld [vmem:[%s6 + $0x1c] sm:$0xf]
    %v1191 = vld [vmem:[%s7] sm:$0x1]
    %v1193 = vlaneseq
    %v1194 = vshrl.u32 %v1193, 7
    %v1195 = vsub.s32 0, %v1194
    %v1196 = vrot.slane %v1191, %v1195
    %v1206 = vunpack.c.l.b16 %v1183
    %v1207 = vunpack.c.l.b16 %v1184
    %v1208 = vunpack.c.l.b16 %v1185
    %v1209 = vunpack.c.l.b16 %v1186
    %v1210 = vunpack.c.l.b16 %v1187
    %v1211 = vunpack.c.l.b16 %v1188
    %v1212 = vunpack.c.l.b16 %v1189
    %v1213 = vunpack.c.l.b16 %v1190
    %v1214 = vpack.c.b16 %v1207, %v1206
    %v1215 = vpack.c.b16 %v1209, %v1208
    %v1216 = vpack.c.b16 %v1211, %v1210
    %v1217 = vpack.c.b16 %v1213, %v1212
    %v1223 = vsel %vm181, %v1182, 0
    %1225 = vmatprep.subr.bf16.mxu0 0
    %1226 = vmatpush1.bf16.msra.mxu0 %v1214
    %1227 = vmatprep.subr.bf16.mxu0 0
    %1228 = vmatpush1.bf16.msra.mxu0 %v1215
    %1229 = vmatprep.subr.bf16.mxu0 0
    %1230 = vmatpush1.bf16.msra.mxu0 %v1216
    %1231 = vmatprep.subr.bf16.mxu0 0
    %1232 = vmatpush1.bf16.msra.mxu0 %v1217
    %1233 = vmatprep.subr.bf16.mxu0 0
    %1234 = vmatpush1.bf16.msra.mxu0 0
    %1235 = vmatprep.subr.bf16.mxu0 0
    %1236 = vmatpush1.bf16.msra.mxu0 0
    %1237 = vmatprep.subr.bf16.mxu0 0
    %1238 = vmatpush1.bf16.msra.mxu0 0
    %1239 = vmatprep.subr.bf16.mxu0 0
    %1240 = vmatpush1.bf16.msra.mxu0 0
    %1241 = vmatprep.subr.bf16.mxu0 0
    %1242 = vmatpush1.bf16.msra.mxu0 0
    %1243 = vmatprep.subr.bf16.mxu0 0
    %1244 = vmatpush1.bf16.msra.mxu0 0
    %1245 = vmatprep.subr.bf16.mxu0 0
    %1246 = vmatpush1.bf16.msra.mxu0 0
    %1247 = vmatprep.subr.bf16.mxu0 0
    %1248 = vmatpush1.bf16.msra.mxu0 0
    %1249 = vmatprep.subr.bf16.mxu0 0
    %1250 = vmatpush1.bf16.msra.mxu0 0
    %1251 = vmatprep.subr.bf16.mxu0 0
    %1252 = vmatpush1.bf16.msra.mxu0 0
    %1253 = vmatprep.subr.bf16.mxu0 0
    %1254 = vmatpush1.bf16.msra.mxu0 0
    %1255 = vmatprep.subr.bf16.mxu0 0
    %1256 = vmatpush1.bf16.msra.mxu0 0
    %1257 = vmatprep.mubr.bf16.mxu0 0
    %1258 = vmatmul.mubr.bf16.gmra.mrb[0].mxu0 %v1223
    %v1259 = vpop.f32.mrb[0].mxu0
    %v1260 = vadd.f32 %v1196, %v1259
    %v1261 = vpop.f32.mrb[0].mxu0
    %v1262 = vpop.f32.mrb[0].mxu0
    %v1263 = vpop.f32.mrb[0].mxu0
    %1264 = vdwg.mxu0
    %vm1265 = vcmask 48128
    %1266 = vst.msk [vmem:[%s8] sm:$0xff] %vm1265, %v1260
    // Predicated region
    $region34: #{conv3_wilson_cowan_random.3} parent=1 // pred_check
      _
    $region35: #{conv3_wilson_cowan_random.3} parent=1 // pred_check_branch
      %1268 = sbr.rel (0) target = $region37
    $region36: #{conv3_wilson_cowan_random.3} parent=1 // pred_region
      _
    $region37: #{conv3_wilson_cowan_random.3} parent=1 // pred_fallthru
      _
    // Predicated region
    $region38: #{conv3_wilson_cowan_random.3} parent=1 // pred_check
      _
    $region39: #{conv3_wilson_cowan_random.3} parent=1 // pred_check_branch
      %1270 = sbr.rel (0) target = $region41
    $region40: #{conv3_wilson_cowan_random.3} parent=1 // pred_region
      %s1272 = ssub.s32 32, 32
      %1273 = vsyncadd [#allocation4], %s1272
      %s1275 = sshll.u32 [#allocation3], 4
      %s1276 = int_to_ptr.vmem [resolvable:$true] %s1275
      %1278 = dma.vmem_to_hbm [thread:$0]  %s1276, 32, %s9, [#allocation4]
    $region41: #{conv3_wilson_cowan_random.3} parent=1 // pred_fallthru
      _
    // Predicated region
    $region42: #{conv3_wilson_cowan_random.3} parent=1 // pred_check
      _
    $region43: #{conv3_wilson_cowan_random.3} parent=1 // pred_check_branch
      %1280 = sbr.rel (0) target = $region45
    $region44: #{conv3_wilson_cowan_random.3} parent=1 // pred_region
      _
    $region45: #{conv3_wilson_cowan_random.3} parent=1 // pred_fallthru
      _
    // Predicated region
    $region46: #{conv3_wilson_cowan_random.3} parent=1 // pred_check
      _
    $region47: #{conv3_wilson_cowan_random.3} parent=1 // pred_check_branch
      %1282 = sbr.rel (0) target = $region49
    $region48: #{conv3_wilson_cowan_random.3} parent=1 // pred_region
      %1283 = dma.done [#allocation4], 32
    $region49: #{conv3_wilson_cowan_random.3} parent=1 // pred_fallthru
      _
    %1284 = vsyncpa [#allocation4], 1

// kernel: conv3_wilson_cowan_random.2
$region0: #{conv3_wilson_cowan_random.2}
  #allocation0 [shape = 'u32[]', space=smem, size = 0x4, offset = 0x4, fixed_abs, tag = 'smem constant byte address 0x4 - core index']
  #allocation1 [shape = 'u32[144,128]{1,0:T(1,128)}', space=vmem, size = 0x12000, scoped, tag = 'internal scratch']
  %s0 = inlined_call_operand.vmem [shape: f32[128,64], index: 0, kind: input, shape index: {}]
  %s1 = inlined_call_operand.vmem [shape: bf16[5,32,64], index: 1, kind: input, shape index: {}]
  %s2 = inlined_call_operand.vmem [shape: bf16[5,64,256], index: 2, kind: input, shape index: {}]
  %s3 = inlined_call_operand.vmem [shape: f32[1,256], index: 3, kind: input, shape index: {}]
  %s4 = inlined_call_operand.vmem [shape: bf16[3,16,32], index: 4, kind: input, shape index: {}, may-alias: {4,16}]
  %s5 = inlined_call_operand.vmem [shape: bf16[3,256,256], index: 5, kind: input, shape index: {}]
  %s6 = inlined_call_operand.vmem [shape: f32[1,256], index: 6, kind: input, shape index: {}]
  %s7 = inlined_call_operand.vmem [shape: bf16[3,8,16], index: 7, kind: input, shape index: {}, may-alias: {7,19}]
  %s8 = inlined_call_operand.vmem [shape: bf16[3,256,256], index: 8, kind: input, shape index: {}]
  %s9 = inlined_call_operand.vmem [shape: f32[1,256], index: 9, kind: input, shape index: {}]
  %s10 = inlined_call_operand.vmem [shape: bf16[3,64,64], index: 10, kind: input, shape index: {}]
  %s11 = inlined_call_operand.vmem [shape: bf16[3,64,256], index: 11, kind: input, shape index: {}]
  %s12 = inlined_call_operand.vmem [shape: f32[1,256], index: 12, kind: input, shape index: {}]
  %s13 = inlined_call_operand.vmem [shape: bf16[3,32,64], index: 13, kind: input, shape index: {}]
  %s14 = inlined_call_operand.vmem [shape: bf16[3,256,256], index: 14, kind: input, shape index: {}]
  %s15 = inlined_call_operand.vmem [shape: f32[1,256], index: 15, kind: input, shape index: {}]
  %s16 = inlined_call_operand.vmem [shape: bf16[3,16,32], index: 16, kind: input, shape index: {}, may-alias: {4,16}]
  %s17 = inlined_call_operand.vmem [shape: bf16[3,256,256], index: 17, kind: input, shape index: {}]
  %s18 = inlined_call_operand.vmem [shape: f32[1,256], index: 18, kind: input, shape index: {}]
  %s19 = inlined_call_operand.vmem [shape: bf16[3,8,16], index: 19, kind: input, shape index: {}, may-alias: {7,19}]
  %s20 = inlined_call_operand.vmem [shape: bf16[3,256,128], index: 20, kind: input, shape index: {}]
  %s21 = inlined_call_operand.vmem [shape: f32[1,128], index: 21, kind: input, shape index: {}]
  %s22 = inlined_call_operand.vmem [shape: bf16[4,8], index: 22, kind: input, shape index: {}]
  %s23 = inlined_call_operand.vmem [shape: bf16[256,128], index: 23, kind: input, shape index: {}]
  %s24 = inlined_call_operand.vmem [shape: bf16[128,128], index: 24, kind: input, shape index: {}]
  %s25 = inlined_call_operand.vmem [shape: f32[1,128], index: 25, kind: input, shape index: {}]
  %s26 = inlined_call_operand.vmem [shape: f32[1,128], index: 26, kind: input, shape index: {}]
  %s27 = inlined_call_operand.vmem [shape: f32[1,128], index: 27, kind: input, shape index: {}]
  %s28 = inlined_call_operand.vmem [shape: f32[2,4,128], index: 28, kind: output, shape index: {}]
  %s29 = sld [smem:[#allocation0]]
  $region145: #{conv3_wilson_cowan_random.2} parent=0
    _
  %s31 = ssub.s32 1, %s29
  %s32 = scalar_select 0, %s31, %s29
  loop: start=0, step=1, limit=4
  $region2: #{conv3_wilson_cowan_random.2} parent=0 // loop_pre_header
    _
  $region3: #{conv3_wilson_cowan_random.2} parent=0 // loop_header
    %s34 = sphi 0, %s38
    %p35 = scmp.ge.s32.totalorder %s34, 4
    %s44 = sphi 0, %s46
    %s47 = sphi 0, %s44
    %s48 = sphi 0, %s47
    %s64 = sphi 0, %s48
    %s68 = sphi 0, %s68
    %s70 = sphi 0, %s68
    %s71 = sphi 0, %s70
    %s85 = sphi 0, %s71
    %s89 = sphi 0, %s89
    %s91 = sphi 0, %s89
    %s92 = sphi 0, %s91
    %s106 = sphi 0, %s92
    %s110 = sphi 0, %s110
    %s112 = sphi 0, %s110
    %s113 = sphi 0, %s112
    %s127 = sphi 0, %s113
    %s131 = sphi 0, %s131
    %s133 = sphi 0, %s131
    %s134 = sphi 0, %s133
    %s148 = sphi 0, %s134
    %s152 = sphi 0, %s152
    %s154 = sphi 0, %s152
    %s155 = sphi 0, %s154
    %s169 = sphi 0, %s155
    %s173 = sphi 0, %s173
    %s175 = sphi 0, %s173
    %s176 = sphi 0, %s175
    %s190 = sphi 0, %s176
    %s194 = sphi 0, %s194
    %s196 = sphi 0, %s194
    %s197 = sphi 0, %s196
    %s211 = sphi 0, %s197
    %s215 = sphi 0, %s215
    %s217 = sphi 0, %s215
    %s218 = sphi 0, %s217
    %s232 = sphi 0, %s218
    %s236 = sphi 0, %s236
    %s238 = sphi 0, %s236
    %s239 = sphi 0, %s238
    %s253 = sphi 0, %s239
    %s257 = sphi 0, %s257
    %s259 = sphi 0, %s257
    %s260 = sphi 0, %s259
    %s274 = sphi 0, %s260
    %s278 = sphi 0, %s278
    %s280 = sphi 0, %s278
    %s281 = sphi 0, %s280
    %s295 = sphi 0, %s281
    %s299 = sphi 0, %s299
    %s301 = sphi 0, %s299
    %s302 = sphi 0, %s301
    %s316 = sphi 0, %s302
    %s320 = sphi 0, %s320
    %s322 = sphi 0, %s320
    %s323 = sphi 0, %s322
    %s337 = sphi 0, %s323
    %s341 = sphi 0, %s341
    %s343 = sphi 0, %s341
    %s344 = sphi 0, %s343
    %s358 = sphi 0, %s344
    %s362 = sphi 0, %s362
    %s364 = sphi 0, %s362
    %s365 = sphi 0, %s364
    %s379 = sphi 0, %s365
    %s383 = sphi 0, %s383
    %s385 = sphi 0, %s383
    %s386 = sphi 0, %s385
    %s400 = sphi 0, %s386
    %s404 = sphi 0, %s404
    %s406 = sphi 0, %s404
    %s407 = sphi 0, %s406
    %s421 = sphi 0, %s407
    %s425 = sphi 0, %s425
    %s427 = sphi 0, %s425
    %s428 = sphi 0, %s427
    %s442 = sphi 0, %s428
    %s446 = sphi 0, %s446
    %s448 = sphi 0, %s446
    %s449 = sphi 0, %s448
    %s463 = sphi 0, %s449
    %s467 = sphi 0, %s467
    %s469 = sphi 0, %s467
    %s470 = sphi 0, %s469
    %s484 = sphi 0, %s470
    %s488 = sphi 0, %s488
    %s490 = sphi 0, %s488
    %s491 = sphi 0, %s490
    %s505 = sphi 0, %s491
    %s509 = sphi 0, %s509
    %s511 = sphi 0, %s509
    %s512 = sphi 0, %s511
    %s526 = sphi 0, %s512
    %s530 = sphi 0, %s530
    %s532 = sphi 0, %s530
    %s533 = sphi 0, %s532
    %s547 = sphi 0, %s533
    %s551 = sphi 0, %s551
    %s553 = sphi 0, %s551
    %s554 = sphi 0, %s553
    %s568 = sphi 0, %s554
    %s572 = sphi 0, %s572
    %s574 = sphi 0, %s572
    %s575 = sphi 0, %s574
    %s589 = sphi 0, %s575
    %s593 = sphi 0, %s593
    %s595 = sphi 0, %s593
    %s596 = sphi 0, %s595
    %s610 = sphi 0, %s596
    %s614 = sphi 0, %s614
    %s616 = sphi 0, %s614
    %s617 = sphi 0, %s616
    %s631 = sphi 0, %s617
    %s637 = sphi 0, %s639
    %s640 = sphi 0, %s637
    %s641 = sphi 0, %s640
    %s657 = sphi 0, %s641
  $region4: #{conv3_wilson_cowan_random.2} parent=0 // loop_header_branch
    %37 = sbr.rel (%p35) target = $region8
  $region5: #{conv3_wilson_cowan_random.2} parent=0 // loop_body
    %s39 = ssub.s32 %s34, 1
    %s40 = ssub.s32 %s34, 2
    %s41 = sadd.s32 %s34, 1
    %s42 = ssub.s32 %s34, %s41
    %p43 = scmp.eq.s32.totalorder %s42, 0
    %s45 = sadd.s32 %s44, 1
    %s46 = scalar_select %p43, %s44, %s45
    %p49 = pneg %p43
    %p50 = scmp.eq.s32.totalorder %s34, 1
    %p51 = por %p49, %p50
    %p52 = scmp.ne.s32.totalorder %s44, %s47
    %p53 = scmp.eq.s32.totalorder %s34, 0
    %p54 = por %p52, %p53
    %p55 = scmp.ne.s32.totalorder %s44, %s47
    %p56 = scmp.eq.s32.totalorder %s39, 1
    %p57 = por %p55, %p56
    %p58 = scmp.ne.s32.totalorder %s47, %s48
    %p59 = scmp.eq.s32.totalorder %s39, 0
    %p60 = por %p58, %p59
    %p61 = scmp.ne.s32.totalorder %s47, %s48
    %p62 = scmp.eq.s32.totalorder %s40, 1
    %p63 = por %p61, %p62
    %p65 = scmp.ne.s32.totalorder %s48, %s64
    %p66 = scmp.eq.s32.totalorder %s40, 0
    %p67 = por %p65, %p66
    %s69 = sadd.s32 %s68, 1
    %p72 = scmp.eq.s32.totalorder %s34, 1
    %p73 = scmp.ne.s32.totalorder %s68, %s70
    %p74 = scmp.eq.s32.totalorder %s34, 0
    %p75 = por %p73, %p74
    %p76 = scmp.ne.s32.totalorder %s68, %s70
    %p77 = scmp.eq.s32.totalorder %s39, 1
    %p78 = por %p76, %p77
    %p79 = scmp.ne.s32.totalorder %s70, %s71
    %p80 = scmp.eq.s32.totalorder %s39, 0
    %p81 = por %p79, %p80
    %p82 = scmp.ne.s32.totalorder %s70, %s71
    %p83 = scmp.eq.s32.totalorder %s40, 1
    %p84 = por %p82, %p83
    %p86 = scmp.ne.s32.totalorder %s71, %s85
    %p87 = scmp.eq.s32.totalorder %s40, 0
    %p88 = por %p86, %p87
    %s90 = sadd.s32 %s89, 1
    %p93 = scmp.eq.s32.totalorder %s34, 1
    %p94 = scmp.ne.s32.totalorder %s89, %s91
    %p95 = scmp.eq.s32.totalorder %s34, 0
    %p96 = por %p94, %p95
    %p97 = scmp.ne.s32.totalorder %s89, %s91
    %p98 = scmp.eq.s32.totalorder %s39, 1
    %p99 = por %p97, %p98
    %p100 = scmp.ne.s32.totalorder %s91, %s92
    %p101 = scmp.eq.s32.totalorder %s39, 0
    %p102 = por %p100, %p101
    %p103 = scmp.ne.s32.totalorder %s91, %s92
    %p104 = scmp.eq.s32.totalorder %s40, 1
    %p105 = por %p103, %p104
    %p107 = scmp.ne.s32.totalorder %s92, %s106
    %p108 = scmp.eq.s32.totalorder %s40, 0
    %p109 = por %p107, %p108
    %s111 = sadd.s32 %s110, 1
    %p114 = scmp.eq.s32.totalorder %s34, 1
    %p115 = scmp.ne.s32.totalorder %s110, %s112
    %p116 = scmp.eq.s32.totalorder %s34, 0
    %p117 = por %p115, %p116
    %p118 = scmp.ne.s32.totalorder %s110, %s112
    %p119 = scmp.eq.s32.totalorder %s39, 1
    %p120 = por %p118, %p119
    %p121 = scmp.ne.s32.totalorder %s112, %s113
    %p122 = scmp.eq.s32.totalorder %s39, 0
    %p123 = por %p121, %p122
    %p124 = scmp.ne.s32.totalorder %s112, %s113
    %p125 = scmp.eq.s32.totalorder %s40, 1
    %p126 = por %p124, %p125
    %p128 = scmp.ne.s32.totalorder %s113, %s127
    %p129 = scmp.eq.s32.totalorder %s40, 0
    %p130 = por %p128, %p129
    %s132 = sadd.s32 %s131, 1
    %p135 = scmp.eq.s32.totalorder %s34, 1
    %p136 = scmp.ne.s32.totalorder %s131, %s133
    %p137 = scmp.eq.s32.totalorder %s34, 0
    %p138 = por %p136, %p137
    %p139 = scmp.ne.s32.totalorder %s131, %s133
    %p140 = scmp.eq.s32.totalorder %s39, 1
    %p141 = por %p139, %p140
    %p142 = scmp.ne.s32.totalorder %s133, %s134
    %p143 = scmp.eq.s32.totalorder %s39, 0
    %p144 = por %p142, %p143
    %p145 = scmp.ne.s32.totalorder %s133, %s134
    %p146 = scmp.eq.s32.totalorder %s40, 1
    %p147 = por %p145, %p146
    %p149 = scmp.ne.s32.totalorder %s134, %s148
    %p150 = scmp.eq.s32.totalorder %s40, 0
    %p151 = por %p149, %p150
    %s153 = sadd.s32 %s152, 1
    %p156 = scmp.eq.s32.totalorder %s34, 1
    %p157 = scmp.ne.s32.totalorder %s152, %s154
    %p158 = scmp.eq.s32.totalorder %s34, 0
    %p159 = por %p157, %p158
    %p160 = scmp.ne.s32.totalorder %s152, %s154
    %p161 = scmp.eq.s32.totalorder %s39, 1
    %p162 = por %p160, %p161
    %p163 = scmp.ne.s32.totalorder %s154, %s155
    %p164 = scmp.eq.s32.totalorder %s39, 0
    %p165 = por %p163, %p164
    %p166 = scmp.ne.s32.totalorder %s154, %s155
    %p167 = scmp.eq.s32.totalorder %s40, 1
    %p168 = por %p166, %p167
    %p170 = scmp.ne.s32.totalorder %s155, %s169
    %p171 = scmp.eq.s32.totalorder %s40, 0
    %p172 = por %p170, %p171
    %s174 = sadd.s32 %s173, 1
    %p177 = scmp.eq.s32.totalorder %s34, 1
    %p178 = scmp.ne.s32.totalorder %s173, %s175
    %p179 = scmp.eq.s32.totalorder %s34, 0
    %p180 = por %p178, %p179
    %p181 = scmp.ne.s32.totalorder %s173, %s175
    %p182 = scmp.eq.s32.totalorder %s39, 1
    %p183 = por %p181, %p182
    %p184 = scmp.ne.s32.totalorder %s175, %s176
    %p185 = scmp.eq.s32.totalorder %s39, 0
    %p186 = por %p184, %p185
    %p187 = scmp.ne.s32.totalorder %s175, %s176
    %p188 = scmp.eq.s32.totalorder %s40, 1
    %p189 = por %p187, %p188
    %p191 = scmp.ne.s32.totalorder %s176, %s190
    %p192 = scmp.eq.s32.totalorder %s40, 0
    %p193 = por %p191, %p192
    %s195 = sadd.s32 %s194, 1
    %p198 = scmp.eq.s32.totalorder %s34, 1
    %p199 = scmp.ne.s32.totalorder %s194, %s196
    %p200 = scmp.eq.s32.totalorder %s34, 0
    %p201 = por %p199, %p200
    %p202 = scmp.ne.s32.totalorder %s194, %s196
    %p203 = scmp.eq.s32.totalorder %s39, 1
    %p204 = por %p202, %p203
    %p205 = scmp.ne.s32.totalorder %s196, %s197
    %p206 = scmp.eq.s32.totalorder %s39, 0
    %p207 = por %p205, %p206
    %p208 = scmp.ne.s32.totalorder %s196, %s197
    %p209 = scmp.eq.s32.totalorder %s40, 1
    %p210 = por %p208, %p209
    %p212 = scmp.ne.s32.totalorder %s197, %s211
    %p213 = scmp.eq.s32.totalorder %s40, 0
    %p214 = por %p212, %p213
    %s216 = sadd.s32 %s215, 1
    %p219 = scmp.eq.s32.totalorder %s34, 1
    %p220 = scmp.ne.s32.totalorder %s215, %s217
    %p221 = scmp.eq.s32.totalorder %s34, 0
    %p222 = por %p220, %p221
    %p223 = scmp.ne.s32.totalorder %s215, %s217
    %p224 = scmp.eq.s32.totalorder %s39, 1
    %p225 = por %p223, %p224
    %p226 = scmp.ne.s32.totalorder %s217, %s218
    %p227 = scmp.eq.s32.totalorder %s39, 0
    %p228 = por %p226, %p227
    %p229 = scmp.ne.s32.totalorder %s217, %s218
    %p230 = scmp.eq.s32.totalorder %s40, 1
    %p231 = por %p229, %p230
    %p233 = scmp.ne.s32.totalorder %s218, %s232
    %p234 = scmp.eq.s32.totalorder %s40, 0
    %p235 = por %p233, %p234
    %s237 = sadd.s32 %s236, 1
    %p240 = scmp.eq.s32.totalorder %s34, 1
    %p241 = scmp.ne.s32.totalorder %s236, %s238
    %p242 = scmp.eq.s32.totalorder %s34, 0
    %p243 = por %p241, %p242
    %p244 = scmp.ne.s32.totalorder %s236, %s238
    %p245 = scmp.eq.s32.totalorder %s39, 1
    %p246 = por %p244, %p245
    %p247 = scmp.ne.s32.totalorder %s238, %s239
    %p248 = scmp.eq.s32.totalorder %s39, 0
    %p249 = por %p247, %p248
    %p250 = scmp.ne.s32.totalorder %s238, %s239
    %p251 = scmp.eq.s32.totalorder %s40, 1
    %p252 = por %p250, %p251
    %p254 = scmp.ne.s32.totalorder %s239, %s253
    %p255 = scmp.eq.s32.totalorder %s40, 0
    %p256 = por %p254, %p255
    %s258 = sadd.s32 %s257, 1
    %p261 = scmp.eq.s32.totalorder %s34, 1
    %p262 = scmp.ne.s32.totalorder %s257, %s259
    %p263 = scmp.eq.s32.totalorder %s34, 0
    %p264 = por %p262, %p263
    %p265 = scmp.ne.s32.totalorder %s257, %s259
    %p266 = scmp.eq.s32.totalorder %s39, 1
    %p267 = por %p265, %p266
    %p268 = scmp.ne.s32.totalorder %s259, %s260
    %p269 = scmp.eq.s32.totalorder %s39, 0
    %p270 = por %p268, %p269
    %p271 = scmp.ne.s32.totalorder %s259, %s260
    %p272 = scmp.eq.s32.totalorder %s40, 1
    %p273 = por %p271, %p272
    %p275 = scmp.ne.s32.totalorder %s260, %s274
    %p276 = scmp.eq.s32.totalorder %s40, 0
    %p277 = por %p275, %p276
    %s279 = sadd.s32 %s278, 1
    %p282 = scmp.eq.s32.totalorder %s34, 1
    %p283 = scmp.ne.s32.totalorder %s278, %s280
    %p284 = scmp.eq.s32.totalorder %s34, 0
    %p285 = por %p283, %p284
    %p286 = scmp.ne.s32.totalorder %s278, %s280
    %p287 = scmp.eq.s32.totalorder %s39, 1
    %p288 = por %p286, %p287
    %p289 = scmp.ne.s32.totalorder %s280, %s281
    %p290 = scmp.eq.s32.totalorder %s39, 0
    %p291 = por %p289, %p290
    %p292 = scmp.ne.s32.totalorder %s280, %s281
    %p293 = scmp.eq.s32.totalorder %s40, 1
    %p294 = por %p292, %p293
    %p296 = scmp.ne.s32.totalorder %s281, %s295
    %p297 = scmp.eq.s32.totalorder %s40, 0
    %p298 = por %p296, %p297
    %s300 = sadd.s32 %s299, 1
    %p303 = scmp.eq.s32.totalorder %s34, 1
    %p304 = scmp.ne.s32.totalorder %s299, %s301
    %p305 = scmp.eq.s32.totalorder %s34, 0
    %p306 = por %p304, %p305
    %p307 = scmp.ne.s32.totalorder %s299, %s301
    %p308 = scmp.eq.s32.totalorder %s39, 1
    %p309 = por %p307, %p308
    %p310 = scmp.ne.s32.totalorder %s301, %s302
    %p311 = scmp.eq.s32.totalorder %s39, 0
    %p312 = por %p310, %p311
    %p313 = scmp.ne.s32.totalorder %s301, %s302
    %p314 = scmp.eq.s32.totalorder %s40, 1
    %p315 = por %p313, %p314
    %p317 = scmp.ne.s32.totalorder %s302, %s316
    %p318 = scmp.eq.s32.totalorder %s40, 0
    %p319 = por %p317, %p318
    %s321 = sadd.s32 %s320, 1
    %p324 = scmp.eq.s32.totalorder %s34, 1
    %p325 = scmp.ne.s32.totalorder %s320, %s322
    %p326 = scmp.eq.s32.totalorder %s34, 0
    %p327 = por %p325, %p326
    %p328 = scmp.ne.s32.totalorder %s320, %s322
    %p329 = scmp.eq.s32.totalorder %s39, 1
    %p330 = por %p328, %p329
    %p331 = scmp.ne.s32.totalorder %s322, %s323
    %p332 = scmp.eq.s32.totalorder %s39, 0
    %p333 = por %p331, %p332
    %p334 = scmp.ne.s32.totalorder %s322, %s323
    %p335 = scmp.eq.s32.totalorder %s40, 1
    %p336 = por %p334, %p335
    %p338 = scmp.ne.s32.totalorder %s323, %s337
    %p339 = scmp.eq.s32.totalorder %s40, 0
    %p340 = por %p338, %p339
    %s342 = sadd.s32 %s341, 1
    %p345 = scmp.eq.s32.totalorder %s34, 1
    %p346 = scmp.ne.s32.totalorder %s341, %s343
    %p347 = scmp.eq.s32.totalorder %s34, 0
    %p348 = por %p346, %p347
    %p349 = scmp.ne.s32.totalorder %s341, %s343
    %p350 = scmp.eq.s32.totalorder %s39, 1
    %p351 = por %p349, %p350
    %p352 = scmp.ne.s32.totalorder %s343, %s344
    %p353 = scmp.eq.s32.totalorder %s39, 0
    %p354 = por %p352, %p353
    %p355 = scmp.ne.s32.totalorder %s343, %s344
    %p356 = scmp.eq.s32.totalorder %s40, 1
    %p357 = por %p355, %p356
    %p359 = scmp.ne.s32.totalorder %s344, %s358
    %p360 = scmp.eq.s32.totalorder %s40, 0
    %p361 = por %p359, %p360
    %s363 = sadd.s32 %s362, 1
    %p366 = scmp.eq.s32.totalorder %s34, 1
    %p367 = scmp.ne.s32.totalorder %s362, %s364
    %p368 = scmp.eq.s32.totalorder %s34, 0
    %p369 = por %p367, %p368
    %p370 = scmp.ne.s32.totalorder %s362, %s364
    %p371 = scmp.eq.s32.totalorder %s39, 1
    %p372 = por %p370, %p371
    %p373 = scmp.ne.s32.totalorder %s364, %s365
    %p374 = scmp.eq.s32.totalorder %s39, 0
    %p375 = por %p373, %p374
    %p376 = scmp.ne.s32.totalorder %s364, %s365
    %p377 = scmp.eq.s32.totalorder %s40, 1
    %p378 = por %p376, %p377
    %p380 = scmp.ne.s32.totalorder %s365, %s379
    %p381 = scmp.eq.s32.totalorder %s40, 0
    %p382 = por %p380, %p381
    %s384 = sadd.s32 %s383, 1
    %p387 = scmp.eq.s32.totalorder %s34, 1
    %p388 = scmp.ne.s32.totalorder %s383, %s385
    %p389 = scmp.eq.s32.totalorder %s34, 0
    %p390 = por %p388, %p389
    %p391 = scmp.ne.s32.totalorder %s383, %s385
    %p392 = scmp.eq.s32.totalorder %s39, 1
    %p393 = por %p391, %p392
    %p394 = scmp.ne.s32.totalorder %s385, %s386
    %p395 = scmp.eq.s32.totalorder %s39, 0
    %p396 = por %p394, %p395
    %p397 = scmp.ne.s32.totalorder %s385, %s386
    %p398 = scmp.eq.s32.totalorder %s40, 1
    %p399 = por %p397, %p398
    %p401 = scmp.ne.s32.totalorder %s386, %s400
    %p402 = scmp.eq.s32.totalorder %s40, 0
    %p403 = por %p401, %p402
    %s405 = sadd.s32 %s404, 1
    %p408 = scmp.eq.s32.totalorder %s34, 1
    %p409 = scmp.ne.s32.totalorder %s404, %s406
    %p410 = scmp.eq.s32.totalorder %s34, 0
    %p411 = por %p409, %p410
    %p412 = scmp.ne.s32.totalorder %s404, %s406
    %p413 = scmp.eq.s32.totalorder %s39, 1
    %p414 = por %p412, %p413
    %p415 = scmp.ne.s32.totalorder %s406, %s407
    %p416 = scmp.eq.s32.totalorder %s39, 0
    %p417 = por %p415, %p416
    %p418 = scmp.ne.s32.totalorder %s406, %s407
    %p419 = scmp.eq.s32.totalorder %s40, 1
    %p420 = por %p418, %p419
    %p422 = scmp.ne.s32.totalorder %s407, %s421
    %p423 = scmp.eq.s32.totalorder %s40, 0
    %p424 = por %p422, %p423
    %s426 = sadd.s32 %s425, 1
    %p429 = scmp.eq.s32.totalorder %s34, 1
    %p430 = scmp.ne.s32.totalorder %s425, %s427
    %p431 = scmp.eq.s32.totalorder %s34, 0
    %p432 = por %p430, %p431
    %p433 = scmp.ne.s32.totalorder %s425, %s427
    %p434 = scmp.eq.s32.totalorder %s39, 1
    %p435 = por %p433, %p434
    %p436 = scmp.ne.s32.totalorder %s427, %s428
    %p437 = scmp.eq.s32.totalorder %s39, 0
    %p438 = por %p436, %p437
    %p439 = scmp.ne.s32.totalorder %s427, %s428
    %p440 = scmp.eq.s32.totalorder %s40, 1
    %p441 = por %p439, %p440
    %p443 = scmp.ne.s32.totalorder %s428, %s442
    %p444 = scmp.eq.s32.totalorder %s40, 0
    %p445 = por %p443, %p444
    %s447 = sadd.s32 %s446, 1
    %p450 = scmp.eq.s32.totalorder %s34, 1
    %p451 = scmp.ne.s32.totalorder %s446, %s448
    %p452 = scmp.eq.s32.totalorder %s34, 0
    %p453 = por %p451, %p452
    %p454 = scmp.ne.s32.totalorder %s446, %s448
    %p455 = scmp.eq.s32.totalorder %s39, 1
    %p456 = por %p454, %p455
    %p457 = scmp.ne.s32.totalorder %s448, %s449
    %p458 = scmp.eq.s32.totalorder %s39, 0
    %p459 = por %p457, %p458
    %p460 = scmp.ne.s32.totalorder %s448, %s449
    %p461 = scmp.eq.s32.totalorder %s40, 1
    %p462 = por %p460, %p461
    %p464 = scmp.ne.s32.totalorder %s449, %s463
    %p465 = scmp.eq.s32.totalorder %s40, 0
    %p466 = por %p464, %p465
    %s468 = sadd.s32 %s467, 1
    %p471 = scmp.eq.s32.totalorder %s34, 1
    %p472 = scmp.ne.s32.totalorder %s467, %s469
    %p473 = scmp.eq.s32.totalorder %s34, 0
    %p474 = por %p472, %p473
    %p475 = scmp.ne.s32.totalorder %s467, %s469
    %p476 = scmp.eq.s32.totalorder %s39, 1
    %p477 = por %p475, %p476
    %p478 = scmp.ne.s32.totalorder %s469, %s470
    %p479 = scmp.eq.s32.totalorder %s39, 0
    %p480 = por %p478, %p479
    %p481 = scmp.ne.s32.totalorder %s469, %s470
    %p482 = scmp.eq.s32.totalorder %s40, 1
    %p483 = por %p481, %p482
    %p485 = scmp.ne.s32.totalorder %s470, %s484
    %p486 = scmp.eq.s32.totalorder %s40, 0
    %p487 = por %p485, %p486
    %s489 = sadd.s32 %s488, 1
    %p492 = scmp.eq.s32.totalorder %s34, 1
    %p493 = scmp.ne.s32.totalorder %s488, %s490
    %p494 = scmp.eq.s32.totalorder %s34, 0
    %p495 = por %p493, %p494
    %p496 = scmp.ne.s32.totalorder %s488, %s490
    %p497 = scmp.eq.s32.totalorder %s39, 1
    %p498 = por %p496, %p497
    %p499 = scmp.ne.s32.totalorder %s490, %s491
    %p500 = scmp.eq.s32.totalorder %s39, 0
    %p501 = por %p499, %p500
    %p502 = scmp.ne.s32.totalorder %s490, %s491
    %p503 = scmp.eq.s32.totalorder %s40, 1
    %p504 = por %p502, %p503
    %p506 = scmp.ne.s32.totalorder %s491, %s505
    %p507 = scmp.eq.s32.totalorder %s40, 0
    %p508 = por %p506, %p507
    %s510 = sadd.s32 %s509, 1
    %p513 = scmp.eq.s32.totalorder %s34, 1
    %p514 = scmp.ne.s32.totalorder %s509, %s511
    %p515 = scmp.eq.s32.totalorder %s34, 0
    %p516 = por %p514, %p515
    %p517 = scmp.ne.s32.totalorder %s509, %s511
    %p518 = scmp.eq.s32.totalorder %s39, 1
    %p519 = por %p517, %p518
    %p520 = scmp.ne.s32.totalorder %s511, %s512
    %p521 = scmp.eq.s32.totalorder %s39, 0
    %p522 = por %p520, %p521
    %p523 = scmp.ne.s32.totalorder %s511, %s512
    %p524 = scmp.eq.s32.totalorder %s40, 1
    %p525 = por %p523, %p524
    %p527 = scmp.ne.s32.totalorder %s512, %s526
    %p528 = scmp.eq.s32.totalorder %s40, 0
    %p529 = por %p527, %p528
    %s531 = sadd.s32 %s530, 1
    %p534 = scmp.eq.s32.totalorder %s34, 1
    %p535 = scmp.ne.s32.totalorder %s530, %s532
    %p536 = scmp.eq.s32.totalorder %s34, 0
    %p537 = por %p535, %p536
    %p538 = scmp.ne.s32.totalorder %s530, %s532
    %p539 = scmp.eq.s32.totalorder %s39, 1
    %p540 = por %p538, %p539
    %p541 = scmp.ne.s32.totalorder %s532, %s533
    %p542 = scmp.eq.s32.totalorder %s39, 0
    %p543 = por %p541, %p542
    %p544 = scmp.ne.s32.totalorder %s532, %s533
    %p545 = scmp.eq.s32.totalorder %s40, 1
    %p546 = por %p544, %p545
    %p548 = scmp.ne.s32.totalorder %s533, %s547
    %p549 = scmp.eq.s32.totalorder %s40, 0
    %p550 = por %p548, %p549
    %s552 = sadd.s32 %s551, 1
    %p555 = scmp.eq.s32.totalorder %s34, 1
    %p556 = scmp.ne.s32.totalorder %s551, %s553
    %p557 = scmp.eq.s32.totalorder %s34, 0
    %p558 = por %p556, %p557
    %p559 = scmp.ne.s32.totalorder %s551, %s553
    %p560 = scmp.eq.s32.totalorder %s39, 1
    %p561 = por %p559, %p560
    %p562 = scmp.ne.s32.totalorder %s553, %s554
    %p563 = scmp.eq.s32.totalorder %s39, 0
    %p564 = por %p562, %p563
    %p565 = scmp.ne.s32.totalorder %s553, %s554
    %p566 = scmp.eq.s32.totalorder %s40, 1
    %p567 = por %p565, %p566
    %p569 = scmp.ne.s32.totalorder %s554, %s568
    %p570 = scmp.eq.s32.totalorder %s40, 0
    %p571 = por %p569, %p570
    %s573 = sadd.s32 %s572, 1
    %p576 = scmp.eq.s32.totalorder %s34, 1
    %p577 = scmp.ne.s32.totalorder %s572, %s574
    %p578 = scmp.eq.s32.totalorder %s34, 0
    %p579 = por %p577, %p578
    %p580 = scmp.ne.s32.totalorder %s572, %s574
    %p581 = scmp.eq.s32.totalorder %s39, 1
    %p582 = por %p580, %p581
    %p583 = scmp.ne.s32.totalorder %s574, %s575
    %p584 = scmp.eq.s32.totalorder %s39, 0
    %p585 = por %p583, %p584
    %p586 = scmp.ne.s32.totalorder %s574, %s575
    %p587 = scmp.eq.s32.totalorder %s40, 1
    %p588 = por %p586, %p587
    %p590 = scmp.ne.s32.totalorder %s575, %s589
    %p591 = scmp.eq.s32.totalorder %s40, 0
    %p592 = por %p590, %p591
    %s594 = sadd.s32 %s593, 1
    %p597 = scmp.eq.s32.totalorder %s34, 1
    %p598 = scmp.ne.s32.totalorder %s593, %s595
    %p599 = scmp.eq.s32.totalorder %s34, 0
    %p600 = por %p598, %p599
    %p601 = scmp.ne.s32.totalorder %s593, %s595
    %p602 = scmp.eq.s32.totalorder %s39, 1
    %p603 = por %p601, %p602
    %p604 = scmp.ne.s32.totalorder %s595, %s596
    %p605 = scmp.eq.s32.totalorder %s39, 0
    %p606 = por %p604, %p605
    %p607 = scmp.ne.s32.totalorder %s595, %s596
    %p608 = scmp.eq.s32.totalorder %s40, 1
    %p609 = por %p607, %p608
    %p611 = scmp.ne.s32.totalorder %s596, %s610
    %p612 = scmp.eq.s32.totalorder %s40, 0
    %p613 = por %p611, %p612
    %s615 = sadd.s32 %s614, 1
    %p618 = scmp.eq.s32.totalorder %s34, 1
    %p619 = scmp.ne.s32.totalorder %s614, %s616
    %p620 = scmp.eq.s32.totalorder %s34, 0
    %p621 = por %p619, %p620
    %p622 = scmp.ne.s32.totalorder %s614, %s616
    %p623 = scmp.eq.s32.totalorder %s39, 1
    %p624 = por %p622, %p623
    %p625 = scmp.ne.s32.totalorder %s616, %s617
    %p626 = scmp.eq.s32.totalorder %s39, 0
    %p627 = por %p625, %p626
    %p628 = scmp.ne.s32.totalorder %s616, %s617
    %p629 = scmp.eq.s32.totalorder %s40, 1
    %p630 = por %p628, %p629
    %p632 = scmp.ne.s32.totalorder %s617, %s631
    %p633 = scmp.eq.s32.totalorder %s40, 0
    %p634 = por %p632, %p633
    %s635 = ssub.s32 %s34, %s41
    %p636 = scmp.eq.s32.totalorder %s635, 0
    %s638 = sadd.s32 %s637, 1
    %s639 = scalar_select %p636, %s637, %s638
    %p642 = pneg %p636
    %p643 = scmp.eq.s32.totalorder %s34, 1
    %p644 = por %p642, %p643
    %p645 = scmp.ne.s32.totalorder %s637, %s640
    %p646 = scmp.eq.s32.totalorder %s34, 0
    %p647 = por %p645, %p646
    %p648 = scmp.ne.s32.totalorder %s637, %s640
    %p649 = scmp.eq.s32.totalorder %s39, 1
    %p650 = por %p648, %p649
    %p651 = scmp.ne.s32.totalorder %s640, %s641
    %p652 = scmp.eq.s32.totalorder %s39, 0
    %p653 = por %p651, %p652
    %p654 = scmp.ne.s32.totalorder %s640, %s641
    %p655 = scmp.eq.s32.totalorder %s40, 1
    %p656 = por %p654, %p655
    %p658 = scmp.ne.s32.totalorder %s641, %s657
    %p659 = scmp.eq.s32.totalorder %s40, 0
    %p660 = por %p658, %p659
    %p661 = scmp.le.s32.totalorder 1, %s34
    %p662 = scmp.lt.s32.totalorder %s34, 3
    %p663 = pnand %p661, %p662
    %p664 = pneg %p663
    // Predicated region
    $region9: #{conv3_wilson_cowan_random.2} parent=5 // pred_check
      _
    $region10: #{conv3_wilson_cowan_random.2} parent=5 // pred_check_branch
      %666 = sbr.rel (%p663) target = $region12
    $region11: #{conv3_wilson_cowan_random.2} parent=5 // pred_region
      %s667 = ssub.s32 %s34, 1
      // Predicated region
      $region13: #{conv3_wilson_cowan_random.2} parent=11 // pred_check
        %p668 = pneg %p81
      $region14: #{conv3_wilson_cowan_random.2} parent=11 // pred_check_branch
        %670 = sbr.rel (%p668) target = $region16
      $region15: #{conv3_wilson_cowan_random.2} parent=11 // pred_region
        _
      $region16: #{conv3_wilson_cowan_random.2} parent=11 // pred_fallthru
        _
      // Predicated region
      $region17: #{conv3_wilson_cowan_random.2} parent=11 // pred_check
        %p671 = pneg %p102
      $region18: #{conv3_wilson_cowan_random.2} parent=11 // pred_check_branch
        %673 = sbr.rel (%p671) target = $region20
      $region19: #{conv3_wilson_cowan_random.2} parent=11 // pred_region
        _
      $region20: #{conv3_wilson_cowan_random.2} parent=11 // pred_fallthru
        _
      // Predicated region
      $region21: #{conv3_wilson_cowan_random.2} parent=11 // pred_check
        %p674 = pneg %p123
      $region22: #{conv3_wilson_cowan_random.2} parent=11 // pred_check_branch
        %676 = sbr.rel (%p674) target = $region24
      $region23: #{conv3_wilson_cowan_random.2} parent=11 // pred_region
        _
      $region24: #{conv3_wilson_cowan_random.2} parent=11 // pred_fallthru
        _
      // Predicated region
      $region25: #{conv3_wilson_cowan_random.2} parent=11 // pred_check
        %p677 = pneg %p144
      $region26: #{conv3_wilson_cowan_random.2} parent=11 // pred_check_branch
        %679 = sbr.rel (%p677) target = $region28
      $region27: #{conv3_wilson_cowan_random.2} parent=11 // pred_region
        _
      $region28: #{conv3_wilson_cowan_random.2} parent=11 // pred_fallthru
        _
      // Predicated region
      $region29: #{conv3_wilson_cowan_random.2} parent=11 // pred_check
        %p680 = pneg %p165
      $region30: #{conv3_wilson_cowan_random.2} parent=11 // pred_check_branch
        %682 = sbr.rel (%p680) target = $region32
      $region31: #{conv3_wilson_cowan_random.2} parent=11 // pred_region
        _
      $region32: #{conv3_wilson_cowan_random.2} parent=11 // pred_fallthru
        _
      // Predicated region
      $region33: #{conv3_wilson_cowan_random.2} parent=11 // pred_check
        %p683 = pneg %p186
      $region34: #{conv3_wilson_cowan_random.2} parent=11 // pred_check_branch
        %685 = sbr.rel (%p683) target = $region36
      $region35: #{conv3_wilson_cowan_random.2} parent=11 // pred_region
        _
      $region36: #{conv3_wilson_cowan_random.2} parent=11 // pred_fallthru
        _
      // Predicated region
      $region37: #{conv3_wilson_cowan_random.2} parent=11 // pred_check
        %p686 = pneg %p207
      $region38: #{conv3_wilson_cowan_random.2} parent=11 // pred_check_branch
        %688 = sbr.rel (%p686) target = $region40
      $region39: #{conv3_wilson_cowan_random.2} parent=11 // pred_region
        _
      $region40: #{conv3_wilson_cowan_random.2} parent=11 // pred_fallthru
        _
      // Predicated region
      $region41: #{conv3_wilson_cowan_random.2} parent=11 // pred_check
        %p689 = pneg %p228
      $region42: #{conv3_wilson_cowan_random.2} parent=11 // pred_check_branch
        %691 = sbr.rel (%p689) target = $region44
      $region43: #{conv3_wilson_cowan_random.2} parent=11 // pred_region
        _
      $region44: #{conv3_wilson_cowan_random.2} parent=11 // pred_fallthru
        _
      // Predicated region
      $region45: #{conv3_wilson_cowan_random.2} parent=11 // pred_check
        %p692 = pneg %p249
      $region46: #{conv3_wilson_cowan_random.2} parent=11 // pred_check_branch
        %694 = sbr.rel (%p692) target = $region48
      $region47: #{conv3_wilson_cowan_random.2} parent=11 // pred_region
        _
      $region48: #{conv3_wilson_cowan_random.2} parent=11 // pred_fallthru
        _
      // Predicated region
      $region49: #{conv3_wilson_cowan_random.2} parent=11 // pred_check
        %p695 = pneg %p270
      $region50: #{conv3_wilson_cowan_random.2} parent=11 // pred_check_branch
        %697 = sbr.rel (%p695) target = $region52
      $region51: #{conv3_wilson_cowan_random.2} parent=11 // pred_region
        _
      $region52: #{conv3_wilson_cowan_random.2} parent=11 // pred_fallthru
        _
      // Predicated region
      $region53: #{conv3_wilson_cowan_random.2} parent=11 // pred_check
        %p698 = pneg %p291
      $region54: #{conv3_wilson_cowan_random.2} parent=11 // pred_check_branch
        %700 = sbr.rel (%p698) target = $region56
      $region55: #{conv3_wilson_cowan_random.2} parent=11 // pred_region
        _
      $region56: #{conv3_wilson_cowan_random.2} parent=11 // pred_fallthru
        _
      // Predicated region
      $region57: #{conv3_wilson_cowan_random.2} parent=11 // pred_check
        %p701 = pneg %p312
      $region58: #{conv3_wilson_cowan_random.2} parent=11 // pred_check_branch
        %703 = sbr.rel (%p701) target = $region60
      $region59: #{conv3_wilson_cowan_random.2} parent=11 // pred_region
        _
      $region60: #{conv3_wilson_cowan_random.2} parent=11 // pred_fallthru
        _
      // Predicated region
      $region61: #{conv3_wilson_cowan_random.2} parent=11 // pred_check
        %p704 = pneg %p333
      $region62: #{conv3_wilson_cowan_random.2} parent=11 // pred_check_branch
        %706 = sbr.rel (%p704) target = $region64
      $region63: #{conv3_wilson_cowan_random.2} parent=11 // pred_region
        _
      $region64: #{conv3_wilson_cowan_random.2} parent=11 // pred_fallthru
        _
      // Predicated region
      $region65: #{conv3_wilson_cowan_random.2} parent=11 // pred_check
        %p707 = pneg %p354
      $region66: #{conv3_wilson_cowan_random.2} parent=11 // pred_check_branch
        %709 = sbr.rel (%p707) target = $region68
      $region67: #{conv3_wilson_cowan_random.2} parent=11 // pred_region
        _
      $region68: #{conv3_wilson_cowan_random.2} parent=11 // pred_fallthru
        _
      // Predicated region
      $region69: #{conv3_wilson_cowan_random.2} parent=11 // pred_check
        %p710 = pneg %p375
      $region70: #{conv3_wilson_cowan_random.2} parent=11 // pred_check_branch
        %712 = sbr.rel (%p710) target = $region72
      $region71: #{conv3_wilson_cowan_random.2} parent=11 // pred_region
        _
      $region72: #{conv3_wilson_cowan_random.2} parent=11 // pred_fallthru
        _
      // Predicated region
      $region73: #{conv3_wilson_cowan_random.2} parent=11 // pred_check
        %p713 = pneg %p396
      $region74: #{conv3_wilson_cowan_random.2} parent=11 // pred_check_branch
        %715 = sbr.rel (%p713) target = $region76
      $region75: #{conv3_wilson_cowan_random.2} parent=11 // pred_region
        _
      $region76: #{conv3_wilson_cowan_random.2} parent=11 // pred_fallthru
        _
      // Predicated region
      $region77: #{conv3_wilson_cowan_random.2} parent=11 // pred_check
        %p716 = pneg %p417
      $region78: #{conv3_wilson_cowan_random.2} parent=11 // pred_check_branch
        %718 = sbr.rel (%p716) target = $region80
      $region79: #{conv3_wilson_cowan_random.2} parent=11 // pred_region
        _
      $region80: #{conv3_wilson_cowan_random.2} parent=11 // pred_fallthru
        _
      // Predicated region
      $region81: #{conv3_wilson_cowan_random.2} parent=11 // pred_check
        %p719 = pneg %p438
      $region82: #{conv3_wilson_cowan_random.2} parent=11 // pred_check_branch
        %721 = sbr.rel (%p719) target = $region84
      $region83: #{conv3_wilson_cowan_random.2} parent=11 // pred_region
        _
      $region84: #{conv3_wilson_cowan_random.2} parent=11 // pred_fallthru
        _
      // Predicated region
      $region85: #{conv3_wilson_cowan_random.2} parent=11 // pred_check
        %p722 = pneg %p459
      $region86: #{conv3_wilson_cowan_random.2} parent=11 // pred_check_branch
        %724 = sbr.rel (%p722) target = $region88
      $region87: #{conv3_wilson_cowan_random.2} parent=11 // pred_region
        _
      $region88: #{conv3_wilson_cowan_random.2} parent=11 // pred_fallthru
        _
      // Predicated region
      $region89: #{conv3_wilson_cowan_random.2} parent=11 // pred_check
        %p725 = pneg %p480
      $region90: #{conv3_wilson_cowan_random.2} parent=11 // pred_check_branch
        %727 = sbr.rel (%p725) target = $region92
      $region91: #{conv3_wilson_cowan_random.2} parent=11 // pred_region
        _
      $region92: #{conv3_wilson_cowan_random.2} parent=11 // pred_fallthru
        _
      // Predicated region
      $region93: #{conv3_wilson_cowan_random.2} parent=11 // pred_check
        %p728 = pneg %p501
      $region94: #{conv3_wilson_cowan_random.2} parent=11 // pred_check_branch
        %730 = sbr.rel (%p728) target = $region96
      $region95: #{conv3_wilson_cowan_random.2} parent=11 // pred_region
        _
      $region96: #{conv3_wilson_cowan_random.2} parent=11 // pred_fallthru
        _
      // Predicated region
      $region97: #{conv3_wilson_cowan_random.2} parent=11 // pred_check
        %p731 = pneg %p522
      $region98: #{conv3_wilson_cowan_random.2} parent=11 // pred_check_branch
        %733 = sbr.rel (%p731) target = $region100
      $region99: #{conv3_wilson_cowan_random.2} parent=11 // pred_region
        _
      $region100: #{conv3_wilson_cowan_random.2} parent=11 // pred_fallthru
        _
      // Predicated region
      $region101: #{conv3_wilson_cowan_random.2} parent=11 // pred_check
        %p734 = pneg %p543
      $region102: #{conv3_wilson_cowan_random.2} parent=11 // pred_check_branch
        %736 = sbr.rel (%p734) target = $region104
      $region103: #{conv3_wilson_cowan_random.2} parent=11 // pred_region
        _
      $region104: #{conv3_wilson_cowan_random.2} parent=11 // pred_fallthru
        _
      // Predicated region
      $region105: #{conv3_wilson_cowan_random.2} parent=11 // pred_check
        %p737 = pneg %p564
      $region106: #{conv3_wilson_cowan_random.2} parent=11 // pred_check_branch
        %739 = sbr.rel (%p737) target = $region108
      $region107: #{conv3_wilson_cowan_random.2} parent=11 // pred_region
        _
      $region108: #{conv3_wilson_cowan_random.2} parent=11 // pred_fallthru
        _
      // Predicated region
      $region109: #{conv3_wilson_cowan_random.2} parent=11 // pred_check
        %p740 = pneg %p585
      $region110: #{conv3_wilson_cowan_random.2} parent=11 // pred_check_branch
        %742 = sbr.rel (%p740) target = $region112
      $region111: #{conv3_wilson_cowan_random.2} parent=11 // pred_region
        _
      $region112: #{conv3_wilson_cowan_random.2} parent=11 // pred_fallthru
        _
      // Predicated region
      $region113: #{conv3_wilson_cowan_random.2} parent=11 // pred_check
        %p743 = pneg %p606
      $region114: #{conv3_wilson_cowan_random.2} parent=11 // pred_check_branch
        %745 = sbr.rel (%p743) target = $region116
      $region115: #{conv3_wilson_cowan_random.2} parent=11 // pred_region
        _
      $region116: #{conv3_wilson_cowan_random.2} parent=11 // pred_fallthru
        _
      // Predicated region
      $region117: #{conv3_wilson_cowan_random.2} parent=11 // pred_check
        %p746 = pneg %p627
      $region118: #{conv3_wilson_cowan_random.2} parent=11 // pred_check_branch
        %748 = sbr.rel (%p746) target = $region120
      $region119: #{conv3_wilson_cowan_random.2} parent=11 // pred_region
        _
      $region120: #{conv3_wilson_cowan_random.2} parent=11 // pred_fallthru
        _
    $region12: #{conv3_wilson_cowan_random.2} parent=5 // pred_fallthru
      _
    %p749 = scmp.lt.s32.totalorder %s34, 2
    // Predicated region
    $region121: #{conv3_wilson_cowan_random.2} parent=5 // pred_check
      %p750 = pneg %p749
    $region122: #{conv3_wilson_cowan_random.2} parent=5 // pred_check_branch
      %752 = sbr.rel (%p750) target = $region124
    $region123: #{conv3_wilson_cowan_random.2} parent=5 // pred_region
      // Predicated region
      $region125: #{conv3_wilson_cowan_random.2} parent=123 // pred_check
        %p753 = pneg %p54
      $region126: #{conv3_wilson_cowan_random.2} parent=123 // pred_check_branch
        %755 = sbr.rel (%p753) target = $region128
      $region127: #{conv3_wilson_cowan_random.2} parent=123 // pred_region
        %s756 = smul.u32 8, %s34
        %p757 = scmp.lt.s32.totalorder %s756, 15
        %s758 = scalar_select %p757, %s756, 15
        %s759 = smul.addr %s758, 8
        %s760 = scalar_lea.vmem %s0, %s759
        %s761 = smul.u32 8, %s34
      $region128: #{conv3_wilson_cowan_random.2} parent=123 // pred_fallthru
        _
    $region124: #{conv3_wilson_cowan_random.2} parent=5 // pred_fallthru
      _
    %p762 = scmp.le.s32.totalorder 1, %s34
    %p763 = scmp.lt.s32.totalorder %s34, 3
    %p764 = pnand %p762, %p763
    %p765 = pneg %p764
    // Predicated region
    $region129: #{conv3_wilson_cowan_random.2} parent=5 // pred_check
      _
    $region130: #{conv3_wilson_cowan_random.2} parent=5 // pred_check_branch
      %767 = sbr.rel (%p764) target = $region132
    $region131: #{conv3_wilson_cowan_random.2} parent=5 // pred_region
      %s768 = ssub.s32 %s34, 1
      %s769 = smul.u32 8, %s39
      %p770 = scmp.lt.s32.totalorder %s769, 15
      %s771 = scalar_select %p770, %s769, 15
      %s772 = smul.addr %s771, 8
      %s773 = scalar_lea.vmem %s0, %s772
      %p774 = pneg %p60
      %p775 = pneg %p57
      %p776 = pneg %p81
      %p777 = pneg %p78
      %p778 = pneg %p102
      %p779 = pneg %p99
      %p780 = pneg %p123
      %p781 = pneg %p120
      %p782 = pneg %p144
      %p783 = pneg %p141
      %p784 = pneg %p165
      %p785 = pneg %p162
      %p786 = pneg %p186
      %p787 = pneg %p183
      %p788 = pneg %p207
      %p789 = pneg %p204
      %p790 = pneg %p228
      %p791 = pneg %p225
      %p792 = pneg %p249
      %p793 = pneg %p246
      %p794 = pneg %p270
      %p795 = pneg %p267
      %p796 = pneg %p291
      %p797 = pneg %p288
      %p798 = pneg %p312
      %p799 = pneg %p309
      %p800 = pneg %p333
      %p801 = pneg %p330
      %p802 = pneg %p354
      %p803 = pneg %p351
      %p804 = pneg %p375
      %p805 = pneg %p372
      %p806 = pneg %p396
      %p807 = pneg %p393
      %p808 = pneg %p417
      %p809 = pneg %p414
      %p810 = pneg %p438
      %p811 = pneg %p435
      %p812 = pneg %p459
      %p813 = pneg %p456
      %p814 = pneg %p480
      %p815 = pneg %p477
      %p816 = pneg %p501
      %p817 = pneg %p498
      %p818 = pneg %p522
      %p819 = pneg %p519
      %p820 = pneg %p543
      %p821 = pneg %p540
      %p822 = pneg %p564
      %p823 = pneg %p561
      %p824 = pneg %p585
      %p825 = pneg %p582
      %p826 = pneg %p606
      %p827 = pneg %p603
      %p828 = pneg %p627
      %p829 = pneg %p624
      %p830 = pneg %p653
      %p831 = pneg %p650
      %p832 = scmp.lt.s32.totalorder %s39, 1
      %s833 = scalar_select %p832, %s39, 1
      %s834 = smul.addr %s833, 4
      %s835 = scalar_lea.vmem %s28, %s834
      %s836 = smul.u32 8, %s39
      %p837 = scmp.lt.s32.totalorder %s836, 15
      %s838 = scalar_select %p837, %s836, 15
      %s839 = smul.addr %s838, 8
      %s840 = scalar_lea.vmem %s0, %s839
      %s841 = smul.u32 8, %s39
      %p842 = scmp.lt.s32.totalorder %s39, 1
      %s843 = scalar_select %p842, %s39, 1
      %s844 = smul.addr %s843, 4
      %s845 = scalar_lea.vmem %s28, %s844
      %v847 = vld [vmem:[%s840] sm:$0xff]
      %v848 = vld [vmem:[%s840 + $0x8] sm:$0xff]
      %v849 = vld [vmem:[%s840 + $0x10] sm:$0xff]
      %v850 = vld [vmem:[%s840 + $0x18] sm:$0xff]
      %v851 = vld [vmem:[%s840 + $0x20] sm:$0xff]
      %v852 = vld [vmem:[%s840 + $0x28] sm:$0xff]
      %v853 = vld [vmem:[%s840 + $0x30] sm:$0xff]
      %v854 = vld [vmem:[%s840 + $0x38] sm:$0xff]
      %v855 = vpack.c.bf16 %v848, %v847
      %v856 = vpack.c.bf16 %v850, %v849
      %v857 = vpack.c.bf16 %v852, %v851
      %v858 = vpack.c.bf16 %v854, %v853
      %v859 = vld [vmem:[%s1] sm:$0xf]
      %v860 = vld [vmem:[%s1 + $0x4] sm:$0xf]
      %v861 = vld [vmem:[%s1 + $0x8] sm:$0xf]
      %v862 = vld [vmem:[%s1 + $0xc] sm:$0xf]
      %v867 = vunpack.c.l.b16 %v859
      %v868 = vunpack.c.l.b16 %v860
      %v869 = vunpack.c.l.b16 %v861
      %v870 = vunpack.c.l.b16 %v862
      %v871 = vpack.c.b16 %v868, %v867
      %v872 = vpack.c.b16 %v870, %v869
      %vm873 = vcmask 523264
      %v875 = vsel %vm873, %v871, 0
      %v878 = vsel %vm873, %v872, 0
      %880 = vmatprep.subr.bf16.mxu0 0
      %881 = vmatpush1.bf16.msra.mxu0 %v855
      %882 = vmatprep.subr.bf16.mxu0 0
      %883 = vmatpush1.bf16.msra.mxu0 %v856
      %884 = vmatprep.subr.bf16.mxu0 0
      %885 = vmatpush1.bf16.msra.mxu0 %v857
      %886 = vmatprep.subr.bf16.mxu0 0
      %887 = vmatpush1.bf16.msra.mxu0 %v858
      %888 = vmatprep.subr.bf16.mxu0 0
      %889 = vmatpush1.bf16.msra.mxu0 0
      %890 = vmatprep.subr.bf16.mxu0 0
      %891 = vmatpush1.bf16.msra.mxu0 0
      %892 = vmatprep.subr.bf16.mxu0 0
      %893 = vmatpush1.bf16.msra.mxu0 0
      %894 = vmatprep.subr.bf16.mxu0 0
      %895 = vmatpush1.bf16.msra.mxu0 0
      %896 = vmatprep.subr.bf16.mxu0 0
      %897 = vmatpush1.bf16.msra.mxu0 0
      %898 = vmatprep.subr.bf16.mxu0 0
      %899 = vmatpush1.bf16.msra.mxu0 0
      %900 = vmatprep.subr.bf16.mxu0 0
      %901 = vmatpush1.bf16.msra.mxu0 0
      %902 = vmatprep.subr.bf16.mxu0 0
      %903 = vmatpush1.bf16.msra.mxu0 0
      %904 = vmatprep.subr.bf16.mxu0 0
      %905 = vmatpush1.bf16.msra.mxu0 0
      %906 = vmatprep.subr.bf16.mxu0 0
      %907 = vmatpush1.bf16.msra.mxu0 0
      %908 = vmatprep.subr.bf16.mxu0 0
      %909 = vmatpush1.bf16.msra.mxu0 0
      %910 = vmatprep.subr.bf16.mxu0 0
      %911 = vmatpush1.bf16.msra.mxu0 0
      %912 = vmatprep.mubr.bf16.mxu0 0
      %913 = vmatmul.mubr.bf16.gmra.mrb[0].mxu0 %v875
      %v914 = vpop.f32.mrb[0].mxu0
      %v915 = vadd.f32 0.0, %v914
      %v916 = vpop.f32.mrb[0].mxu0
      %v917 = vpop.f32.mrb[0].mxu0
      %v918 = vadd.f32 0.0, %v917
      %v919 = vpop.f32.mrb[0].mxu0
      %920 = vmatprep.mubr.bf16.mxu0 0
      %921 = vmatmul.mubr.bf16.gmra.mrb[0].mxu0 %v878
      %v922 = vpop.f32.mrb[0].mxu0
      %v923 = vadd.f32 0.0, %v922
      %v924 = vpop.f32.mrb[0].mxu0
      %v925 = vpop.f32.mrb[0].mxu0
      %v926 = vadd.f32 0.0, %v925
      %v927 = vpop.f32.mrb[0].mxu0
      %928 = vdwg.mxu0
      %v929 = vpack.c.bf16 %v918, %v915
      %v930 = vpack.c.bf16 %v926, %v923
      %v931 = vld [vmem:[%s2] sm:$0xff]
      %v932 = vld [vmem:[%s2 + $0x8] sm:$0xff]
      %v933 = vld [vmem:[%s2 + $0x10] sm:$0xff]
      %v934 = vld [vmem:[%s2 + $0x18] sm:$0xff]
      %v935 = vld [vmem:[%s2 + $0x20] sm:$0xff]
      %v936 = vld [vmem:[%s2 + $0x28] sm:$0xff]
      %v937 = vld [vmem:[%s2 + $0x30] sm:$0xff]
      %v938 = vld [vmem:[%s2 + $0x38] sm:$0xff]
      %s939 = scalar_lea.vmem %s1, 16
      %v940 = vld [vmem:[%s939] sm:$0xf]
      %v941 = vld [vmem:[%s939 + $0x4] sm:$0xf]
      %v942 = vld [vmem:[%s939 + $0x8] sm:$0xf]
      %v943 = vld [vmem:[%s939 + $0xc] sm:$0xf]
      %v948 = vunpack.c.l.b16 %v940
      %v949 = vunpack.c.l.b16 %v941
      %v950 = vunpack.c.l.b16 %v942
      %v951 = vunpack.c.l.b16 %v943
      %v952 = vpack.c.b16 %v949, %v948
      %v953 = vpack.c.b16 %v951, %v950
      %v955 = vsel %vm873, %v952, 0
      %v958 = vsel %vm873, %v953, 0
      %960 = vmatprep.subr.bf16.mxu0 0
      %961 = vmatpush1.bf16.msra.mxu0 %v855
      %962 = vmatprep.subr.bf16.mxu0 0
      %963 = vmatpush1.bf16.msra.mxu0 %v856
      %964 = vmatprep.subr.bf16.mxu0 0
      %965 = vmatpush1.bf16.msra.mxu0 %v857
      %966 = vmatprep.subr.bf16.mxu0 0
      %967 = vmatpush1.bf16.msra.mxu0 %v858
      %968 = vmatprep.subr.bf16.mxu0 0
      %969 = vmatpush1.bf16.msra.mxu0 0
      %970 = vmatprep.subr.bf16.mxu0 0
      %971 = vmatpush1.bf16.msra.mxu0 0
      %972 = vmatprep.subr.bf16.mxu0 0
      %973 = vmatpush1.bf16.msra.mxu0 0
      %974 = vmatprep.subr.bf16.mxu0 0
      %975 = vmatpush1.bf16.msra.mxu0 0
      %976 = vmatprep.subr.bf16.mxu0 0
      %977 = vmatpush1.bf16.msra.mxu0 0
      %978 = vmatprep.subr.bf16.mxu0 0
      %979 = vmatpush1.bf16.msra.mxu0 0
      %980 = vmatprep.subr.bf16.mxu0 0
      %981 = vmatpush1.bf16.msra.mxu0 0
      %982 = vmatprep.subr.bf16.mxu0 0
      %983 = vmatpush1.bf16.msra.mxu0 0
      %984 = vmatprep.subr.bf16.mxu0 0
      %985 = vmatpush1.bf16.msra.mxu0 0
      %986 = vmatprep.subr.bf16.mxu0 0
      %987 = vmatpush1.bf16.msra.mxu0 0
      %988 = vmatprep.subr.bf16.mxu0 0
      %989 = vmatpush1.bf16.msra.mxu0 0
      %990 = vmatprep.subr.bf16.mxu0 0
      %991 = vmatpush1.bf16.msra.mxu0 0
      %992 = vmatprep.mubr.bf16.mxu0 0
      %993 = vmatmul.mubr.bf16.gmra.mrb[0].mxu0 %v955
      %v994 = vpop.f32.mrb[0].mxu0
      %v995 = vadd.f32 0.0, %v994
      %v996 = vpop.f32.mrb[0].mxu0
      %v997 = vpop.f32.mrb[0].mxu0
      %v998 = vadd.f32 0.0, %v997
      %v999 = vpop.f32.mrb[0].mxu0
      %1000 = vmatprep.mubr.bf16.mxu0 0
      %1001 = vmatmul.mubr.bf16.gmra.mrb[0].mxu0 %v958
      %v1002 = vpop.f32.mrb[0].mxu0
      %v1003 = vadd.f32 0.0, %v1002
      %v1004 = vpop.f32.mrb[0].mxu0
      %v1005 = vpop.f32.mrb[0].mxu0
      %v1006 = vadd.f32 0.0, %v1005
      %v1007 = vpop.f32.mrb[0].mxu0
      %1008 = vdwg.mxu0
      %v1009 = vpack.c.bf16 %v998, %v995
      %v1010 = vpack.c.bf16 %v1006, %v1003
      %s1011 = scalar_lea.vmem %s2, 64
      %v1012 = vld [vmem:[%s1011] sm:$0xff]
      %v1013 = vld [vmem:[%s1011 + $0x8] sm:$0xff]
      %v1014 = vld [vmem:[%s1011 + $0x10] sm:$0xff]
      %v1015 = vld [vmem:[%s1011 + $0x18] sm:$0xff]
      %v1016 = vld [vmem:[%s1011 + $0x20] sm:$0xff]
      %v1017 = vld [vmem:[%s1011 + $0x28] sm:$0xff]
      %v1018 = vld [vmem:[%s1011 + $0x30] sm:$0xff]
      %v1019 = vld [vmem:[%s1011 + $0x38] sm:$0xff]
      %v1028 = vunpack.c.l.b16 %v1012
      %v1029 = vunpack.c.h.b16 %v1012
      %v1030 = vunpack.c.l.b16 %v1013
      %v1031 = vunpack.c.h.b16 %v1013
      %v1032 = vunpack.c.l.b16 %v1014
      %v1033 = vunpack.c.h.b16 %v1014
      %v1034 = vunpack.c.l.b16 %v1015
      %v1035 = vunpack.c.h.b16 %v1015
      %v1036 = vunpack.c.l.b16 %v1016
      %v1037 = vunpack.c.h.b16 %v1016
      %v1038 = vunpack.c.l.b16 %v1017
      %v1039 = vunpack.c.h.b16 %v1017
      %v1040 = vunpack.c.l.b16 %v1018
      %v1041 = vunpack.c.h.b16 %v1018
      %v1042 = vunpack.c.l.b16 %v1019
      %v1043 = vunpack.c.h.b16 %v1019
      %v1044 = vpack.c.b16 %v1030, %v1028
      %v1045 = vpack.c.b16 %v1031, %v1029
      %v1046 = vpack.c.b16 %v1034, %v1032
      %v1047 = vpack.c.b16 %v1035, %v1033
      %v1048 = vpack.c.b16 %v1038, %v1036
      %v1049 = vpack.c.b16 %v1039, %v1037
      %v1050 = vpack.c.b16 %v1042, %v1040
      %v1051 = vpack.c.b16 %v1043, %v1041
      %v1061 = vsel %vm873, %v1009, 0
      %v1064 = vsel %vm873, %v1010, 0
      %1066 = vmatprep.subr.bf16.mxu0 %v1045
      %1067 = vmatpush1.bf16.msra.mxu0 %v1044
      %1068 = vmatprep.subr.bf16.mxu0 %v1047
      %1069 = vmatpush1.bf16.msra.mxu0 %v1046
      %1070 = vmatprep.subr.bf16.mxu0 %v1049
      %1071 = vmatpush1.bf16.msra.mxu0 %v1048
      %1072 = vmatprep.subr.bf16.mxu0 %v1051
      %1073 = vmatpush1.bf16.msra.mxu0 %v1050
      %1074 = vmatprep.subr.bf16.mxu0 0
      %1075 = vmatpush1.bf16.msra.mxu0 0
      %1076 = vmatprep.subr.bf16.mxu0 0
      %1077 = vmatpush1.bf16.msra.mxu0 0
      %1078 = vmatprep.subr.bf16.mxu0 0
      %1079 = vmatpush1.bf16.msra.mxu0 0
      %1080 = vmatprep.subr.bf16.mxu0 0
      %1081 = vmatpush1.bf16.msra.mxu0 0
      %1082 = vmatprep.subr.bf16.mxu0 0
      %1083 = vmatpush1.bf16.msra.mxu0 0
      %1084 = vmatprep.subr.bf16.mxu0 0
      %1085 = vmatpush1.bf16.msra.mxu0 0
      %1086 = vmatprep.subr.bf16.mxu0 0
      %1087 = vmatpush1.bf16.msra.mxu0 0
      %1088 = vmatprep.subr.bf16.mxu0 0
      %1089 = vmatpush1.bf16.msra.mxu0 0
      %1090 = vmatprep.subr.bf16.mxu0 0
      %1091 = vmatpush1.bf16.msra.mxu0 0
      %1092 = vmatprep.subr.bf16.mxu0 0
      %1093 = vmatpush1.bf16.msra.mxu0 0
      %1094 = vmatprep.subr.bf16.mxu0 0
      %1095 = vmatpush1.bf16.msra.mxu0 0
      %1096 = vmatprep.subr.bf16.mxu0 0
      %1097 = vmatpush1.bf16.msra.mxu0 0
      %1098 = vmatprep.mubr.bf16.mxu0 0
      %1099 = vmatmul.mubr.bf16.gmra.mrb[0].mxu0 %v1061
      %v1100 = vpop.f32.mrb[0].mxu0
      %v1101 = vadd.f32 0.0, %v1100
      %v1102 = vpop.f32.mrb[0].mxu0
      %v1103 = vadd.f32 0.0, %v1102
      %v1104 = vpop.f32.mrb[0].mxu0
      %v1105 = vadd.f32 0.0, %v1104
      %v1106 = vpop.f32.mrb[0].mxu0
      %v1107 = vadd.f32 0.0, %v1106
      %1108 = vmatprep.mubr.bf16.mxu0 0
      %1109 = vmatmul.mubr.bf16.gmra.mrb[0].mxu0 %v1064
      %v1110 = vpop.f32.mrb[0].mxu0
      %v1111 = vadd.f32 0.0, %v1110
      %v1112 = vpop.f32.mrb[0].mxu0
      %v1113 = vadd.f32 0.0, %v1112
      %v1114 = vpop.f32.mrb[0].mxu0
      %v1115 = vadd.f32 0.0, %v1114
      %v1116 = vpop.f32.mrb[0].mxu0
      %v1117 = vadd.f32 0.0, %v1116
      %1118 = vdwg.mxu0
      %v1127 = vunpack.c.l.b16 %v931
      %v1128 = vunpack.c.h.b16 %v931
      %v1129 = vunpack.c.l.b16 %v932
      %v1130 = vunpack.c.h.b16 %v932
      %v1131 = vunpack.c.l.b16 %v933
      %v1132 = vunpack.c.h.b16 %v933
      %v1133 = vunpack.c.l.b16 %v934
      %v1134 = vunpack.c.h.b16 %v934
      %v1135 = vunpack.c.l.b16 %v935
      %v1136 = vunpack.c.h.b16 %v935
      %v1137 = vunpack.c.l.b16 %v936
      %v1138 = vunpack.c.h.b16 %v936
      %v1139 = vunpack.c.l.b16 %v937
      %v1140 = vunpack.c.h.b16 %v937
      %v1141 = vunpack.c.l.b16 %v938
      %v1142 = vunpack.c.h.b16 %v938
      %v1143 = vpack.c.b16 %v1129, %v1127
      %v1144 = vpack.c.b16 %v1130, %v1128
      %v1145 = vpack.c.b16 %v1133, %v1131
      %v1146 = vpack.c.b16 %v1134, %v1132
      %v1147 = vpack.c.b16 %v1137, %v1135
      %v1148 = vpack.c.b16 %v1138, %v1136
      %v1149 = vpack.c.b16 %v1141, %v1139
      %v1150 = vpack.c.b16 %v1142, %v1140
      %v1160 = vsel %vm873, %v929, 0
      %v1163 = vsel %vm873, %v930, 0
      %1165 = vmatprep.subr.bf16.mxu0 %v1144
      %1166 = vmatpush1.bf16.msra.mxu0 %v1143
      %1167 = vmatprep.subr.bf16.mxu0 %v1146
      %1168 = vmatpush1.bf16.msra.mxu0 %v1145
      %1169 = vmatprep.subr.bf16.mxu0 %v1148
      %1170 = vmatpush1.bf16.msra.mxu0 %v1147
      %1171 = vmatprep.subr.bf16.mxu0 %v1150
      %1172 = vmatpush1.bf16.msra.mxu0 %v1149
      %1173 = vmatprep.subr.bf16.mxu0 0
      %1174 = vmatpush1.bf16.msra.mxu0 0
      %1175 = vmatprep.subr.bf16.mxu0 0
      %1176 = vmatpush1.bf16.msra.mxu0 0
      %1177 = vmatprep.subr.bf16.mxu0 0
      %1178 = vmatpush1.bf16.msra.mxu0 0
      %1179 = vmatprep.subr.bf16.mxu0 0
      %1180 = vmatpush1.bf16.msra.mxu0 0
      %1181 = vmatprep.subr.bf16.mxu0 0
      %1182 = vmatpush1.bf16.msra.mxu0 0
      %1183 = vmatprep.subr.bf16.mxu0 0
      %1184 = vmatpush1.bf16.msra.mxu0 0
      %1185 = vmatprep.subr.bf16.mxu0 0
      %1186 = vmatpush1.bf16.msra.mxu0 0
      %1187 = vmatprep.subr.bf16.mxu0 0
      %1188 = vmatpush1.bf16.msra.mxu0 0
      %1189 = vmatprep.subr.bf16.mxu0 0
      %1190 = vmatpush1.bf16.msra.mxu0 0
      %1191 = vmatprep.subr.bf16.mxu0 0
      %1192 = vmatpush1.bf16.msra.mxu0 0
      %1193 = vmatprep.subr.bf16.mxu0 0
      %1194 = vmatpush1.bf16.msra.mxu0 0
      %1195 = vmatprep.subr.bf16.mxu0 0
      %1196 = vmatpush1.bf16.msra.mxu0 0
      %1197 = vmatprep.mubr.bf16.mxu0 0
      %1198 = vmatmul.mubr.bf16.gmra.mrb[0].mxu0 %v1160
      %v1199 = vpop.f32.mrb[0].mxu0
      %v1200 = vadd.f32 %v1101, %v1199
      %v1201 = vpop.f32.mrb[0].mxu0
      %v1202 = vadd.f32 %v1103, %v1201
      %v1203 = vpop.f32.mrb[0].mxu0
      %v1204 = vadd.f32 %v1105, %v1203
      %v1205 = vpop.f32.mrb[0].mxu0
      %v1206 = vadd.f32 %v1107, %v1205
      %1207 = vmatprep.mubr.bf16.mxu0 0
      %1208 = vmatmul.mubr.bf16.gmra.mrb[0].mxu0 %v1163
      %v1209 = vpop.f32.mrb[0].mxu0
      %v1210 = vadd.f32 %v1111, %v1209
      %v1211 = vpop.f32.mrb[0].mxu0
      %v1212 = vadd.f32 %v1113, %v1211
      %v1213 = vpop.f32.mrb[0].mxu0
      %v1214 = vadd.f32 %v1115, %v1213
      %v1215 = vpop.f32.mrb[0].mxu0
      %v1216 = vadd.f32 %v1117, %v1215
      %1217 = vdwg.mxu0
      %s1218 = scalar_lea.vmem %s1, 32
      %v1219 = vld [vmem:[%s1218] sm:$0xf]
      %v1220 = vld [vmem:[%s1218 + $0x4] sm:$0xf]
      %v1221 = vld [vmem:[%s1218 + $0x8] sm:$0xf]
      %v1222 = vld [vmem:[%s1218 + $0xc] sm:$0xf]
      %v1227 = vunpack.c.l.b16 %v1219
      %v1228 = vunpack.c.l.b16 %v1220
      %v1229 = vunpack.c.l.b16 %v1221
      %v1230 = vunpack.c.l.b16 %v1222
      %v1231 = vpack.c.b16 %v1228, %v1227
      %v1232 = vpack.c.b16 %v1230, %v1229
      %v1234 = vsel %vm873, %v1231, 0
      %v1237 = vsel %vm873, %v1232, 0
      %1239 = vmatprep.subr.bf16.mxu0 0
      %1240 = vmatpush1.bf16.msra.mxu0 %v855
      %1241 = vmatprep.subr.bf16.mxu0 0
      %1242 = vmatpush1.bf16.msra.mxu0 %v856
      %1243 = vmatprep.subr.bf16.mxu0 0
      %1244 = vmatpush1.bf16.msra.mxu0 %v857
      %1245 = vmatprep.subr.bf16.mxu0 0
      %1246 = vmatpush1.bf16.msra.mxu0 %v858
      %1247 = vmatprep.subr.bf16.mxu0 0
      %1248 = vmatpush1.bf16.msra.mxu0 0
      %1249 = vmatprep.subr.bf16.mxu0 0
      %1250 = vmatpush1.bf16.msra.mxu0 0
      %1251 = vmatprep.subr.bf16.mxu0 0
      %1252 = vmatpush1.bf16.msra.mxu0 0
      %1253 = vmatprep.subr.bf16.mxu0 0
      %1254 = vmatpush1.bf16.msra.mxu0 0
      %1255 = vmatprep.subr.bf16.mxu0 0
      %1256 = vmatpush1.bf16.msra.mxu0 0
      %1257 = vmatprep.subr.bf16.mxu0 0
      %1258 = vmatpush1.bf16.msra.mxu0 0
      %1259 = vmatprep.subr.bf16.mxu0 0
      %1260 = vmatpush1.bf16.msra.mxu0 0
      %1261 = vmatprep.subr.bf16.mxu0 0
      %1262 = vmatpush1.bf16.msra.mxu0 0
      %1263 = vmatprep.subr.bf16.mxu0 0
      %1264 = vmatpush1.bf16.msra.mxu0 0
      %1265 = vmatprep.subr.bf16.mxu0 0
      %1266 = vmatpush1.bf16.msra.mxu0 0
      %1267 = vmatprep.subr.bf16.mxu0 0
      %1268 = vmatpush1.bf16.msra.mxu0 0
      %1269 = vmatprep.subr.bf16.mxu0 0
      %1270 = vmatpush1.bf16.msra.mxu0 0
      %1271 = vmatprep.mubr.bf16.mxu0 0
      %1272 = vmatmul.mubr.bf16.gmra.mrb[0].mxu0 %v1234
      %v1273 = vpop.f32.mrb[0].mxu0
      %v1274 = vadd.f32 0.0, %v1273
      %v1275 = vpop.f32.mrb[0].mxu0
      %v1276 = vpop.f32.mrb[0].mxu0
      %v1277 = vadd.f32 0.0, %v1276
      %v1278 = vpop.f32.mrb[0].mxu0
      %1279 = vmatprep.mubr.bf16.mxu0 0
      %1280 = vmatmul.mubr.bf16.gmra.mrb[0].mxu0 %v1237
      %v1281 = vpop.f32.mrb[0].mxu0
      %v1282 = vadd.f32 0.0, %v1281
      %v1283 = vpop.f32.mrb[0].mxu0
      %v1284 = vpop.f32.mrb[0].mxu0
      %v1285 = vadd.f32 0.0, %v1284
      %v1286 = vpop.f32.mrb[0].mxu0
      %1287 = vdwg.mxu0
      %v1288 = vpack.c.bf16 %v1277, %v1274
      %v1289 = vpack.c.bf16 %v1285, %v1282
      %s1290 = scalar_lea.vmem %s2, 128
      %v1291 = vld [vmem:[%s1290] sm:$0xff]
      %v1292 = vld [vmem:[%s1290 + $0x8] sm:$0xff]
      %v1293 = vld [vmem:[%s1290 + $0x10] sm:$0xff]
      %v1294 = vld [vmem:[%s1290 + $0x18] sm:$0xff]
      %v1295 = vld [vmem:[%s1290 + $0x20] sm:$0xff]
      %v1296 = vld [vmem:[%s1290 + $0x28] sm:$0xff]
      %v1297 = vld [vmem:[%s1290 + $0x30] sm:$0xff]
      %v1298 = vld [vmem:[%s1290 + $0x38] sm:$0xff]
      %v1307 = vunpack.c.l.b16 %v1291
      %v1308 = vunpack.c.h.b16 %v1291
      %v1309 = vunpack.c.l.b16 %v1292
      %v1310 = vunpack.c.h.b16 %v1292
      %v1311 = vunpack.c.l.b16 %v1293
      %v1312 = vunpack.c.h.b16 %v1293
      %v1313 = vunpack.c.l.b16 %v1294
      %v1314 = vunpack.c.h.b16 %v1294
      %v1315 = vunpack.c.l.b16 %v1295
      %v1316 = vunpack.c.h.b16 %v1295
      %v1317 = vunpack.c.l.b16 %v1296
      %v1318 = vunpack.c.h.b16 %v1296
      %v1319 = vunpack.c.l.b16 %v1297
      %v1320 = vunpack.c.h.b16 %v1297
      %v1321 = vunpack.c.l.b16 %v1298
      %v1322 = vunpack.c.h.b16 %v1298
      %v1323 = vpack.c.b16 %v1309, %v1307
      %v1324 = vpack.c.b16 %v1310, %v1308
      %v1325 = vpack.c.b16 %v1313, %v1311
      %v1326 = vpack.c.b16 %v1314, %v1312
      %v1327 = vpack.c.b16 %v1317, %v1315
      %v1328 = vpack.c.b16 %v1318, %v1316
      %v1329 = vpack.c.b16 %v1321, %v1319
      %v1330 = vpack.c.b16 %v1322, %v1320
      %v1340 = vsel %vm873, %v1288, 0
      %v1343 = vsel %vm873, %v1289, 0
      %1345 = vmatprep.subr.bf16.mxu0 %v1324
      %1346 = vmatpush1.bf16.msra.mxu0 %v1323
      %1347 = vmatprep.subr.bf16.mxu0 %v1326
      %1348 = vmatpush1.bf16.msra.mxu0 %v1325
      %1349 = vmatprep.subr.bf16.mxu0 %v1328
      %1350 = vmatpush1.bf16.msra.mxu0 %v1327
      %1351 = vmatprep.subr.bf16.mxu0 %v1330
      %1352 = vmatpush1.bf16.msra.mxu0 %v1329
      %1353 = vmatprep.subr.bf16.mxu0 0
      %1354 = vmatpush1.bf16.msra.mxu0 0
      %1355 = vmatprep.subr.bf16.mxu0 0
      %1356 = vmatpush1.bf16.msra.mxu0 0
      %1357 = vmatprep.subr.bf16.mxu0 0
      %1358 = vmatpush1.bf16.msra.mxu0 0
      %1359 = vmatprep.subr.bf16.mxu0 0
      %1360 = vmatpush1.bf16.msra.mxu0 0
      %1361 = vmatprep.subr.bf16.mxu0 0
      %1362 = vmatpush1.bf16.msra.mxu0 0
      %1363 = vmatprep.subr.bf16.mxu0 0
      %1364 = vmatpush1.bf16.msra.mxu0 0
      %1365 = vmatprep.subr.bf16.mxu0 0
      %1366 = vmatpush1.bf16.msra.mxu0 0
      %1367 = vmatprep.subr.bf16.mxu0 0
      %1368 = vmatpush1.bf16.msra.mxu0 0
      %1369 = vmatprep.subr.bf16.mxu0 0
      %1370 = vmatpush1.bf16.msra.mxu0 0
      %1371 = vmatprep.subr.bf16.mxu0 0
      %1372 = vmatpush1.bf16.msra.mxu0 0
      %1373 = vmatprep.subr.bf16.mxu0 0
      %1374 = vmatpush1.bf16.msra.mxu0 0
      %1375 = vmatprep.subr.bf16.mxu0 0
      %1376 = vmatpush1.bf16.msra.mxu0 0
      %1377 = vmatprep.mubr.bf16.mxu0 0
      %1378 = vmatmul.mubr.bf16.gmra.mrb[0].mxu0 %v1340
      %v1379 = vpop.f32.mrb[0].mxu0
      %v1380 = vadd.f32 0.0, %v1379
      %v1381 = vpop.f32.mrb[0].mxu0
      %v1382 = vadd.f32 0.0, %v1381
      %v1383 = vpop.f32.mrb[0].mxu0
      %v1384 = vadd.f32 0.0, %v1383
      %v1385 = vpop.f32.mrb[0].mxu0
      %v1386 = vadd.f32 0.0, %v1385
      %1387 = vmatprep.mubr.bf16.mxu0 0
      %1388 = vmatmul.mubr.bf16.gmra.mrb[0].mxu0 %v1343
      %v1389 = vpop.f32.mrb[0].mxu0
      %v1390 = vadd.f32 0.0, %v1389
      %v1391 = vpop.f32.mrb[0].mxu0
      %v1392 = vadd.f32 0.0, %v1391
      %v1393 = vpop.f32.mrb[0].mxu0
      %v1394 = vadd.f32 0.0, %v1393
      %v1395 = vpop.f32.mrb[0].mxu0
      %v1396 = vadd.f32 0.0, %v1395
      %1397 = vdwg.mxu0
      %v1398 = vadd.f32 %v1200, %v1380
      %v1399 = vadd.f32 %v1202, %v1382
      %v1400 = vadd.f32 %v1204, %v1384
      %v1401 = vadd.f32 %v1206, %v1386
      %v1402 = vadd.f32 %v1210, %v1390
      %v1403 = vadd.f32 %v1212, %v1392
      %v1404 = vadd.f32 %v1214, %v1394
      %v1405 = vadd.f32 %v1216, %v1396
      %s1406 = scalar_lea.vmem %s1, 48
      %v1407 = vld [vmem:[%s1406] sm:$0xf]
      %v1408 = vld [vmem:[%s1406 + $0x4] sm:$0xf]
      %v1409 = vld [vmem:[%s1406 + $0x8] sm:$0xf]
      %v1410 = vld [vmem:[%s1406 + $0xc] sm:$0xf]
      %v1415 = vunpack.c.l.b16 %v1407
      %v1416 = vunpack.c.l.b16 %v1408
      %v1417 = vunpack.c.l.b16 %v1409
      %v1418 = vunpack.c.l.b16 %v1410
      %v1419 = vpack.c.b16 %v1416, %v1415
      %v1420 = vpack.c.b16 %v1418, %v1417
      %v1422 = vsel %vm873, %v1419, 0
      %v1425 = vsel %vm873, %v1420, 0
      %1427 = vmatprep.subr.bf16.mxu0 0
      %1428 = vmatpush1.bf16.msra.mxu0 %v855
      %1429 = vmatprep.subr.bf16.mxu0 0
      %1430 = vmatpush1.bf16.msra.mxu0 %v856
      %1431 = vmatprep.subr.bf16.mxu0 0
      %1432 = vmatpush1.bf16.msra.mxu0 %v857
      %1433 = vmatprep.subr.bf16.mxu0 0
      %1434 = vmatpush1.bf16.msra.mxu0 %v858
      %1435 = vmatprep.subr.bf16.mxu0 0
      %1436 = vmatpush1.bf16.msra.mxu0 0
      %1437 = vmatprep.subr.bf16.mxu0 0
      %1438 = vmatpush1.bf16.msra.mxu0 0
      %1439 = vmatprep.subr.bf16.mxu0 0
      %1440 = vmatpush1.bf16.msra.mxu0 0
      %1441 = vmatprep.subr.bf16.mxu0 0
      %1442 = vmatpush1.bf16.msra.mxu0 0
      %1443 = vmatprep.subr.bf16.mxu0 0
      %1444 = vmatpush1.bf16.msra.mxu0 0
      %1445 = vmatprep.subr.bf16.mxu0 0
      %1446 = vmatpush1.bf16.msra.mxu0 0
      %1447 = vmatprep.subr.bf16.mxu0 0
      %1448 = vmatpush1.bf16.msra.mxu0 0
      %1449 = vmatprep.subr.bf16.mxu0 0
      %1450 = vmatpush1.bf16.msra.mxu0 0
      %1451 = vmatprep.subr.bf16.mxu0 0
      %1452 = vmatpush1.bf16.msra.mxu0 0
      %1453 = vmatprep.subr.bf16.mxu0 0
      %1454 = vmatpush1.bf16.msra.mxu0 0
      %1455 = vmatprep.subr.bf16.mxu0 0
      %1456 = vmatpush1.bf16.msra.mxu0 0
      %1457 = vmatprep.subr.bf16.mxu0 0
      %1458 = vmatpush1.bf16.msra.mxu0 0
      %1459 = vmatprep.mubr.bf16.mxu0 0
      %1460 = vmatmul.mubr.bf16.gmra.mrb[0].mxu0 %v1422
      %v1461 = vpop.f32.mrb[0].mxu0
      %v1462 = vadd.f32 0.0, %v1461
      %v1463 = vpop.f32.mrb[0].mxu0
      %v1464 = vpop.f32.mrb[0].mxu0
      %v1465 = vadd.f32 0.0, %v1464
      %v1466 = vpop.f32.mrb[0].mxu0
      %1467 = vmatprep.mubr.bf16.mxu0 0
      %1468 = vmatmul.mubr.bf16.gmra.mrb[0].mxu0 %v1425
      %v1469 = vpop.f32.mrb[0].mxu0
      %v1470 = vadd.f32 0.0, %v1469
      %v1471 = vpop.f32.mrb[0].mxu0
      %v1472 = vpop.f32.mrb[0].mxu0
      %v1473 = vadd.f32 0.0, %v1472
      %v1474 = vpop.f32.mrb[0].mxu0
      %1475 = vdwg.mxu0
      %v1476 = vpack.c.bf16 %v1465, %v1462
      %v1477 = vpack.c.bf16 %v1473, %v1470
      %s1478 = scalar_lea.vmem %s2, 192
      %v1479 = vld [vmem:[%s1478] sm:$0xff]
      %v1480 = vld [vmem:[%s1478 + $0x8] sm:$0xff]
      %v1481 = vld [vmem:[%s1478 + $0x10] sm:$0xff]
      %v1482 = vld [vmem:[%s1478 + $0x18] sm:$0xff]
      %v1483 = vld [vmem:[%s1478 + $0x20] sm:$0xff]
      %v1484 = vld [vmem:[%s1478 + $0x28] sm:$0xff]
      %v1485 = vld [vmem:[%s1478 + $0x30] sm:$0xff]
      %v1486 = vld [vmem:[%s1478 + $0x38] sm:$0xff]
      %v1495 = vunpack.c.l.b16 %v1479
      %v1496 = vunpack.c.h.b16 %v1479
      %v1497 = vunpack.c.l.b16 %v1480
      %v1498 = vunpack.c.h.b16 %v1480
      %v1499 = vunpack.c.l.b16 %v1481
      %v1500 = vunpack.c.h.b16 %v1481
      %v1501 = vunpack.c.l.b16 %v1482
      %v1502 = vunpack.c.h.b16 %v1482
      %v1503 = vunpack.c.l.b16 %v1483
      %v1504 = vunpack.c.h.b16 %v1483
      %v1505 = vunpack.c.l.b16 %v1484
      %v1506 = vunpack.c.h.b16 %v1484
      %v1507 = vunpack.c.l.b16 %v1485
      %v1508 = vunpack.c.h.b16 %v1485
      %v1509 = vunpack.c.l.b16 %v1486
      %v1510 = vunpack.c.h.b16 %v1486
      %v1511 = vpack.c.b16 %v1497, %v1495
      %v1512 = vpack.c.b16 %v1498, %v1496
      %v1513 = vpack.c.b16 %v1501, %v1499
      %v1514 = vpack.c.b16 %v1502, %v1500
      %v1515 = vpack.c.b16 %v1505, %v1503
      %v1516 = vpack.c.b16 %v1506, %v1504
      %v1517 = vpack.c.b16 %v1509, %v1507
      %v1518 = vpack.c.b16 %v1510, %v1508
      %v1528 = vsel %vm873, %v1476, 0
      %v1531 = vsel %vm873, %v1477, 0
      %1533 = vmatprep.subr.bf16.mxu0 %v1512
      %1534 = vmatpush1.bf16.msra.mxu0 %v1511
      %1535 = vmatprep.subr.bf16.mxu0 %v1514
      %1536 = vmatpush1.bf16.msra.mxu0 %v1513
      %1537 = vmatprep.subr.bf16.mxu0 %v1516
      %1538 = vmatpush1.bf16.msra.mxu0 %v1515
      %1539 = vmatprep.subr.bf16.mxu0 %v1518
      %1540 = vmatpush1.bf16.msra.mxu0 %v1517
      %1541 = vmatprep.subr.bf16.mxu0 0
      %1542 = vmatpush1.bf16.msra.mxu0 0
      %1543 = vmatprep.subr.bf16.mxu0 0
      %1544 = vmatpush1.bf16.msra.mxu0 0
      %1545 = vmatprep.subr.bf16.mxu0 0
      %1546 = vmatpush1.bf16.msra.mxu0 0
      %1547 = vmatprep.subr.bf16.mxu0 0
      %1548 = vmatpush1.bf16.msra.mxu0 0
      %1549 = vmatprep.subr.bf16.mxu0 0
      %1550 = vmatpush1.bf16.msra.mxu0 0
      %1551 = vmatprep.subr.bf16.mxu0 0
      %1552 = vmatpush1.bf16.msra.mxu0 0
      %1553 = vmatprep.subr.bf16.mxu0 0
      %1554 = vmatpush1.bf16.msra.mxu0 0
      %1555 = vmatprep.subr.bf16.mxu0 0
      %1556 = vmatpush1.bf16.msra.mxu0 0
      %1557 = vmatprep.subr.bf16.mxu0 0
      %1558 = vmatpush1.bf16.msra.mxu0 0
      %1559 = vmatprep.subr.bf16.mxu0 0
      %1560 = vmatpush1.bf16.msra.mxu0 0
      %1561 = vmatprep.subr.bf16.mxu0 0
      %1562 = vmatpush1.bf16.msra.mxu0 0
      %1563 = vmatprep.subr.bf16.mxu0 0
      %1564 = vmatpush1.bf16.msra.mxu0 0
      %1565 = vmatprep.mubr.bf16.mxu0 0
      %1566 = vmatmul.mubr.bf16.gmra.mrb[0].mxu0 %v1528
      %v1567 = vpop.f32.mrb[0].mxu0
      %v1568 = vadd.f32 0.0, %v1567
      %v1569 = vpop.f32.mrb[0].mxu0
      %v1570 = vadd.f32 0.0, %v1569
      %v1571 = vpop.f32.mrb[0].mxu0
      %v1572 = vadd.f32 0.0, %v1571
      %v1573 = vpop.f32.mrb[0].mxu0
      %v1574 = vadd.f32 0.0, %v1573
      %1575 = vmatprep.mubr.bf16.mxu0 0
      %1576 = vmatmul.mubr.bf16.gmra.mrb[0].mxu0 %v1531
      %v1577 = vpop.f32.mrb[0].mxu0
      %v1578 = vadd.f32 0.0, %v1577
      %v1579 = vpop.f32.mrb[0].mxu0
      %v1580 = vadd.f32 0.0, %v1579
      %v1581 = vpop.f32.mrb[0].mxu0
      %v1582 = vadd.f32 0.0, %v1581
      %v1583 = vpop.f32.mrb[0].mxu0
      %v1584 = vadd.f32 0.0, %v1583
      %1585 = vdwg.mxu0
      %v1586 = vadd.f32 %v1398, %v1568
      %v1587 = vadd.f32 %v1399, %v1570
      %v1588 = vadd.f32 %v1400, %v1572
      %v1589 = vadd.f32 %v1401, %v1574
      %v1590 = vadd.f32 %v1402, %v1578
      %v1591 = vadd.f32 %v1403, %v1580
      %v1592 = vadd.f32 %v1404, %v1582
      %v1593 = vadd.f32 %v1405, %v1584
      %s1594 = scalar_lea.vmem %s1, 64
      %v1595 = vld [vmem:[%s1594] sm:$0xf]
      %v1596 = vld [vmem:[%s1594 + $0x4] sm:$0xf]
      %v1597 = vld [vmem:[%s1594 + $0x8] sm:$0xf]
      %v1598 = vld [vmem:[%s1594 + $0xc] sm:$0xf]
      %v1603 = vunpack.c.l.b16 %v1595
      %v1604 = vunpack.c.l.b16 %v1596
      %v1605 = vunpack.c.l.b16 %v1597
      %v1606 = vunpack.c.l.b16 %v1598
      %v1607 = vpack.c.b16 %v1604, %v1603
      %v1608 = vpack.c.b16 %v1606, %v1605
      %v1610 = vsel %vm873, %v1607, 0
      %v1613 = vsel %vm873, %v1608, 0
      %1615 = vmatprep.subr.bf16.mxu0 0
      %1616 = vmatpush1.bf16.msra.mxu0 %v855
      %1617 = vmatprep.subr.bf16.mxu0 0
      %1618 = vmatpush1.bf16.msra.mxu0 %v856
      %1619 = vmatprep.subr.bf16.mxu0 0
      %1620 = vmatpush1.bf16.msra.mxu0 %v857
      %1621 = vmatprep.subr.bf16.mxu0 0
      %1622 = vmatpush1.bf16.msra.mxu0 %v858
      %1623 = vmatprep.subr.bf16.mxu0 0
      %1624 = vmatpush1.bf16.msra.mxu0 0
      %1625 = vmatprep.subr.bf16.mxu0 0
      %1626 = vmatpush1.bf16.msra.mxu0 0
      %1627 = vmatprep.subr.bf16.mxu0 0
      %1628 = vmatpush1.bf16.msra.mxu0 0
      %1629 = vmatprep.subr.bf16.mxu0 0
      %1630 = vmatpush1.bf16.msra.mxu0 0
      %1631 = vmatprep.subr.bf16.mxu0 0
      %1632 = vmatpush1.bf16.msra.mxu0 0
      %1633 = vmatprep.subr.bf16.mxu0 0
      %1634 = vmatpush1.bf16.msra.mxu0 0
      %1635 = vmatprep.subr.bf16.mxu0 0
      %1636 = vmatpush1.bf16.msra.mxu0 0
      %1637 = vmatprep.subr.bf16.mxu0 0
      %1638 = vmatpush1.bf16.msra.mxu0 0
      %1639 = vmatprep.subr.bf16.mxu0 0
      %1640 = vmatpush1.bf16.msra.mxu0 0
      %1641 = vmatprep.subr.bf16.mxu0 0
      %1642 = vmatpush1.bf16.msra.mxu0 0
      %1643 = vmatprep.subr.bf16.mxu0 0
      %1644 = vmatpush1.bf16.msra.mxu0 0
      %1645 = vmatprep.subr.bf16.mxu0 0
      %1646 = vmatpush1.bf16.msra.mxu0 0
      %1647 = vmatprep.mubr.bf16.mxu0 0
      %1648 = vmatmul.mubr.bf16.gmra.mrb[0].mxu0 %v1610
      %v1649 = vpop.f32.mrb[0].mxu0
      %v1650 = vadd.f32 0.0, %v1649
      %v1651 = vpop.f32.mrb[0].mxu0
      %v1652 = vpop.f32.mrb[0].mxu0
      %v1653 = vadd.f32 0.0, %v1652
      %v1654 = vpop.f32.mrb[0].mxu0
      %1655 = vmatprep.mubr.bf16.mxu0 0
      %1656 = vmatmul.mubr.bf16.gmra.mrb[0].mxu0 %v1613
      %v1657 = vpop.f32.mrb[0].mxu0
      %v1658 = vadd.f32 0.0, %v1657
      %v1659 = vpop.f32.mrb[0].mxu0
      %v1660 = vpop.f32.mrb[0].mxu0
      %v1661 = vadd.f32 0.0, %v1660
      %v1662 = vpop.f32.mrb[0].mxu0
      %1663 = vdwg.mxu0
      %v1664 = vpack.c.bf16 %v1653, %v1650
      %v1665 = vpack.c.bf16 %v1661, %v1658
      %s1666 = scalar_lea.vmem %s2, 256
      %v1667 = vld [vmem:[%s1666] sm:$0xff]
      %v1668 = vld [vmem:[%s1666 + $0x8] sm:$0xff]
      %v1669 = vld [vmem:[%s1666 + $0x10] sm:$0xff]
      %v1670 = vld [vmem:[%s1666 + $0x18] sm:$0xff]
      %v1671 = vld [vmem:[%s1666 + $0x20] sm:$0xff]
      %v1672 = vld [vmem:[%s1666 + $0x28] sm:$0xff]
      %v1673 = vld [vmem:[%s1666 + $0x30] sm:$0xff]
      %v1674 = vld [vmem:[%s1666 + $0x38] sm:$0xff]
      %v1683 = vunpack.c.l.b16 %v1667
      %v1684 = vunpack.c.h.b16 %v1667
      %v1685 = vunpack.c.l.b16 %v1668
      %v1686 = vunpack.c.h.b16 %v1668
      %v1687 = vunpack.c.l.b16 %v1669
      %v1688 = vunpack.c.h.b16 %v1669
      %v1689 = vunpack.c.l.b16 %v1670
      %v1690 = vunpack.c.h.b16 %v1670
      %v1691 = vunpack.c.l.b16 %v1671
      %v1692 = vunpack.c.h.b16 %v1671
      %v1693 = vunpack.c.l.b16 %v1672
      %v1694 = vunpack.c.h.b16 %v1672
      %v1695 = vunpack.c.l.b16 %v1673
      %v1696 = vunpack.c.h.b16 %v1673
      %v1697 = vunpack.c.l.b16 %v1674
      %v1698 = vunpack.c.h.b16 %v1674
      %v1699 = vpack.c.b16 %v1685, %v1683
      %v1700 = vpack.c.b16 %v1686, %v1684
      %v1701 = vpack.c.b16 %v1689, %v1687
      %v1702 = vpack.c.b16 %v1690, %v1688
      %v1703 = vpack.c.b16 %v1693, %v1691
      %v1704 = vpack.c.b16 %v1694, %v1692
      %v1705 = vpack.c.b16 %v1697, %v1695
      %v1706 = vpack.c.b16 %v1698, %v1696
      %v1716 = vsel %vm873, %v1664, 0
      %v1719 = vsel %vm873, %v1665, 0
      %1721 = vmatprep.subr.bf16.mxu0 %v1700
      %1722 = vmatpush1.bf16.msra.mxu0 %v1699
      %1723 = vmatprep.subr.bf16.mxu0 %v1702
      %1724 = vmatpush1.bf16.msra.mxu0 %v1701
      %1725 = vmatprep.subr.bf16.mxu0 %v1704
      %1726 = vmatpush1.bf16.msra.mxu0 %v1703
      %1727 = vmatprep.subr.bf16.mxu0 %v1706
      %1728 = vmatpush1.bf16.msra.mxu0 %v1705
      %1729 = vmatprep.subr.bf16.mxu0 0
      %1730 = vmatpush1.bf16.msra.mxu0 0
      %1731 = vmatprep.subr.bf16.mxu0 0
      %1732 = vmatpush1.bf16.msra.mxu0 0
      %1733 = vmatprep.subr.bf16.mxu0 0
      %1734 = vmatpush1.bf16.msra.mxu0 0
      %1735 = vmatprep.subr.bf16.mxu0 0
      %1736 = vmatpush1.bf16.msra.mxu0 0
      %1737 = vmatprep.subr.bf16.mxu0 0
      %1738 = vmatpush1.bf16.msra.mxu0 0
      %1739 = vmatprep.subr.bf16.mxu0 0
      %1740 = vmatpush1.bf16.msra.mxu0 0
      %1741 = vmatprep.subr.bf16.mxu0 0
      %1742 = vmatpush1.bf16.msra.mxu0 0
      %1743 = vmatprep.subr.bf16.mxu0 0
      %1744 = vmatpush1.bf16.msra.mxu0 0
      %1745 = vmatprep.subr.bf16.mxu0 0
      %1746 = vmatpush1.bf16.msra.mxu0 0
      %1747 = vmatprep.subr.bf16.mxu0 0
      %1748 = vmatpush1.bf16.msra.mxu0 0
      %1749 = vmatprep.subr.bf16.mxu0 0
      %1750 = vmatpush1.bf16.msra.mxu0 0
      %1751 = vmatprep.subr.bf16.mxu0 0
      %1752 = vmatpush1.bf16.msra.mxu0 0
      %1753 = vmatprep.mubr.bf16.mxu0 0
      %1754 = vmatmul.mubr.bf16.gmra.mrb[0].mxu0 %v1716
      %v1755 = vpop.f32.mrb[0].mxu0
      %v1756 = vadd.f32 0.0, %v1755
      %v1757 = vpop.f32.mrb[0].mxu0
      %v1758 = vadd.f32 0.0, %v1757
      %v1759 = vpop.f32.mrb[0].mxu0
      %v1760 = vadd.f32 0.0, %v1759
      %v1761 = vpop.f32.mrb[0].mxu0
      %v1762 = vadd.f32 0.0, %v1761
      %1763 = vmatprep.mubr.bf16.mxu0 0
      %1764 = vmatmul.mubr.bf16.gmra.mrb[0].mxu0 %v1719
      %v1765 = vpop.f32.mrb[0].mxu0
      %v1766 = vadd.f32 0.0, %v1765
      %v1767 = vpop.f32.mrb[0].mxu0
      %v1768 = vadd.f32 0.0, %v1767
      %v1769 = vpop.f32.mrb[0].mxu0
      %v1770 = vadd.f32 0.0, %v1769
      %v1771 = vpop.f32.mrb[0].mxu0
      %v1772 = vadd.f32 0.0, %v1771
      %1773 = vdwg.mxu0
      %v1774 = vadd.f32 %v1586, %v1756
      %v1775 = vadd.f32 %v1587, %v1758
      %v1776 = vadd.f32 %v1588, %v1760
      %v1777 = vadd.f32 %v1589, %v1762
      %v1778 = vadd.f32 %v1590, %v1766
      %v1779 = vadd.f32 %v1591, %v1768
      %v1780 = vadd.f32 %v1592, %v1770
      %v1781 = vadd.f32 %v1593, %v1772
      %v1782 = vld [vmem:[%s3] sm:$0x3]
      %v1784 = vlaneseq
      %v1785 = vshrl.u32 %v1784, 7
      %v1786 = vsub.s32 0, %v1785
      %v1787 = vrot.slane %v1782, %v1786
      %v1788 = vlaneseq
      %v1789 = vshrl.u32 %v1788, 7
      %v1790 = vsub.s32 1, %v1789
      %v1791 = vrot.slane %v1782, %v1790
      %v1794 = vadd.f32 %v1774, %v1787
      %v1795 = vadd.f32 %v1775, %v1791
      %v1796 = vadd.f32 %v1776, %v1787
      %v1797 = vadd.f32 %v1777, %v1791
      %v1798 = vadd.f32 %v1778, %v1787
      %v1799 = vadd.f32 %v1779, %v1791
      %v1800 = vadd.f32 %v1780, %v1787
      %v1801 = vadd.f32 %v1781, %v1791
      %v1802 = vmax.f32 %v1794, 0.0
      %v1803 = vmax.f32 %v1795, 0.0
      %v1804 = vmax.f32 %v1796, 0.0
      %v1805 = vmax.f32 %v1797, 0.0
      %v1806 = vmax.f32 %v1798, 0.0
      %v1807 = vmax.f32 %v1799, 0.0
      %v1808 = vmax.f32 %v1800, 0.0
      %v1809 = vmax.f32 %v1801, 0.0
      %v1810 = vpack.c.bf16 %v1804, %v1802
      %v1811 = vpack.c.bf16 %v1805, %v1803
      %v1812 = vpack.c.bf16 %v1808, %v1806
      %v1813 = vpack.c.bf16 %v1809, %v1807
      %v1814 = vld [vmem:[%s4] sm:$0xf]
      %v1815 = vld [vmem:[%s4 + $0x4] sm:$0xf]
      %v1818 = vunpack.c.l.b16 %v1814
      %v1819 = vunpack.c.l.b16 %v1815
      %v1820 = vpack.c.b16 %v1819, %v1818
      %vm1821 = vcmask 261120
      %v1823 = vsel %vm1821, %v1820, 0
      %1825 = vmatprep.subr.bf16.mxu0 %v1811
      %1826 = vmatpush1.bf16.msra.mxu0 %v1810
      %1827 = vmatprep.subr.bf16.mxu0 %v1813
      %1828 = vmatpush1.bf16.msra.mxu0 %v1812
      %1829 = vmatprep.subr.bf16.mxu0 0
      %1830 = vmatpush1.bf16.msra.mxu0 0
      %1831 = vmatprep.subr.bf16.mxu0 0
      %1832 = vmatpush1.bf16.msra.mxu0 0
      %1833 = vmatprep.subr.bf16.mxu0 0
      %1834 = vmatpush1.bf16.msra.mxu0 0
      %1835 = vmatprep.subr.bf16.mxu0 0
      %1836 = vmatpush1.bf16.msra.mxu0 0
      %1837 = vmatprep.subr.bf16.mxu0 0
      %1838 = vmatpush1.bf16.msra.mxu0 0
      %1839 = vmatprep.subr.bf16.mxu0 0
      %1840 = vmatpush1.bf16.msra.mxu0 0
      %1841 = vmatprep.subr.bf16.mxu0 0
      %1842 = vmatpush1.bf16.msra.mxu0 0
      %1843 = vmatprep.subr.bf16.mxu0 0
      %1844 = vmatpush1.bf16.msra.mxu0 0
      %1845 = vmatprep.subr.bf16.mxu0 0
      %1846 = vmatpush1.bf16.msra.mxu0 0
      %1847 = vmatprep.subr.bf16.mxu0 0
      %1848 = vmatpush1.bf16.msra.mxu0 0
      %1849 = vmatprep.subr.bf16.mxu0 0
      %1850 = vmatpush1.bf16.msra.mxu0 0
      %1851 = vmatprep.subr.bf16.mxu0 0
      %1852 = vmatpush1.bf16.msra.mxu0 0
      %1853 = vmatprep.subr.bf16.mxu0 0
      %1854 = vmatpush1.bf16.msra.mxu0 0
      %1855 = vmatprep.subr.bf16.mxu0 0
      %1856 = vmatpush1.bf16.msra.mxu0 0
      %1857 = vmatprep.mubr.bf16.mxu0 0
      %1858 = vmatmul.mubr.bf16.gmra.mrb[0].mxu0 %v1823
      %v1859 = vpop.f32.mrb[0].mxu0
      %v1860 = vadd.f32 0.0, %v1859
      %v1861 = vpop.f32.mrb[0].mxu0
      %v1862 = vadd.f32 0.0, %v1861
      %v1863 = vpop.f32.mrb[0].mxu0
      %v1864 = vadd.f32 0.0, %v1863
      %v1865 = vpop.f32.mrb[0].mxu0
      %v1866 = vadd.f32 0.0, %v1865
      %1867 = vdwg.mxu0
      %v1868 = vpack.c.bf16 %v1864, %v1860
      %v1869 = vpack.c.bf16 %v1866, %v1862
      %v1870 = vld [vmem:[%s5] sm:$0xff]
      %v1871 = vld [vmem:[%s5 + $0x8] sm:$0xff]
      %v1872 = vld [vmem:[%s5 + $0x10] sm:$0xff]
      %v1873 = vld [vmem:[%s5 + $0x18] sm:$0xff]
      %v1874 = vld [vmem:[%s5 + $0x20] sm:$0xff]
      %v1875 = vld [vmem:[%s5 + $0x28] sm:$0xff]
      %v1876 = vld [vmem:[%s5 + $0x30] sm:$0xff]
      %v1877 = vld [vmem:[%s5 + $0x38] sm:$0xff]
      %v1878 = vld [vmem:[%s5 + $0x40] sm:$0xff]
      %v1879 = vld [vmem:[%s5 + $0x48] sm:$0xff]
      %v1880 = vld [vmem:[%s5 + $0x50] sm:$0xff]
      %v1881 = vld [vmem:[%s5 + $0x58] sm:$0xff]
      %v1882 = vld [vmem:[%s5 + $0x60] sm:$0xff]
      %v1883 = vld [vmem:[%s5 + $0x68] sm:$0xff]
      %v1884 = vld [vmem:[%s5 + $0x70] sm:$0xff]
      %v1885 = vld [vmem:[%s5 + $0x78] sm:$0xff]
      %v1886 = vld [vmem:[%s5 + $0x80] sm:$0xff]
      %v1887 = vld [vmem:[%s5 + $0x88] sm:$0xff]
      %v1888 = vld [vmem:[%s5 + $0x90] sm:$0xff]
      %v1889 = vld [vmem:[%s5 + $0x98] sm:$0xff]
      %v1890 = vld [vmem:[%s5 + $0xa0] sm:$0xff]
      %v1891 = vld [vmem:[%s5 + $0xa8] sm:$0xff]
      %v1892 = vld [vmem:[%s5 + $0xb0] sm:$0xff]
      %v1893 = vld [vmem:[%s5 + $0xb8] sm:$0xff]
      %v1894 = vld [vmem:[%s5 + $0xc0] sm:$0xff]
      %v1895 = vld [vmem:[%s5 + $0xc8] sm:$0xff]
      %v1896 = vld [vmem:[%s5 + $0xd0] sm:$0xff]
      %v1897 = vld [vmem:[%s5 + $0xd8] sm:$0xff]
      %v1898 = vld [vmem:[%s5 + $0xe0] sm:$0xff]
      %v1899 = vld [vmem:[%s5 + $0xe8] sm:$0xff]
      %v1900 = vld [vmem:[%s5 + $0xf0] sm:$0xff]
      %v1901 = vld [vmem:[%s5 + $0xf8] sm:$0xff]
      %s1902 = scalar_lea.vmem %s4, 8
      %v1903 = vld [vmem:[%s1902] sm:$0xf]
      %v1904 = vld [vmem:[%s1902 + $0x4] sm:$0xf]
      %v1907 = vunpack.c.l.b16 %v1903
      %v1908 = vunpack.c.l.b16 %v1904
      %v1909 = vpack.c.b16 %v1908, %v1907
      %v1911 = vsel %vm1821, %v1909, 0
      %1913 = vmatprep.subr.bf16.mxu0 %v1811
      %1914 = vmatpush1.bf16.msra.mxu0 %v1810
      %1915 = vmatprep.subr.bf16.mxu0 %v1813
      %1916 = vmatpush1.bf16.msra.mxu0 %v1812
      %1917 = vmatprep.subr.bf16.mxu0 0
      %1918 = vmatpush1.bf16.msra.mxu0 0
      %1919 = vmatprep.subr.bf16.mxu0 0
      %1920 = vmatpush1.bf16.msra.mxu0 0
      %1921 = vmatprep.subr.bf16.mxu0 0
      %1922 = vmatpush1.bf16.msra.mxu0 0
      %1923 = vmatprep.subr.bf16.mxu0 0
      %1924 = vmatpush1.bf16.msra.mxu0 0
      %1925 = vmatprep.subr.bf16.mxu0 0
      %1926 = vmatpush1.bf16.msra.mxu0 0
      %1927 = vmatprep.subr.bf16.mxu0 0
      %1928 = vmatpush1.bf16.msra.mxu0 0
      %1929 = vmatprep.subr.bf16.mxu0 0
      %1930 = vmatpush1.bf16.msra.mxu0 0
      %1931 = vmatprep.subr.bf16.mxu0 0
      %1932 = vmatpush1.bf16.msra.mxu0 0
      %1933 = vmatprep.subr.bf16.mxu0 0
      %1934 = vmatpush1.bf16.msra.mxu0 0
      %1935 = vmatprep.subr.bf16.mxu0 0
      %1936 = vmatpush1.bf16.msra.mxu0 0
      %1937 = vmatprep.subr.bf16.mxu0 0
      %1938 = vmatpush1.bf16.msra.mxu0 0
      %1939 = vmatprep.subr.bf16.mxu0 0
      %1940 = vmatpush1.bf16.msra.mxu0 0
      %1941 = vmatprep.subr.bf16.mxu0 0
      %1942 = vmatpush1.bf16.msra.mxu0 0
      %1943 = vmatprep.subr.bf16.mxu0 0
      %1944 = vmatpush1.bf16.msra.mxu0 0
      %1945 = vmatprep.mubr.bf16.mxu0 0
      %1946 = vmatmul.mubr.bf16.gmra.mrb[0].mxu0 %v1911
      %v1947 = vpop.f32.mrb[0].mxu0
      %v1948 = vadd.f32 0.0, %v1947
      %v1949 = vpop.f32.mrb[0].mxu0
      %v1950 = vadd.f32 0.0, %v1949
      %v1951 = vpop.f32.mrb[0].mxu0
      %v1952 = vadd.f32 0.0, %v1951
      %v1953 = vpop.f32.mrb[0].mxu0
      %v1954 = vadd.f32 0.0, %v1953
      %1955 = vdwg.mxu0
      %v1956 = vpack.c.bf16 %v1952, %v1948
      %v1957 = vpack.c.bf16 %v1954, %v1950
      %s1958 = scalar_lea.vmem %s5, 256
      %v1959 = vld [vmem:[%s1958] sm:$0xff]
      %v1960 = vld [vmem:[%s1958 + $0x8] sm:$0xff]
      %v1961 = vld [vmem:[%s1958 + $0x10] sm:$0xff]
      %v1962 = vld [vmem:[%s1958 + $0x18] sm:$0xff]
      %v1963 = vld [vmem:[%s1958 + $0x20] sm:$0xff]
      %v1964 = vld [vmem:[%s1958 + $0x28] sm:$0xff]
      %v1965 = vld [vmem:[%s1958 + $0x30] sm:$0xff]
      %v1966 = vld [vmem:[%s1958 + $0x38] sm:$0xff]
      %v1967 = vld [vmem:[%s1958 + $0x40] sm:$0xff]
      %v1968 = vld [vmem:[%s1958 + $0x48] sm:$0xff]
      %v1969 = vld [vmem:[%s1958 + $0x50] sm:$0xff]
      %v1970 = vld [vmem:[%s1958 + $0x58] sm:$0xff]
      %v1971 = vld [vmem:[%s1958 + $0x60] sm:$0xff]
      %v1972 = vld [vmem:[%s1958 + $0x68] sm:$0xff]
      %v1973 = vld [vmem:[%s1958 + $0x70] sm:$0xff]
      %v1974 = vld [vmem:[%s1958 + $0x78] sm:$0xff]
      %v1975 = vld [vmem:[%s1958 + $0x80] sm:$0xff]
      %v1976 = vld [vmem:[%s1958 + $0x88] sm:$0xff]
      %v1977 = vld [vmem:[%s1958 + $0x90] sm:$0xff]
      %v1978 = vld [vmem:[%s1958 + $0x98] sm:$0xff]
      %v1979 = vld [vmem:[%s1958 + $0xa0] sm:$0xff]
      %v1980 = vld [vmem:[%s1958 + $0xa8] sm:$0xff]
      %v1981 = vld [vmem:[%s1958 + $0xb0] sm:$0xff]
      %v1982 = vld [vmem:[%s1958 + $0xb8] sm:$0xff]
      %v1983 = vld [vmem:[%s1958 + $0xc0] sm:$0xff]
      %v1984 = vld [vmem:[%s1958 + $0xc8] sm:$0xff]
      %v1985 = vld [vmem:[%s1958 + $0xd0] sm:$0xff]
      %v1986 = vld [vmem:[%s1958 + $0xd8] sm:$0xff]
      %v1987 = vld [vmem:[%s1958 + $0xe0] sm:$0xff]
      %v1988 = vld [vmem:[%s1958 + $0xe8] sm:$0xff]
      %v1989 = vld [vmem:[%s1958 + $0xf0] sm:$0xff]
      %v1990 = vld [vmem:[%s1958 + $0xf8] sm:$0xff]
      %v2023 = vunpack.c.l.b16 %v1959
      %v2024 = vunpack.c.h.b16 %v1959
      %v2025 = vunpack.c.l.b16 %v1960
      %v2026 = vunpack.c.h.b16 %v1960
      %v2027 = vunpack.c.l.b16 %v1961
      %v2028 = vunpack.c.h.b16 %v1961
      %v2029 = vunpack.c.l.b16 %v1962
      %v2030 = vunpack.c.h.b16 %v1962
      %v2031 = vunpack.c.l.b16 %v1963
      %v2032 = vunpack.c.h.b16 %v1963
      %v2033 = vunpack.c.l.b16 %v1964
      %v2034 = vunpack.c.h.b16 %v1964
      %v2035 = vunpack.c.l.b16 %v1965
      %v2036 = vunpack.c.h.b16 %v1965
      %v2037 = vunpack.c.l.b16 %v1966
      %v2038 = vunpack.c.h.b16 %v1966
      %v2039 = vunpack.c.l.b16 %v1967
      %v2040 = vunpack.c.h.b16 %v1967
      %v2041 = vunpack.c.l.b16 %v1968
      %v2042 = vunpack.c.h.b16 %v1968
      %v2043 = vunpack.c.l.b16 %v1969
      %v2044 = vunpack.c.h.b16 %v1969
      %v2045 = vunpack.c.l.b16 %v1970
      %v2046 = vunpack.c.h.b16 %v1970
      %v2047 = vunpack.c.l.b16 %v1971
      %v2048 = vunpack.c.h.b16 %v1971
      %v2049 = vunpack.c.l.b16 %v1972
      %v2050 = vunpack.c.h.b16 %v1972
      %v2051 = vunpack.c.l.b16 %v1973
      %v2052 = vunpack.c.h.b16 %v1973
      %v2053 = vunpack.c.l.b16 %v1974
      %v2054 = vunpack.c.h.b16 %v1974
      %v2055 = vunpack.c.l.b16 %v1975
      %v2056 = vunpack.c.h.b16 %v1975
      %v2057 = vunpack.c.l.b16 %v1976
      %v2058 = vunpack.c.h.b16 %v1976
      %v2059 = vunpack.c.l.b16 %v1977
      %v2060 = vunpack.c.h.b16 %v1977
      %v2061 = vunpack.c.l.b16 %v1978
      %v2062 = vunpack.c.h.b16 %v1978
      %v2063 = vunpack.c.l.b16 %v1979
      %v2064 = vunpack.c.h.b16 %v1979
      %v2065 = vunpack.c.l.b16 %v1980
      %v2066 = vunpack.c.h.b16 %v1980
      %v2067 = vunpack.c.l.b16 %v1981
      %v2068 = vunpack.c.h.b16 %v1981
      %v2069 = vunpack.c.l.b16 %v1982
      %v2070 = vunpack.c.h.b16 %v1982
      %v2071 = vunpack.c.l.b16 %v1983
      %v2072 = vunpack.c.h.b16 %v1983
      %v2073 = vunpack.c.l.b16 %v1984
      %v2074 = vunpack.c.h.b16 %v1984
      %v2075 = vunpack.c.l.b16 %v1985
      %v2076 = vunpack.c.h.b16 %v1985
      %v2077 = vunpack.c.l.b16 %v1986
      %v2078 = vunpack.c.h.b16 %v1986
      %v2079 = vunpack.c.l.b16 %v1987
      %v2080 = vunpack.c.h.b16 %v1987
      %v2081 = vunpack.c.l.b16 %v1988
      %v2082 = vunpack.c.h.b16 %v1988
      %v2083 = vunpack.c.l.b16 %v1989
      %v2084 = vunpack.c.h.b16 %v1989
      %v2085 = vunpack.c.l.b16 %v1990
      %v2086 = vunpack.c.h.b16 %v1990
      %v2087 = vpack.c.b16 %v2025, %v2023
      %v2088 = vpack.c.b16 %v2026, %v2024
      %v2089 = vpack.c.b16 %v2029, %v2027
      %v2090 = vpack.c.b16 %v2030, %v2028
      %v2091 = vpack.c.b16 %v2033, %v2031
      %v2092 = vpack.c.b16 %v2034, %v2032
      %v2093 = vpack.c.b16 %v2037, %v2035
      %v2094 = vpack.c.b16 %v2038, %v2036
      %v2095 = vpack.c.b16 %v2041, %v2039
      %v2096 = vpack.c.b16 %v2042, %v2040
      %v2097 = vpack.c.b16 %v2045, %v2043
      %v2098 = vpack.c.b16 %v2046, %v2044
      %v2099 = vpack.c.b16 %v2049, %v2047
      %v2100 = vpack.c.b16 %v2050, %v2048
      %v2101 = vpack.c.b16 %v2053, %v2051
      %v2102 = vpack.c.b16 %v2054, %v2052
      %v2103 = vpack.c.b16 %v2057, %v2055
      %v2104 = vpack.c.b16 %v2058, %v2056
      %v2105 = vpack.c.b16 %v2061, %v2059
      %v2106 = vpack.c.b16 %v2062, %v2060
      %v2107 = vpack.c.b16 %v2065, %v2063
      %v2108 = vpack.c.b16 %v2066, %v2064
      %v2109 = vpack.c.b16 %v2069, %v2067
      %v2110 = vpack.c.b16 %v2070, %v2068
      %v2111 = vpack.c.b16 %v2073, %v2071
      %v2112 = vpack.c.b16 %v2074, %v2072
      %v2113 = vpack.c.b16 %v2077, %v2075
      %v2114 = vpack.c.b16 %v2078, %v2076
      %v2115 = vpack.c.b16 %v2081, %v2079
      %v2116 = vpack.c.b16 %v2082, %v2080
      %v2117 = vpack.c.b16 %v2085, %v2083
      %v2118 = vpack.c.b16 %v2086, %v2084
      %2151 = vmatprep.subr.bf16.mxu0 %v2088
      %2152 = vmatpush1.bf16.msra.mxu0 %v2087
      %2153 = vmatprep.subr.bf16.mxu0 %v2090
      %2154 = vmatpush1.bf16.msra.mxu0 %v2089
      %2155 = vmatprep.subr.bf16.mxu0 %v2092
      %2156 = vmatpush1.bf16.msra.mxu0 %v2091
      %2157 = vmatprep.subr.bf16.mxu0 %v2094
      %2158 = vmatpush1.bf16.msra.mxu0 %v2093
      %2159 = vmatprep.subr.bf16.mxu0 %v2096
      %2160 = vmatpush1.bf16.msra.mxu0 %v2095
      %2161 = vmatprep.subr.bf16.mxu0 %v2098
      %2162 = vmatpush1.bf16.msra.mxu0 %v2097
      %2163 = vmatprep.subr.bf16.mxu0 %v2100
      %2164 = vmatpush1.bf16.msra.mxu0 %v2099
      %2165 = vmatprep.subr.bf16.mxu0 %v2102
      %2166 = vmatpush1.bf16.msra.mxu0 %v2101
      %2167 = vmatprep.subr.bf16.mxu0 %v2104
      %2168 = vmatpush1.bf16.msra.mxu0 %v2103
      %2169 = vmatprep.subr.bf16.mxu0 %v2106
      %2170 = vmatpush1.bf16.msra.mxu0 %v2105
      %2171 = vmatprep.subr.bf16.mxu0 %v2108
      %2172 = vmatpush1.bf16.msra.mxu0 %v2107
      %2173 = vmatprep.subr.bf16.mxu0 %v2110
      %2174 = vmatpush1.bf16.msra.mxu0 %v2109
      %2175 = vmatprep.subr.bf16.mxu0 %v2112
      %2176 = vmatpush1.bf16.msra.mxu0 %v2111
      %2177 = vmatprep.subr.bf16.mxu0 %v2114
      %2178 = vmatpush1.bf16.msra.mxu0 %v2113
      %2179 = vmatprep.subr.bf16.mxu0 %v2116
      %2180 = vmatpush1.bf16.msra.mxu0 %v2115
      %2181 = vmatprep.subr.bf16.mxu0 %v2118
      %2182 = vmatpush1.bf16.msra.mxu0 %v2117
      %2183 = vmatprep.mubr.bf16.mxu0 %v1957
      %2184 = vmatmul.mubr.bf16.gmra.mrb[0].mxu0 %v1956
      %v2185 = vpop.f32.mrb[0].mxu0
      %v2186 = vadd.f32 0.0, %v2185
      %v2187 = vpop.f32.mrb[0].mxu0
      %v2188 = vadd.f32 0.0, %v2187
      %v2189 = vpop.f32.mrb[0].mxu0
      %v2190 = vadd.f32 0.0, %v2189
      %v2191 = vpop.f32.mrb[0].mxu0
      %v2192 = vadd.f32 0.0, %v2191
      %2193 = vdwg.mxu0
      %v2226 = vunpack.c.l.b16 %v1870
      %v2227 = vunpack.c.h.b16 %v1870
      %v2228 = vunpack.c.l.b16 %v1871
      %v2229 = vunpack.c.h.b16 %v1871
      %v2230 = vunpack.c.l.b16 %v1872
      %v2231 = vunpack.c.h.b16 %v1872
      %v2232 = vunpack.c.l.b16 %v1873
      %v2233 = vunpack.c.h.b16 %v1873
      %v2234 = vunpack.c.l.b16 %v1874
      %v2235 = vunpack.c.h.b16 %v1874
      %v2236 = vunpack.c.l.b16 %v1875
      %v2237 = vunpack.c.h.b16 %v1875
      %v2238 = vunpack.c.l.b16 %v1876
      %v2239 = vunpack.c.h.b16 %v1876
      %v2240 = vunpack.c.l.b16 %v1877
      %v2241 = vunpack.c.h.b16 %v1877
      %v2242 = vunpack.c.l.b16 %v1878
      %v2243 = vunpack.c.h.b16 %v1878
      %v2244 = vunpack.c.l.b16 %v1879
      %v2245 = vunpack.c.h.b16 %v1879
      %v2246 = vunpack.c.l.b16 %v1880
      %v2247 = vunpack.c.h.b16 %v1880
      %v2248 = vunpack.c.l.b16 %v1881
      %v2249 = vunpack.c.h.b16 %v1881
      %v2250 = vunpack.c.l.b16 %v1882
      %v2251 = vunpack.c.h.b16 %v1882
      %v2252 = vunpack.c.l.b16 %v1883
      %v2253 = vunpack.c.h.b16 %v1883
      %v2254 = vunpack.c.l.b16 %v1884
      %v2255 = vunpack.c.h.b16 %v1884
      %v2256 = vunpack.c.l.b16 %v1885
      %v2257 = vunpack.c.h.b16 %v1885
      %v2258 = vunpack.c.l.b16 %v1886
      %v2259 = vunpack.c.h.b16 %v1886
      %v2260 = vunpack.c.l.b16 %v1887
      %v2261 = vunpack.c.h.b16 %v1887
      %v2262 = vunpack.c.l.b16 %v1888
      %v2263 = vunpack.c.h.b16 %v1888
      %v2264 = vunpack.c.l.b16 %v1889
      %v2265 = vunpack.c.h.b16 %v1889
      %v2266 = vunpack.c.l.b16 %v1890
      %v2267 = vunpack.c.h.b16 %v1890
      %v2268 = vunpack.c.l.b16 %v1891
      %v2269 = vunpack.c.h.b16 %v1891
      %v2270 = vunpack.c.l.b16 %v1892
      %v2271 = vunpack.c.h.b16 %v1892
      %v2272 = vunpack.c.l.b16 %v1893
      %v2273 = vunpack.c.h.b16 %v1893
      %v2274 = vunpack.c.l.b16 %v1894
      %v2275 = vunpack.c.h.b16 %v1894
      %v2276 = vunpack.c.l.b16 %v1895
      %v2277 = vunpack.c.h.b16 %v1895
      %v2278 = vunpack.c.l.b16 %v1896
      %v2279 = vunpack.c.h.b16 %v1896
      %v2280 = vunpack.c.l.b16 %v1897
      %v2281 = vunpack.c.h.b16 %v1897
      %v2282 = vunpack.c.l.b16 %v1898
      %v2283 = vunpack.c.h.b16 %v1898
      %v2284 = vunpack.c.l.b16 %v1899
      %v2285 = vunpack.c.h.b16 %v1899
      %v2286 = vunpack.c.l.b16 %v1900
      %v2287 = vunpack.c.h.b16 %v1900
      %v2288 = vunpack.c.l.b16 %v1901
      %v2289 = vunpack.c.h.b16 %v1901
      %v2290 = vpack.c.b16 %v2228, %v2226
      %v2291 = vpack.c.b16 %v2229, %v2227
      %v2292 = vpack.c.b16 %v2232, %v2230
      %v2293 = vpack.c.b16 %v2233, %v2231
      %v2294 = vpack.c.b16 %v2236, %v2234
      %v2295 = vpack.c.b16 %v2237, %v2235
      %v2296 = vpack.c.b16 %v2240, %v2238
      %v2297 = vpack.c.b16 %v2241, %v2239
      %v2298 = vpack.c.b16 %v2244, %v2242
      %v2299 = vpack.c.b16 %v2245, %v2243
      %v2300 = vpack.c.b16 %v2248, %v2246
      %v2301 = vpack.c.b16 %v2249, %v2247
      %v2302 = vpack.c.b16 %v2252, %v2250
      %v2303 = vpack.c.b16 %v2253, %v2251
      %v2304 = vpack.c.b16 %v2256, %v2254
      %v2305 = vpack.c.b16 %v2257, %v2255
      %v2306 = vpack.c.b16 %v2260, %v2258
      %v2307 = vpack.c.b16 %v2261, %v2259
      %v2308 = vpack.c.b16 %v2264, %v2262
      %v2309 = vpack.c.b16 %v2265, %v2263
      %v2310 = vpack.c.b16 %v2268, %v2266
      %v2311 = vpack.c.b16 %v2269, %v2267
      %v2312 = vpack.c.b16 %v2272, %v2270
      %v2313 = vpack.c.b16 %v2273, %v2271
      %v2314 = vpack.c.b16 %v2276, %v2274
      %v2315 = vpack.c.b16 %v2277, %v2275
      %v2316 = vpack.c.b16 %v2280, %v2278
      %v2317 = vpack.c.b16 %v2281, %v2279
      %v2318 = vpack.c.b16 %v2284, %v2282
      %v2319 = vpack.c.b16 %v2285, %v2283
      %v2320 = vpack.c.b16 %v2288, %v2286
      %v2321 = vpack.c.b16 %v2289, %v2287
      %2354 = vmatprep.subr.bf16.mxu0 %v2291
      %2355 = vmatpush1.bf16.msra.mxu0 %v2290
      %2356 = vmatprep.subr.bf16.mxu0 %v2293
      %2357 = vmatpush1.bf16.msra.mxu0 %v2292
      %2358 = vmatprep.subr.bf16.mxu0 %v2295
      %2359 = vmatpush1.bf16.msra.mxu0 %v2294
      %2360 = vmatprep.subr.bf16.mxu0 %v2297
      %2361 = vmatpush1.bf16.msra.mxu0 %v2296
      %2362 = vmatprep.subr.bf16.mxu0 %v2299
      %2363 = vmatpush1.bf16.msra.mxu0 %v2298
      %2364 = vmatprep.subr.bf16.mxu0 %v2301
      %2365 = vmatpush1.bf16.msra.mxu0 %v2300
      %2366 = vmatprep.subr.bf16.mxu0 %v2303
      %2367 = vmatpush1.bf16.msra.mxu0 %v2302
      %2368 = vmatprep.subr.bf16.mxu0 %v2305
      %2369 = vmatpush1.bf16.msra.mxu0 %v2304
      %2370 = vmatprep.subr.bf16.mxu0 %v2307
      %2371 = vmatpush1.bf16.msra.mxu0 %v2306
      %2372 = vmatprep.subr.bf16.mxu0 %v2309
      %2373 = vmatpush1.bf16.msra.mxu0 %v2308
      %2374 = vmatprep.subr.bf16.mxu0 %v2311
      %2375 = vmatpush1.bf16.msra.mxu0 %v2310
      %2376 = vmatprep.subr.bf16.mxu0 %v2313
      %2377 = vmatpush1.bf16.msra.mxu0 %v2312
      %2378 = vmatprep.subr.bf16.mxu0 %v2315
      %2379 = vmatpush1.bf16.msra.mxu0 %v2314
      %2380 = vmatprep.subr.bf16.mxu0 %v2317
      %2381 = vmatpush1.bf16.msra.mxu0 %v2316
      %2382 = vmatprep.subr.bf16.mxu0 %v2319
      %2383 = vmatpush1.bf16.msra.mxu0 %v2318
      %2384 = vmatprep.subr.bf16.mxu0 %v2321
      %2385 = vmatpush1.bf16.msra.mxu0 %v2320
      %2386 = vmatprep.mubr.bf16.mxu0 %v1869
      %2387 = vmatmul.mubr.bf16.gmra.mrb[0].mxu0 %v1868
      %v2388 = vpop.f32.mrb[0].mxu0
      %v2389 = vadd.f32 %v2186, %v2388
      %v2390 = vpop.f32.mrb[0].mxu0
      %v2391 = vadd.f32 %v2188, %v2390
      %v2392 = vpop.f32.mrb[0].mxu0
      %v2393 = vadd.f32 %v2190, %v2392
      %v2394 = vpop.f32.mrb[0].mxu0
      %v2395 = vadd.f32 %v2192, %v2394
      %2396 = vdwg.mxu0
      %s2397 = scalar_lea.vmem %s4, 16
      %v2398 = vld [vmem:[%s2397] sm:$0xf]
      %v2399 = vld [vmem:[%s2397 + $0x4] sm:$0xf]
      %v2402 = vunpack.c.l.b16 %v2398
      %v2403 = vunpack.c.l.b16 %v2399
      %v2404 = vpack.c.b16 %v2403, %v2402
      %v2406 = vsel %vm1821, %v2404, 0
      %2408 = vmatprep.subr.bf16.mxu0 %v1811
      %2409 = vmatpush1.bf16.msra.mxu0 %v1810
      %2410 = vmatprep.subr.bf16.mxu0 %v1813
      %2411 = vmatpush1.bf16.msra.mxu0 %v1812
      %2412 = vmatprep.subr.bf16.mxu0 0
      %2413 = vmatpush1.bf16.msra.mxu0 0
      %2414 = vmatprep.subr.bf16.mxu0 0
      %2415 = vmatpush1.bf16.msra.mxu0 0
      %2416 = vmatprep.subr.bf16.mxu0 0
      %2417 = vmatpush1.bf16.msra.mxu0 0
      %2418 = vmatprep.subr.bf16.mxu0 0
      %2419 = vmatpush1.bf16.msra.mxu0 0
      %2420 = vmatprep.subr.bf16.mxu0 0
      %2421 = vmatpush1.bf16.msra.mxu0 0
      %2422 = vmatprep.subr.bf16.mxu0 0
      %2423 = vmatpush1.bf16.msra.mxu0 0
      %2424 = vmatprep.subr.bf16.mxu0 0
      %2425 = vmatpush1.bf16.msra.mxu0 0
      %2426 = vmatprep.subr.bf16.mxu0 0
      %2427 = vmatpush1.bf16.msra.mxu0 0
      %2428 = vmatprep.subr.bf16.mxu0 0
      %2429 = vmatpush1.bf16.msra.mxu0 0
      %2430 = vmatprep.subr.bf16.mxu0 0
      %2431 = vmatpush1.bf16.msra.mxu0 0
      %2432 = vmatprep.subr.bf16.mxu0 0
      %2433 = vmatpush1.bf16.msra.mxu0 0
      %2434 = vmatprep.subr.bf16.mxu0 0
      %2435 = vmatpush1.bf16.msra.mxu0 0
      %2436 = vmatprep.subr.bf16.mxu0 0
      %2437 = vmatpush1.bf16.msra.mxu0 0
      %2438 = vmatprep.subr.bf16.mxu0 0
      %2439 = vmatpush1.bf16.msra.mxu0 0
      %2440 = vmatprep.mubr.bf16.mxu0 0
      %2441 = vmatmul.mubr.bf16.gmra.mrb[0].mxu0 %v2406
      %v2442 = vpop.f32.mrb[0].mxu0
      %v2443 = vadd.f32 0.0, %v2442
      %v2444 = vpop.f32.mrb[0].mxu0
      %v2445 = vadd.f32 0.0, %v2444
      %v2446 = vpop.f32.mrb[0].mxu0
      %v2447 = vadd.f32 0.0, %v2446
      %v2448 = vpop.f32.mrb[0].mxu0
      %v2449 = vadd.f32 0.0, %v2448
      %2450 = vdwg.mxu0
      %v2451 = vpack.c.bf16 %v2447, %v2443
      %v2452 = vpack.c.bf16 %v2449, %v2445
      %s2453 = scalar_lea.vmem %s5, 512
      %v2454 = vld [vmem:[%s2453] sm:$0xff]
      %v2455 = vld [vmem:[%s2453 + $0x8] sm:$0xff]
      %v2456 = vld [vmem:[%s2453 + $0x10] sm:$0xff]
      %v2457 = vld [vmem:[%s2453 + $0x18] sm:$0xff]
      %v2458 = vld [vmem:[%s2453 + $0x20] sm:$0xff]
      %v2459 = vld [vmem:[%s2453 + $0x28] sm:$0xff]
      %v2460 = vld [vmem:[%s2453 + $0x30] sm:$0xff]
      %v2461 = vld [vmem:[%s2453 + $0x38] sm:$0xff]
      %v2462 = vld [vmem:[%s2453 + $0x40] sm:$0xff]
      %v2463 = vld [vmem:[%s2453 + $0x48] sm:$0xff]
      %v2464 = vld [vmem:[%s2453 + $0x50] sm:$0xff]
      %v2465 = vld [vmem:[%s2453 + $0x58] sm:$0xff]
      %v2466 = vld [vmem:[%s2453 + $0x60] sm:$0xff]
      %v2467 = vld [vmem:[%s2453 + $0x68] sm:$0xff]
      %v2468 = vld [vmem:[%s2453 + $0x70] sm:$0xff]
      %v2469 = vld [vmem:[%s2453 + $0x78] sm:$0xff]
      %v2470 = vld [vmem:[%s2453 + $0x80] sm:$0xff]
      %v2471 = vld [vmem:[%s2453 + $0x88] sm:$0xff]
      %v2472 = vld [vmem:[%s2453 + $0x90] sm:$0xff]
      %v2473 = vld [vmem:[%s2453 + $0x98] sm:$0xff]
      %v2474 = vld [vmem:[%s2453 + $0xa0] sm:$0xff]
      %v2475 = vld [vmem:[%s2453 + $0xa8] sm:$0xff]
      %v2476 = vld [vmem:[%s2453 + $0xb0] sm:$0xff]
      %v2477 = vld [vmem:[%s2453 + $0xb8] sm:$0xff]
      %v2478 = vld [vmem:[%s2453 + $0xc0] sm:$0xff]
      %v2479 = vld [vmem:[%s2453 + $0xc8] sm:$0xff]
      %v2480 = vld [vmem:[%s2453 + $0xd0] sm:$0xff]
      %v2481 = vld [vmem:[%s2453 + $0xd8] sm:$0xff]
      %v2482 = vld [vmem:[%s2453 + $0xe0] sm:$0xff]
      %v2483 = vld [vmem:[%s2453 + $0xe8] sm:$0xff]
      %v2484 = vld [vmem:[%s2453 + $0xf0] sm:$0xff]
      %v2485 = vld [vmem:[%s2453 + $0xf8] sm:$0xff]
      %v2518 = vunpack.c.l.b16 %v2454
      %v2519 = vunpack.c.h.b16 %v2454
      %v2520 = vunpack.c.l.b16 %v2455
      %v2521 = vunpack.c.h.b16 %v2455
      %v2522 = vunpack.c.l.b16 %v2456
      %v2523 = vunpack.c.h.b16 %v2456
      %v2524 = vunpack.c.l.b16 %v2457
      %v2525 = vunpack.c.h.b16 %v2457
      %v2526 = vunpack.c.l.b16 %v2458
      %v2527 = vunpack.c.h.b16 %v2458
      %v2528 = vunpack.c.l.b16 %v2459
      %v2529 = vunpack.c.h.b16 %v2459
      %v2530 = vunpack.c.l.b16 %v2460
      %v2531 = vunpack.c.h.b16 %v2460
      %v2532 = vunpack.c.l.b16 %v2461
      %v2533 = vunpack.c.h.b16 %v2461
      %v2534 = vunpack.c.l.b16 %v2462
      %v2535 = vunpack.c.h.b16 %v2462
      %v2536 = vunpack.c.l.b16 %v2463
      %v2537 = vunpack.c.h.b16 %v2463
      %v2538 = vunpack.c.l.b16 %v2464
      %v2539 = vunpack.c.h.b16 %v2464
      %v2540 = vunpack.c.l.b16 %v2465
      %v2541 = vunpack.c.h.b16 %v2465
      %v2542 = vunpack.c.l.b16 %v2466
      %v2543 = vunpack.c.h.b16 %v2466
      %v2544 = vunpack.c.l.b16 %v2467
      %v2545 = vunpack.c.h.b16 %v2467
      %v2546 = vunpack.c.l.b16 %v2468
      %v2547 = vunpack.c.h.b16 %v2468
      %v2548 = vunpack.c.l.b16 %v2469
      %v2549 = vunpack.c.h.b16 %v2469
      %v2550 = vunpack.c.l.b16 %v2470
      %v2551 = vunpack.c.h.b16 %v2470
      %v2552 = vunpack.c.l.b16 %v2471
      %v2553 = vunpack.c.h.b16 %v2471
      %v2554 = vunpack.c.l.b16 %v2472
      %v2555 = vunpack.c.h.b16 %v2472
      %v2556 = vunpack.c.l.b16 %v2473
      %v2557 = vunpack.c.h.b16 %v2473
      %v2558 = vunpack.c.l.b16 %v2474
      %v2559 = vunpack.c.h.b16 %v2474
      %v2560 = vunpack.c.l.b16 %v2475
      %v2561 = vunpack.c.h.b16 %v2475
      %v2562 = vunpack.c.l.b16 %v2476
      %v2563 = vunpack.c.h.b16 %v2476
      %v2564 = vunpack.c.l.b16 %v2477
      %v2565 = vunpack.c.h.b16 %v2477
      %v2566 = vunpack.c.l.b16 %v2478
      %v2567 = vunpack.c.h.b16 %v2478
      %v2568 = vunpack.c.l.b16 %v2479
      %v2569 = vunpack.c.h.b16 %v2479
      %v2570 = vunpack.c.l.b16 %v2480
      %v2571 = vunpack.c.h.b16 %v2480
      %v2572 = vunpack.c.l.b16 %v2481
      %v2573 = vunpack.c.h.b16 %v2481
      %v2574 = vunpack.c.l.b16 %v2482
      %v2575 = vunpack.c.h.b16 %v2482
      %v2576 = vunpack.c.l.b16 %v2483
      %v2577 = vunpack.c.h.b16 %v2483
      %v2578 = vunpack.c.l.b16 %v2484
      %v2579 = vunpack.c.h.b16 %v2484
      %v2580 = vunpack.c.l.b16 %v2485
      %v2581 = vunpack.c.h.b16 %v2485
      %v2582 = vpack.c.b16 %v2520, %v2518
      %v2583 = vpack.c.b16 %v2521, %v2519
      %v2584 = vpack.c.b16 %v2524, %v2522
      %v2585 = vpack.c.b16 %v2525, %v2523
      %v2586 = vpack.c.b16 %v2528, %v2526
      %v2587 = vpack.c.b16 %v2529, %v2527
      %v2588 = vpack.c.b16 %v2532, %v2530
      %v2589 = vpack.c.b16 %v2533, %v2531
      %v2590 = vpack.c.b16 %v2536, %v2534
      %v2591 = vpack.c.b16 %v2537, %v2535
      %v2592 = vpack.c.b16 %v2540, %v2538
      %v2593 = vpack.c.b16 %v2541, %v2539
      %v2594 = vpack.c.b16 %v2544, %v2542
      %v2595 = vpack.c.b16 %v2545, %v2543
      %v2596 = vpack.c.b16 %v2548, %v2546
      %v2597 = vpack.c.b16 %v2549, %v2547
      %v2598 = vpack.c.b16 %v2552, %v2550
      %v2599 = vpack.c.b16 %v2553, %v2551
      %v2600 = vpack.c.b16 %v2556, %v2554
      %v2601 = vpack.c.b16 %v2557, %v2555
      %v2602 = vpack.c.b16 %v2560, %v2558
      %v2603 = vpack.c.b16 %v2561, %v2559
      %v2604 = vpack.c.b16 %v2564, %v2562
      %v2605 = vpack.c.b16 %v2565, %v2563
      %v2606 = vpack.c.b16 %v2568, %v2566
      %v2607 = vpack.c.b16 %v2569, %v2567
      %v2608 = vpack.c.b16 %v2572, %v2570
      %v2609 = vpack.c.b16 %v2573, %v2571
      %v2610 = vpack.c.b16 %v2576, %v2574
      %v2611 = vpack.c.b16 %v2577, %v2575
      %v2612 = vpack.c.b16 %v2580, %v2578
      %v2613 = vpack.c.b16 %v2581, %v2579
      %2646 = vmatprep.subr.bf16.mxu0 %v2583
      %2647 = vmatpush1.bf16.msra.mxu0 %v2582
      %2648 = vmatprep.subr.bf16.mxu0 %v2585
      %2649 = vmatpush1.bf16.msra.mxu0 %v2584
      %2650 = vmatprep.subr.bf16.mxu0 %v2587
      %2651 = vmatpush1.bf16.msra.mxu0 %v2586
      %2652 = vmatprep.subr.bf16.mxu0 %v2589
      %2653 = vmatpush1.bf16.msra.mxu0 %v2588
      %2654 = vmatprep.subr.bf16.mxu0 %v2591
      %2655 = vmatpush1.bf16.msra.mxu0 %v2590
      %2656 = vmatprep.subr.bf16.mxu0 %v2593
      %2657 = vmatpush1.bf16.msra.mxu0 %v2592
      %2658 = vmatprep.subr.bf16.mxu0 %v2595
      %2659 = vmatpush1.bf16.msra.mxu0 %v2594
      %2660 = vmatprep.subr.bf16.mxu0 %v2597
      %2661 = vmatpush1.bf16.msra.mxu0 %v2596
      %2662 = vmatprep.subr.bf16.mxu0 %v2599
      %2663 = vmatpush1.bf16.msra.mxu0 %v2598
      %2664 = vmatprep.subr.bf16.mxu0 %v2601
      %2665 = vmatpush1.bf16.msra.mxu0 %v2600
      %2666 = vmatprep.subr.bf16.mxu0 %v2603
      %2667 = vmatpush1.bf16.msra.mxu0 %v2602
      %2668 = vmatprep.subr.bf16.mxu0 %v2605
      %2669 = vmatpush1.bf16.msra.mxu0 %v2604
      %2670 = vmatprep.subr.bf16.mxu0 %v2607
      %2671 = vmatpush1.bf16.msra.mxu0 %v2606
      %2672 = vmatprep.subr.bf16.mxu0 %v2609
      %2673 = vmatpush1.bf16.msra.mxu0 %v2608
      %2674 = vmatprep.subr.bf16.mxu0 %v2611
      %2675 = vmatpush1.bf16.msra.mxu0 %v2610
      %2676 = vmatprep.subr.bf16.mxu0 %v2613
      %2677 = vmatpush1.bf16.msra.mxu0 %v2612
      %2678 = vmatprep.mubr.bf16.mxu0 %v2452
      %2679 = vmatmul.mubr.bf16.gmra.mrb[0].mxu0 %v2451
      %v2680 = vpop.f32.mrb[0].mxu0
      %v2681 = vadd.f32 0.0, %v2680
      %v2682 = vpop.f32.mrb[0].mxu0
      %v2683 = vadd.f32 0.0, %v2682
      %v2684 = vpop.f32.mrb[0].mxu0
      %v2685 = vadd.f32 0.0, %v2684
      %v2686 = vpop.f32.mrb[0].mxu0
      %v2687 = vadd.f32 0.0, %v2686
      %2688 = vdwg.mxu0
      %v2689 = vadd.f32 %v2389, %v2681
      %v2690 = vadd.f32 %v2391, %v2683
      %v2691 = vadd.f32 %v2393, %v2685
      %v2692 = vadd.f32 %v2395, %v2687
      %v2693 = vld [vmem:[%s6] sm:$0x3]
      %v2695 = vlaneseq
      %v2696 = vshrl.u32 %v2695, 7
      %v2697 = vsub.s32 0, %v2696
      %v2698 = vrot.slane %v2693, %v2697
      %v2699 = vlaneseq
      %v2700 = vshrl.u32 %v2699, 7
      %v2701 = vsub.s32 1, %v2700
      %v2702 = vrot.slane %v2693, %v2701
      %v2705 = vadd.f32 %v2689, %v2698
      %v2706 = vadd.f32 %v2690, %v2702
      %v2707 = vadd.f32 %v2691, %v2698
      %v2708 = vadd.f32 %v2692, %v2702
      %v2709 = vmax.f32 %v2705, 0.0
      %v2710 = vmax.f32 %v2706, 0.0
      %v2711 = vmax.f32 %v2707, 0.0
      %v2712 = vmax.f32 %v2708, 0.0
      %v2713 = vpack.c.bf16 %v2711, %v2709
      %v2714 = vpack.c.bf16 %v2712, %v2710
      %v2715 = vld [vmem:[%s7] sm:$0xf]
      %vm2716 = vcmask 130048
      %v2718 = vsel %vm2716, %v2715, 0
      %2720 = vmatprep.subr.bf16.mxu0 %v2714
      %2721 = vmatpush1.bf16.msra.mxu0 %v2713
      %2722 = vmatprep.subr.bf16.mxu0 0
      %2723 = vmatpush1.bf16.msra.mxu0 0
      %2724 = vmatprep.subr.bf16.mxu0 0
      %2725 = vmatpush1.bf16.msra.mxu0 0
      %2726 = vmatprep.subr.bf16.mxu0 0
      %2727 = vmatpush1.bf16.msra.mxu0 0
      %2728 = vmatprep.subr.bf16.mxu0 0
      %2729 = vmatpush1.bf16.msra.mxu0 0
      %2730 = vmatprep.subr.bf16.mxu0 0
      %2731 = vmatpush1.bf16.msra.mxu0 0
      %2732 = vmatprep.subr.bf16.mxu0 0
      %2733 = vmatpush1.bf16.msra.mxu0 0
      %2734 = vmatprep.subr.bf16.mxu0 0
      %2735 = vmatpush1.bf16.msra.mxu0 0
      %2736 = vmatprep.subr.bf16.mxu0 0
      %2737 = vmatpush1.bf16.msra.mxu0 0
      %2738 = vmatprep.subr.bf16.mxu0 0
      %2739 = vmatpush1.bf16.msra.mxu0 0
      %2740 = vmatprep.subr.bf16.mxu0 0
      %2741 = vmatpush1.bf16.msra.mxu0 0
      %2742 = vmatprep.subr.bf16.mxu0 0
      %2743 = vmatpush1.bf16.msra.mxu0 0
      %2744 = vmatprep.subr.bf16.mxu0 0
      %2745 = vmatpush1.bf16.msra.mxu0 0
      %2746 = vmatprep.subr.bf16.mxu0 0
      %2747 = vmatpush1.bf16.msra.mxu0 0
      %2748 = vmatprep.subr.bf16.mxu0 0
      %2749 = vmatpush1.bf16.msra.mxu0 0
      %2750 = vmatprep.subr.bf16.mxu0 0
      %2751 = vmatpush1.bf16.msra.mxu0 0
      %2752 = vmatprep.mubr.bf16.mxu0 0
      %2753 = vmatmul.mubr.bf16.gmra.mrb[0].mxu0 %v2718
      %v2754 = vpop.f32.mrb[0].mxu0
      %v2755 = vadd.f32 0.0, %v2754
      %v2756 = vpop.f32.mrb[0].mxu0
      %v2757 = vadd.f32 0.0, %v2756
      %v2758 = vpop.f32.mrb[0].mxu0
      %v2759 = vpop.f32.mrb[0].mxu0
      %2760 = vdwg.mxu0
      %v2761 = vpack.c.bf16 %v2755, %v2755
      %v2762 = vpack.c.bf16 %v2757, %v2757
      %v2763 = vld [vmem:[%s8] sm:$0xff]
      %v2764 = vld [vmem:[%s8 + $0x8] sm:$0xff]
      %v2765 = vld [vmem:[%s8 + $0x10] sm:$0xff]
      %v2766 = vld [vmem:[%s8 + $0x18] sm:$0xff]
      %v2767 = vld [vmem:[%s8 + $0x20] sm:$0xff]
      %v2768 = vld [vmem:[%s8 + $0x28] sm:$0xff]
      %v2769 = vld [vmem:[%s8 + $0x30] sm:$0xff]
      %v2770 = vld [vmem:[%s8 + $0x38] sm:$0xff]
      %v2771 = vld [vmem:[%s8 + $0x40] sm:$0xff]
      %v2772 = vld [vmem:[%s8 + $0x48] sm:$0xff]
      %v2773 = vld [vmem:[%s8 + $0x50] sm:$0xff]
      %v2774 = vld [vmem:[%s8 + $0x58] sm:$0xff]
      %v2775 = vld [vmem:[%s8 + $0x60] sm:$0xff]
      %v2776 = vld [vmem:[%s8 + $0x68] sm:$0xff]
      %v2777 = vld [vmem:[%s8 + $0x70] sm:$0xff]
      %v2778 = vld [vmem:[%s8 + $0x78] sm:$0xff]
      %v2779 = vld [vmem:[%s8 + $0x80] sm:$0xff]
      %v2780 = vld [vmem:[%s8 + $0x88] sm:$0xff]
      %v2781 = vld [vmem:[%s8 + $0x90] sm:$0xff]
      %v2782 = vld [vmem:[%s8 + $0x98] sm:$0xff]
      %v2783 = vld [vmem:[%s8 + $0xa0] sm:$0xff]
      %v2784 = vld [vmem:[%s8 + $0xa8] sm:$0xff]
      %v2785 = vld [vmem:[%s8 + $0xb0] sm:$0xff]
      %v2786 = vld [vmem:[%s8 + $0xb8] sm:$0xff]
      %v2787 = vld [vmem:[%s8 + $0xc0] sm:$0xff]
      %v2788 = vld [vmem:[%s8 + $0xc8] sm:$0xff]
      %v2789 = vld [vmem:[%s8 + $0xd0] sm:$0xff]
      %v2790 = vld [vmem:[%s8 + $0xd8] sm:$0xff]
      %v2791 = vld [vmem:[%s8 + $0xe0] sm:$0xff]
      %v2792 = vld [vmem:[%s8 + $0xe8] sm:$0xff]
      %v2793 = vld [vmem:[%s8 + $0xf0] sm:$0xff]
      %v2794 = vld [vmem:[%s8 + $0xf8] sm:$0xff]
      %s2795 = scalar_lea.vmem %s7, 4
      %v2796 = vld [vmem:[%s2795] sm:$0xf]
      %v2798 = vsel %vm2716, %v2796, 0
      %2800 = vmatprep.subr.bf16.mxu0 %v2714
      %2801 = vmatpush1.bf16.msra.mxu0 %v2713
      %2802 = vmatprep.subr.bf16.mxu0 0
      %2803 = vmatpush1.bf16.msra.mxu0 0
      %2804 = vmatprep.subr.bf16.mxu0 0
      %2805 = vmatpush1.bf16.msra.mxu0 0
      %2806 = vmatprep.subr.bf16.mxu0 0
      %2807 = vmatpush1.bf16.msra.mxu0 0
      %2808 = vmatprep.subr.bf16.mxu0 0
      %2809 = vmatpush1.bf16.msra.mxu0 0
      %2810 = vmatprep.subr.bf16.mxu0 0
      %2811 = vmatpush1.bf16.msra.mxu0 0
      %2812 = vmatprep.subr.bf16.mxu0 0
      %2813 = vmatpush1.bf16.msra.mxu0 0
      %2814 = vmatprep.subr.bf16.mxu0 0
      %2815 = vmatpush1.bf16.msra.mxu0 0
      %2816 = vmatprep.subr.bf16.mxu0 0
      %2817 = vmatpush1.bf16.msra.mxu0 0
      %2818 = vmatprep.subr.bf16.mxu0 0
      %2819 = vmatpush1.bf16.msra.mxu0 0
      %2820 = vmatprep.subr.bf16.mxu0 0
      %2821 = vmatpush1.bf16.msra.mxu0 0
      %2822 = vmatprep.subr.bf16.mxu0 0
      %2823 = vmatpush1.bf16.msra.mxu0 0
      %2824 = vmatprep.subr.bf16.mxu0 0
      %2825 = vmatpush1.bf16.msra.mxu0 0
      %2826 = vmatprep.subr.bf16.mxu0 0
      %2827 = vmatpush1.bf16.msra.mxu0 0
      %2828 = vmatprep.subr.bf16.mxu0 0
      %2829 = vmatpush1.bf16.msra.mxu0 0
      %2830 = vmatprep.subr.bf16.mxu0 0
      %2831 = vmatpush1.bf16.msra.mxu0 0
      %2832 = vmatprep.mubr.bf16.mxu0 0
      %2833 = vmatmul.mubr.bf16.gmra.mrb[0].mxu0 %v2798
      %v2834 = vpop.f32.mrb[0].mxu0
      %v2835 = vadd.f32 0.0, %v2834
      %v2836 = vpop.f32.mrb[0].mxu0
      %v2837 = vadd.f32 0.0, %v2836
      %v2838 = vpop.f32.mrb[0].mxu0
      %v2839 = vpop.f32.mrb[0].mxu0
      %2840 = vdwg.mxu0
      %v2841 = vpack.c.bf16 %v2835, %v2835
      %v2842 = vpack.c.bf16 %v2837, %v2837
      %s2843 = scalar_lea.vmem %s8, 256
      %v2844 = vld [vmem:[%s2843] sm:$0xff]
      %v2845 = vld [vmem:[%s2843 + $0x8] sm:$0xff]
      %v2846 = vld [vmem:[%s2843 + $0x10] sm:$0xff]
      %v2847 = vld [vmem:[%s2843 + $0x18] sm:$0xff]
      %v2848 = vld [vmem:[%s2843 + $0x20] sm:$0xff]
      %v2849 = vld [vmem:[%s2843 + $0x28] sm:$0xff]
      %v2850 = vld [vmem:[%s2843 + $0x30] sm:$0xff]
      %v2851 = vld [vmem:[%s2843 + $0x38] sm:$0xff]
      %v2852 = vld [vmem:[%s2843 + $0x40] sm:$0xff]
      %v2853 = vld [vmem:[%s2843 + $0x48] sm:$0xff]
      %v2854 = vld [vmem:[%s2843 + $0x50] sm:$0xff]
      %v2855 = vld [vmem:[%s2843 + $0x58] sm:$0xff]
      %v2856 = vld [vmem:[%s2843 + $0x60] sm:$0xff]
      %v2857 = vld [vmem:[%s2843 + $0x68] sm:$0xff]
      %v2858 = vld [vmem:[%s2843 + $0x70] sm:$0xff]
      %v2859 = vld [vmem:[%s2843 + $0x78] sm:$0xff]
      %v2860 = vld [vmem:[%s2843 + $0x80] sm:$0xff]
      %v2861 = vld [vmem:[%s2843 + $0x88] sm:$0xff]
      %v2862 = vld [vmem:[%s2843 + $0x90] sm:$0xff]
      %v2863 = vld [vmem:[%s2843 + $0x98] sm:$0xff]
      %v2864 = vld [vmem:[%s2843 + $0xa0] sm:$0xff]
      %v2865 = vld [vmem:[%s2843 + $0xa8] sm:$0xff]
      %v2866 = vld [vmem:[%s2843 + $0xb0] sm:$0xff]
      %v2867 = vld [vmem:[%s2843 + $0xb8] sm:$0xff]
      %v2868 = vld [vmem:[%s2843 + $0xc0] sm:$0xff]
      %v2869 = vld [vmem:[%s2843 + $0xc8] sm:$0xff]
      %v2870 = vld [vmem:[%s2843 + $0xd0] sm:$0xff]
      %v2871 = vld [vmem:[%s2843 + $0xd8] sm:$0xff]
      %v2872 = vld [vmem:[%s2843 + $0xe0] sm:$0xff]
      %v2873 = vld [vmem:[%s2843 + $0xe8] sm:$0xff]
      %v2874 = vld [vmem:[%s2843 + $0xf0] sm:$0xff]
      %v2875 = vld [vmem:[%s2843 + $0xf8] sm:$0xff]
      %v2908 = vunpack.c.l.b16 %v2844
      %v2909 = vunpack.c.h.b16 %v2844
      %v2910 = vunpack.c.l.b16 %v2845
      %v2911 = vunpack.c.h.b16 %v2845
      %v2912 = vunpack.c.l.b16 %v2846
      %v2913 = vunpack.c.h.b16 %v2846
      %v2914 = vunpack.c.l.b16 %v2847
      %v2915 = vunpack.c.h.b16 %v2847
      %v2916 = vunpack.c.l.b16 %v2848
      %v2917 = vunpack.c.h.b16 %v2848
      %v2918 = vunpack.c.l.b16 %v2849
      %v2919 = vunpack.c.h.b16 %v2849
      %v2920 = vunpack.c.l.b16 %v2850
      %v2921 = vunpack.c.h.b16 %v2850
      %v2922 = vunpack.c.l.b16 %v2851
      %v2923 = vunpack.c.h.b16 %v2851
      %v2924 = vunpack.c.l.b16 %v2852
      %v2925 = vunpack.c.h.b16 %v2852
      %v2926 = vunpack.c.l.b16 %v2853
      %v2927 = vunpack.c.h.b16 %v2853
      %v2928 = vunpack.c.l.b16 %v2854
      %v2929 = vunpack.c.h.b16 %v2854
      %v2930 = vunpack.c.l.b16 %v2855
      %v2931 = vunpack.c.h.b16 %v2855
      %v2932 = vunpack.c.l.b16 %v2856
      %v2933 = vunpack.c.h.b16 %v2856
      %v2934 = vunpack.c.l.b16 %v2857
      %v2935 = vunpack.c.h.b16 %v2857
      %v2936 = vunpack.c.l.b16 %v2858
      %v2937 = vunpack.c.h.b16 %v2858
      %v2938 = vunpack.c.l.b16 %v2859
      %v2939 = vunpack.c.h.b16 %v2859
      %v2940 = vunpack.c.l.b16 %v2860
      %v2941 = vunpack.c.h.b16 %v2860
      %v2942 = vunpack.c.l.b16 %v2861
      %v2943 = vunpack.c.h.b16 %v2861
      %v2944 = vunpack.c.l.b16 %v2862
      %v2945 = vunpack.c.h.b16 %v2862
      %v2946 = vunpack.c.l.b16 %v2863
      %v2947 = vunpack.c.h.b16 %v2863
      %v2948 = vunpack.c.l.b16 %v2864
      %v2949 = vunpack.c.h.b16 %v2864
      %v2950 = vunpack.c.l.b16 %v2865
      %v2951 = vunpack.c.h.b16 %v2865
      %v2952 = vunpack.c.l.b16 %v2866
      %v2953 = vunpack.c.h.b16 %v2866
      %v2954 = vunpack.c.l.b16 %v2867
      %v2955 = vunpack.c.h.b16 %v2867
      %v2956 = vunpack.c.l.b16 %v2868
      %v2957 = vunpack.c.h.b16 %v2868
      %v2958 = vunpack.c.l.b16 %v2869
      %v2959 = vunpack.c.h.b16 %v2869
      %v2960 = vunpack.c.l.b16 %v2870
      %v2961 = vunpack.c.h.b16 %v2870
      %v2962 = vunpack.c.l.b16 %v2871
      %v2963 = vunpack.c.h.b16 %v2871
      %v2964 = vunpack.c.l.b16 %v2872
      %v2965 = vunpack.c.h.b16 %v2872
      %v2966 = vunpack.c.l.b16 %v2873
      %v2967 = vunpack.c.h.b16 %v2873
      %v2968 = vunpack.c.l.b16 %v2874
      %v2969 = vunpack.c.h.b16 %v2874
      %v2970 = vunpack.c.l.b16 %v2875
      %v2971 = vunpack.c.h.b16 %v2875
      %v2972 = vpack.c.b16 %v2910, %v2908
      %v2973 = vpack.c.b16 %v2911, %v2909
      %v2974 = vpack.c.b16 %v2914, %v2912
      %v2975 = vpack.c.b16 %v2915, %v2913
      %v2976 = vpack.c.b16 %v2918, %v2916
      %v2977 = vpack.c.b16 %v2919, %v2917
      %v2978 = vpack.c.b16 %v2922, %v2920
      %v2979 = vpack.c.b16 %v2923, %v2921
      %v2980 = vpack.c.b16 %v2926, %v2924
      %v2981 = vpack.c.b16 %v2927, %v2925
      %v2982 = vpack.c.b16 %v2930, %v2928
      %v2983 = vpack.c.b16 %v2931, %v2929
      %v2984 = vpack.c.b16 %v2934, %v2932
      %v2985 = vpack.c.b16 %v2935, %v2933
      %v2986 = vpack.c.b16 %v2938, %v2936
      %v2987 = vpack.c.b16 %v2939, %v2937
      %v2988 = vpack.c.b16 %v2942, %v2940
      %v2989 = vpack.c.b16 %v2943, %v2941
      %v2990 = vpack.c.b16 %v2946, %v2944
      %v2991 = vpack.c.b16 %v2947, %v2945
      %v2992 = vpack.c.b16 %v2950, %v2948
      %v2993 = vpack.c.b16 %v2951, %v2949
      %v2994 = vpack.c.b16 %v2954, %v2952
      %v2995 = vpack.c.b16 %v2955, %v2953
      %v2996 = vpack.c.b16 %v2958, %v2956
      %v2997 = vpack.c.b16 %v2959, %v2957
      %v2998 = vpack.c.b16 %v2962, %v2960
      %v2999 = vpack.c.b16 %v2963, %v2961
      %v3000 = vpack.c.b16 %v2966, %v2964
      %v3001 = vpack.c.b16 %v2967, %v2965
      %v3002 = vpack.c.b16 %v2970, %v2968
      %v3003 = vpack.c.b16 %v2971, %v2969
      %3036 = vmatprep.subr.bf16.mxu0 %v2973
      %3037 = vmatpush1.bf16.msra.mxu0 %v2972
      %3038 = vmatprep.subr.bf16.mxu0 %v2975
      %3039 = vmatpush1.bf16.msra.mxu0 %v2974
      %3040 = vmatprep.subr.bf16.mxu0 %v2977
      %3041 = vmatpush1.bf16.msra.mxu0 %v2976
      %3042 = vmatprep.subr.bf16.mxu0 %v2979
      %3043 = vmatpush1.bf16.msra.mxu0 %v2978
      %3044 = vmatprep.subr.bf16.mxu0 %v2981
      %3045 = vmatpush1.bf16.msra.mxu0 %v2980
      %3046 = vmatprep.subr.bf16.mxu0 %v2983
      %3047 = vmatpush1.bf16.msra.mxu0 %v2982
      %3048 = vmatprep.subr.bf16.mxu0 %v2985
      %3049 = vmatpush1.bf16.msra.mxu0 %v2984
      %3050 = vmatprep.subr.bf16.mxu0 %v2987
      %3051 = vmatpush1.bf16.msra.mxu0 %v2986
      %3052 = vmatprep.subr.bf16.mxu0 %v2989
      %3053 = vmatpush1.bf16.msra.mxu0 %v2988
      %3054 = vmatprep.subr.bf16.mxu0 %v2991
      %3055 = vmatpush1.bf16.msra.mxu0 %v2990
      %3056 = vmatprep.subr.bf16.mxu0 %v2993
      %3057 = vmatpush1.bf16.msra.mxu0 %v2992
      %3058 = vmatprep.subr.bf16.mxu0 %v2995
      %3059 = vmatpush1.bf16.msra.mxu0 %v2994
      %3060 = vmatprep.subr.bf16.mxu0 %v2997
      %3061 = vmatpush1.bf16.msra.mxu0 %v2996
      %3062 = vmatprep.subr.bf16.mxu0 %v2999
      %3063 = vmatpush1.bf16.msra.mxu0 %v2998
      %3064 = vmatprep.subr.bf16.mxu0 %v3001
      %3065 = vmatpush1.bf16.msra.mxu0 %v3000
      %3066 = vmatprep.subr.bf16.mxu0 %v3003
      %3067 = vmatpush1.bf16.msra.mxu0 %v3002
      %3068 = vmatprep.mubr.bf16.mxu0 %v2842
      %3069 = vmatmul.mubr.bf16.gmra.mrb[0].mxu0 %v2841
      %v3070 = vpop.f32.mrb[0].mxu0
      %v3071 = vadd.f32 0.0, %v3070
      %v3072 = vpop.f32.mrb[0].mxu0
      %v3073 = vadd.f32 0.0, %v3072
      %v3074 = vpop.f32.mrb[0].mxu0
      %v3075 = vpop.f32.mrb[0].mxu0
      %3076 = vdwg.mxu0
      %v3109 = vunpack.c.l.b16 %v2763
      %v3110 = vunpack.c.h.b16 %v2763
      %v3111 = vunpack.c.l.b16 %v2764
      %v3112 = vunpack.c.h.b16 %v2764
      %v3113 = vunpack.c.l.b16 %v2765
      %v3114 = vunpack.c.h.b16 %v2765
      %v3115 = vunpack.c.l.b16 %v2766
      %v3116 = vunpack.c.h.b16 %v2766
      %v3117 = vunpack.c.l.b16 %v2767
      %v3118 = vunpack.c.h.b16 %v2767
      %v3119 = vunpack.c.l.b16 %v2768
      %v3120 = vunpack.c.h.b16 %v2768
      %v3121 = vunpack.c.l.b16 %v2769
      %v3122 = vunpack.c.h.b16 %v2769
      %v3123 = vunpack.c.l.b16 %v2770
      %v3124 = vunpack.c.h.b16 %v2770
      %v3125 = vunpack.c.l.b16 %v2771
      %v3126 = vunpack.c.h.b16 %v2771
      %v3127 = vunpack.c.l.b16 %v2772
      %v3128 = vunpack.c.h.b16 %v2772
      %v3129 = vunpack.c.l.b16 %v2773
      %v3130 = vunpack.c.h.b16 %v2773
      %v3131 = vunpack.c.l.b16 %v2774
      %v3132 = vunpack.c.h.b16 %v2774
      %v3133 = vunpack.c.l.b16 %v2775
      %v3134 = vunpack.c.h.b16 %v2775
      %v3135 = vunpack.c.l.b16 %v2776
      %v3136 = vunpack.c.h.b16 %v2776
      %v3137 = vunpack.c.l.b16 %v2777
      %v3138 = vunpack.c.h.b16 %v2777
      %v3139 = vunpack.c.l.b16 %v2778
      %v3140 = vunpack.c.h.b16 %v2778
      %v3141 = vunpack.c.l.b16 %v2779
      %v3142 = vunpack.c.h.b16 %v2779
      %v3143 = vunpack.c.l.b16 %v2780
      %v3144 = vunpack.c.h.b16 %v2780
      %v3145 = vunpack.c.l.b16 %v2781
      %v3146 = vunpack.c.h.b16 %v2781
      %v3147 = vunpack.c.l.b16 %v2782
      %v3148 = vunpack.c.h.b16 %v2782
      %v3149 = vunpack.c.l.b16 %v2783
      %v3150 = vunpack.c.h.b16 %v2783
      %v3151 = vunpack.c.l.b16 %v2784
      %v3152 = vunpack.c.h.b16 %v2784
      %v3153 = vunpack.c.l.b16 %v2785
      %v3154 = vunpack.c.h.b16 %v2785
      %v3155 = vunpack.c.l.b16 %v2786
      %v3156 = vunpack.c.h.b16 %v2786
      %v3157 = vunpack.c.l.b16 %v2787
      %v3158 = vunpack.c.h.b16 %v2787
      %v3159 = vunpack.c.l.b16 %v2788
      %v3160 = vunpack.c.h.b16 %v2788
      %v3161 = vunpack.c.l.b16 %v2789
      %v3162 = vunpack.c.h.b16 %v2789
      %v3163 = vunpack.c.l.b16 %v2790
      %v3164 = vunpack.c.h.b16 %v2790
      %v3165 = vunpack.c.l.b16 %v2791
      %v3166 = vunpack.c.h.b16 %v2791
      %v3167 = vunpack.c.l.b16 %v2792
      %v3168 = vunpack.c.h.b16 %v2792
      %v3169 = vunpack.c.l.b16 %v2793
      %v3170 = vunpack.c.h.b16 %v2793
      %v3171 = vunpack.c.l.b16 %v2794
      %v3172 = vunpack.c.h.b16 %v2794
      %v3173 = vpack.c.b16 %v3111, %v3109
      %v3174 = vpack.c.b16 %v3112, %v3110
      %v3175 = vpack.c.b16 %v3115, %v3113
      %v3176 = vpack.c.b16 %v3116, %v3114
      %v3177 = vpack.c.b16 %v3119, %v3117
      %v3178 = vpack.c.b16 %v3120, %v3118
      %v3179 = vpack.c.b16 %v3123, %v3121
      %v3180 = vpack.c.b16 %v3124, %v3122
      %v3181 = vpack.c.b16 %v3127, %v3125
      %v3182 = vpack.c.b16 %v3128, %v3126
      %v3183 = vpack.c.b16 %v3131, %v3129
      %v3184 = vpack.c.b16 %v3132, %v3130
      %v3185 = vpack.c.b16 %v3135, %v3133
      %v3186 = vpack.c.b16 %v3136, %v3134
      %v3187 = vpack.c.b16 %v3139, %v3137
      %v3188 = vpack.c.b16 %v3140, %v3138
      %v3189 = vpack.c.b16 %v3143, %v3141
      %v3190 = vpack.c.b16 %v3144, %v3142
      %v3191 = vpack.c.b16 %v3147, %v3145
      %v3192 = vpack.c.b16 %v3148, %v3146
      %v3193 = vpack.c.b16 %v3151, %v3149
      %v3194 = vpack.c.b16 %v3152, %v3150
      %v3195 = vpack.c.b16 %v3155, %v3153
      %v3196 = vpack.c.b16 %v3156, %v3154
      %v3197 = vpack.c.b16 %v3159, %v3157
      %v3198 = vpack.c.b16 %v3160, %v3158
      %v3199 = vpack.c.b16 %v3163, %v3161
      %v3200 = vpack.c.b16 %v3164, %v3162
      %v3201 = vpack.c.b16 %v3167, %v3165
      %v3202 = vpack.c.b16 %v3168, %v3166
      %v3203 = vpack.c.b16 %v3171, %v3169
      %v3204 = vpack.c.b16 %v3172, %v3170
      %3237 = vmatprep.subr.bf16.mxu0 %v3174
      %3238 = vmatpush1.bf16.msra.mxu0 %v3173
      %3239 = vmatprep.subr.bf16.mxu0 %v3176
      %3240 = vmatpush1.bf16.msra.mxu0 %v3175
      %3241 = vmatprep.subr.bf16.mxu0 %v3178
      %3242 = vmatpush1.bf16.msra.mxu0 %v3177
      %3243 = vmatprep.subr.bf16.mxu0 %v3180
      %3244 = vmatpush1.bf16.msra.mxu0 %v3179
      %3245 = vmatprep.subr.bf16.mxu0 %v3182
      %3246 = vmatpush1.bf16.msra.mxu0 %v3181
      %3247 = vmatprep.subr.bf16.mxu0 %v3184
      %3248 = vmatpush1.bf16.msra.mxu0 %v3183
      %3249 = vmatprep.subr.bf16.mxu0 %v3186
      %3250 = vmatpush1.bf16.msra.mxu0 %v3185
      %3251 = vmatprep.subr.bf16.mxu0 %v3188
      %3252 = vmatpush1.bf16.msra.mxu0 %v3187
      %3253 = vmatprep.subr.bf16.mxu0 %v3190
      %3254 = vmatpush1.bf16.msra.mxu0 %v3189
      %3255 = vmatprep.subr.bf16.mxu0 %v3192
      %3256 = vmatpush1.bf16.msra.mxu0 %v3191
      %3257 = vmatprep.subr.bf16.mxu0 %v3194
      %3258 = vmatpush1.bf16.msra.mxu0 %v3193
      %3259 = vmatprep.subr.bf16.mxu0 %v3196
      %3260 = vmatpush1.bf16.msra.mxu0 %v3195
      %3261 = vmatprep.subr.bf16.mxu0 %v3198
      %3262 = vmatpush1.bf16.msra.mxu0 %v3197
      %3263 = vmatprep.subr.bf16.mxu0 %v3200
      %3264 = vmatpush1.bf16.msra.mxu0 %v3199
      %3265 = vmatprep.subr.bf16.mxu0 %v3202
      %3266 = vmatpush1.bf16.msra.mxu0 %v3201
      %3267 = vmatprep.subr.bf16.mxu0 %v3204
      %3268 = vmatpush1.bf16.msra.mxu0 %v3203
      %3269 = vmatprep.mubr.bf16.mxu0 %v2762
      %3270 = vmatmul.mubr.bf16.gmra.mrb[0].mxu0 %v2761
      %v3271 = vpop.f32.mrb[0].mxu0
      %v3272 = vadd.f32 %v3071, %v3271
      %v3273 = vpop.f32.mrb[0].mxu0
      %v3274 = vadd.f32 %v3073, %v3273
      %v3275 = vpop.f32.mrb[0].mxu0
      %v3276 = vpop.f32.mrb[0].mxu0
      %3277 = vdwg.mxu0
      %s3278 = scalar_lea.vmem %s7, 8
      %v3279 = vld [vmem:[%s3278] sm:$0xf]
      %v3281 = vsel %vm2716, %v3279, 0
      %3283 = vmatprep.subr.bf16.mxu0 %v2714
      %3284 = vmatpush1.bf16.msra.mxu0 %v2713
      %3285 = vmatprep.subr.bf16.mxu0 0
      %3286 = vmatpush1.bf16.msra.mxu0 0
      %3287 = vmatprep.subr.bf16.mxu0 0
      %3288 = vmatpush1.bf16.msra.mxu0 0
      %3289 = vmatprep.subr.bf16.mxu0 0
      %3290 = vmatpush1.bf16.msra.mxu0 0
      %3291 = vmatprep.subr.bf16.mxu0 0
      %3292 = vmatpush1.bf16.msra.mxu0 0
      %3293 = vmatprep.subr.bf16.mxu0 0
      %3294 = vmatpush1.bf16.msra.mxu0 0
      %3295 = vmatprep.subr.bf16.mxu0 0
      %3296 = vmatpush1.bf16.msra.mxu0 0
      %3297 = vmatprep.subr.bf16.mxu0 0
      %3298 = vmatpush1.bf16.msra.mxu0 0
      %3299 = vmatprep.subr.bf16.mxu0 0
      %3300 = vmatpush1.bf16.msra.mxu0 0
      %3301 = vmatprep.subr.bf16.mxu0 0
      %3302 = vmatpush1.bf16.msra.mxu0 0
      %3303 = vmatprep.subr.bf16.mxu0 0
      %3304 = vmatpush1.bf16.msra.mxu0 0
      %3305 = vmatprep.subr.bf16.mxu0 0
      %3306 = vmatpush1.bf16.msra.mxu0 0
      %3307 = vmatprep.subr.bf16.mxu0 0
      %3308 = vmatpush1.bf16.msra.mxu0 0
      %3309 = vmatprep.subr.bf16.mxu0 0
      %3310 = vmatpush1.bf16.msra.mxu0 0
      %3311 = vmatprep.subr.bf16.mxu0 0
      %3312 = vmatpush1.bf16.msra.mxu0 0
      %3313 = vmatprep.subr.bf16.mxu0 0
      %3314 = vmatpush1.bf16.msra.mxu0 0
      %3315 = vmatprep.mubr.bf16.mxu0 0
      %3316 = vmatmul.mubr.bf16.gmra.mrb[0].mxu0 %v3281
      %v3317 = vpop.f32.mrb[0].mxu0
      %v3318 = vadd.f32 0.0, %v3317
      %v3319 = vpop.f32.mrb[0].mxu0
      %v3320 = vadd.f32 0.0, %v3319
      %v3321 = vpop.f32.mrb[0].mxu0
      %v3322 = vpop.f32.mrb[0].mxu0
      %3323 = vdwg.mxu0
      %v3324 = vpack.c.bf16 %v3318, %v3318
      %v3325 = vpack.c.bf16 %v3320, %v3320
      %s3326 = scalar_lea.vmem %s8, 512
      %v3327 = vld [vmem:[%s3326] sm:$0xff]
      %v3328 = vld [vmem:[%s3326 + $0x8] sm:$0xff]
      %v3329 = vld [vmem:[%s3326 + $0x10] sm:$0xff]
      %v3330 = vld [vmem:[%s3326 + $0x18] sm:$0xff]
      %v3331 = vld [vmem:[%s3326 + $0x20] sm:$0xff]
      %v3332 = vld [vmem:[%s3326 + $0x28] sm:$0xff]
      %v3333 = vld [vmem:[%s3326 + $0x30] sm:$0xff]
      %v3334 = vld [vmem:[%s3326 + $0x38] sm:$0xff]
      %v3335 = vld [vmem:[%s3326 + $0x40] sm:$0xff]
      %v3336 = vld [vmem:[%s3326 + $0x48] sm:$0xff]
      %v3337 = vld [vmem:[%s3326 + $0x50] sm:$0xff]
      %v3338 = vld [vmem:[%s3326 + $0x58] sm:$0xff]
      %v3339 = vld [vmem:[%s3326 + $0x60] sm:$0xff]
      %v3340 = vld [vmem:[%s3326 + $0x68] sm:$0xff]
      %v3341 = vld [vmem:[%s3326 + $0x70] sm:$0xff]
      %v3342 = vld [vmem:[%s3326 + $0x78] sm:$0xff]
      %v3343 = vld [vmem:[%s3326 + $0x80] sm:$0xff]
      %v3344 = vld [vmem:[%s3326 + $0x88] sm:$0xff]
      %v3345 = vld [vmem:[%s3326 + $0x90] sm:$0xff]
      %v3346 = vld [vmem:[%s3326 + $0x98] sm:$0xff]
      %v3347 = vld [vmem:[%s3326 + $0xa0] sm:$0xff]
      %v3348 = vld [vmem:[%s3326 + $0xa8] sm:$0xff]
      %v3349 = vld [vmem:[%s3326 + $0xb0] sm:$0xff]
      %v3350 = vld [vmem:[%s3326 + $0xb8] sm:$0xff]
      %v3351 = vld [vmem:[%s3326 + $0xc0] sm:$0xff]
      %v3352 = vld [vmem:[%s3326 + $0xc8] sm:$0xff]
      %v3353 = vld [vmem:[%s3326 + $0xd0] sm:$0xff]
      %v3354 = vld [vmem:[%s3326 + $0xd8] sm:$0xff]
      %v3355 = vld [vmem:[%s3326 + $0xe0] sm:$0xff]
      %v3356 = vld [vmem:[%s3326 + $0xe8] sm:$0xff]
      %v3357 = vld [vmem:[%s3326 + $0xf0] sm:$0xff]
      %v3358 = vld [vmem:[%s3326 + $0xf8] sm:$0xff]
      %v3391 = vunpack.c.l.b16 %v3327
      %v3392 = vunpack.c.h.b16 %v3327
      %v3393 = vunpack.c.l.b16 %v3328
      %v3394 = vunpack.c.h.b16 %v3328
      %v3395 = vunpack.c.l.b16 %v3329
      %v3396 = vunpack.c.h.b16 %v3329
      %v3397 = vunpack.c.l.b16 %v3330
      %v3398 = vunpack.c.h.b16 %v3330
      %v3399 = vunpack.c.l.b16 %v3331
      %v3400 = vunpack.c.h.b16 %v3331
      %v3401 = vunpack.c.l.b16 %v3332
      %v3402 = vunpack.c.h.b16 %v3332
      %v3403 = vunpack.c.l.b16 %v3333
      %v3404 = vunpack.c.h.b16 %v3333
      %v3405 = vunpack.c.l.b16 %v3334
      %v3406 = vunpack.c.h.b16 %v3334
      %v3407 = vunpack.c.l.b16 %v3335
      %v3408 = vunpack.c.h.b16 %v3335
      %v3409 = vunpack.c.l.b16 %v3336
      %v3410 = vunpack.c.h.b16 %v3336
      %v3411 = vunpack.c.l.b16 %v3337
      %v3412 = vunpack.c.h.b16 %v3337
      %v3413 = vunpack.c.l.b16 %v3338
      %v3414 = vunpack.c.h.b16 %v3338
      %v3415 = vunpack.c.l.b16 %v3339
      %v3416 = vunpack.c.h.b16 %v3339
      %v3417 = vunpack.c.l.b16 %v3340
      %v3418 = vunpack.c.h.b16 %v3340
      %v3419 = vunpack.c.l.b16 %v3341
      %v3420 = vunpack.c.h.b16 %v3341
      %v3421 = vunpack.c.l.b16 %v3342
      %v3422 = vunpack.c.h.b16 %v3342
      %v3423 = vunpack.c.l.b16 %v3343
      %v3424 = vunpack.c.h.b16 %v3343
      %v3425 = vunpack.c.l.b16 %v3344
      %v3426 = vunpack.c.h.b16 %v3344
      %v3427 = vunpack.c.l.b16 %v3345
      %v3428 = vunpack.c.h.b16 %v3345
      %v3429 = vunpack.c.l.b16 %v3346
      %v3430 = vunpack.c.h.b16 %v3346
      %v3431 = vunpack.c.l.b16 %v3347
      %v3432 = vunpack.c.h.b16 %v3347
      %v3433 = vunpack.c.l.b16 %v3348
      %v3434 = vunpack.c.h.b16 %v3348
      %v3435 = vunpack.c.l.b16 %v3349
      %v3436 = vunpack.c.h.b16 %v3349
      %v3437 = vunpack.c.l.b16 %v3350
      %v3438 = vunpack.c.h.b16 %v3350
      %v3439 = vunpack.c.l.b16 %v3351
      %v3440 = vunpack.c.h.b16 %v3351
      %v3441 = vunpack.c.l.b16 %v3352
      %v3442 = vunpack.c.h.b16 %v3352
      %v3443 = vunpack.c.l.b16 %v3353
      %v3444 = vunpack.c.h.b16 %v3353
      %v3445 = vunpack.c.l.b16 %v3354
      %v3446 = vunpack.c.h.b16 %v3354
      %v3447 = vunpack.c.l.b16 %v3355
      %v3448 = vunpack.c.h.b16 %v3355
      %v3449 = vunpack.c.l.b16 %v3356
      %v3450 = vunpack.c.h.b16 %v3356
      %v3451 = vunpack.c.l.b16 %v3357
      %v3452 = vunpack.c.h.b16 %v3357
      %v3453 = vunpack.c.l.b16 %v3358
      %v3454 = vunpack.c.h.b16 %v3358
      %v3455 = vpack.c.b16 %v3393, %v3391
      %v3456 = vpack.c.b16 %v3394, %v3392
      %v3457 = vpack.c.b16 %v3397, %v3395
      %v3458 = vpack.c.b16 %v3398, %v3396
      %v3459 = vpack.c.b16 %v3401, %v3399
      %v3460 = vpack.c.b16 %v3402, %v3400
      %v3461 = vpack.c.b16 %v3405, %v3403
      %v3462 = vpack.c.b16 %v3406, %v3404
      %v3463 = vpack.c.b16 %v3409, %v3407
      %v3464 = vpack.c.b16 %v3410, %v3408
      %v3465 = vpack.c.b16 %v3413, %v3411
      %v3466 = vpack.c.b16 %v3414, %v3412
      %v3467 = vpack.c.b16 %v3417, %v3415
      %v3468 = vpack.c.b16 %v3418, %v3416
      %v3469 = vpack.c.b16 %v3421, %v3419
      %v3470 = vpack.c.b16 %v3422, %v3420
      %v3471 = vpack.c.b16 %v3425, %v3423
      %v3472 = vpack.c.b16 %v3426, %v3424
      %v3473 = vpack.c.b16 %v3429, %v3427
      %v3474 = vpack.c.b16 %v3430, %v3428
      %v3475 = vpack.c.b16 %v3433, %v3431
      %v3476 = vpack.c.b16 %v3434, %v3432
      %v3477 = vpack.c.b16 %v3437, %v3435
      %v3478 = vpack.c.b16 %v3438, %v3436
      %v3479 = vpack.c.b16 %v3441, %v3439
      %v3480 = vpack.c.b16 %v3442, %v3440
      %v3481 = vpack.c.b16 %v3445, %v3443
      %v3482 = vpack.c.b16 %v3446, %v3444
      %v3483 = vpack.c.b16 %v3449, %v3447
      %v3484 = vpack.c.b16 %v3450, %v3448
      %v3485 = vpack.c.b16 %v3453, %v3451
      %v3486 = vpack.c.b16 %v3454, %v3452
      %3519 = vmatprep.subr.bf16.mxu0 %v3456
      %3520 = vmatpush1.bf16.msra.mxu0 %v3455
      %3521 = vmatprep.subr.bf16.mxu0 %v3458
      %3522 = vmatpush1.bf16.msra.mxu0 %v3457
      %3523 = vmatprep.subr.bf16.mxu0 %v3460
      %3524 = vmatpush1.bf16.msra.mxu0 %v3459
      %3525 = vmatprep.subr.bf16.mxu0 %v3462
      %3526 = vmatpush1.bf16.msra.mxu0 %v3461
      %3527 = vmatprep.subr.bf16.mxu0 %v3464
      %3528 = vmatpush1.bf16.msra.mxu0 %v3463
      %3529 = vmatprep.subr.bf16.mxu0 %v3466
      %3530 = vmatpush1.bf16.msra.mxu0 %v3465
      %3531 = vmatprep.subr.bf16.mxu0 %v3468
      %3532 = vmatpush1.bf16.msra.mxu0 %v3467
      %3533 = vmatprep.subr.bf16.mxu0 %v3470
      %3534 = vmatpush1.bf16.msra.mxu0 %v3469
      %3535 = vmatprep.subr.bf16.mxu0 %v3472
      %3536 = vmatpush1.bf16.msra.mxu0 %v3471
      %3537 = vmatprep.subr.bf16.mxu0 %v3474
      %3538 = vmatpush1.bf16.msra.mxu0 %v3473
      %3539 = vmatprep.subr.bf16.mxu0 %v3476
      %3540 = vmatpush1.bf16.msra.mxu0 %v3475
      %3541 = vmatprep.subr.bf16.mxu0 %v3478
      %3542 = vmatpush1.bf16.msra.mxu0 %v3477
      %3543 = vmatprep.subr.bf16.mxu0 %v3480
      %3544 = vmatpush1.bf16.msra.mxu0 %v3479
      %3545 = vmatprep.subr.bf16.mxu0 %v3482
      %3546 = vmatpush1.bf16.msra.mxu0 %v3481
      %3547 = vmatprep.subr.bf16.mxu0 %v3484
      %3548 = vmatpush1.bf16.msra.mxu0 %v3483
      %3549 = vmatprep.subr.bf16.mxu0 %v3486
      %3550 = vmatpush1.bf16.msra.mxu0 %v3485
      %3551 = vmatprep.mubr.bf16.mxu0 %v3325
      %3552 = vmatmul.mubr.bf16.gmra.mrb[0].mxu0 %v3324
      %v3553 = vpop.f32.mrb[0].mxu0
      %v3554 = vadd.f32 0.0, %v3553
      %v3555 = vpop.f32.mrb[0].mxu0
      %v3556 = vadd.f32 0.0, %v3555
      %v3557 = vpop.f32.mrb[0].mxu0
      %v3558 = vpop.f32.mrb[0].mxu0
      %3559 = vdwg.mxu0
      %v3560 = vadd.f32 %v3272, %v3554
      %v3561 = vadd.f32 %v3274, %v3556
      %v3562 = vld [vmem:[%s9] sm:$0x3]
      %v3564 = vlaneseq
      %v3565 = vshrl.u32 %v3564, 7
      %v3566 = vsub.s32 0, %v3565
      %v3567 = vrot.slane %v3562, %v3566
      %v3568 = vlaneseq
      %v3569 = vshrl.u32 %v3568, 7
      %v3570 = vsub.s32 1, %v3569
      %v3571 = vrot.slane %v3562, %v3570
      %v3574 = vadd.f32 %v3560, %v3567
      %v3575 = vadd.f32 %v3561, %v3571
      %v3576 = vmax.f32 %v3574, 0.0
      %v3577 = vmax.f32 %v3575, 0.0
      %v3578 = vpack.c.bf16 %v3576, %v3576
      %v3579 = vpack.c.bf16 %v3577, %v3577
      %v3580 = vld [vmem:[%s10] sm:$0xf]
      %v3581 = vld [vmem:[%s10 + $0x4] sm:$0xf]
      %v3582 = vld [vmem:[%s10 + $0x8] sm:$0xf]
      %v3583 = vld [vmem:[%s10 + $0xc] sm:$0xf]
      %v3584 = vld [vmem:[%s10 + $0x10] sm:$0xf]
      %v3585 = vld [vmem:[%s10 + $0x14] sm:$0xf]
      %v3586 = vld [vmem:[%s10 + $0x18] sm:$0xf]
      %v3587 = vld [vmem:[%s10 + $0x1c] sm:$0xf]
      %v3596 = vunpack.c.l.b16 %v3580
      %v3597 = vunpack.c.l.b16 %v3581
      %v3598 = vunpack.c.l.b16 %v3582
      %v3599 = vunpack.c.l.b16 %v3583
      %v3600 = vunpack.c.l.b16 %v3584
      %v3601 = vunpack.c.l.b16 %v3585
      %v3602 = vunpack.c.l.b16 %v3586
      %v3603 = vunpack.c.l.b16 %v3587
      %v3604 = vpack.c.b16 %v3597, %v3596
      %v3605 = vpack.c.b16 %v3599, %v3598
      %v3606 = vpack.c.b16 %v3601, %v3600
      %v3607 = vpack.c.b16 %v3603, %v3602
      %v3609 = vsel %vm873, %v3604, 0
      %v3612 = vsel %vm873, %v3605, 0
      %v3615 = vsel %vm873, %v3606, 0
      %v3618 = vsel %vm873, %v3607, 0
      %3620 = vmatprep.subr.bf16.mxu0 0
      %3621 = vmatpush1.bf16.msra.mxu0 %v855
      %3622 = vmatprep.subr.bf16.mxu0 0
      %3623 = vmatpush1.bf16.msra.mxu0 %v856
      %3624 = vmatprep.subr.bf16.mxu0 0
      %3625 = vmatpush1.bf16.msra.mxu0 %v857
      %3626 = vmatprep.subr.bf16.mxu0 0
      %3627 = vmatpush1.bf16.msra.mxu0 %v858
      %3628 = vmatprep.subr.bf16.mxu0 0
      %3629 = vmatpush1.bf16.msra.mxu0 0
      %3630 = vmatprep.subr.bf16.mxu0 0
      %3631 = vmatpush1.bf16.msra.mxu0 0
      %3632 = vmatprep.subr.bf16.mxu0 0
      %3633 = vmatpush1.bf16.msra.mxu0 0
      %3634 = vmatprep.subr.bf16.mxu0 0
      %3635 = vmatpush1.bf16.msra.mxu0 0
      %3636 = vmatprep.subr.bf16.mxu0 0
      %3637 = vmatpush1.bf16.msra.mxu0 0
      %3638 = vmatprep.subr.bf16.mxu0 0
      %3639 = vmatpush1.bf16.msra.mxu0 0
      %3640 = vmatprep.subr.bf16.mxu0 0
      %3641 = vmatpush1.bf16.msra.mxu0 0
      %3642 = vmatprep.subr.bf16.mxu0 0
      %3643 = vmatpush1.bf16.msra.mxu0 0
      %3644 = vmatprep.subr.bf16.mxu0 0
      %3645 = vmatpush1.bf16.msra.mxu0 0
      %3646 = vmatprep.subr.bf16.mxu0 0
      %3647 = vmatpush1.bf16.msra.mxu0 0
      %3648 = vmatprep.subr.bf16.mxu0 0
      %3649 = vmatpush1.bf16.msra.mxu0 0
      %3650 = vmatprep.subr.bf16.mxu0 0
      %3651 = vmatpush1.bf16.msra.mxu0 0
      %3652 = vmatprep.mubr.bf16.mxu0 0
      %3653 = vmatmul.mubr.bf16.gmra.mrb[0].mxu0 %v3609
      %v3654 = vpop.f32.mrb[0].mxu0
      %v3655 = vadd.f32 0.0, %v3654
      %v3656 = vpop.f32.mrb[0].mxu0
      %v3657 = vpop.f32.mrb[0].mxu0
      %v3658 = vadd.f32 0.0, %v3657
      %v3659 = vpop.f32.mrb[0].mxu0
      %3660 = vmatprep.mubr.bf16.mxu0 0
      %3661 = vmatmul.mubr.bf16.gmra.mrb[0].mxu0 %v3612
      %v3662 = vpop.f32.mrb[0].mxu0
      %v3663 = vadd.f32 0.0, %v3662
      %v3664 = vpop.f32.mrb[0].mxu0
      %v3665 = vpop.f32.mrb[0].mxu0
      %v3666 = vadd.f32 0.0, %v3665
      %v3667 = vpop.f32.mrb[0].mxu0
      %3668 = vmatprep.mubr.bf16.mxu0 0
      %3669 = vmatmul.mubr.bf16.gmra.mrb[0].mxu0 %v3615
      %v3670 = vpop.f32.mrb[0].mxu0
      %v3671 = vadd.f32 0.0, %v3670
      %v3672 = vpop.f32.mrb[0].mxu0
      %v3673 = vpop.f32.mrb[0].mxu0
      %v3674 = vadd.f32 0.0, %v3673
      %v3675 = vpop.f32.mrb[0].mxu0
      %3676 = vmatprep.mubr.bf16.mxu0 0
      %3677 = vmatmul.mubr.bf16.gmra.mrb[0].mxu0 %v3618
      %v3678 = vpop.f32.mrb[0].mxu0
      %v3679 = vadd.f32 0.0, %v3678
      %v3680 = vpop.f32.mrb[0].mxu0
      %v3681 = vpop.f32.mrb[0].mxu0
      %v3682 = vadd.f32 0.0, %v3681
      %v3683 = vpop.f32.mrb[0].mxu0
      %3684 = vdwg.mxu0
      %v3685 = vpack.c.bf16 %v3658, %v3655
      %v3686 = vpack.c.bf16 %v3666, %v3663
      %v3687 = vpack.c.bf16 %v3674, %v3671
      %v3688 = vpack.c.bf16 %v3682, %v3679
      %v3689 = vld [vmem:[%s11] sm:$0xff]
      %v3690 = vld [vmem:[%s11 + $0x8] sm:$0xff]
      %v3691 = vld [vmem:[%s11 + $0x10] sm:$0xff]
      %v3692 = vld [vmem:[%s11 + $0x18] sm:$0xff]
      %v3693 = vld [vmem:[%s11 + $0x20] sm:$0xff]
      %v3694 = vld [vmem:[%s11 + $0x28] sm:$0xff]
      %v3695 = vld [vmem:[%s11 + $0x30] sm:$0xff]
      %v3696 = vld [vmem:[%s11 + $0x38] sm:$0xff]
      %s3697 = scalar_lea.vmem %s10, 32
      %v3698 = vld [vmem:[%s3697] sm:$0xf]
      %v3699 = vld [vmem:[%s3697 + $0x4] sm:$0xf]
      %v3700 = vld [vmem:[%s3697 + $0x8] sm:$0xf]
      %v3701 = vld [vmem:[%s3697 + $0xc] sm:$0xf]
      %v3702 = vld [vmem:[%s3697 + $0x10] sm:$0xf]
      %v3703 = vld [vmem:[%s3697 + $0x14] sm:$0xf]
      %v3704 = vld [vmem:[%s3697 + $0x18] sm:$0xf]
      %v3705 = vld [vmem:[%s3697 + $0x1c] sm:$0xf]
      %v3714 = vunpack.c.l.b16 %v3698
      %v3715 = vunpack.c.l.b16 %v3699
      %v3716 = vunpack.c.l.b16 %v3700
      %v3717 = vunpack.c.l.b16 %v3701
      %v3718 = vunpack.c.l.b16 %v3702
      %v3719 = vunpack.c.l.b16 %v3703
      %v3720 = vunpack.c.l.b16 %v3704
      %v3721 = vunpack.c.l.b16 %v3705
      %v3722 = vpack.c.b16 %v3715, %v3714
      %v3723 = vpack.c.b16 %v3717, %v3716
      %v3724 = vpack.c.b16 %v3719, %v3718
      %v3725 = vpack.c.b16 %v3721, %v3720
      %v3727 = vsel %vm873, %v3722, 0
      %v3730 = vsel %vm873, %v3723, 0
      %v3733 = vsel %vm873, %v3724, 0
      %v3736 = vsel %vm873, %v3725, 0
      %3738 = vmatprep.subr.bf16.mxu0 0
      %3739 = vmatpush1.bf16.msra.mxu0 %v855
      %3740 = vmatprep.subr.bf16.mxu0 0
      %3741 = vmatpush1.bf16.msra.mxu0 %v856
      %3742 = vmatprep.subr.bf16.mxu0 0
      %3743 = vmatpush1.bf16.msra.mxu0 %v857
      %3744 = vmatprep.subr.bf16.mxu0 0
      %3745 = vmatpush1.bf16.msra.mxu0 %v858
      %3746 = vmatprep.subr.bf16.mxu0 0
      %3747 = vmatpush1.bf16.msra.mxu0 0
      %3748 = vmatprep.subr.bf16.mxu0 0
      %3749 = vmatpush1.bf16.msra.mxu0 0
      %3750 = vmatprep.subr.bf16.mxu0 0
      %3751 = vmatpush1.bf16.msra.mxu0 0
      %3752 = vmatprep.subr.bf16.mxu0 0
      %3753 = vmatpush1.bf16.msra.mxu0 0
      %3754 = vmatprep.subr.bf16.mxu0 0
      %3755 = vmatpush1.bf16.msra.mxu0 0
      %3756 = vmatprep.subr.bf16.mxu0 0
      %3757 = vmatpush1.bf16.msra.mxu0 0
      %3758 = vmatprep.subr.bf16.mxu0 0
      %3759 = vmatpush1.bf16.msra.mxu0 0
      %3760 = vmatprep.subr.bf16.mxu0 0
      %3761 = vmatpush1.bf16.msra.mxu0 0
      %3762 = vmatprep.subr.bf16.mxu0 0
      %3763 = vmatpush1.bf16.msra.mxu0 0
      %3764 = vmatprep.subr.bf16.mxu0 0
      %3765 = vmatpush1.bf16.msra.mxu0 0
      %3766 = vmatprep.subr.bf16.mxu0 0
      %3767 = vmatpush1.bf16.msra.mxu0 0
      %3768 = vmatprep.subr.bf16.mxu0 0
      %3769 = vmatpush1.bf16.msra.mxu0 0
      %3770 = vmatprep.mubr.bf16.mxu0 0
      %3771 = vmatmul.mubr.bf16.gmra.mrb[0].mxu0 %v3727
      %v3772 = vpop.f32.mrb[0].mxu0
      %v3773 = vadd.f32 0.0, %v3772
      %v3774 = vpop.f32.mrb[0].mxu0
      %v3775 = vpop.f32.mrb[0].mxu0
      %v3776 = vadd.f32 0.0, %v3775
      %v3777 = vpop.f32.mrb[0].mxu0
      %3778 = vmatprep.mubr.bf16.mxu0 0
      %3779 = vmatmul.mubr.bf16.gmra.mrb[0].mxu0 %v3730
      %v3780 = vpop.f32.mrb[0].mxu0
      %v3781 = vadd.f32 0.0, %v3780
      %v3782 = vpop.f32.mrb[0].mxu0
      %v3783 = vpop.f32.mrb[0].mxu0
      %v3784 = vadd.f32 0.0, %v3783
      %v3785 = vpop.f32.mrb[0].mxu0
      %3786 = vmatprep.mubr.bf16.mxu0 0
      %3787 = vmatmul.mubr.bf16.gmra.mrb[0].mxu0 %v3733
      %v3788 = vpop.f32.mrb[0].mxu0
      %v3789 = vadd.f32 0.0, %v3788
      %v3790 = vpop.f32.mrb[0].mxu0
      %v3791 = vpop.f32.mrb[0].mxu0
      %v3792 = vadd.f32 0.0, %v3791
      %v3793 = vpop.f32.mrb[0].mxu0
      %3794 = vmatprep.mubr.bf16.mxu0 0
      %3795 = vmatmul.mubr.bf16.gmra.mrb[0].mxu0 %v3736
      %v3796 = vpop.f32.mrb[0].mxu0
      %v3797 = vadd.f32 0.0, %v3796
      %v3798 = vpop.f32.mrb[0].mxu0
      %v3799 = vpop.f32.mrb[0].mxu0
      %v3800 = vadd.f32 0.0, %v3799
      %v3801 = vpop.f32.mrb[0].mxu0
      %3802 = vdwg.mxu0
      %v3803 = vpack.c.bf16 %v3776, %v3773
      %v3804 = vpack.c.bf16 %v3784, %v3781
      %v3805 = vpack.c.bf16 %v3792, %v3789
      %v3806 = vpack.c.bf16 %v3800, %v3797
      %s3807 = scalar_lea.vmem %s11, 64
      %v3808 = vld [vmem:[%s3807] sm:$0xff]
      %v3809 = vld [vmem:[%s3807 + $0x8] sm:$0xff]
      %v3810 = vld [vmem:[%s3807 + $0x10] sm:$0xff]
      %v3811 = vld [vmem:[%s3807 + $0x18] sm:$0xff]
      %v3812 = vld [vmem:[%s3807 + $0x20] sm:$0xff]
      %v3813 = vld [vmem:[%s3807 + $0x28] sm:$0xff]
      %v3814 = vld [vmem:[%s3807 + $0x30] sm:$0xff]
      %v3815 = vld [vmem:[%s3807 + $0x38] sm:$0xff]
      %v3824 = vunpack.c.l.b16 %v3808
      %v3825 = vunpack.c.h.b16 %v3808
      %v3826 = vunpack.c.l.b16 %v3809
      %v3827 = vunpack.c.h.b16 %v3809
      %v3828 = vunpack.c.l.b16 %v3810
      %v3829 = vunpack.c.h.b16 %v3810
      %v3830 = vunpack.c.l.b16 %v3811
      %v3831 = vunpack.c.h.b16 %v3811
      %v3832 = vunpack.c.l.b16 %v3812
      %v3833 = vunpack.c.h.b16 %v3812
      %v3834 = vunpack.c.l.b16 %v3813
      %v3835 = vunpack.c.h.b16 %v3813
      %v3836 = vunpack.c.l.b16 %v3814
      %v3837 = vunpack.c.h.b16 %v3814
      %v3838 = vunpack.c.l.b16 %v3815
      %v3839 = vunpack.c.h.b16 %v3815
      %v3840 = vpack.c.b16 %v3826, %v3824
      %v3841 = vpack.c.b16 %v3827, %v3825
      %v3842 = vpack.c.b16 %v3830, %v3828
      %v3843 = vpack.c.b16 %v3831, %v3829
      %v3844 = vpack.c.b16 %v3834, %v3832
      %v3845 = vpack.c.b16 %v3835, %v3833
      %v3846 = vpack.c.b16 %v3838, %v3836
      %v3847 = vpack.c.b16 %v3839, %v3837
      %v3857 = vsel %vm873, %v3803, 0
      %v3860 = vsel %vm873, %v3804, 0
      %v3863 = vsel %vm873, %v3805, 0
      %v3866 = vsel %vm873, %v3806, 0
      %3868 = vmatprep.subr.bf16.mxu0 %v3841
      %3869 = vmatpush1.bf16.msra.mxu0 %v3840
      %3870 = vmatprep.subr.bf16.mxu0 %v3843
      %3871 = vmatpush1.bf16.msra.mxu0 %v3842
      %3872 = vmatprep.subr.bf16.mxu0 %v3845
      %3873 = vmatpush1.bf16.msra.mxu0 %v3844
      %3874 = vmatprep.subr.bf16.mxu0 %v3847
      %3875 = vmatpush1.bf16.msra.mxu0 %v3846
      %3876 = vmatprep.subr.bf16.mxu0 0
      %3877 = vmatpush1.bf16.msra.mxu0 0
      %3878 = vmatprep.subr.bf16.mxu0 0
      %3879 = vmatpush1.bf16.msra.mxu0 0
      %3880 = vmatprep.subr.bf16.mxu0 0
      %3881 = vmatpush1.bf16.msra.mxu0 0
      %3882 = vmatprep.subr.bf16.mxu0 0
      %3883 = vmatpush1.bf16.msra.mxu0 0
      %3884 = vmatprep.subr.bf16.mxu0 0
      %3885 = vmatpush1.bf16.msra.mxu0 0
      %3886 = vmatprep.subr.bf16.mxu0 0
      %3887 = vmatpush1.bf16.msra.mxu0 0
      %3888 = vmatprep.subr.bf16.mxu0 0
      %3889 = vmatpush1.bf16.msra.mxu0 0
      %3890 = vmatprep.subr.bf16.mxu0 0
      %3891 = vmatpush1.bf16.msra.mxu0 0
      %3892 = vmatprep.subr.bf16.mxu0 0
      %3893 = vmatpush1.bf16.msra.mxu0 0
      %3894 = vmatprep.subr.bf16.mxu0 0
      %3895 = vmatpush1.bf16.msra.mxu0 0
      %3896 = vmatprep.subr.bf16.mxu0 0
      %3897 = vmatpush1.bf16.msra.mxu0 0
      %3898 = vmatprep.subr.bf16.mxu0 0
      %3899 = vmatpush1.bf16.msra.mxu0 0
      %3900 = vmatprep.mubr.bf16.mxu0 0
      %3901 = vmatmul.mubr.bf16.gmra.mrb[0].mxu0 %v3857
      %v3902 = vpop.f32.mrb[0].mxu0
      %v3903 = vadd.f32 0.0, %v3902
      %v3904 = vpop.f32.mrb[0].mxu0
      %v3905 = vadd.f32 0.0, %v3904
      %v3906 = vpop.f32.mrb[0].mxu0
      %v3907 = vadd.f32 0.0, %v3906
      %v3908 = vpop.f32.mrb[0].mxu0
      %v3909 = vadd.f32 0.0, %v3908
      %3910 = vmatprep.mubr.bf16.mxu0 0
      %3911 = vmatmul.mubr.bf16.gmra.mrb[0].mxu0 %v3860
      %v3912 = vpop.f32.mrb[0].mxu0
      %v3913 = vadd.f32 0.0, %v3912
      %v3914 = vpop.f32.mrb[0].mxu0
      %v3915 = vadd.f32 0.0, %v3914
      %v3916 = vpop.f32.mrb[0].mxu0
      %v3917 = vadd.f32 0.0, %v3916
      %v3918 = vpop.f32.mrb[0].mxu0
      %v3919 = vadd.f32 0.0, %v3918
      %3920 = vmatprep.mubr.bf16.mxu0 0
      %3921 = vmatmul.mubr.bf16.gmra.mrb[0].mxu0 %v3863
      %v3922 = vpop.f32.mrb[0].mxu0
      %v3923 = vadd.f32 0.0, %v3922
      %v3924 = vpop.f32.mrb[0].mxu0
      %v3925 = vadd.f32 0.0, %v3924
      %v3926 = vpop.f32.mrb[0].mxu0
      %v3927 = vadd.f32 0.0, %v3926
      %v3928 = vpop.f32.mrb[0].mxu0
      %v3929 = vadd.f32 0.0, %v3928
      %3930 = vmatprep.mubr.bf16.mxu0 0
      %3931 = vmatmul.mubr.bf16.gmra.mrb[0].mxu0 %v3866
      %v3932 = vpop.f32.mrb[0].mxu0
      %v3933 = vadd.f32 0.0, %v3932
      %v3934 = vpop.f32.mrb[0].mxu0
      %v3935 = vadd.f32 0.0, %v3934
      %v3936 = vpop.f32.mrb[0].mxu0
      %v3937 = vadd.f32 0.0, %v3936
      %v3938 = vpop.f32.mrb[0].mxu0
      %v3939 = vadd.f32 0.0, %v3938
      %3940 = vdwg.mxu0
      %v3949 = vunpack.c.l.b16 %v3689
      %v3950 = vunpack.c.h.b16 %v3689
      %v3951 = vunpack.c.l.b16 %v3690
      %v3952 = vunpack.c.h.b16 %v3690
      %v3953 = vunpack.c.l.b16 %v3691
      %v3954 = vunpack.c.h.b16 %v3691
      %v3955 = vunpack.c.l.b16 %v3692
      %v3956 = vunpack.c.h.b16 %v3692
      %v3957 = vunpack.c.l.b16 %v3693
      %v3958 = vunpack.c.h.b16 %v3693
      %v3959 = vunpack.c.l.b16 %v3694
      %v3960 = vunpack.c.h.b16 %v3694
      %v3961 = vunpack.c.l.b16 %v3695
      %v3962 = vunpack.c.h.b16 %v3695
      %v3963 = vunpack.c.l.b16 %v3696
      %v3964 = vunpack.c.h.b16 %v3696
      %v3965 = vpack.c.b16 %v3951, %v3949
      %v3966 = vpack.c.b16 %v3952, %v3950
      %v3967 = vpack.c.b16 %v3955, %v3953
      %v3968 = vpack.c.b16 %v3956, %v3954
      %v3969 = vpack.c.b16 %v3959, %v3957
      %v3970 = vpack.c.b16 %v3960, %v3958
      %v3971 = vpack.c.b16 %v3963, %v3961
      %v3972 = vpack.c.b16 %v3964, %v3962
      %v3982 = vsel %vm873, %v3685, 0
      %v3985 = vsel %vm873, %v3686, 0
      %v3988 = vsel %vm873, %v3687, 0
      %v3991 = vsel %vm873, %v3688, 0
      %3993 = vmatprep.subr.bf16.mxu0 %v3966
      %3994 = vmatpush1.bf16.msra.mxu0 %v3965
      %3995 = vmatprep.subr.bf16.mxu0 %v3968
      %3996 = vmatpush1.bf16.msra.mxu0 %v3967
      %3997 = vmatprep.subr.bf16.mxu0 %v3970
      %3998 = vmatpush1.bf16.msra.mxu0 %v3969
      %3999 = vmatprep.subr.bf16.mxu0 %v3972
      %4000 = vmatpush1.bf16.msra.mxu0 %v3971
      %4001 = vmatprep.subr.bf16.mxu0 0
      %4002 = vmatpush1.bf16.msra.mxu0 0
      %4003 = vmatprep.subr.bf16.mxu0 0
      %4004 = vmatpush1.bf16.msra.mxu0 0
      %4005 = vmatprep.subr.bf16.mxu0 0
      %4006 = vmatpush1.bf16.msra.mxu0 0
      %4007 = vmatprep.subr.bf16.mxu0 0
      %4008 = vmatpush1.bf16.msra.mxu0 0
      %4009 = vmatprep.subr.bf16.mxu0 0
      %4010 = vmatpush1.bf16.msra.mxu0 0
      %4011 = vmatprep.subr.bf16.mxu0 0
      %4012 = vmatpush1.bf16.msra.mxu0 0
      %4013 = vmatprep.subr.bf16.mxu0 0
      %4014 = vmatpush1.bf16.msra.mxu0 0
      %4015 = vmatprep.subr.bf16.mxu0 0
      %4016 = vmatpush1.bf16.msra.mxu0 0
      %4017 = vmatprep.subr.bf16.mxu0 0
      %4018 = vmatpush1.bf16.msra.mxu0 0
      %4019 = vmatprep.subr.bf16.mxu0 0
      %4020 = vmatpush1.bf16.msra.mxu0 0
      %4021 = vmatprep.subr.bf16.mxu0 0
      %4022 = vmatpush1.bf16.msra.mxu0 0
      %4023 = vmatprep.subr.bf16.mxu0 0
      %4024 = vmatpush1.bf16.msra.mxu0 0
      %4025 = vmatprep.mubr.bf16.mxu0 0
      %4026 = vmatmul.mubr.bf16.gmra.mrb[0].mxu0 %v3982
      %v4027 = vpop.f32.mrb[0].mxu0
      %v4028 = vadd.f32 %v3903, %v4027
      %v4029 = vpop.f32.mrb[0].mxu0
      %v4030 = vadd.f32 %v3905, %v4029
      %v4031 = vpop.f32.mrb[0].mxu0
      %v4032 = vadd.f32 %v3907, %v4031
      %v4033 = vpop.f32.mrb[0].mxu0
      %v4034 = vadd.f32 %v3909, %v4033
      %4035 = vmatprep.mubr.bf16.mxu0 0
      %4036 = vmatmul.mubr.bf16.gmra.mrb[0].mxu0 %v3985
      %v4037 = vpop.f32.mrb[0].mxu0
      %v4038 = vadd.f32 %v3913, %v4037
      %v4039 = vpop.f32.mrb[0].mxu0
      %v4040 = vadd.f32 %v3915, %v4039
      %v4041 = vpop.f32.mrb[0].mxu0
      %v4042 = vadd.f32 %v3917, %v4041
      %v4043 = vpop.f32.mrb[0].mxu0
      %v4044 = vadd.f32 %v3919, %v4043
      %4045 = vmatprep.mubr.bf16.mxu0 0
      %4046 = vmatmul.mubr.bf16.gmra.mrb[0].mxu0 %v3988
      %v4047 = vpop.f32.mrb[0].mxu0
      %v4048 = vadd.f32 %v3923, %v4047
      %v4049 = vpop.f32.mrb[0].mxu0
      %v4050 = vadd.f32 %v3925, %v4049
      %v4051 = vpop.f32.mrb[0].mxu0
      %v4052 = vadd.f32 %v3927, %v4051
      %v4053 = vpop.f32.mrb[0].mxu0
      %v4054 = vadd.f32 %v3929, %v4053
      %4055 = vmatprep.mubr.bf16.mxu0 0
      %4056 = vmatmul.mubr.bf16.gmra.mrb[0].mxu0 %v3991
      %v4057 = vpop.f32.mrb[0].mxu0
      %v4058 = vadd.f32 %v3933, %v4057
      %v4059 = vpop.f32.mrb[0].mxu0
      %v4060 = vadd.f32 %v3935, %v4059
      %v4061 = vpop.f32.mrb[0].mxu0
      %v4062 = vadd.f32 %v3937, %v4061
      %v4063 = vpop.f32.mrb[0].mxu0
      %v4064 = vadd.f32 %v3939, %v4063
      %4065 = vdwg.mxu0
      %s4066 = scalar_lea.vmem %s10, 64
      %v4067 = vld [vmem:[%s4066] sm:$0xf]
      %v4068 = vld [vmem:[%s4066 + $0x4] sm:$0xf]
      %v4069 = vld [vmem:[%s4066 + $0x8] sm:$0xf]
      %v4070 = vld [vmem:[%s4066 + $0xc] sm:$0xf]
      %v4071 = vld [vmem:[%s4066 + $0x10] sm:$0xf]
      %v4072 = vld [vmem:[%s4066 + $0x14] sm:$0xf]
      %v4073 = vld [vmem:[%s4066 + $0x18] sm:$0xf]
      %v4074 = vld [vmem:[%s4066 + $0x1c] sm:$0xf]
      %v4083 = vunpack.c.l.b16 %v4067
      %v4084 = vunpack.c.l.b16 %v4068
      %v4085 = vunpack.c.l.b16 %v4069
      %v4086 = vunpack.c.l.b16 %v4070
      %v4087 = vunpack.c.l.b16 %v4071
      %v4088 = vunpack.c.l.b16 %v4072
      %v4089 = vunpack.c.l.b16 %v4073
      %v4090 = vunpack.c.l.b16 %v4074
      %v4091 = vpack.c.b16 %v4084, %v4083
      %v4092 = vpack.c.b16 %v4086, %v4085
      %v4093 = vpack.c.b16 %v4088, %v4087
      %v4094 = vpack.c.b16 %v4090, %v4089
      %v4096 = vsel %vm873, %v4091, 0
      %v4099 = vsel %vm873, %v4092, 0
      %v4102 = vsel %vm873, %v4093, 0
      %v4105 = vsel %vm873, %v4094, 0
      %4107 = vmatprep.subr.bf16.mxu0 0
      %4108 = vmatpush1.bf16.msra.mxu0 %v855
      %4109 = vmatprep.subr.bf16.mxu0 0
      %4110 = vmatpush1.bf16.msra.mxu0 %v856
      %4111 = vmatprep.subr.bf16.mxu0 0
      %4112 = vmatpush1.bf16.msra.mxu0 %v857
      %4113 = vmatprep.subr.bf16.mxu0 0
      %4114 = vmatpush1.bf16.msra.mxu0 %v858
      %4115 = vmatprep.subr.bf16.mxu0 0
      %4116 = vmatpush1.bf16.msra.mxu0 0
      %4117 = vmatprep.subr.bf16.mxu0 0
      %4118 = vmatpush1.bf16.msra.mxu0 0
      %4119 = vmatprep.subr.bf16.mxu0 0
      %4120 = vmatpush1.bf16.msra.mxu0 0
      %4121 = vmatprep.subr.bf16.mxu0 0
      %4122 = vmatpush1.bf16.msra.mxu0 0
      %4123 = vmatprep.subr.bf16.mxu0 0
      %4124 = vmatpush1.bf16.msra.mxu0 0
      %4125 = vmatprep.subr.bf16.mxu0 0
      %4126 = vmatpush1.bf16.msra.mxu0 0
      %4127 = vmatprep.subr.bf16.mxu0 0
      %4128 = vmatpush1.bf16.msra.mxu0 0
      %4129 = vmatprep.subr.bf16.mxu0 0
      %4130 = vmatpush1.bf16.msra.mxu0 0
      %4131 = vmatprep.subr.bf16.mxu0 0
      %4132 = vmatpush1.bf16.msra.mxu0 0
      %4133 = vmatprep.subr.bf16.mxu0 0
      %4134 = vmatpush1.bf16.msra.mxu0 0
      %4135 = vmatprep.subr.bf16.mxu0 0
      %4136 = vmatpush1.bf16.msra.mxu0 0
      %4137 = vmatprep.subr.bf16.mxu0 0
      %4138 = vmatpush1.bf16.msra.mxu0 0
      %4139 = vmatprep.mubr.bf16.mxu0 0
      %4140 = vmatmul.mubr.bf16.gmra.mrb[0].mxu0 %v4096
      %v4141 = vpop.f32.mrb[0].mxu0
      %v4142 = vadd.f32 0.0, %v4141
      %v4143 = vpop.f32.mrb[0].mxu0
      %v4144 = vpop.f32.mrb[0].mxu0
      %v4145 = vadd.f32 0.0, %v4144
      %v4146 = vpop.f32.mrb[0].mxu0
      %4147 = vmatprep.mubr.bf16.mxu0 0
      %4148 = vmatmul.mubr.bf16.gmra.mrb[0].mxu0 %v4099
      %v4149 = vpop.f32.mrb[0].mxu0
      %v4150 = vadd.f32 0.0, %v4149
      %v4151 = vpop.f32.mrb[0].mxu0
      %v4152 = vpop.f32.mrb[0].mxu0
      %v4153 = vadd.f32 0.0, %v4152
      %v4154 = vpop.f32.mrb[0].mxu0
      %4155 = vmatprep.mubr.bf16.mxu0 0
      %4156 = vmatmul.mubr.bf16.gmra.mrb[0].mxu0 %v4102
      %v4157 = vpop.f32.mrb[0].mxu0
      %v4158 = vadd.f32 0.0, %v4157
      %v4159 = vpop.f32.mrb[0].mxu0
      %v4160 = vpop.f32.mrb[0].mxu0
      %v4161 = vadd.f32 0.0, %v4160
      %v4162 = vpop.f32.mrb[0].mxu0
      %4163 = vmatprep.mubr.bf16.mxu0 0
      %4164 = vmatmul.mubr.bf16.gmra.mrb[0].mxu0 %v4105
      %v4165 = vpop.f32.mrb[0].mxu0
      %v4166 = vadd.f32 0.0, %v4165
      %v4167 = vpop.f32.mrb[0].mxu0
      %v4168 = vpop.f32.mrb[0].mxu0
      %v4169 = vadd.f32 0.0, %v4168
      %v4170 = vpop.f32.mrb[0].mxu0
      %4171 = vdwg.mxu0
      %v4172 = vpack.c.bf16 %v4145, %v4142
      %v4173 = vpack.c.bf16 %v4153, %v4150
      %v4174 = vpack.c.bf16 %v4161, %v4158
      %v4175 = vpack.c.bf16 %v4169, %v4166
      %s4176 = scalar_lea.vmem %s11, 128
      %v4177 = vld [vmem:[%s4176] sm:$0xff]
      %v4178 = vld [vmem:[%s4176 + $0x8] sm:$0xff]
      %v4179 = vld [vmem:[%s4176 + $0x10] sm:$0xff]
      %v4180 = vld [vmem:[%s4176 + $0x18] sm:$0xff]
      %v4181 = vld [vmem:[%s4176 + $0x20] sm:$0xff]
      %v4182 = vld [vmem:[%s4176 + $0x28] sm:$0xff]
      %v4183 = vld [vmem:[%s4176 + $0x30] sm:$0xff]
      %v4184 = vld [vmem:[%s4176 + $0x38] sm:$0xff]
      %v4193 = vunpack.c.l.b16 %v4177
      %v4194 = vunpack.c.h.b16 %v4177
      %v4195 = vunpack.c.l.b16 %v4178
      %v4196 = vunpack.c.h.b16 %v4178
      %v4197 = vunpack.c.l.b16 %v4179
      %v4198 = vunpack.c.h.b16 %v4179
      %v4199 = vunpack.c.l.b16 %v4180
      %v4200 = vunpack.c.h.b16 %v4180
      %v4201 = vunpack.c.l.b16 %v4181
      %v4202 = vunpack.c.h.b16 %v4181
      %v4203 = vunpack.c.l.b16 %v4182
      %v4204 = vunpack.c.h.b16 %v4182
      %v4205 = vunpack.c.l.b16 %v4183
      %v4206 = vunpack.c.h.b16 %v4183
      %v4207 = vunpack.c.l.b16 %v4184
      %v4208 = vunpack.c.h.b16 %v4184
      %v4209 = vpack.c.b16 %v4195, %v4193
      %v4210 = vpack.c.b16 %v4196, %v4194
      %v4211 = vpack.c.b16 %v4199, %v4197
      %v4212 = vpack.c.b16 %v4200, %v4198
      %v4213 = vpack.c.b16 %v4203, %v4201
      %v4214 = vpack.c.b16 %v4204, %v4202
      %v4215 = vpack.c.b16 %v4207, %v4205
      %v4216 = vpack.c.b16 %v4208, %v4206
      %v4226 = vsel %vm873, %v4172, 0
      %v4229 = vsel %vm873, %v4173, 0
      %v4232 = vsel %vm873, %v4174, 0
      %v4235 = vsel %vm873, %v4175, 0
      %4237 = vmatprep.subr.bf16.mxu0 %v4210
      %4238 = vmatpush1.bf16.msra.mxu0 %v4209
      %4239 = vmatprep.subr.bf16.mxu0 %v4212
      %4240 = vmatpush1.bf16.msra.mxu0 %v4211
      %4241 = vmatprep.subr.bf16.mxu0 %v4214
      %4242 = vmatpush1.bf16.msra.mxu0 %v4213
      %4243 = vmatprep.subr.bf16.mxu0 %v4216
      %4244 = vmatpush1.bf16.msra.mxu0 %v4215
      %4245 = vmatprep.subr.bf16.mxu0 0
      %4246 = vmatpush1.bf16.msra.mxu0 0
      %4247 = vmatprep.subr.bf16.mxu0 0
      %4248 = vmatpush1.bf16.msra.mxu0 0
      %4249 = vmatprep.subr.bf16.mxu0 0
      %4250 = vmatpush1.bf16.msra.mxu0 0
      %4251 = vmatprep.subr.bf16.mxu0 0
      %4252 = vmatpush1.bf16.msra.mxu0 0
      %4253 = vmatprep.subr.bf16.mxu0 0
      %4254 = vmatpush1.bf16.msra.mxu0 0
      %4255 = vmatprep.subr.bf16.mxu0 0
      %4256 = vmatpush1.bf16.msra.mxu0 0
      %4257 = vmatprep.subr.bf16.mxu0 0
      %4258 = vmatpush1.bf16.msra.mxu0 0
      %4259 = vmatprep.subr.bf16.mxu0 0
      %4260 = vmatpush1.bf16.msra.mxu0 0
      %4261 = vmatprep.subr.bf16.mxu0 0
      %4262 = vmatpush1.bf16.msra.mxu0 0
      %4263 = vmatprep.subr.bf16.mxu0 0
      %4264 = vmatpush1.bf16.msra.mxu0 0
      %4265 = vmatprep.subr.bf16.mxu0 0
      %4266 = vmatpush1.bf16.msra.mxu0 0
      %4267 = vmatprep.subr.bf16.mxu0 0
      %4268 = vmatpush1.bf16.msra.mxu0 0
      %4269 = vmatprep.mubr.bf16.mxu0 0
      %4270 = vmatmul.mubr.bf16.gmra.mrb[0].mxu0 %v4226
      %v4271 = vpop.f32.mrb[0].mxu0
      %v4272 = vadd.f32 0.0, %v4271
      %v4273 = vpop.f32.mrb[0].mxu0
      %v4274 = vadd.f32 0.0, %v4273
      %v4275 = vpop.f32.mrb[0].mxu0
      %v4276 = vadd.f32 0.0, %v4275
      %v4277 = vpop.f32.mrb[0].mxu0
      %v4278 = vadd.f32 0.0, %v4277
      %4279 = vmatprep.mubr.bf16.mxu0 0
      %4280 = vmatmul.mubr.bf16.gmra.mrb[0].mxu0 %v4229
      %v4281 = vpop.f32.mrb[0].mxu0
      %v4282 = vadd.f32 0.0, %v4281
      %v4283 = vpop.f32.mrb[0].mxu0
      %v4284 = vadd.f32 0.0, %v4283
      %v4285 = vpop.f32.mrb[0].mxu0
      %v4286 = vadd.f32 0.0, %v4285
      %v4287 = vpop.f32.mrb[0].mxu0
      %v4288 = vadd.f32 0.0, %v4287
      %4289 = vmatprep.mubr.bf16.mxu0 0
      %4290 = vmatmul.mubr.bf16.gmra.mrb[0].mxu0 %v4232
      %v4291 = vpop.f32.mrb[0].mxu0
      %v4292 = vadd.f32 0.0, %v4291
      %v4293 = vpop.f32.mrb[0].mxu0
      %v4294 = vadd.f32 0.0, %v4293
      %v4295 = vpop.f32.mrb[0].mxu0
      %v4296 = vadd.f32 0.0, %v4295
      %v4297 = vpop.f32.mrb[0].mxu0
      %v4298 = vadd.f32 0.0, %v4297
      %4299 = vmatprep.mubr.bf16.mxu0 0
      %4300 = vmatmul.mubr.bf16.gmra.mrb[0].mxu0 %v4235
      %v4301 = vpop.f32.mrb[0].mxu0
      %v4302 = vadd.f32 0.0, %v4301
      %v4303 = vpop.f32.mrb[0].mxu0
      %v4304 = vadd.f32 0.0, %v4303
      %v4305 = vpop.f32.mrb[0].mxu0
      %v4306 = vadd.f32 0.0, %v4305
      %v4307 = vpop.f32.mrb[0].mxu0
      %v4308 = vadd.f32 0.0, %v4307
      %4309 = vdwg.mxu0
      %v4310 = vadd.f32 %v4028, %v4272
      %v4311 = vadd.f32 %v4030, %v4274
      %v4312 = vadd.f32 %v4032, %v4276
      %v4313 = vadd.f32 %v4034, %v4278
      %v4314 = vadd.f32 %v4038, %v4282
      %v4315 = vadd.f32 %v4040, %v4284
      %v4316 = vadd.f32 %v4042, %v4286
      %v4317 = vadd.f32 %v4044, %v4288
      %v4318 = vadd.f32 %v4048, %v4292
      %v4319 = vadd.f32 %v4050, %v4294
      %v4320 = vadd.f32 %v4052, %v4296
      %v4321 = vadd.f32 %v4054, %v4298
      %v4322 = vadd.f32 %v4058, %v4302
      %v4323 = vadd.f32 %v4060, %v4304
      %v4324 = vadd.f32 %v4062, %v4306
      %v4325 = vadd.f32 %v4064, %v4308
      %v4326 = vld [vmem:[%s12] sm:$0x3]
      %v4328 = vlaneseq
      %v4329 = vshrl.u32 %v4328, 7
      %v4330 = vsub.s32 0, %v4329
      %v4331 = vrot.slane %v4326, %v4330
      %v4332 = vlaneseq
      %v4333 = vshrl.u32 %v4332, 7
      %v4334 = vsub.s32 1, %v4333
      %v4335 = vrot.slane %v4326, %v4334
      %v4338 = vadd.f32 %v4310, %v4331
      %v4339 = vadd.f32 %v4311, %v4335
      %v4340 = vadd.f32 %v4312, %v4331
      %v4341 = vadd.f32 %v4313, %v4335
      %v4342 = vadd.f32 %v4314, %v4331
      %v4343 = vadd.f32 %v4315, %v4335
      %v4344 = vadd.f32 %v4316, %v4331
      %v4345 = vadd.f32 %v4317, %v4335
      %v4346 = vadd.f32 %v4318, %v4331
      %v4347 = vadd.f32 %v4319, %v4335
      %v4348 = vadd.f32 %v4320, %v4331
      %v4349 = vadd.f32 %v4321, %v4335
      %v4350 = vadd.f32 %v4322, %v4331
      %v4351 = vadd.f32 %v4323, %v4335
      %v4352 = vadd.f32 %v4324, %v4331
      %v4353 = vadd.f32 %v4325, %v4335
      %v4354 = vmax.f32 %v4338, 0.0
      %v4355 = vmax.f32 %v4339, 0.0
      %v4356 = vmax.f32 %v4340, 0.0
      %v4357 = vmax.f32 %v4341, 0.0
      %v4358 = vmax.f32 %v4342, 0.0
      %v4359 = vmax.f32 %v4343, 0.0
      %v4360 = vmax.f32 %v4344, 0.0
      %v4361 = vmax.f32 %v4345, 0.0
      %v4362 = vmax.f32 %v4346, 0.0
      %v4363 = vmax.f32 %v4347, 0.0
      %v4364 = vmax.f32 %v4348, 0.0
      %v4365 = vmax.f32 %v4349, 0.0
      %v4366 = vmax.f32 %v4350, 0.0
      %v4367 = vmax.f32 %v4351, 0.0
      %v4368 = vmax.f32 %v4352, 0.0
      %v4369 = vmax.f32 %v4353, 0.0
      %v4370 = vpack.c.bf16 %v4356, %v4354
      %v4371 = vpack.c.bf16 %v4357, %v4355
      %v4372 = vpack.c.bf16 %v4360, %v4358
      %v4373 = vpack.c.bf16 %v4361, %v4359
      %v4374 = vpack.c.bf16 %v4364, %v4362
      %v4375 = vpack.c.bf16 %v4365, %v4363
      %v4376 = vpack.c.bf16 %v4368, %v4366
      %v4377 = vpack.c.bf16 %v4369, %v4367
      %v4378 = vld [vmem:[%s13] sm:$0xf]
      %v4379 = vld [vmem:[%s13 + $0x4] sm:$0xf]
      %v4380 = vld [vmem:[%s13 + $0x8] sm:$0xf]
      %v4381 = vld [vmem:[%s13 + $0xc] sm:$0xf]
      %v4386 = vunpack.c.l.b16 %v4378
      %v4387 = vunpack.c.l.b16 %v4379
      %v4388 = vunpack.c.l.b16 %v4380
      %v4389 = vunpack.c.l.b16 %v4381
      %v4390 = vpack.c.b16 %v4387, %v4386
      %v4391 = vpack.c.b16 %v4389, %v4388
      %v4393 = vsel %vm873, %v4390, 0
      %v4396 = vsel %vm873, %v4391, 0
      %4398 = vmatprep.subr.bf16.mxu0 %v4371
      %4399 = vmatpush1.bf16.msra.mxu0 %v4370
      %4400 = vmatprep.subr.bf16.mxu0 %v4373
      %4401 = vmatpush1.bf16.msra.mxu0 %v4372
      %4402 = vmatprep.subr.bf16.mxu0 %v4375
      %4403 = vmatpush1.bf16.msra.mxu0 %v4374
      %4404 = vmatprep.subr.bf16.mxu0 %v4377
      %4405 = vmatpush1.bf16.msra.mxu0 %v4376
      %4406 = vmatprep.subr.bf16.mxu0 0
      %4407 = vmatpush1.bf16.msra.mxu0 0
      %4408 = vmatprep.subr.bf16.mxu0 0
      %4409 = vmatpush1.bf16.msra.mxu0 0
      %4410 = vmatprep.subr.bf16.mxu0 0
      %4411 = vmatpush1.bf16.msra.mxu0 0
      %4412 = vmatprep.subr.bf16.mxu0 0
      %4413 = vmatpush1.bf16.msra.mxu0 0
      %4414 = vmatprep.subr.bf16.mxu0 0
      %4415 = vmatpush1.bf16.msra.mxu0 0
      %4416 = vmatprep.subr.bf16.mxu0 0
      %4417 = vmatpush1.bf16.msra.mxu0 0
      %4418 = vmatprep.subr.bf16.mxu0 0
      %4419 = vmatpush1.bf16.msra.mxu0 0
      %4420 = vmatprep.subr.bf16.mxu0 0
      %4421 = vmatpush1.bf16.msra.mxu0 0
      %4422 = vmatprep.subr.bf16.mxu0 0
      %4423 = vmatpush1.bf16.msra.mxu0 0
      %4424 = vmatprep.subr.bf16.mxu0 0
      %4425 = vmatpush1.bf16.msra.mxu0 0
      %4426 = vmatprep.subr.bf16.mxu0 0
      %4427 = vmatpush1.bf16.msra.mxu0 0
      %4428 = vmatprep.subr.bf16.mxu0 0
      %4429 = vmatpush1.bf16.msra.mxu0 0
      %4430 = vmatprep.mubr.bf16.mxu0 0
      %4431 = vmatmul.mubr.bf16.gmra.mrb[0].mxu0 %v4393
      %v4432 = vpop.f32.mrb[0].mxu0
      %v4433 = vadd.f32 0.0, %v4432
      %v4434 = vpop.f32.mrb[0].mxu0
      %v4435 = vadd.f32 0.0, %v4434
      %v4436 = vpop.f32.mrb[0].mxu0
      %v4437 = vadd.f32 0.0, %v4436
      %v4438 = vpop.f32.mrb[0].mxu0
      %v4439 = vadd.f32 0.0, %v4438
      %4440 = vmatprep.mubr.bf16.mxu0 0
      %4441 = vmatmul.mubr.bf16.gmra.mrb[0].mxu0 %v4396
      %v4442 = vpop.f32.mrb[0].mxu0
      %v4443 = vadd.f32 0.0, %v4442
      %v4444 = vpop.f32.mrb[0].mxu0
      %v4445 = vadd.f32 0.0, %v4444
      %v4446 = vpop.f32.mrb[0].mxu0
      %v4447 = vadd.f32 0.0, %v4446
      %v4448 = vpop.f32.mrb[0].mxu0
      %v4449 = vadd.f32 0.0, %v4448
      %4450 = vdwg.mxu0
      %v4451 = vpack.c.bf16 %v4437, %v4433
      %v4452 = vpack.c.bf16 %v4439, %v4435
      %v4453 = vpack.c.bf16 %v4447, %v4443
      %v4454 = vpack.c.bf16 %v4449, %v4445
      %v4455 = vld [vmem:[%s14] sm:$0xff]
      %v4456 = vld [vmem:[%s14 + $0x8] sm:$0xff]
      %v4457 = vld [vmem:[%s14 + $0x10] sm:$0xff]
      %v4458 = vld [vmem:[%s14 + $0x18] sm:$0xff]
      %v4459 = vld [vmem:[%s14 + $0x20] sm:$0xff]
      %v4460 = vld [vmem:[%s14 + $0x28] sm:$0xff]
      %v4461 = vld [vmem:[%s14 + $0x30] sm:$0xff]
      %v4462 = vld [vmem:[%s14 + $0x38] sm:$0xff]
      %v4463 = vld [vmem:[%s14 + $0x40] sm:$0xff]
      %v4464 = vld [vmem:[%s14 + $0x48] sm:$0xff]
      %v4465 = vld [vmem:[%s14 + $0x50] sm:$0xff]
      %v4466 = vld [vmem:[%s14 + $0x58] sm:$0xff]
      %v4467 = vld [vmem:[%s14 + $0x60] sm:$0xff]
      %v4468 = vld [vmem:[%s14 + $0x68] sm:$0xff]
      %v4469 = vld [vmem:[%s14 + $0x70] sm:$0xff]
      %v4470 = vld [vmem:[%s14 + $0x78] sm:$0xff]
      %v4471 = vld [vmem:[%s14 + $0x80] sm:$0xff]
      %v4472 = vld [vmem:[%s14 + $0x88] sm:$0xff]
      %v4473 = vld [vmem:[%s14 + $0x90] sm:$0xff]
      %v4474 = vld [vmem:[%s14 + $0x98] sm:$0xff]
      %v4475 = vld [vmem:[%s14 + $0xa0] sm:$0xff]
      %v4476 = vld [vmem:[%s14 + $0xa8] sm:$0xff]
      %v4477 = vld [vmem:[%s14 + $0xb0] sm:$0xff]
      %v4478 = vld [vmem:[%s14 + $0xb8] sm:$0xff]
      %v4479 = vld [vmem:[%s14 + $0xc0] sm:$0xff]
      %v4480 = vld [vmem:[%s14 + $0xc8] sm:$0xff]
      %v4481 = vld [vmem:[%s14 + $0xd0] sm:$0xff]
      %v4482 = vld [vmem:[%s14 + $0xd8] sm:$0xff]
      %v4483 = vld [vmem:[%s14 + $0xe0] sm:$0xff]
      %v4484 = vld [vmem:[%s14 + $0xe8] sm:$0xff]
      %v4485 = vld [vmem:[%s14 + $0xf0] sm:$0xff]
      %v4486 = vld [vmem:[%s14 + $0xf8] sm:$0xff]
      %s4487 = scalar_lea.vmem %s13, 16
      %v4488 = vld [vmem:[%s4487] sm:$0xf]
      %v4489 = vld [vmem:[%s4487 + $0x4] sm:$0xf]
      %v4490 = vld [vmem:[%s4487 + $0x8] sm:$0xf]
      %v4491 = vld [vmem:[%s4487 + $0xc] sm:$0xf]
      %v4496 = vunpack.c.l.b16 %v4488
      %v4497 = vunpack.c.l.b16 %v4489
      %v4498 = vunpack.c.l.b16 %v4490
      %v4499 = vunpack.c.l.b16 %v4491
      %v4500 = vpack.c.b16 %v4497, %v4496
      %v4501 = vpack.c.b16 %v4499, %v4498
      %v4503 = vsel %vm873, %v4500, 0
      %v4506 = vsel %vm873, %v4501, 0
      %4508 = vmatprep.subr.bf16.mxu0 %v4371
      %4509 = vmatpush1.bf16.msra.mxu0 %v4370
      %4510 = vmatprep.subr.bf16.mxu0 %v4373
      %4511 = vmatpush1.bf16.msra.mxu0 %v4372
      %4512 = vmatprep.subr.bf16.mxu0 %v4375
      %4513 = vmatpush1.bf16.msra.mxu0 %v4374
      %4514 = vmatprep.subr.bf16.mxu0 %v4377
      %4515 = vmatpush1.bf16.msra.mxu0 %v4376
      %4516 = vmatprep.subr.bf16.mxu0 0
      %4517 = vmatpush1.bf16.msra.mxu0 0
      %4518 = vmatprep.subr.bf16.mxu0 0
      %4519 = vmatpush1.bf16.msra.mxu0 0
      %4520 = vmatprep.subr.bf16.mxu0 0
      %4521 = vmatpush1.bf16.msra.mxu0 0
      %4522 = vmatprep.subr.bf16.mxu0 0
      %4523 = vmatpush1.bf16.msra.mxu0 0
      %4524 = vmatprep.subr.bf16.mxu0 0
      %4525 = vmatpush1.bf16.msra.mxu0 0
      %4526 = vmatprep.subr.bf16.mxu0 0
      %4527 = vmatpush1.bf16.msra.mxu0 0
      %4528 = vmatprep.subr.bf16.mxu0 0
      %4529 = vmatpush1.bf16.msra.mxu0 0
      %4530 = vmatprep.subr.bf16.mxu0 0
      %4531 = vmatpush1.bf16.msra.mxu0 0
      %4532 = vmatprep.subr.bf16.mxu0 0
      %4533 = vmatpush1.bf16.msra.mxu0 0
      %4534 = vmatprep.subr.bf16.mxu0 0
      %4535 = vmatpush1.bf16.msra.mxu0 0
      %4536 = vmatprep.subr.bf16.mxu0 0
      %4537 = vmatpush1.bf16.msra.mxu0 0
      %4538 = vmatprep.subr.bf16.mxu0 0
      %4539 = vmatpush1.bf16.msra.mxu0 0
      %4540 = vmatprep.mubr.bf16.mxu0 0
      %4541 = vmatmul.mubr.bf16.gmra.mrb[0].mxu0 %v4503
      %v4542 = vpop.f32.mrb[0].mxu0
      %v4543 = vadd.f32 0.0, %v4542
      %v4544 = vpop.f32.mrb[0].mxu0
      %v4545 = vadd.f32 0.0, %v4544
      %v4546 = vpop.f32.mrb[0].mxu0
      %v4547 = vadd.f32 0.0, %v4546
      %v4548 = vpop.f32.mrb[0].mxu0
      %v4549 = vadd.f32 0.0, %v4548
      %4550 = vmatprep.mubr.bf16.mxu0 0
      %4551 = vmatmul.mubr.bf16.gmra.mrb[0].mxu0 %v4506
      %v4552 = vpop.f32.mrb[0].mxu0
      %v4553 = vadd.f32 0.0, %v4552
      %v4554 = vpop.f32.mrb[0].mxu0
      %v4555 = vadd.f32 0.0, %v4554
      %v4556 = vpop.f32.mrb[0].mxu0
      %v4557 = vadd.f32 0.0, %v4556
      %v4558 = vpop.f32.mrb[0].mxu0
      %v4559 = vadd.f32 0.0, %v4558
      %4560 = vdwg.mxu0
      %v4561 = vpack.c.bf16 %v4547, %v4543
      %v4562 = vpack.c.bf16 %v4549, %v4545
      %v4563 = vpack.c.bf16 %v4557, %v4553
      %v4564 = vpack.c.bf16 %v4559, %v4555
      %s4565 = scalar_lea.vmem %s14, 256
      %v4566 = vld [vmem:[%s4565] sm:$0xff]
      %v4567 = vld [vmem:[%s4565 + $0x8] sm:$0xff]
      %v4568 = vld [vmem:[%s4565 + $0x10] sm:$0xff]
      %v4569 = vld [vmem:[%s4565 + $0x18] sm:$0xff]
      %v4570 = vld [vmem:[%s4565 + $0x20] sm:$0xff]
      %v4571 = vld [vmem:[%s4565 + $0x28] sm:$0xff]
      %v4572 = vld [vmem:[%s4565 + $0x30] sm:$0xff]
      %v4573 = vld [vmem:[%s4565 + $0x38] sm:$0xff]
      %v4574 = vld [vmem:[%s4565 + $0x40] sm:$0xff]
      %v4575 = vld [vmem:[%s4565 + $0x48] sm:$0xff]
      %v4576 = vld [vmem:[%s4565 + $0x50] sm:$0xff]
      %v4577 = vld [vmem:[%s4565 + $0x58] sm:$0xff]
      %v4578 = vld [vmem:[%s4565 + $0x60] sm:$0xff]
      %v4579 = vld [vmem:[%s4565 + $0x68] sm:$0xff]
      %v4580 = vld [vmem:[%s4565 + $0x70] sm:$0xff]
      %v4581 = vld [vmem:[%s4565 + $0x78] sm:$0xff]
      %v4582 = vld [vmem:[%s4565 + $0x80] sm:$0xff]
      %v4583 = vld [vmem:[%s4565 + $0x88] sm:$0xff]
      %v4584 = vld [vmem:[%s4565 + $0x90] sm:$0xff]
      %v4585 = vld [vmem:[%s4565 + $0x98] sm:$0xff]
      %v4586 = vld [vmem:[%s4565 + $0xa0] sm:$0xff]
      %v4587 = vld [vmem:[%s4565 + $0xa8] sm:$0xff]
      %v4588 = vld [vmem:[%s4565 + $0xb0] sm:$0xff]
      %v4589 = vld [vmem:[%s4565 + $0xb8] sm:$0xff]
      %v4590 = vld [vmem:[%s4565 + $0xc0] sm:$0xff]
      %v4591 = vld [vmem:[%s4565 + $0xc8] sm:$0xff]
      %v4592 = vld [vmem:[%s4565 + $0xd0] sm:$0xff]
      %v4593 = vld [vmem:[%s4565 + $0xd8] sm:$0xff]
      %v4594 = vld [vmem:[%s4565 + $0xe0] sm:$0xff]
      %v4595 = vld [vmem:[%s4565 + $0xe8] sm:$0xff]
      %v4596 = vld [vmem:[%s4565 + $0xf0] sm:$0xff]
      %v4597 = vld [vmem:[%s4565 + $0xf8] sm:$0xff]
      %v4630 = vunpack.c.l.b16 %v4566
      %v4631 = vunpack.c.h.b16 %v4566
      %v4632 = vunpack.c.l.b16 %v4567
      %v4633 = vunpack.c.h.b16 %v4567
      %v4634 = vunpack.c.l.b16 %v4568
      %v4635 = vunpack.c.h.b16 %v4568
      %v4636 = vunpack.c.l.b16 %v4569
      %v4637 = vunpack.c.h.b16 %v4569
      %v4638 = vunpack.c.l.b16 %v4570
      %v4639 = vunpack.c.h.b16 %v4570
      %v4640 = vunpack.c.l.b16 %v4571
      %v4641 = vunpack.c.h.b16 %v4571
      %v4642 = vunpack.c.l.b16 %v4572
      %v4643 = vunpack.c.h.b16 %v4572
      %v4644 = vunpack.c.l.b16 %v4573
      %v4645 = vunpack.c.h.b16 %v4573
      %v4646 = vunpack.c.l.b16 %v4574
      %v4647 = vunpack.c.h.b16 %v4574
      %v4648 = vunpack.c.l.b16 %v4575
      %v4649 = vunpack.c.h.b16 %v4575
      %v4650 = vunpack.c.l.b16 %v4576
      %v4651 = vunpack.c.h.b16 %v4576
      %v4652 = vunpack.c.l.b16 %v4577
      %v4653 = vunpack.c.h.b16 %v4577
      %v4654 = vunpack.c.l.b16 %v4578
      %v4655 = vunpack.c.h.b16 %v4578
      %v4656 = vunpack.c.l.b16 %v4579
      %v4657 = vunpack.c.h.b16 %v4579
      %v4658 = vunpack.c.l.b16 %v4580
      %v4659 = vunpack.c.h.b16 %v4580
      %v4660 = vunpack.c.l.b16 %v4581
      %v4661 = vunpack.c.h.b16 %v4581
      %v4662 = vunpack.c.l.b16 %v4582
      %v4663 = vunpack.c.h.b16 %v4582
      %v4664 = vunpack.c.l.b16 %v4583
      %v4665 = vunpack.c.h.b16 %v4583
      %v4666 = vunpack.c.l.b16 %v4584
      %v4667 = vunpack.c.h.b16 %v4584
      %v4668 = vunpack.c.l.b16 %v4585
      %v4669 = vunpack.c.h.b16 %v4585
      %v4670 = vunpack.c.l.b16 %v4586
      %v4671 = vunpack.c.h.b16 %v4586
      %v4672 = vunpack.c.l.b16 %v4587
      %v4673 = vunpack.c.h.b16 %v4587
      %v4674 = vunpack.c.l.b16 %v4588
      %v4675 = vunpack.c.h.b16 %v4588
      %v4676 = vunpack.c.l.b16 %v4589
      %v4677 = vunpack.c.h.b16 %v4589
      %v4678 = vunpack.c.l.b16 %v4590
      %v4679 = vunpack.c.h.b16 %v4590
      %v4680 = vunpack.c.l.b16 %v4591
      %v4681 = vunpack.c.h.b16 %v4591
      %v4682 = vunpack.c.l.b16 %v4592
      %v4683 = vunpack.c.h.b16 %v4592
      %v4684 = vunpack.c.l.b16 %v4593
      %v4685 = vunpack.c.h.b16 %v4593
      %v4686 = vunpack.c.l.b16 %v4594
      %v4687 = vunpack.c.h.b16 %v4594
      %v4688 = vunpack.c.l.b16 %v4595
      %v4689 = vunpack.c.h.b16 %v4595
      %v4690 = vunpack.c.l.b16 %v4596
      %v4691 = vunpack.c.h.b16 %v4596
      %v4692 = vunpack.c.l.b16 %v4597
      %v4693 = vunpack.c.h.b16 %v4597
      %v4694 = vpack.c.b16 %v4632, %v4630
      %v4695 = vpack.c.b16 %v4633, %v4631
      %v4696 = vpack.c.b16 %v4636, %v4634
      %v4697 = vpack.c.b16 %v4637, %v4635
      %v4698 = vpack.c.b16 %v4640, %v4638
      %v4699 = vpack.c.b16 %v4641, %v4639
      %v4700 = vpack.c.b16 %v4644, %v4642
      %v4701 = vpack.c.b16 %v4645, %v4643
      %v4702 = vpack.c.b16 %v4648, %v4646
      %v4703 = vpack.c.b16 %v4649, %v4647
      %v4704 = vpack.c.b16 %v4652, %v4650
      %v4705 = vpack.c.b16 %v4653, %v4651
      %v4706 = vpack.c.b16 %v4656, %v4654
      %v4707 = vpack.c.b16 %v4657, %v4655
      %v4708 = vpack.c.b16 %v4660, %v4658
      %v4709 = vpack.c.b16 %v4661, %v4659
      %v4710 = vpack.c.b16 %v4664, %v4662
      %v4711 = vpack.c.b16 %v4665, %v4663
      %v4712 = vpack.c.b16 %v4668, %v4666
      %v4713 = vpack.c.b16 %v4669, %v4667
      %v4714 = vpack.c.b16 %v4672, %v4670
      %v4715 = vpack.c.b16 %v4673, %v4671
      %v4716 = vpack.c.b16 %v4676, %v4674
      %v4717 = vpack.c.b16 %v4677, %v4675
      %v4718 = vpack.c.b16 %v4680, %v4678
      %v4719 = vpack.c.b16 %v4681, %v4679
      %v4720 = vpack.c.b16 %v4684, %v4682
      %v4721 = vpack.c.b16 %v4685, %v4683
      %v4722 = vpack.c.b16 %v4688, %v4686
      %v4723 = vpack.c.b16 %v4689, %v4687
      %v4724 = vpack.c.b16 %v4692, %v4690
      %v4725 = vpack.c.b16 %v4693, %v4691
      %4758 = vmatprep.subr.bf16.mxu0 %v4695
      %4759 = vmatpush1.bf16.msra.mxu0 %v4694
      %4760 = vmatprep.subr.bf16.mxu0 %v4697
      %4761 = vmatpush1.bf16.msra.mxu0 %v4696
      %4762 = vmatprep.subr.bf16.mxu0 %v4699
      %4763 = vmatpush1.bf16.msra.mxu0 %v4698
      %4764 = vmatprep.subr.bf16.mxu0 %v4701
      %4765 = vmatpush1.bf16.msra.mxu0 %v4700
      %4766 = vmatprep.subr.bf16.mxu0 %v4703
      %4767 = vmatpush1.bf16.msra.mxu0 %v4702
      %4768 = vmatprep.subr.bf16.mxu0 %v4705
      %4769 = vmatpush1.bf16.msra.mxu0 %v4704
      %4770 = vmatprep.subr.bf16.mxu0 %v4707
      %4771 = vmatpush1.bf16.msra.mxu0 %v4706
      %4772 = vmatprep.subr.bf16.mxu0 %v4709
      %4773 = vmatpush1.bf16.msra.mxu0 %v4708
      %4774 = vmatprep.subr.bf16.mxu0 %v4711
      %4775 = vmatpush1.bf16.msra.mxu0 %v4710
      %4776 = vmatprep.subr.bf16.mxu0 %v4713
      %4777 = vmatpush1.bf16.msra.mxu0 %v4712
      %4778 = vmatprep.subr.bf16.mxu0 %v4715
      %4779 = vmatpush1.bf16.msra.mxu0 %v4714
      %4780 = vmatprep.subr.bf16.mxu0 %v4717
      %4781 = vmatpush1.bf16.msra.mxu0 %v4716
      %4782 = vmatprep.subr.bf16.mxu0 %v4719
      %4783 = vmatpush1.bf16.msra.mxu0 %v4718
      %4784 = vmatprep.subr.bf16.mxu0 %v4721
      %4785 = vmatpush1.bf16.msra.mxu0 %v4720
      %4786 = vmatprep.subr.bf16.mxu0 %v4723
      %4787 = vmatpush1.bf16.msra.mxu0 %v4722
      %4788 = vmatprep.subr.bf16.mxu0 %v4725
      %4789 = vmatpush1.bf16.msra.mxu0 %v4724
      %4790 = vmatprep.mubr.bf16.mxu0 %v4562
      %4791 = vmatmul.mubr.bf16.gmra.mrb[0].mxu0 %v4561
      %v4792 = vpop.f32.mrb[0].mxu0
      %v4793 = vadd.f32 0.0, %v4792
      %v4794 = vpop.f32.mrb[0].mxu0
      %v4795 = vadd.f32 0.0, %v4794
      %v4796 = vpop.f32.mrb[0].mxu0
      %v4797 = vadd.f32 0.0, %v4796
      %v4798 = vpop.f32.mrb[0].mxu0
      %v4799 = vadd.f32 0.0, %v4798
      %4800 = vmatprep.mubr.bf16.mxu0 %v4564
      %4801 = vmatmul.mubr.bf16.gmra.mrb[0].mxu0 %v4563
      %v4802 = vpop.f32.mrb[0].mxu0
      %v4803 = vadd.f32 0.0, %v4802
      %v4804 = vpop.f32.mrb[0].mxu0
      %v4805 = vadd.f32 0.0, %v4804
      %v4806 = vpop.f32.mrb[0].mxu0
      %v4807 = vadd.f32 0.0, %v4806
      %v4808 = vpop.f32.mrb[0].mxu0
      %v4809 = vadd.f32 0.0, %v4808
      %4810 = vdwg.mxu0
      %v4843 = vunpack.c.l.b16 %v4455
      %v4844 = vunpack.c.h.b16 %v4455
      %v4845 = vunpack.c.l.b16 %v4456
      %v4846 = vunpack.c.h.b16 %v4456
      %v4847 = vunpack.c.l.b16 %v4457
      %v4848 = vunpack.c.h.b16 %v4457
      %v4849 = vunpack.c.l.b16 %v4458
      %v4850 = vunpack.c.h.b16 %v4458
      %v4851 = vunpack.c.l.b16 %v4459
      %v4852 = vunpack.c.h.b16 %v4459
      %v4853 = vunpack.c.l.b16 %v4460
      %v4854 = vunpack.c.h.b16 %v4460
      %v4855 = vunpack.c.l.b16 %v4461
      %v4856 = vunpack.c.h.b16 %v4461
      %v4857 = vunpack.c.l.b16 %v4462
      %v4858 = vunpack.c.h.b16 %v4462
      %v4859 = vunpack.c.l.b16 %v4463
      %v4860 = vunpack.c.h.b16 %v4463
      %v4861 = vunpack.c.l.b16 %v4464
      %v4862 = vunpack.c.h.b16 %v4464
      %v4863 = vunpack.c.l.b16 %v4465
      %v4864 = vunpack.c.h.b16 %v4465
      %v4865 = vunpack.c.l.b16 %v4466
      %v4866 = vunpack.c.h.b16 %v4466
      %v4867 = vunpack.c.l.b16 %v4467
      %v4868 = vunpack.c.h.b16 %v4467
      %v4869 = vunpack.c.l.b16 %v4468
      %v4870 = vunpack.c.h.b16 %v4468
      %v4871 = vunpack.c.l.b16 %v4469
      %v4872 = vunpack.c.h.b16 %v4469
      %v4873 = vunpack.c.l.b16 %v4470
      %v4874 = vunpack.c.h.b16 %v4470
      %v4875 = vunpack.c.l.b16 %v4471
      %v4876 = vunpack.c.h.b16 %v4471
      %v4877 = vunpack.c.l.b16 %v4472
      %v4878 = vunpack.c.h.b16 %v4472
      %v4879 = vunpack.c.l.b16 %v4473
      %v4880 = vunpack.c.h.b16 %v4473
      %v4881 = vunpack.c.l.b16 %v4474
      %v4882 = vunpack.c.h.b16 %v4474
      %v4883 = vunpack.c.l.b16 %v4475
      %v4884 = vunpack.c.h.b16 %v4475
      %v4885 = vunpack.c.l.b16 %v4476
      %v4886 = vunpack.c.h.b16 %v4476
      %v4887 = vunpack.c.l.b16 %v4477
      %v4888 = vunpack.c.h.b16 %v4477
      %v4889 = vunpack.c.l.b16 %v4478
      %v4890 = vunpack.c.h.b16 %v4478
      %v4891 = vunpack.c.l.b16 %v4479
      %v4892 = vunpack.c.h.b16 %v4479
      %v4893 = vunpack.c.l.b16 %v4480
      %v4894 = vunpack.c.h.b16 %v4480
      %v4895 = vunpack.c.l.b16 %v4481
      %v4896 = vunpack.c.h.b16 %v4481
      %v4897 = vunpack.c.l.b16 %v4482
      %v4898 = vunpack.c.h.b16 %v4482
      %v4899 = vunpack.c.l.b16 %v4483
      %v4900 = vunpack.c.h.b16 %v4483
      %v4901 = vunpack.c.l.b16 %v4484
      %v4902 = vunpack.c.h.b16 %v4484
      %v4903 = vunpack.c.l.b16 %v4485
      %v4904 = vunpack.c.h.b16 %v4485
      %v4905 = vunpack.c.l.b16 %v4486
      %v4906 = vunpack.c.h.b16 %v4486
      %v4907 = vpack.c.b16 %v4845, %v4843
      %v4908 = vpack.c.b16 %v4846, %v4844
      %v4909 = vpack.c.b16 %v4849, %v4847
      %v4910 = vpack.c.b16 %v4850, %v4848
      %v4911 = vpack.c.b16 %v4853, %v4851
      %v4912 = vpack.c.b16 %v4854, %v4852
      %v4913 = vpack.c.b16 %v4857, %v4855
      %v4914 = vpack.c.b16 %v4858, %v4856
      %v4915 = vpack.c.b16 %v4861, %v4859
      %v4916 = vpack.c.b16 %v4862, %v4860
      %v4917 = vpack.c.b16 %v4865, %v4863
      %v4918 = vpack.c.b16 %v4866, %v4864
      %v4919 = vpack.c.b16 %v4869, %v4867
      %v4920 = vpack.c.b16 %v4870, %v4868
      %v4921 = vpack.c.b16 %v4873, %v4871
      %v4922 = vpack.c.b16 %v4874, %v4872
      %v4923 = vpack.c.b16 %v4877, %v4875
      %v4924 = vpack.c.b16 %v4878, %v4876
      %v4925 = vpack.c.b16 %v4881, %v4879
      %v4926 = vpack.c.b16 %v4882, %v4880
      %v4927 = vpack.c.b16 %v4885, %v4883
      %v4928 = vpack.c.b16 %v4886, %v4884
      %v4929 = vpack.c.b16 %v4889, %v4887
      %v4930 = vpack.c.b16 %v4890, %v4888
      %v4931 = vpack.c.b16 %v4893, %v4891
      %v4932 = vpack.c.b16 %v4894, %v4892
      %v4933 = vpack.c.b16 %v4897, %v4895
      %v4934 = vpack.c.b16 %v4898, %v4896
      %v4935 = vpack.c.b16 %v4901, %v4899
      %v4936 = vpack.c.b16 %v4902, %v4900
      %v4937 = vpack.c.b16 %v4905, %v4903
      %v4938 = vpack.c.b16 %v4906, %v4904
      %4971 = vmatprep.subr.bf16.mxu0 %v4908
      %4972 = vmatpush1.bf16.msra.mxu0 %v4907
      %4973 = vmatprep.subr.bf16.mxu0 %v4910
      %4974 = vmatpush1.bf16.msra.mxu0 %v4909
      %4975 = vmatprep.subr.bf16.mxu0 %v4912
      %4976 = vmatpush1.bf16.msra.mxu0 %v4911
      %4977 = vmatprep.subr.bf16.mxu0 %v4914
      %4978 = vmatpush1.bf16.msra.mxu0 %v4913
      %4979 = vmatprep.subr.bf16.mxu0 %v4916
      %4980 = vmatpush1.bf16.msra.mxu0 %v4915
      %4981 = vmatprep.subr.bf16.mxu0 %v4918
      %4982 = vmatpush1.bf16.msra.mxu0 %v4917
      %4983 = vmatprep.subr.bf16.mxu0 %v4920
      %4984 = vmatpush1.bf16.msra.mxu0 %v4919
      %4985 = vmatprep.subr.bf16.mxu0 %v4922
      %4986 = vmatpush1.bf16.msra.mxu0 %v4921
      %4987 = vmatprep.subr.bf16.mxu0 %v4924
      %4988 = vmatpush1.bf16.msra.mxu0 %v4923
      %4989 = vmatprep.subr.bf16.mxu0 %v4926
      %4990 = vmatpush1.bf16.msra.mxu0 %v4925
      %4991 = vmatprep.subr.bf16.mxu0 %v4928
      %4992 = vmatpush1.bf16.msra.mxu0 %v4927
      %4993 = vmatprep.subr.bf16.mxu0 %v4930
      %4994 = vmatpush1.bf16.msra.mxu0 %v4929
      %4995 = vmatprep.subr.bf16.mxu0 %v4932
      %4996 = vmatpush1.bf16.msra.mxu0 %v4931
      %4997 = vmatprep.subr.bf16.mxu0 %v4934
      %4998 = vmatpush1.bf16.msra.mxu0 %v4933
      %4999 = vmatprep.subr.bf16.mxu0 %v4936
      %5000 = vmatpush1.bf16.msra.mxu0 %v4935
      %5001 = vmatprep.subr.bf16.mxu0 %v4938
      %5002 = vmatpush1.bf16.msra.mxu0 %v4937
      %5003 = vmatprep.mubr.bf16.mxu0 %v4452
      %5004 = vmatmul.mubr.bf16.gmra.mrb[0].mxu0 %v4451
      %v5005 = vpop.f32.mrb[0].mxu0
      %v5006 = vadd.f32 %v4793, %v5005
      %v5007 = vpop.f32.mrb[0].mxu0
      %v5008 = vadd.f32 %v4795, %v5007
      %v5009 = vpop.f32.mrb[0].mxu0
      %v5010 = vadd.f32 %v4797, %v5009
      %v5011 = vpop.f32.mrb[0].mxu0
      %v5012 = vadd.f32 %v4799, %v5011
      %5013 = vmatprep.mubr.bf16.mxu0 %v4454
      %5014 = vmatmul.mubr.bf16.gmra.mrb[0].mxu0 %v4453
      %v5015 = vpop.f32.mrb[0].mxu0
      %v5016 = vadd.f32 %v4803, %v5015
      %v5017 = vpop.f32.mrb[0].mxu0
      %v5018 = vadd.f32 %v4805, %v5017
      %v5019 = vpop.f32.mrb[0].mxu0
      %v5020 = vadd.f32 %v4807, %v5019
      %v5021 = vpop.f32.mrb[0].mxu0
      %v5022 = vadd.f32 %v4809, %v5021
      %5023 = vdwg.mxu0
      %s5024 = scalar_lea.vmem %s13, 32
      %v5025 = vld [vmem:[%s5024] sm:$0xf]
      %v5026 = vld [vmem:[%s5024 + $0x4] sm:$0xf]
      %v5027 = vld [vmem:[%s5024 + $0x8] sm:$0xf]
      %v5028 = vld [vmem:[%s5024 + $0xc] sm:$0xf]
      %v5033 = vunpack.c.l.b16 %v5025
      %v5034 = vunpack.c.l.b16 %v5026
      %v5035 = vunpack.c.l.b16 %v5027
      %v5036 = vunpack.c.l.b16 %v5028
      %v5037 = vpack.c.b16 %v5034, %v5033
      %v5038 = vpack.c.b16 %v5036, %v5035
      %v5040 = vsel %vm873, %v5037, 0
      %v5043 = vsel %vm873, %v5038, 0
      %5045 = vmatprep.subr.bf16.mxu0 %v4371
      %5046 = vmatpush1.bf16.msra.mxu0 %v4370
      %5047 = vmatprep.subr.bf16.mxu0 %v4373
      %5048 = vmatpush1.bf16.msra.mxu0 %v4372
      %5049 = vmatprep.subr.bf16.mxu0 %v4375
      %5050 = vmatpush1.bf16.msra.mxu0 %v4374
      %5051 = vmatprep.subr.bf16.mxu0 %v4377
      %5052 = vmatpush1.bf16.msra.mxu0 %v4376
      %5053 = vmatprep.subr.bf16.mxu0 0
      %5054 = vmatpush1.bf16.msra.mxu0 0
      %5055 = vmatprep.subr.bf16.mxu0 0
      %5056 = vmatpush1.bf16.msra.mxu0 0
      %5057 = vmatprep.subr.bf16.mxu0 0
      %5058 = vmatpush1.bf16.msra.mxu0 0
      %5059 = vmatprep.subr.bf16.mxu0 0
      %5060 = vmatpush1.bf16.msra.mxu0 0
      %5061 = vmatprep.subr.bf16.mxu0 0
      %5062 = vmatpush1.bf16.msra.mxu0 0
      %5063 = vmatprep.subr.bf16.mxu0 0
      %5064 = vmatpush1.bf16.msra.mxu0 0
      %5065 = vmatprep.subr.bf16.mxu0 0
      %5066 = vmatpush1.bf16.msra.mxu0 0
      %5067 = vmatprep.subr.bf16.mxu0 0
      %5068 = vmatpush1.bf16.msra.mxu0 0
      %5069 = vmatprep.subr.bf16.mxu0 0
      %5070 = vmatpush1.bf16.msra.mxu0 0
      %5071 = vmatprep.subr.bf16.mxu0 0
      %5072 = vmatpush1.bf16.msra.mxu0 0
      %5073 = vmatprep.subr.bf16.mxu0 0
      %5074 = vmatpush1.bf16.msra.mxu0 0
      %5075 = vmatprep.subr.bf16.mxu0 0
      %5076 = vmatpush1.bf16.msra.mxu0 0
      %5077 = vmatprep.mubr.bf16.mxu0 0
      %5078 = vmatmul.mubr.bf16.gmra.mrb[0].mxu0 %v5040
      %v5079 = vpop.f32.mrb[0].mxu0
      %v5080 = vadd.f32 0.0, %v5079
      %v5081 = vpop.f32.mrb[0].mxu0
      %v5082 = vadd.f32 0.0, %v5081
      %v5083 = vpop.f32.mrb[0].mxu0
      %v5084 = vadd.f32 0.0, %v5083
      %v5085 = vpop.f32.mrb[0].mxu0
      %v5086 = vadd.f32 0.0, %v5085
      %5087 = vmatprep.mubr.bf16.mxu0 0
      %5088 = vmatmul.mubr.bf16.gmra.mrb[0].mxu0 %v5043
      %v5089 = vpop.f32.mrb[0].mxu0
      %v5090 = vadd.f32 0.0, %v5089
      %v5091 = vpop.f32.mrb[0].mxu0
      %v5092 = vadd.f32 0.0, %v5091
      %v5093 = vpop.f32.mrb[0].mxu0
      %v5094 = vadd.f32 0.0, %v5093
      %v5095 = vpop.f32.mrb[0].mxu0
      %v5096 = vadd.f32 0.0, %v5095
      %5097 = vdwg.mxu0
      %v5098 = vpack.c.bf16 %v5084, %v5080
      %v5099 = vpack.c.bf16 %v5086, %v5082
      %v5100 = vpack.c.bf16 %v5094, %v5090
      %v5101 = vpack.c.bf16 %v5096, %v5092
      %s5102 = scalar_lea.vmem %s14, 512
      %v5103 = vld [vmem:[%s5102] sm:$0xff]
      %v5104 = vld [vmem:[%s5102 + $0x8] sm:$0xff]
      %v5105 = vld [vmem:[%s5102 + $0x10] sm:$0xff]
      %v5106 = vld [vmem:[%s5102 + $0x18] sm:$0xff]
      %v5107 = vld [vmem:[%s5102 + $0x20] sm:$0xff]
      %v5108 = vld [vmem:[%s5102 + $0x28] sm:$0xff]
      %v5109 = vld [vmem:[%s5102 + $0x30] sm:$0xff]
      %v5110 = vld [vmem:[%s5102 + $0x38] sm:$0xff]
      %v5111 = vld [vmem:[%s5102 + $0x40] sm:$0xff]
      %v5112 = vld [vmem:[%s5102 + $0x48] sm:$0xff]
      %v5113 = vld [vmem:[%s5102 + $0x50] sm:$0xff]
      %v5114 = vld [vmem:[%s5102 + $0x58] sm:$0xff]
      %v5115 = vld [vmem:[%s5102 + $0x60] sm:$0xff]
      %v5116 = vld [vmem:[%s5102 + $0x68] sm:$0xff]
      %v5117 = vld [vmem:[%s5102 + $0x70] sm:$0xff]
      %v5118 = vld [vmem:[%s5102 + $0x78] sm:$0xff]
      %v5119 = vld [vmem:[%s5102 + $0x80] sm:$0xff]
      %v5120 = vld [vmem:[%s5102 + $0x88] sm:$0xff]
      %v5121 = vld [vmem:[%s5102 + $0x90] sm:$0xff]
      %v5122 = vld [vmem:[%s5102 + $0x98] sm:$0xff]
      %v5123 = vld [vmem:[%s5102 + $0xa0] sm:$0xff]
      %v5124 = vld [vmem:[%s5102 + $0xa8] sm:$0xff]
      %v5125 = vld [vmem:[%s5102 + $0xb0] sm:$0xff]
      %v5126 = vld [vmem:[%s5102 + $0xb8] sm:$0xff]
      %v5127 = vld [vmem:[%s5102 + $0xc0] sm:$0xff]
      %v5128 = vld [vmem:[%s5102 + $0xc8] sm:$0xff]
      %v5129 = vld [vmem:[%s5102 + $0xd0] sm:$0xff]
      %v5130 = vld [vmem:[%s5102 + $0xd8] sm:$0xff]
      %v5131 = vld [vmem:[%s5102 + $0xe0] sm:$0xff]
      %v5132 = vld [vmem:[%s5102 + $0xe8] sm:$0xff]
      %v5133 = vld [vmem:[%s5102 + $0xf0] sm:$0xff]
      %v5134 = vld [vmem:[%s5102 + $0xf8] sm:$0xff]
      %v5167 = vunpack.c.l.b16 %v5103
      %v5168 = vunpack.c.h.b16 %v5103
      %v5169 = vunpack.c.l.b16 %v5104
      %v5170 = vunpack.c.h.b16 %v5104
      %v5171 = vunpack.c.l.b16 %v5105
      %v5172 = vunpack.c.h.b16 %v5105
      %v5173 = vunpack.c.l.b16 %v5106
      %v5174 = vunpack.c.h.b16 %v5106
      %v5175 = vunpack.c.l.b16 %v5107
      %v5176 = vunpack.c.h.b16 %v5107
      %v5177 = vunpack.c.l.b16 %v5108
      %v5178 = vunpack.c.h.b16 %v5108
      %v5179 = vunpack.c.l.b16 %v5109
      %v5180 = vunpack.c.h.b16 %v5109
      %v5181 = vunpack.c.l.b16 %v5110
      %v5182 = vunpack.c.h.b16 %v5110
      %v5183 = vunpack.c.l.b16 %v5111
      %v5184 = vunpack.c.h.b16 %v5111
      %v5185 = vunpack.c.l.b16 %v5112
      %v5186 = vunpack.c.h.b16 %v5112
      %v5187 = vunpack.c.l.b16 %v5113
      %v5188 = vunpack.c.h.b16 %v5113
      %v5189 = vunpack.c.l.b16 %v5114
      %v5190 = vunpack.c.h.b16 %v5114
      %v5191 = vunpack.c.l.b16 %v5115
      %v5192 = vunpack.c.h.b16 %v5115
      %v5193 = vunpack.c.l.b16 %v5116
      %v5194 = vunpack.c.h.b16 %v5116
      %v5195 = vunpack.c.l.b16 %v5117
      %v5196 = vunpack.c.h.b16 %v5117
      %v5197 = vunpack.c.l.b16 %v5118
      %v5198 = vunpack.c.h.b16 %v5118
      %v5199 = vunpack.c.l.b16 %v5119
      %v5200 = vunpack.c.h.b16 %v5119
      %v5201 = vunpack.c.l.b16 %v5120
      %v5202 = vunpack.c.h.b16 %v5120
      %v5203 = vunpack.c.l.b16 %v5121
      %v5204 = vunpack.c.h.b16 %v5121
      %v5205 = vunpack.c.l.b16 %v5122
      %v5206 = vunpack.c.h.b16 %v5122
      %v5207 = vunpack.c.l.b16 %v5123
      %v5208 = vunpack.c.h.b16 %v5123
      %v5209 = vunpack.c.l.b16 %v5124
      %v5210 = vunpack.c.h.b16 %v5124
      %v5211 = vunpack.c.l.b16 %v5125
      %v5212 = vunpack.c.h.b16 %v5125
      %v5213 = vunpack.c.l.b16 %v5126
      %v5214 = vunpack.c.h.b16 %v5126
      %v5215 = vunpack.c.l.b16 %v5127
      %v5216 = vunpack.c.h.b16 %v5127
      %v5217 = vunpack.c.l.b16 %v5128
      %v5218 = vunpack.c.h.b16 %v5128
      %v5219 = vunpack.c.l.b16 %v5129
      %v5220 = vunpack.c.h.b16 %v5129
      %v5221 = vunpack.c.l.b16 %v5130
      %v5222 = vunpack.c.h.b16 %v5130
      %v5223 = vunpack.c.l.b16 %v5131
      %v5224 = vunpack.c.h.b16 %v5131
      %v5225 = vunpack.c.l.b16 %v5132
      %v5226 = vunpack.c.h.b16 %v5132
      %v5227 = vunpack.c.l.b16 %v5133
      %v5228 = vunpack.c.h.b16 %v5133
      %v5229 = vunpack.c.l.b16 %v5134
      %v5230 = vunpack.c.h.b16 %v5134
      %v5231 = vpack.c.b16 %v5169, %v5167
      %v5232 = vpack.c.b16 %v5170, %v5168
      %v5233 = vpack.c.b16 %v5173, %v5171
      %v5234 = vpack.c.b16 %v5174, %v5172
      %v5235 = vpack.c.b16 %v5177, %v5175
      %v5236 = vpack.c.b16 %v5178, %v5176
      %v5237 = vpack.c.b16 %v5181, %v5179
      %v5238 = vpack.c.b16 %v5182, %v5180
      %v5239 = vpack.c.b16 %v5185, %v5183
      %v5240 = vpack.c.b16 %v5186, %v5184
      %v5241 = vpack.c.b16 %v5189, %v5187
      %v5242 = vpack.c.b16 %v5190, %v5188
      %v5243 = vpack.c.b16 %v5193, %v5191
      %v5244 = vpack.c.b16 %v5194, %v5192
      %v5245 = vpack.c.b16 %v5197, %v5195
      %v5246 = vpack.c.b16 %v5198, %v5196
      %v5247 = vpack.c.b16 %v5201, %v5199
      %v5248 = vpack.c.b16 %v5202, %v5200
      %v5249 = vpack.c.b16 %v5205, %v5203
      %v5250 = vpack.c.b16 %v5206, %v5204
      %v5251 = vpack.c.b16 %v5209, %v5207
      %v5252 = vpack.c.b16 %v5210, %v5208
      %v5253 = vpack.c.b16 %v5213, %v5211
      %v5254 = vpack.c.b16 %v5214, %v5212
      %v5255 = vpack.c.b16 %v5217, %v5215
      %v5256 = vpack.c.b16 %v5218, %v5216
      %v5257 = vpack.c.b16 %v5221, %v5219
      %v5258 = vpack.c.b16 %v5222, %v5220
      %v5259 = vpack.c.b16 %v5225, %v5223
      %v5260 = vpack.c.b16 %v5226, %v5224
      %v5261 = vpack.c.b16 %v5229, %v5227
      %v5262 = vpack.c.b16 %v5230, %v5228
      %5295 = vmatprep.subr.bf16.mxu0 %v5232
      %5296 = vmatpush1.bf16.msra.mxu0 %v5231
      %5297 = vmatprep.subr.bf16.mxu0 %v5234
      %5298 = vmatpush1.bf16.msra.mxu0 %v5233
      %5299 = vmatprep.subr.bf16.mxu0 %v5236
      %5300 = vmatpush1.bf16.msra.mxu0 %v5235
      %5301 = vmatprep.subr.bf16.mxu0 %v5238
      %5302 = vmatpush1.bf16.msra.mxu0 %v5237
      %5303 = vmatprep.subr.bf16.mxu0 %v5240
      %5304 = vmatpush1.bf16.msra.mxu0 %v5239
      %5305 = vmatprep.subr.bf16.mxu0 %v5242
      %5306 = vmatpush1.bf16.msra.mxu0 %v5241
      %5307 = vmatprep.subr.bf16.mxu0 %v5244
      %5308 = vmatpush1.bf16.msra.mxu0 %v5243
      %5309 = vmatprep.subr.bf16.mxu0 %v5246
      %5310 = vmatpush1.bf16.msra.mxu0 %v5245
      %5311 = vmatprep.subr.bf16.mxu0 %v5248
      %5312 = vmatpush1.bf16.msra.mxu0 %v5247
      %5313 = vmatprep.subr.bf16.mxu0 %v5250
      %5314 = vmatpush1.bf16.msra.mxu0 %v5249
      %5315 = vmatprep.subr.bf16.mxu0 %v5252
      %5316 = vmatpush1.bf16.msra.mxu0 %v5251
      %5317 = vmatprep.subr.bf16.mxu0 %v5254
      %5318 = vmatpush1.bf16.msra.mxu0 %v5253
      %5319 = vmatprep.subr.bf16.mxu0 %v5256
      %5320 = vmatpush1.bf16.msra.mxu0 %v5255
      %5321 = vmatprep.subr.bf16.mxu0 %v5258
      %5322 = vmatpush1.bf16.msra.mxu0 %v5257
      %5323 = vmatprep.subr.bf16.mxu0 %v5260
      %5324 = vmatpush1.bf16.msra.mxu0 %v5259
      %5325 = vmatprep.subr.bf16.mxu0 %v5262
      %5326 = vmatpush1.bf16.msra.mxu0 %v5261
      %5327 = vmatprep.mubr.bf16.mxu0 %v5099
      %5328 = vmatmul.mubr.bf16.gmra.mrb[0].mxu0 %v5098
      %v5329 = vpop.f32.mrb[0].mxu0
      %v5330 = vadd.f32 0.0, %v5329
      %v5331 = vpop.f32.mrb[0].mxu0
      %v5332 = vadd.f32 0.0, %v5331
      %v5333 = vpop.f32.mrb[0].mxu0
      %v5334 = vadd.f32 0.0, %v5333
      %v5335 = vpop.f32.mrb[0].mxu0
      %v5336 = vadd.f32 0.0, %v5335
      %5337 = vmatprep.mubr.bf16.mxu0 %v5101
      %5338 = vmatmul.mubr.bf16.gmra.mrb[0].mxu0 %v5100
      %v5339 = vpop.f32.mrb[0].mxu0
      %v5340 = vadd.f32 0.0, %v5339
      %v5341 = vpop.f32.mrb[0].mxu0
      %v5342 = vadd.f32 0.0, %v5341
      %v5343 = vpop.f32.mrb[0].mxu0
      %v5344 = vadd.f32 0.0, %v5343
      %v5345 = vpop.f32.mrb[0].mxu0
      %v5346 = vadd.f32 0.0, %v5345
      %5347 = vdwg.mxu0
      %v5348 = vadd.f32 %v5006, %v5330
      %v5349 = vadd.f32 %v5008, %v5332
      %v5350 = vadd.f32 %v5010, %v5334
      %v5351 = vadd.f32 %v5012, %v5336
      %v5352 = vadd.f32 %v5016, %v5340
      %v5353 = vadd.f32 %v5018, %v5342
      %v5354 = vadd.f32 %v5020, %v5344
      %v5355 = vadd.f32 %v5022, %v5346
      %v5356 = vld [vmem:[%s15] sm:$0x3]
      %v5358 = vlaneseq
      %v5359 = vshrl.u32 %v5358, 7
      %v5360 = vsub.s32 0, %v5359
      %v5361 = vrot.slane %v5356, %v5360
      %v5362 = vlaneseq
      %v5363 = vshrl.u32 %v5362, 7
      %v5364 = vsub.s32 1, %v5363
      %v5365 = vrot.slane %v5356, %v5364
      %v5368 = vadd.f32 %v5348, %v5361
      %v5369 = vadd.f32 %v5349, %v5365
      %v5370 = vadd.f32 %v5350, %v5361
      %v5371 = vadd.f32 %v5351, %v5365
      %v5372 = vadd.f32 %v5352, %v5361
      %v5373 = vadd.f32 %v5353, %v5365
      %v5374 = vadd.f32 %v5354, %v5361
      %v5375 = vadd.f32 %v5355, %v5365
      %v5376 = vmax.f32 %v5368, 0.0
      %v5377 = vmax.f32 %v5369, 0.0
      %v5378 = vmax.f32 %v5370, 0.0
      %v5379 = vmax.f32 %v5371, 0.0
      %v5380 = vmax.f32 %v5372, 0.0
      %v5381 = vmax.f32 %v5373, 0.0
      %v5382 = vmax.f32 %v5374, 0.0
      %v5383 = vmax.f32 %v5375, 0.0
      %v5384 = vpack.c.bf16 %v5378, %v5376
      %v5385 = vpack.c.bf16 %v5379, %v5377
      %v5386 = vpack.c.bf16 %v5382, %v5380
      %v5387 = vpack.c.bf16 %v5383, %v5381
      %v5388 = vld [vmem:[%s16] sm:$0xf]
      %v5389 = vld [vmem:[%s16 + $0x4] sm:$0xf]
      %v5392 = vunpack.c.l.b16 %v5388
      %v5393 = vunpack.c.l.b16 %v5389
      %v5394 = vpack.c.b16 %v5393, %v5392
      %v5396 = vsel %vm1821, %v5394, 0
      %5398 = vmatprep.subr.bf16.mxu0 %v5385
      %5399 = vmatpush1.bf16.msra.mxu0 %v5384
      %5400 = vmatprep.subr.bf16.mxu0 %v5387
      %5401 = vmatpush1.bf16.msra.mxu0 %v5386
      %5402 = vmatprep.subr.bf16.mxu0 0
      %5403 = vmatpush1.bf16.msra.mxu0 0
      %5404 = vmatprep.subr.bf16.mxu0 0
      %5405 = vmatpush1.bf16.msra.mxu0 0
      %5406 = vmatprep.subr.bf16.mxu0 0
      %5407 = vmatpush1.bf16.msra.mxu0 0
      %5408 = vmatprep.subr.bf16.mxu0 0
      %5409 = vmatpush1.bf16.msra.mxu0 0
      %5410 = vmatprep.subr.bf16.mxu0 0
      %5411 = vmatpush1.bf16.msra.mxu0 0
      %5412 = vmatprep.subr.bf16.mxu0 0
      %5413 = vmatpush1.bf16.msra.mxu0 0
      %5414 = vmatprep.subr.bf16.mxu0 0
      %5415 = vmatpush1.bf16.msra.mxu0 0
      %5416 = vmatprep.subr.bf16.mxu0 0
      %5417 = vmatpush1.bf16.msra.mxu0 0
      %5418 = vmatprep.subr.bf16.mxu0 0
      %5419 = vmatpush1.bf16.msra.mxu0 0
      %5420 = vmatprep.subr.bf16.mxu0 0
      %5421 = vmatpush1.bf16.msra.mxu0 0
      %5422 = vmatprep.subr.bf16.mxu0 0
      %5423 = vmatpush1.bf16.msra.mxu0 0
      %5424 = vmatprep.subr.bf16.mxu0 0
      %5425 = vmatpush1.bf16.msra.mxu0 0
      %5426 = vmatprep.subr.bf16.mxu0 0
      %5427 = vmatpush1.bf16.msra.mxu0 0
      %5428 = vmatprep.subr.bf16.mxu0 0
      %5429 = vmatpush1.bf16.msra.mxu0 0
      %5430 = vmatprep.mubr.bf16.mxu0 0
      %5431 = vmatmul.mubr.bf16.gmra.mrb[0].mxu0 %v5396
      %v5432 = vpop.f32.mrb[0].mxu0
      %v5433 = vadd.f32 0.0, %v5432
      %v5434 = vpop.f32.mrb[0].mxu0
      %v5435 = vadd.f32 0.0, %v5434
      %v5436 = vpop.f32.mrb[0].mxu0
      %v5437 = vadd.f32 0.0, %v5436
      %v5438 = vpop.f32.mrb[0].mxu0
      %v5439 = vadd.f32 0.0, %v5438
      %5440 = vdwg.mxu0
      %v5441 = vpack.c.bf16 %v5437, %v5433
      %v5442 = vpack.c.bf16 %v5439, %v5435
      %v5443 = vld [vmem:[%s17] sm:$0xff]
      %v5444 = vld [vmem:[%s17 + $0x8] sm:$0xff]
      %v5445 = vld [vmem:[%s17 + $0x10] sm:$0xff]
      %v5446 = vld [vmem:[%s17 + $0x18] sm:$0xff]
      %v5447 = vld [vmem:[%s17 + $0x20] sm:$0xff]
      %v5448 = vld [vmem:[%s17 + $0x28] sm:$0xff]
      %v5449 = vld [vmem:[%s17 + $0x30] sm:$0xff]
      %v5450 = vld [vmem:[%s17 + $0x38] sm:$0xff]
      %v5451 = vld [vmem:[%s17 + $0x40] sm:$0xff]
      %v5452 = vld [vmem:[%s17 + $0x48] sm:$0xff]
      %v5453 = vld [vmem:[%s17 + $0x50] sm:$0xff]
      %v5454 = vld [vmem:[%s17 + $0x58] sm:$0xff]
      %v5455 = vld [vmem:[%s17 + $0x60] sm:$0xff]
      %v5456 = vld [vmem:[%s17 + $0x68] sm:$0xff]
      %v5457 = vld [vmem:[%s17 + $0x70] sm:$0xff]
      %v5458 = vld [vmem:[%s17 + $0x78] sm:$0xff]
      %v5459 = vld [vmem:[%s17 + $0x80] sm:$0xff]
      %v5460 = vld [vmem:[%s17 + $0x88] sm:$0xff]
      %v5461 = vld [vmem:[%s17 + $0x90] sm:$0xff]
      %v5462 = vld [vmem:[%s17 + $0x98] sm:$0xff]
      %v5463 = vld [vmem:[%s17 + $0xa0] sm:$0xff]
      %v5464 = vld [vmem:[%s17 + $0xa8] sm:$0xff]
      %v5465 = vld [vmem:[%s17 + $0xb0] sm:$0xff]
      %v5466 = vld [vmem:[%s17 + $0xb8] sm:$0xff]
      %v5467 = vld [vmem:[%s17 + $0xc0] sm:$0xff]
      %v5468 = vld [vmem:[%s17 + $0xc8] sm:$0xff]
      %v5469 = vld [vmem:[%s17 + $0xd0] sm:$0xff]
      %v5470 = vld [vmem:[%s17 + $0xd8] sm:$0xff]
      %v5471 = vld [vmem:[%s17 + $0xe0] sm:$0xff]
      %v5472 = vld [vmem:[%s17 + $0xe8] sm:$0xff]
      %v5473 = vld [vmem:[%s17 + $0xf0] sm:$0xff]
      %v5474 = vld [vmem:[%s17 + $0xf8] sm:$0xff]
      %s5475 = scalar_lea.vmem %s16, 8
      %v5476 = vld [vmem:[%s5475] sm:$0xf]
      %v5477 = vld [vmem:[%s5475 + $0x4] sm:$0xf]
      %v5480 = vunpack.c.l.b16 %v5476
      %v5481 = vunpack.c.l.b16 %v5477
      %v5482 = vpack.c.b16 %v5481, %v5480
      %v5484 = vsel %vm1821, %v5482, 0
      %5486 = vmatprep.subr.bf16.mxu0 %v5385
      %5487 = vmatpush1.bf16.msra.mxu0 %v5384
      %5488 = vmatprep.subr.bf16.mxu0 %v5387
      %5489 = vmatpush1.bf16.msra.mxu0 %v5386
      %5490 = vmatprep.subr.bf16.mxu0 0
      %5491 = vmatpush1.bf16.msra.mxu0 0
      %5492 = vmatprep.subr.bf16.mxu0 0
      %5493 = vmatpush1.bf16.msra.mxu0 0
      %5494 = vmatprep.subr.bf16.mxu0 0
      %5495 = vmatpush1.bf16.msra.mxu0 0
      %5496 = vmatprep.subr.bf16.mxu0 0
      %5497 = vmatpush1.bf16.msra.mxu0 0
      %5498 = vmatprep.subr.bf16.mxu0 0
      %5499 = vmatpush1.bf16.msra.mxu0 0
      %5500 = vmatprep.subr.bf16.mxu0 0
      %5501 = vmatpush1.bf16.msra.mxu0 0
      %5502 = vmatprep.subr.bf16.mxu0 0
      %5503 = vmatpush1.bf16.msra.mxu0 0
      %5504 = vmatprep.subr.bf16.mxu0 0
      %5505 = vmatpush1.bf16.msra.mxu0 0
      %5506 = vmatprep.subr.bf16.mxu0 0
      %5507 = vmatpush1.bf16.msra.mxu0 0
      %5508 = vmatprep.subr.bf16.mxu0 0
      %5509 = vmatpush1.bf16.msra.mxu0 0
      %5510 = vmatprep.subr.bf16.mxu0 0
      %5511 = vmatpush1.bf16.msra.mxu0 0
      %5512 = vmatprep.subr.bf16.mxu0 0
      %5513 = vmatpush1.bf16.msra.mxu0 0
      %5514 = vmatprep.subr.bf16.mxu0 0
      %5515 = vmatpush1.bf16.msra.mxu0 0
      %5516 = vmatprep.subr.bf16.mxu0 0
      %5517 = vmatpush1.bf16.msra.mxu0 0
      %5518 = vmatprep.mubr.bf16.mxu0 0
      %5519 = vmatmul.mubr.bf16.gmra.mrb[0].mxu0 %v5484
      %v5520 = vpop.f32.mrb[0].mxu0
      %v5521 = vadd.f32 0.0, %v5520
      %v5522 = vpop.f32.mrb[0].mxu0
      %v5523 = vadd.f32 0.0, %v5522
      %v5524 = vpop.f32.mrb[0].mxu0
      %v5525 = vadd.f32 0.0, %v5524
      %v5526 = vpop.f32.mrb[0].mxu0
      %v5527 = vadd.f32 0.0, %v5526
      %5528 = vdwg.mxu0
      %v5529 = vpack.c.bf16 %v5525, %v5521
      %v5530 = vpack.c.bf16 %v5527, %v5523
      %s5531 = scalar_lea.vmem %s17, 256
      %v5532 = vld [vmem:[%s5531] sm:$0xff]
      %v5533 = vld [vmem:[%s5531 + $0x8] sm:$0xff]
      %v5534 = vld [vmem:[%s5531 + $0x10] sm:$0xff]
      %v5535 = vld [vmem:[%s5531 + $0x18] sm:$0xff]
      %v5536 = vld [vmem:[%s5531 + $0x20] sm:$0xff]
      %v5537 = vld [vmem:[%s5531 + $0x28] sm:$0xff]
      %v5538 = vld [vmem:[%s5531 + $0x30] sm:$0xff]
      %v5539 = vld [vmem:[%s5531 + $0x38] sm:$0xff]
      %v5540 = vld [vmem:[%s5531 + $0x40] sm:$0xff]
      %v5541 = vld [vmem:[%s5531 + $0x48] sm:$0xff]
      %v5542 = vld [vmem:[%s5531 + $0x50] sm:$0xff]
      %v5543 = vld [vmem:[%s5531 + $0x58] sm:$0xff]
      %v5544 = vld [vmem:[%s5531 + $0x60] sm:$0xff]
      %v5545 = vld [vmem:[%s5531 + $0x68] sm:$0xff]
      %v5546 = vld [vmem:[%s5531 + $0x70] sm:$0xff]
      %v5547 = vld [vmem:[%s5531 + $0x78] sm:$0xff]
      %v5548 = vld [vmem:[%s5531 + $0x80] sm:$0xff]
      %v5549 = vld [vmem:[%s5531 + $0x88] sm:$0xff]
      %v5550 = vld [vmem:[%s5531 + $0x90] sm:$0xff]
      %v5551 = vld [vmem:[%s5531 + $0x98] sm:$0xff]
      %v5552 = vld [vmem:[%s5531 + $0xa0] sm:$0xff]
      %v5553 = vld [vmem:[%s5531 + $0xa8] sm:$0xff]
      %v5554 = vld [vmem:[%s5531 + $0xb0] sm:$0xff]
      %v5555 = vld [vmem:[%s5531 + $0xb8] sm:$0xff]
      %v5556 = vld [vmem:[%s5531 + $0xc0] sm:$0xff]
      %v5557 = vld [vmem:[%s5531 + $0xc8] sm:$0xff]
      %v5558 = vld [vmem:[%s5531 + $0xd0] sm:$0xff]
      %v5559 = vld [vmem:[%s5531 + $0xd8] sm:$0xff]
      %v5560 = vld [vmem:[%s5531 + $0xe0] sm:$0xff]
      %v5561 = vld [vmem:[%s5531 + $0xe8] sm:$0xff]
      %v5562 = vld [vmem:[%s5531 + $0xf0] sm:$0xff]
      %v5563 = vld [vmem:[%s5531 + $0xf8] sm:$0xff]
      %v5596 = vunpack.c.l.b16 %v5532
      %v5597 = vunpack.c.h.b16 %v5532
      %v5598 = vunpack.c.l.b16 %v5533
      %v5599 = vunpack.c.h.b16 %v5533
      %v5600 = vunpack.c.l.b16 %v5534
      %v5601 = vunpack.c.h.b16 %v5534
      %v5602 = vunpack.c.l.b16 %v5535
      %v5603 = vunpack.c.h.b16 %v5535
      %v5604 = vunpack.c.l.b16 %v5536
      %v5605 = vunpack.c.h.b16 %v5536
      %v5606 = vunpack.c.l.b16 %v5537
      %v5607 = vunpack.c.h.b16 %v5537
      %v5608 = vunpack.c.l.b16 %v5538
      %v5609 = vunpack.c.h.b16 %v5538
      %v5610 = vunpack.c.l.b16 %v5539
      %v5611 = vunpack.c.h.b16 %v5539
      %v5612 = vunpack.c.l.b16 %v5540
      %v5613 = vunpack.c.h.b16 %v5540
      %v5614 = vunpack.c.l.b16 %v5541
      %v5615 = vunpack.c.h.b16 %v5541
      %v5616 = vunpack.c.l.b16 %v5542
      %v5617 = vunpack.c.h.b16 %v5542
      %v5618 = vunpack.c.l.b16 %v5543
      %v5619 = vunpack.c.h.b16 %v5543
      %v5620 = vunpack.c.l.b16 %v5544
      %v5621 = vunpack.c.h.b16 %v5544
      %v5622 = vunpack.c.l.b16 %v5545
      %v5623 = vunpack.c.h.b16 %v5545
      %v5624 = vunpack.c.l.b16 %v5546
      %v5625 = vunpack.c.h.b16 %v5546
      %v5626 = vunpack.c.l.b16 %v5547
      %v5627 = vunpack.c.h.b16 %v5547
      %v5628 = vunpack.c.l.b16 %v5548
      %v5629 = vunpack.c.h.b16 %v5548
      %v5630 = vunpack.c.l.b16 %v5549
      %v5631 = vunpack.c.h.b16 %v5549
      %v5632 = vunpack.c.l.b16 %v5550
      %v5633 = vunpack.c.h.b16 %v5550
      %v5634 = vunpack.c.l.b16 %v5551
      %v5635 = vunpack.c.h.b16 %v5551
      %v5636 = vunpack.c.l.b16 %v5552
      %v5637 = vunpack.c.h.b16 %v5552
      %v5638 = vunpack.c.l.b16 %v5553
      %v5639 = vunpack.c.h.b16 %v5553
      %v5640 = vunpack.c.l.b16 %v5554
      %v5641 = vunpack.c.h.b16 %v5554
      %v5642 = vunpack.c.l.b16 %v5555
      %v5643 = vunpack.c.h.b16 %v5555
      %v5644 = vunpack.c.l.b16 %v5556
      %v5645 = vunpack.c.h.b16 %v5556
      %v5646 = vunpack.c.l.b16 %v5557
      %v5647 = vunpack.c.h.b16 %v5557
      %v5648 = vunpack.c.l.b16 %v5558
      %v5649 = vunpack.c.h.b16 %v5558
      %v5650 = vunpack.c.l.b16 %v5559
      %v5651 = vunpack.c.h.b16 %v5559
      %v5652 = vunpack.c.l.b16 %v5560
      %v5653 = vunpack.c.h.b16 %v5560
      %v5654 = vunpack.c.l.b16 %v5561
      %v5655 = vunpack.c.h.b16 %v5561
      %v5656 = vunpack.c.l.b16 %v5562
      %v5657 = vunpack.c.h.b16 %v5562
      %v5658 = vunpack.c.l.b16 %v5563
      %v5659 = vunpack.c.h.b16 %v5563
      %v5660 = vpack.c.b16 %v5598, %v5596
      %v5661 = vpack.c.b16 %v5599, %v5597
      %v5662 = vpack.c.b16 %v5602, %v5600
      %v5663 = vpack.c.b16 %v5603, %v5601
      %v5664 = vpack.c.b16 %v5606, %v5604
      %v5665 = vpack.c.b16 %v5607, %v5605
      %v5666 = vpack.c.b16 %v5610, %v5608
      %v5667 = vpack.c.b16 %v5611, %v5609
      %v5668 = vpack.c.b16 %v5614, %v5612
      %v5669 = vpack.c.b16 %v5615, %v5613
      %v5670 = vpack.c.b16 %v5618, %v5616
      %v5671 = vpack.c.b16 %v5619, %v5617
      %v5672 = vpack.c.b16 %v5622, %v5620
      %v5673 = vpack.c.b16 %v5623, %v5621
      %v5674 = vpack.c.b16 %v5626, %v5624
      %v5675 = vpack.c.b16 %v5627, %v5625
      %v5676 = vpack.c.b16 %v5630, %v5628
      %v5677 = vpack.c.b16 %v5631, %v5629
      %v5678 = vpack.c.b16 %v5634, %v5632
      %v5679 = vpack.c.b16 %v5635, %v5633
      %v5680 = vpack.c.b16 %v5638, %v5636
      %v5681 = vpack.c.b16 %v5639, %v5637
      %v5682 = vpack.c.b16 %v5642, %v5640
      %v5683 = vpack.c.b16 %v5643, %v5641
      %v5684 = vpack.c.b16 %v5646, %v5644
      %v5685 = vpack.c.b16 %v5647, %v5645
      %v5686 = vpack.c.b16 %v5650, %v5648
      %v5687 = vpack.c.b16 %v5651, %v5649
      %v5688 = vpack.c.b16 %v5654, %v5652
      %v5689 = vpack.c.b16 %v5655, %v5653
      %v5690 = vpack.c.b16 %v5658, %v5656
      %v5691 = vpack.c.b16 %v5659, %v5657
      %5724 = vmatprep.subr.bf16.mxu0 %v5661
      %5725 = vmatpush1.bf16.msra.mxu0 %v5660
      %5726 = vmatprep.subr.bf16.mxu0 %v5663
      %5727 = vmatpush1.bf16.msra.mxu0 %v5662
      %5728 = vmatprep.subr.bf16.mxu0 %v5665
      %5729 = vmatpush1.bf16.msra.mxu0 %v5664
      %5730 = vmatprep.subr.bf16.mxu0 %v5667
      %5731 = vmatpush1.bf16.msra.mxu0 %v5666
      %5732 = vmatprep.subr.bf16.mxu0 %v5669
      %5733 = vmatpush1.bf16.msra.mxu0 %v5668
      %5734 = vmatprep.subr.bf16.mxu0 %v5671
      %5735 = vmatpush1.bf16.msra.mxu0 %v5670
      %5736 = vmatprep.subr.bf16.mxu0 %v5673
      %5737 = vmatpush1.bf16.msra.mxu0 %v5672
      %5738 = vmatprep.subr.bf16.mxu0 %v5675
      %5739 = vmatpush1.bf16.msra.mxu0 %v5674
      %5740 = vmatprep.subr.bf16.mxu0 %v5677
      %5741 = vmatpush1.bf16.msra.mxu0 %v5676
      %5742 = vmatprep.subr.bf16.mxu0 %v5679
      %5743 = vmatpush1.bf16.msra.mxu0 %v5678
      %5744 = vmatprep.subr.bf16.mxu0 %v5681
      %5745 = vmatpush1.bf16.msra.mxu0 %v5680
      %5746 = vmatprep.subr.bf16.mxu0 %v5683
      %5747 = vmatpush1.bf16.msra.mxu0 %v5682
      %5748 = vmatprep.subr.bf16.mxu0 %v5685
      %5749 = vmatpush1.bf16.msra.mxu0 %v5684
      %5750 = vmatprep.subr.bf16.mxu0 %v5687
      %5751 = vmatpush1.bf16.msra.mxu0 %v5686
      %5752 = vmatprep.subr.bf16.mxu0 %v5689
      %5753 = vmatpush1.bf16.msra.mxu0 %v5688
      %5754 = vmatprep.subr.bf16.mxu0 %v5691
      %5755 = vmatpush1.bf16.msra.mxu0 %v5690
      %5756 = vmatprep.mubr.bf16.mxu0 %v5530
      %5757 = vmatmul.mubr.bf16.gmra.mrb[0].mxu0 %v5529
      %v5758 = vpop.f32.mrb[0].mxu0
      %v5759 = vadd.f32 0.0, %v5758
      %v5760 = vpop.f32.mrb[0].mxu0
      %v5761 = vadd.f32 0.0, %v5760
      %v5762 = vpop.f32.mrb[0].mxu0
      %v5763 = vadd.f32 0.0, %v5762
      %v5764 = vpop.f32.mrb[0].mxu0
      %v5765 = vadd.f32 0.0, %v5764
      %5766 = vdwg.mxu0
      %v5799 = vunpack.c.l.b16 %v5443
      %v5800 = vunpack.c.h.b16 %v5443
      %v5801 = vunpack.c.l.b16 %v5444
      %v5802 = vunpack.c.h.b16 %v5444
      %v5803 = vunpack.c.l.b16 %v5445
      %v5804 = vunpack.c.h.b16 %v5445
      %v5805 = vunpack.c.l.b16 %v5446
      %v5806 = vunpack.c.h.b16 %v5446
      %v5807 = vunpack.c.l.b16 %v5447
      %v5808 = vunpack.c.h.b16 %v5447
      %v5809 = vunpack.c.l.b16 %v5448
      %v5810 = vunpack.c.h.b16 %v5448
      %v5811 = vunpack.c.l.b16 %v5449
      %v5812 = vunpack.c.h.b16 %v5449
      %v5813 = vunpack.c.l.b16 %v5450
      %v5814 = vunpack.c.h.b16 %v5450
      %v5815 = vunpack.c.l.b16 %v5451
      %v5816 = vunpack.c.h.b16 %v5451
      %v5817 = vunpack.c.l.b16 %v5452
      %v5818 = vunpack.c.h.b16 %v5452
      %v5819 = vunpack.c.l.b16 %v5453
      %v5820 = vunpack.c.h.b16 %v5453
      %v5821 = vunpack.c.l.b16 %v5454
      %v5822 = vunpack.c.h.b16 %v5454
      %v5823 = vunpack.c.l.b16 %v5455
      %v5824 = vunpack.c.h.b16 %v5455
      %v5825 = vunpack.c.l.b16 %v5456
      %v5826 = vunpack.c.h.b16 %v5456
      %v5827 = vunpack.c.l.b16 %v5457
      %v5828 = vunpack.c.h.b16 %v5457
      %v5829 = vunpack.c.l.b16 %v5458
      %v5830 = vunpack.c.h.b16 %v5458
      %v5831 = vunpack.c.l.b16 %v5459
      %v5832 = vunpack.c.h.b16 %v5459
      %v5833 = vunpack.c.l.b16 %v5460
      %v5834 = vunpack.c.h.b16 %v5460
      %v5835 = vunpack.c.l.b16 %v5461
      %v5836 = vunpack.c.h.b16 %v5461
      %v5837 = vunpack.c.l.b16 %v5462
      %v5838 = vunpack.c.h.b16 %v5462
      %v5839 = vunpack.c.l.b16 %v5463
      %v5840 = vunpack.c.h.b16 %v5463
      %v5841 = vunpack.c.l.b16 %v5464
      %v5842 = vunpack.c.h.b16 %v5464
      %v5843 = vunpack.c.l.b16 %v5465
      %v5844 = vunpack.c.h.b16 %v5465
      %v5845 = vunpack.c.l.b16 %v5466
      %v5846 = vunpack.c.h.b16 %v5466
      %v5847 = vunpack.c.l.b16 %v5467
      %v5848 = vunpack.c.h.b16 %v5467
      %v5849 = vunpack.c.l.b16 %v5468
      %v5850 = vunpack.c.h.b16 %v5468
      %v5851 = vunpack.c.l.b16 %v5469
      %v5852 = vunpack.c.h.b16 %v5469
      %v5853 = vunpack.c.l.b16 %v5470
      %v5854 = vunpack.c.h.b16 %v5470
      %v5855 = vunpack.c.l.b16 %v5471
      %v5856 = vunpack.c.h.b16 %v5471
      %v5857 = vunpack.c.l.b16 %v5472
      %v5858 = vunpack.c.h.b16 %v5472
      %v5859 = vunpack.c.l.b16 %v5473
      %v5860 = vunpack.c.h.b16 %v5473
      %v5861 = vunpack.c.l.b16 %v5474
      %v5862 = vunpack.c.h.b16 %v5474
      %v5863 = vpack.c.b16 %v5801, %v5799
      %v5864 = vpack.c.b16 %v5802, %v5800
      %v5865 = vpack.c.b16 %v5805, %v5803
      %v5866 = vpack.c.b16 %v5806, %v5804
      %v5867 = vpack.c.b16 %v5809, %v5807
      %v5868 = vpack.c.b16 %v5810, %v5808
      %v5869 = vpack.c.b16 %v5813, %v5811
      %v5870 = vpack.c.b16 %v5814, %v5812
      %v5871 = vpack.c.b16 %v5817, %v5815
      %v5872 = vpack.c.b16 %v5818, %v5816
      %v5873 = vpack.c.b16 %v5821, %v5819
      %v5874 = vpack.c.b16 %v5822, %v5820
      %v5875 = vpack.c.b16 %v5825, %v5823
      %v5876 = vpack.c.b16 %v5826, %v5824
      %v5877 = vpack.c.b16 %v5829, %v5827
      %v5878 = vpack.c.b16 %v5830, %v5828
      %v5879 = vpack.c.b16 %v5833, %v5831
      %v5880 = vpack.c.b16 %v5834, %v5832
      %v5881 = vpack.c.b16 %v5837, %v5835
      %v5882 = vpack.c.b16 %v5838, %v5836
      %v5883 = vpack.c.b16 %v5841, %v5839
      %v5884 = vpack.c.b16 %v5842, %v5840
      %v5885 = vpack.c.b16 %v5845, %v5843
      %v5886 = vpack.c.b16 %v5846, %v5844
      %v5887 = vpack.c.b16 %v5849, %v5847
      %v5888 = vpack.c.b16 %v5850, %v5848
      %v5889 = vpack.c.b16 %v5853, %v5851
      %v5890 = vpack.c.b16 %v5854, %v5852
      %v5891 = vpack.c.b16 %v5857, %v5855
      %v5892 = vpack.c.b16 %v5858, %v5856
      %v5893 = vpack.c.b16 %v5861, %v5859
      %v5894 = vpack.c.b16 %v5862, %v5860
      %5927 = vmatprep.subr.bf16.mxu0 %v5864
      %5928 = vmatpush1.bf16.msra.mxu0 %v5863
      %5929 = vmatprep.subr.bf16.mxu0 %v5866
      %5930 = vmatpush1.bf16.msra.mxu0 %v5865
      %5931 = vmatprep.subr.bf16.mxu0 %v5868
      %5932 = vmatpush1.bf16.msra.mxu0 %v5867
      %5933 = vmatprep.subr.bf16.mxu0 %v5870
      %5934 = vmatpush1.bf16.msra.mxu0 %v5869
      %5935 = vmatprep.subr.bf16.mxu0 %v5872
      %5936 = vmatpush1.bf16.msra.mxu0 %v5871
      %5937 = vmatprep.subr.bf16.mxu0 %v5874
      %5938 = vmatpush1.bf16.msra.mxu0 %v5873
      %5939 = vmatprep.subr.bf16.mxu0 %v5876
      %5940 = vmatpush1.bf16.msra.mxu0 %v5875
      %5941 = vmatprep.subr.bf16.mxu0 %v5878
      %5942 = vmatpush1.bf16.msra.mxu0 %v5877
      %5943 = vmatprep.subr.bf16.mxu0 %v5880
      %5944 = vmatpush1.bf16.msra.mxu0 %v5879
      %5945 = vmatprep.subr.bf16.mxu0 %v5882
      %5946 = vmatpush1.bf16.msra.mxu0 %v5881
      %5947 = vmatprep.subr.bf16.mxu0 %v5884
      %5948 = vmatpush1.bf16.msra.mxu0 %v5883
      %5949 = vmatprep.subr.bf16.mxu0 %v5886
      %5950 = vmatpush1.bf16.msra.mxu0 %v5885
      %5951 = vmatprep.subr.bf16.mxu0 %v5888
      %5952 = vmatpush1.bf16.msra.mxu0 %v5887
      %5953 = vmatprep.subr.bf16.mxu0 %v5890
      %5954 = vmatpush1.bf16.msra.mxu0 %v5889
      %5955 = vmatprep.subr.bf16.mxu0 %v5892
      %5956 = vmatpush1.bf16.msra.mxu0 %v5891
      %5957 = vmatprep.subr.bf16.mxu0 %v5894
      %5958 = vmatpush1.bf16.msra.mxu0 %v5893
      %5959 = vmatprep.mubr.bf16.mxu0 %v5442
      %5960 = vmatmul.mubr.bf16.gmra.mrb[0].mxu0 %v5441
      %v5961 = vpop.f32.mrb[0].mxu0
      %v5962 = vadd.f32 %v5759, %v5961
      %v5963 = vpop.f32.mrb[0].mxu0
      %v5964 = vadd.f32 %v5761, %v5963
      %v5965 = vpop.f32.mrb[0].mxu0
      %v5966 = vadd.f32 %v5763, %v5965
      %v5967 = vpop.f32.mrb[0].mxu0
      %v5968 = vadd.f32 %v5765, %v5967
      %5969 = vdwg.mxu0
      %s5970 = scalar_lea.vmem %s16, 16
      %v5971 = vld [vmem:[%s5970] sm:$0xf]
      %v5972 = vld [vmem:[%s5970 + $0x4] sm:$0xf]
      %v5975 = vunpack.c.l.b16 %v5971
      %v5976 = vunpack.c.l.b16 %v5972
      %v5977 = vpack.c.b16 %v5976, %v5975
      %v5979 = vsel %vm1821, %v5977, 0
      %5981 = vmatprep.subr.bf16.mxu0 %v5385
      %5982 = vmatpush1.bf16.msra.mxu0 %v5384
      %5983 = vmatprep.subr.bf16.mxu0 %v5387
      %5984 = vmatpush1.bf16.msra.mxu0 %v5386
      %5985 = vmatprep.subr.bf16.mxu0 0
      %5986 = vmatpush1.bf16.msra.mxu0 0
      %5987 = vmatprep.subr.bf16.mxu0 0
      %5988 = vmatpush1.bf16.msra.mxu0 0
      %5989 = vmatprep.subr.bf16.mxu0 0
      %5990 = vmatpush1.bf16.msra.mxu0 0
      %5991 = vmatprep.subr.bf16.mxu0 0
      %5992 = vmatpush1.bf16.msra.mxu0 0
      %5993 = vmatprep.subr.bf16.mxu0 0
      %5994 = vmatpush1.bf16.msra.mxu0 0
      %5995 = vmatprep.subr.bf16.mxu0 0
      %5996 = vmatpush1.bf16.msra.mxu0 0
      %5997 = vmatprep.subr.bf16.mxu0 0
      %5998 = vmatpush1.bf16.msra.mxu0 0
      %5999 = vmatprep.subr.bf16.mxu0 0
      %6000 = vmatpush1.bf16.msra.mxu0 0
      %6001 = vmatprep.subr.bf16.mxu0 0
      %6002 = vmatpush1.bf16.msra.mxu0 0
      %6003 = vmatprep.subr.bf16.mxu0 0
      %6004 = vmatpush1.bf16.msra.mxu0 0
      %6005 = vmatprep.subr.bf16.mxu0 0
      %6006 = vmatpush1.bf16.msra.mxu0 0
      %6007 = vmatprep.subr.bf16.mxu0 0
      %6008 = vmatpush1.bf16.msra.mxu0 0
      %6009 = vmatprep.subr.bf16.mxu0 0
      %6010 = vmatpush1.bf16.msra.mxu0 0
      %6011 = vmatprep.subr.bf16.mxu0 0
      %6012 = vmatpush1.bf16.msra.mxu0 0
      %6013 = vmatprep.mubr.bf16.mxu0 0
      %6014 = vmatmul.mubr.bf16.gmra.mrb[0].mxu0 %v5979
      %v6015 = vpop.f32.mrb[0].mxu0
      %v6016 = vadd.f32 0.0, %v6015
      %v6017 = vpop.f32.mrb[0].mxu0
      %v6018 = vadd.f32 0.0, %v6017
      %v6019 = vpop.f32.mrb[0].mxu0
      %v6020 = vadd.f32 0.0, %v6019
      %v6021 = vpop.f32.mrb[0].mxu0
      %v6022 = vadd.f32 0.0, %v6021
      %6023 = vdwg.mxu0
      %v6024 = vpack.c.bf16 %v6020, %v6016
      %v6025 = vpack.c.bf16 %v6022, %v6018
      %s6026 = scalar_lea.vmem %s17, 512
      %v6027 = vld [vmem:[%s6026] sm:$0xff]
      %v6028 = vld [vmem:[%s6026 + $0x8] sm:$0xff]
      %v6029 = vld [vmem:[%s6026 + $0x10] sm:$0xff]
      %v6030 = vld [vmem:[%s6026 + $0x18] sm:$0xff]
      %v6031 = vld [vmem:[%s6026 + $0x20] sm:$0xff]
      %v6032 = vld [vmem:[%s6026 + $0x28] sm:$0xff]
      %v6033 = vld [vmem:[%s6026 + $0x30] sm:$0xff]
      %v6034 = vld [vmem:[%s6026 + $0x38] sm:$0xff]
      %v6035 = vld [vmem:[%s6026 + $0x40] sm:$0xff]
      %v6036 = vld [vmem:[%s6026 + $0x48] sm:$0xff]
      %v6037 = vld [vmem:[%s6026 + $0x50] sm:$0xff]
      %v6038 = vld [vmem:[%s6026 + $0x58] sm:$0xff]
      %v6039 = vld [vmem:[%s6026 + $0x60] sm:$0xff]
      %v6040 = vld [vmem:[%s6026 + $0x68] sm:$0xff]
      %v6041 = vld [vmem:[%s6026 + $0x70] sm:$0xff]
      %v6042 = vld [vmem:[%s6026 + $0x78] sm:$0xff]
      %v6043 = vld [vmem:[%s6026 + $0x80] sm:$0xff]
      %v6044 = vld [vmem:[%s6026 + $0x88] sm:$0xff]
      %v6045 = vld [vmem:[%s6026 + $0x90] sm:$0xff]
      %v6046 = vld [vmem:[%s6026 + $0x98] sm:$0xff]
      %v6047 = vld [vmem:[%s6026 + $0xa0] sm:$0xff]
      %v6048 = vld [vmem:[%s6026 + $0xa8] sm:$0xff]
      %v6049 = vld [vmem:[%s6026 + $0xb0] sm:$0xff]
      %v6050 = vld [vmem:[%s6026 + $0xb8] sm:$0xff]
      %v6051 = vld [vmem:[%s6026 + $0xc0] sm:$0xff]
      %v6052 = vld [vmem:[%s6026 + $0xc8] sm:$0xff]
      %v6053 = vld [vmem:[%s6026 + $0xd0] sm:$0xff]
      %v6054 = vld [vmem:[%s6026 + $0xd8] sm:$0xff]
      %v6055 = vld [vmem:[%s6026 + $0xe0] sm:$0xff]
      %v6056 = vld [vmem:[%s6026 + $0xe8] sm:$0xff]
      %v6057 = vld [vmem:[%s6026 + $0xf0] sm:$0xff]
      %v6058 = vld [vmem:[%s6026 + $0xf8] sm:$0xff]
      %v6091 = vunpack.c.l.b16 %v6027
      %v6092 = vunpack.c.h.b16 %v6027
      %v6093 = vunpack.c.l.b16 %v6028
      %v6094 = vunpack.c.h.b16 %v6028
      %v6095 = vunpack.c.l.b16 %v6029
      %v6096 = vunpack.c.h.b16 %v6029
      %v6097 = vunpack.c.l.b16 %v6030
      %v6098 = vunpack.c.h.b16 %v6030
      %v6099 = vunpack.c.l.b16 %v6031
      %v6100 = vunpack.c.h.b16 %v6031
      %v6101 = vunpack.c.l.b16 %v6032
      %v6102 = vunpack.c.h.b16 %v6032
      %v6103 = vunpack.c.l.b16 %v6033
      %v6104 = vunpack.c.h.b16 %v6033
      %v6105 = vunpack.c.l.b16 %v6034
      %v6106 = vunpack.c.h.b16 %v6034
      %v6107 = vunpack.c.l.b16 %v6035
      %v6108 = vunpack.c.h.b16 %v6035
      %v6109 = vunpack.c.l.b16 %v6036
      %v6110 = vunpack.c.h.b16 %v6036
      %v6111 = vunpack.c.l.b16 %v6037
      %v6112 = vunpack.c.h.b16 %v6037
      %v6113 = vunpack.c.l.b16 %v6038
      %v6114 = vunpack.c.h.b16 %v6038
      %v6115 = vunpack.c.l.b16 %v6039
      %v6116 = vunpack.c.h.b16 %v6039
      %v6117 = vunpack.c.l.b16 %v6040
      %v6118 = vunpack.c.h.b16 %v6040
      %v6119 = vunpack.c.l.b16 %v6041
      %v6120 = vunpack.c.h.b16 %v6041
      %v6121 = vunpack.c.l.b16 %v6042
      %v6122 = vunpack.c.h.b16 %v6042
      %v6123 = vunpack.c.l.b16 %v6043
      %v6124 = vunpack.c.h.b16 %v6043
      %v6125 = vunpack.c.l.b16 %v6044
      %v6126 = vunpack.c.h.b16 %v6044
      %v6127 = vunpack.c.l.b16 %v6045
      %v6128 = vunpack.c.h.b16 %v6045
      %v6129 = vunpack.c.l.b16 %v6046
      %v6130 = vunpack.c.h.b16 %v6046
      %v6131 = vunpack.c.l.b16 %v6047
      %v6132 = vunpack.c.h.b16 %v6047
      %v6133 = vunpack.c.l.b16 %v6048
      %v6134 = vunpack.c.h.b16 %v6048
      %v6135 = vunpack.c.l.b16 %v6049
      %v6136 = vunpack.c.h.b16 %v6049
      %v6137 = vunpack.c.l.b16 %v6050
      %v6138 = vunpack.c.h.b16 %v6050
      %v6139 = vunpack.c.l.b16 %v6051
      %v6140 = vunpack.c.h.b16 %v6051
      %v6141 = vunpack.c.l.b16 %v6052
      %v6142 = vunpack.c.h.b16 %v6052
      %v6143 = vunpack.c.l.b16 %v6053
      %v6144 = vunpack.c.h.b16 %v6053
      %v6145 = vunpack.c.l.b16 %v6054
      %v6146 = vunpack.c.h.b16 %v6054
      %v6147 = vunpack.c.l.b16 %v6055
      %v6148 = vunpack.c.h.b16 %v6055
      %v6149 = vunpack.c.l.b16 %v6056
      %v6150 = vunpack.c.h.b16 %v6056
      %v6151 = vunpack.c.l.b16 %v6057
      %v6152 = vunpack.c.h.b16 %v6057
      %v6153 = vunpack.c.l.b16 %v6058
      %v6154 = vunpack.c.h.b16 %v6058
      %v6155 = vpack.c.b16 %v6093, %v6091
      %v6156 = vpack.c.b16 %v6094, %v6092
      %v6157 = vpack.c.b16 %v6097, %v6095
      %v6158 = vpack.c.b16 %v6098, %v6096
      %v6159 = vpack.c.b16 %v6101, %v6099
      %v6160 = vpack.c.b16 %v6102, %v6100
      %v6161 = vpack.c.b16 %v6105, %v6103
      %v6162 = vpack.c.b16 %v6106, %v6104
      %v6163 = vpack.c.b16 %v6109, %v6107
      %v6164 = vpack.c.b16 %v6110, %v6108
      %v6165 = vpack.c.b16 %v6113, %v6111
      %v6166 = vpack.c.b16 %v6114, %v6112
      %v6167 = vpack.c.b16 %v6117, %v6115
      %v6168 = vpack.c.b16 %v6118, %v6116
      %v6169 = vpack.c.b16 %v6121, %v6119
      %v6170 = vpack.c.b16 %v6122, %v6120
      %v6171 = vpack.c.b16 %v6125, %v6123
      %v6172 = vpack.c.b16 %v6126, %v6124
      %v6173 = vpack.c.b16 %v6129, %v6127
      %v6174 = vpack.c.b16 %v6130, %v6128
      %v6175 = vpack.c.b16 %v6133, %v6131
      %v6176 = vpack.c.b16 %v6134, %v6132
      %v6177 = vpack.c.b16 %v6137, %v6135
      %v6178 = vpack.c.b16 %v6138, %v6136
      %v6179 = vpack.c.b16 %v6141, %v6139
      %v6180 = vpack.c.b16 %v6142, %v6140
      %v6181 = vpack.c.b16 %v6145, %v6143
      %v6182 = vpack.c.b16 %v6146, %v6144
      %v6183 = vpack.c.b16 %v6149, %v6147
      %v6184 = vpack.c.b16 %v6150, %v6148
      %v6185 = vpack.c.b16 %v6153, %v6151
      %v6186 = vpack.c.b16 %v6154, %v6152
      %6219 = vmatprep.subr.bf16.mxu0 %v6156
      %6220 = vmatpush1.bf16.msra.mxu0 %v6155
      %6221 = vmatprep.subr.bf16.mxu0 %v6158
      %6222 = vmatpush1.bf16.msra.mxu0 %v6157
      %6223 = vmatprep.subr.bf16.mxu0 %v6160
      %6224 = vmatpush1.bf16.msra.mxu0 %v6159
      %6225 = vmatprep.subr.bf16.mxu0 %v6162
      %6226 = vmatpush1.bf16.msra.mxu0 %v6161
      %6227 = vmatprep.subr.bf16.mxu0 %v6164
      %6228 = vmatpush1.bf16.msra.mxu0 %v6163
      %6229 = vmatprep.subr.bf16.mxu0 %v6166
      %6230 = vmatpush1.bf16.msra.mxu0 %v6165
      %6231 = vmatprep.subr.bf16.mxu0 %v6168
      %6232 = vmatpush1.bf16.msra.mxu0 %v6167
      %6233 = vmatprep.subr.bf16.mxu0 %v6170
      %6234 = vmatpush1.bf16.msra.mxu0 %v6169
      %6235 = vmatprep.subr.bf16.mxu0 %v6172
      %6236 = vmatpush1.bf16.msra.mxu0 %v6171
      %6237 = vmatprep.subr.bf16.mxu0 %v6174
      %6238 = vmatpush1.bf16.msra.mxu0 %v6173
      %6239 = vmatprep.subr.bf16.mxu0 %v6176
      %6240 = vmatpush1.bf16.msra.mxu0 %v6175
      %6241 = vmatprep.subr.bf16.mxu0 %v6178
      %6242 = vmatpush1.bf16.msra.mxu0 %v6177
      %6243 = vmatprep.subr.bf16.mxu0 %v6180
      %6244 = vmatpush1.bf16.msra.mxu0 %v6179
      %6245 = vmatprep.subr.bf16.mxu0 %v6182
      %6246 = vmatpush1.bf16.msra.mxu0 %v6181
      %6247 = vmatprep.subr.bf16.mxu0 %v6184
      %6248 = vmatpush1.bf16.msra.mxu0 %v6183
      %6249 = vmatprep.subr.bf16.mxu0 %v6186
      %6250 = vmatpush1.bf16.msra.mxu0 %v6185
      %6251 = vmatprep.mubr.bf16.mxu0 %v6025
      %6252 = vmatmul.mubr.bf16.gmra.mrb[0].mxu0 %v6024
      %v6253 = vpop.f32.mrb[0].mxu0
      %v6254 = vadd.f32 0.0, %v6253
      %v6255 = vpop.f32.mrb[0].mxu0
      %v6256 = vadd.f32 0.0, %v6255
      %v6257 = vpop.f32.mrb[0].mxu0
      %v6258 = vadd.f32 0.0, %v6257
      %v6259 = vpop.f32.mrb[0].mxu0
      %v6260 = vadd.f32 0.0, %v6259
      %6261 = vdwg.mxu0
      %v6262 = vadd.f32 %v5962, %v6254
      %v6263 = vadd.f32 %v5964, %v6256
      %v6264 = vadd.f32 %v5966, %v6258
      %v6265 = vadd.f32 %v5968, %v6260
      %v6266 = vld [vmem:[%s18] sm:$0x3]
      %v6268 = vlaneseq
      %v6269 = vshrl.u32 %v6268, 7
      %v6270 = vsub.s32 0, %v6269
      %v6271 = vrot.slane %v6266, %v6270
      %v6272 = vlaneseq
      %v6273 = vshrl.u32 %v6272, 7
      %v6274 = vsub.s32 1, %v6273
      %v6275 = vrot.slane %v6266, %v6274
      %v6278 = vadd.f32 %v6262, %v6271
      %v6279 = vadd.f32 %v6263, %v6275
      %v6280 = vadd.f32 %v6264, %v6271
      %v6281 = vadd.f32 %v6265, %v6275
      %v6282 = vmax.f32 %v6278, 0.0
      %v6283 = vmax.f32 %v6279, 0.0
      %v6284 = vmax.f32 %v6280, 0.0
      %v6285 = vmax.f32 %v6281, 0.0
      %v6286 = vpack.c.bf16 %v6284, %v6282
      %v6287 = vpack.c.bf16 %v6285, %v6283
      %v6288 = vld [vmem:[%s19] sm:$0xf]
      %v6290 = vsel %vm2716, %v6288, 0
      %6292 = vmatprep.subr.bf16.mxu0 %v6287
      %6293 = vmatpush1.bf16.msra.mxu0 %v6286
      %6294 = vmatprep.subr.bf16.mxu0 0
      %6295 = vmatpush1.bf16.msra.mxu0 0
      %6296 = vmatprep.subr.bf16.mxu0 0
      %6297 = vmatpush1.bf16.msra.mxu0 0
      %6298 = vmatprep.subr.bf16.mxu0 0
      %6299 = vmatpush1.bf16.msra.mxu0 0
      %6300 = vmatprep.subr.bf16.mxu0 0
      %6301 = vmatpush1.bf16.msra.mxu0 0
      %6302 = vmatprep.subr.bf16.mxu0 0
      %6303 = vmatpush1.bf16.msra.mxu0 0
      %6304 = vmatprep.subr.bf16.mxu0 0
      %6305 = vmatpush1.bf16.msra.mxu0 0
      %6306 = vmatprep.subr.bf16.mxu0 0
      %6307 = vmatpush1.bf16.msra.mxu0 0
      %6308 = vmatprep.subr.bf16.mxu0 0
      %6309 = vmatpush1.bf16.msra.mxu0 0
      %6310 = vmatprep.subr.bf16.mxu0 0
      %6311 = vmatpush1.bf16.msra.mxu0 0
      %6312 = vmatprep.subr.bf16.mxu0 0
      %6313 = vmatpush1.bf16.msra.mxu0 0
      %6314 = vmatprep.subr.bf16.mxu0 0
      %6315 = vmatpush1.bf16.msra.mxu0 0
      %6316 = vmatprep.subr.bf16.mxu0 0
      %6317 = vmatpush1.bf16.msra.mxu0 0
      %6318 = vmatprep.subr.bf16.mxu0 0
      %6319 = vmatpush1.bf16.msra.mxu0 0
      %6320 = vmatprep.subr.bf16.mxu0 0
      %6321 = vmatpush1.bf16.msra.mxu0 0
      %6322 = vmatprep.subr.bf16.mxu0 0
      %6323 = vmatpush1.bf16.msra.mxu0 0
      %6324 = vmatprep.mubr.bf16.mxu0 0
      %6325 = vmatmul.mubr.bf16.gmra.mrb[0].mxu0 %v6290
      %v6326 = vpop.f32.mrb[0].mxu0
      %v6327 = vadd.f32 0.0, %v6326
      %v6328 = vpop.f32.mrb[0].mxu0
      %v6329 = vadd.f32 0.0, %v6328
      %v6330 = vpop.f32.mrb[0].mxu0
      %v6331 = vpop.f32.mrb[0].mxu0
      %6332 = vdwg.mxu0
      %v6333 = vpack.c.bf16 %v6327, %v6327
      %v6334 = vpack.c.bf16 %v6329, %v6329
      %v6335 = vld [vmem:[%s20] sm:$0xf]
      %v6336 = vld [vmem:[%s20 + $0x4] sm:$0xf]
      %v6337 = vld [vmem:[%s20 + $0x8] sm:$0xf]
      %v6338 = vld [vmem:[%s20 + $0xc] sm:$0xf]
      %v6339 = vld [vmem:[%s20 + $0x10] sm:$0xf]
      %v6340 = vld [vmem:[%s20 + $0x14] sm:$0xf]
      %v6341 = vld [vmem:[%s20 + $0x18] sm:$0xf]
      %v6342 = vld [vmem:[%s20 + $0x1c] sm:$0xf]
      %v6343 = vld [vmem:[%s20 + $0x20] sm:$0xf]
      %v6344 = vld [vmem:[%s20 + $0x24] sm:$0xf]
      %v6345 = vld [vmem:[%s20 + $0x28] sm:$0xf]
      %v6346 = vld [vmem:[%s20 + $0x2c] sm:$0xf]
      %v6347 = vld [vmem:[%s20 + $0x30] sm:$0xf]
      %v6348 = vld [vmem:[%s20 + $0x34] sm:$0xf]
      %v6349 = vld [vmem:[%s20 + $0x38] sm:$0xf]
      %v6350 = vld [vmem:[%s20 + $0x3c] sm:$0xf]
      %v6351 = vld [vmem:[%s20 + $0x40] sm:$0xf]
      %v6352 = vld [vmem:[%s20 + $0x44] sm:$0xf]
      %v6353 = vld [vmem:[%s20 + $0x48] sm:$0xf]
      %v6354 = vld [vmem:[%s20 + $0x4c] sm:$0xf]
      %v6355 = vld [vmem:[%s20 + $0x50] sm:$0xf]
      %v6356 = vld [vmem:[%s20 + $0x54] sm:$0xf]
      %v6357 = vld [vmem:[%s20 + $0x58] sm:$0xf]
      %v6358 = vld [vmem:[%s20 + $0x5c] sm:$0xf]
      %v6359 = vld [vmem:[%s20 + $0x60] sm:$0xf]
      %v6360 = vld [vmem:[%s20 + $0x64] sm:$0xf]
      %v6361 = vld [vmem:[%s20 + $0x68] sm:$0xf]
      %v6362 = vld [vmem:[%s20 + $0x6c] sm:$0xf]
      %v6363 = vld [vmem:[%s20 + $0x70] sm:$0xf]
      %v6364 = vld [vmem:[%s20 + $0x74] sm:$0xf]
      %v6365 = vld [vmem:[%s20 + $0x78] sm:$0xf]
      %v6366 = vld [vmem:[%s20 + $0x7c] sm:$0xf]
      %s6367 = scalar_lea.vmem %s19, 4
      %v6368 = vld [vmem:[%s6367] sm:$0xf]
      %v6370 = vsel %vm2716, %v6368, 0
      %6372 = vmatprep.subr.bf16.mxu0 %v6287
      %6373 = vmatpush1.bf16.msra.mxu0 %v6286
      %6374 = vmatprep.subr.bf16.mxu0 0
      %6375 = vmatpush1.bf16.msra.mxu0 0
      %6376 = vmatprep.subr.bf16.mxu0 0
      %6377 = vmatpush1.bf16.msra.mxu0 0
      %6378 = vmatprep.subr.bf16.mxu0 0
      %6379 = vmatpush1.bf16.msra.mxu0 0
      %6380 = vmatprep.subr.bf16.mxu0 0
      %6381 = vmatpush1.bf16.msra.mxu0 0
      %6382 = vmatprep.subr.bf16.mxu0 0
      %6383 = vmatpush1.bf16.msra.mxu0 0
      %6384 = vmatprep.subr.bf16.mxu0 0
      %6385 = vmatpush1.bf16.msra.mxu0 0
      %6386 = vmatprep.subr.bf16.mxu0 0
      %6387 = vmatpush1.bf16.msra.mxu0 0
      %6388 = vmatprep.subr.bf16.mxu0 0
      %6389 = vmatpush1.bf16.msra.mxu0 0
      %6390 = vmatprep.subr.bf16.mxu0 0
      %6391 = vmatpush1.bf16.msra.mxu0 0
      %6392 = vmatprep.subr.bf16.mxu0 0
      %6393 = vmatpush1.bf16.msra.mxu0 0
      %6394 = vmatprep.subr.bf16.mxu0 0
      %6395 = vmatpush1.bf16.msra.mxu0 0
      %6396 = vmatprep.subr.bf16.mxu0 0
      %6397 = vmatpush1.bf16.msra.mxu0 0
      %6398 = vmatprep.subr.bf16.mxu0 0
      %6399 = vmatpush1.bf16.msra.mxu0 0
      %6400 = vmatprep.subr.bf16.mxu0 0
      %6401 = vmatpush1.bf16.msra.mxu0 0
      %6402 = vmatprep.subr.bf16.mxu0 0
      %6403 = vmatpush1.bf16.msra.mxu0 0
      %6404 = vmatprep.mubr.bf16.mxu0 0
      %6405 = vmatmul.mubr.bf16.gmra.mrb[0].mxu0 %v6370
      %v6406 = vpop.f32.mrb[0].mxu0
      %v6407 = vadd.f32 0.0, %v6406
      %v6408 = vpop.f32.mrb[0].mxu0
      %v6409 = vadd.f32 0.0, %v6408
      %v6410 = vpop.f32.mrb[0].mxu0
      %v6411 = vpop.f32.mrb[0].mxu0
      %6412 = vdwg.mxu0
      %v6413 = vpack.c.bf16 %v6407, %v6407
      %v6414 = vpack.c.bf16 %v6409, %v6409
      %s6415 = scalar_lea.vmem %s20, 128
      %v6416 = vld [vmem:[%s6415] sm:$0xf]
      %v6417 = vld [vmem:[%s6415 + $0x4] sm:$0xf]
      %v6418 = vld [vmem:[%s6415 + $0x8] sm:$0xf]
      %v6419 = vld [vmem:[%s6415 + $0xc] sm:$0xf]
      %v6420 = vld [vmem:[%s6415 + $0x10] sm:$0xf]
      %v6421 = vld [vmem:[%s6415 + $0x14] sm:$0xf]
      %v6422 = vld [vmem:[%s6415 + $0x18] sm:$0xf]
      %v6423 = vld [vmem:[%s6415 + $0x1c] sm:$0xf]
      %v6424 = vld [vmem:[%s6415 + $0x20] sm:$0xf]
      %v6425 = vld [vmem:[%s6415 + $0x24] sm:$0xf]
      %v6426 = vld [vmem:[%s6415 + $0x28] sm:$0xf]
      %v6427 = vld [vmem:[%s6415 + $0x2c] sm:$0xf]
      %v6428 = vld [vmem:[%s6415 + $0x30] sm:$0xf]
      %v6429 = vld [vmem:[%s6415 + $0x34] sm:$0xf]
      %v6430 = vld [vmem:[%s6415 + $0x38] sm:$0xf]
      %v6431 = vld [vmem:[%s6415 + $0x3c] sm:$0xf]
      %v6432 = vld [vmem:[%s6415 + $0x40] sm:$0xf]
      %v6433 = vld [vmem:[%s6415 + $0x44] sm:$0xf]
      %v6434 = vld [vmem:[%s6415 + $0x48] sm:$0xf]
      %v6435 = vld [vmem:[%s6415 + $0x4c] sm:$0xf]
      %v6436 = vld [vmem:[%s6415 + $0x50] sm:$0xf]
      %v6437 = vld [vmem:[%s6415 + $0x54] sm:$0xf]
      %v6438 = vld [vmem:[%s6415 + $0x58] sm:$0xf]
      %v6439 = vld [vmem:[%s6415 + $0x5c] sm:$0xf]
      %v6440 = vld [vmem:[%s6415 + $0x60] sm:$0xf]
      %v6441 = vld [vmem:[%s6415 + $0x64] sm:$0xf]
      %v6442 = vld [vmem:[%s6415 + $0x68] sm:$0xf]
      %v6443 = vld [vmem:[%s6415 + $0x6c] sm:$0xf]
      %v6444 = vld [vmem:[%s6415 + $0x70] sm:$0xf]
      %v6445 = vld [vmem:[%s6415 + $0x74] sm:$0xf]
      %v6446 = vld [vmem:[%s6415 + $0x78] sm:$0xf]
      %v6447 = vld [vmem:[%s6415 + $0x7c] sm:$0xf]
      %v6480 = vunpack.c.l.b16 %v6416
      %v6481 = vunpack.c.l.b16 %v6417
      %v6482 = vunpack.c.l.b16 %v6418
      %v6483 = vunpack.c.l.b16 %v6419
      %v6484 = vunpack.c.l.b16 %v6420
      %v6485 = vunpack.c.l.b16 %v6421
      %v6486 = vunpack.c.l.b16 %v6422
      %v6487 = vunpack.c.l.b16 %v6423
      %v6488 = vunpack.c.l.b16 %v6424
      %v6489 = vunpack.c.l.b16 %v6425
      %v6490 = vunpack.c.l.b16 %v6426
      %v6491 = vunpack.c.l.b16 %v6427
      %v6492 = vunpack.c.l.b16 %v6428
      %v6493 = vunpack.c.l.b16 %v6429
      %v6494 = vunpack.c.l.b16 %v6430
      %v6495 = vunpack.c.l.b16 %v6431
      %v6496 = vunpack.c.l.b16 %v6432
      %v6497 = vunpack.c.l.b16 %v6433
      %v6498 = vunpack.c.l.b16 %v6434
      %v6499 = vunpack.c.l.b16 %v6435
      %v6500 = vunpack.c.l.b16 %v6436
      %v6501 = vunpack.c.l.b16 %v6437
      %v6502 = vunpack.c.l.b16 %v6438
      %v6503 = vunpack.c.l.b16 %v6439
      %v6504 = vunpack.c.l.b16 %v6440
      %v6505 = vunpack.c.l.b16 %v6441
      %v6506 = vunpack.c.l.b16 %v6442
      %v6507 = vunpack.c.l.b16 %v6443
      %v6508 = vunpack.c.l.b16 %v6444
      %v6509 = vunpack.c.l.b16 %v6445
      %v6510 = vunpack.c.l.b16 %v6446
      %v6511 = vunpack.c.l.b16 %v6447
      %v6512 = vpack.c.b16 %v6481, %v6480
      %v6513 = vpack.c.b16 %v6483, %v6482
      %v6514 = vpack.c.b16 %v6485, %v6484
      %v6515 = vpack.c.b16 %v6487, %v6486
      %v6516 = vpack.c.b16 %v6489, %v6488
      %v6517 = vpack.c.b16 %v6491, %v6490
      %v6518 = vpack.c.b16 %v6493, %v6492
      %v6519 = vpack.c.b16 %v6495, %v6494
      %v6520 = vpack.c.b16 %v6497, %v6496
      %v6521 = vpack.c.b16 %v6499, %v6498
      %v6522 = vpack.c.b16 %v6501, %v6500
      %v6523 = vpack.c.b16 %v6503, %v6502
      %v6524 = vpack.c.b16 %v6505, %v6504
      %v6525 = vpack.c.b16 %v6507, %v6506
      %v6526 = vpack.c.b16 %v6509, %v6508
      %v6527 = vpack.c.b16 %v6511, %v6510
      %6544 = vmatprep.subr.bf16.mxu0 0
      %6545 = vmatpush1.bf16.msra.mxu0 %v6512
      %6546 = vmatprep.subr.bf16.mxu0 0
      %6547 = vmatpush1.bf16.msra.mxu0 %v6513
      %6548 = vmatprep.subr.bf16.mxu0 0
      %6549 = vmatpush1.bf16.msra.mxu0 %v6514
      %6550 = vmatprep.subr.bf16.mxu0 0
      %6551 = vmatpush1.bf16.msra.mxu0 %v6515
      %6552 = vmatprep.subr.bf16.mxu0 0
      %6553 = vmatpush1.bf16.msra.mxu0 %v6516
      %6554 = vmatprep.subr.bf16.mxu0 0
      %6555 = vmatpush1.bf16.msra.mxu0 %v6517
      %6556 = vmatprep.subr.bf16.mxu0 0
      %6557 = vmatpush1.bf16.msra.mxu0 %v6518
      %6558 = vmatprep.subr.bf16.mxu0 0
      %6559 = vmatpush1.bf16.msra.mxu0 %v6519
      %6560 = vmatprep.subr.bf16.mxu0 0
      %6561 = vmatpush1.bf16.msra.mxu0 %v6520
      %6562 = vmatprep.subr.bf16.mxu0 0
      %6563 = vmatpush1.bf16.msra.mxu0 %v6521
      %6564 = vmatprep.subr.bf16.mxu0 0
      %6565 = vmatpush1.bf16.msra.mxu0 %v6522
      %6566 = vmatprep.subr.bf16.mxu0 0
      %6567 = vmatpush1.bf16.msra.mxu0 %v6523
      %6568 = vmatprep.subr.bf16.mxu0 0
      %6569 = vmatpush1.bf16.msra.mxu0 %v6524
      %6570 = vmatprep.subr.bf16.mxu0 0
      %6571 = vmatpush1.bf16.msra.mxu0 %v6525
      %6572 = vmatprep.subr.bf16.mxu0 0
      %6573 = vmatpush1.bf16.msra.mxu0 %v6526
      %6574 = vmatprep.subr.bf16.mxu0 0
      %6575 = vmatpush1.bf16.msra.mxu0 %v6527
      %6576 = vmatprep.mubr.bf16.mxu0 %v6414
      %6577 = vmatmul.mubr.bf16.gmra.mrb[0].mxu0 %v6413
      %v6578 = vpop.f32.mrb[0].mxu0
      %v6579 = vadd.f32 0.0, %v6578
      %v6580 = vpop.f32.mrb[0].mxu0
      %v6581 = vpop.f32.mrb[0].mxu0
      %v6582 = vpop.f32.mrb[0].mxu0
      %6583 = vdwg.mxu0
      %v6616 = vunpack.c.l.b16 %v6335
      %v6617 = vunpack.c.l.b16 %v6336
      %v6618 = vunpack.c.l.b16 %v6337
      %v6619 = vunpack.c.l.b16 %v6338
      %v6620 = vunpack.c.l.b16 %v6339
      %v6621 = vunpack.c.l.b16 %v6340
      %v6622 = vunpack.c.l.b16 %v6341
      %v6623 = vunpack.c.l.b16 %v6342
      %v6624 = vunpack.c.l.b16 %v6343
      %v6625 = vunpack.c.l.b16 %v6344
      %v6626 = vunpack.c.l.b16 %v6345
      %v6627 = vunpack.c.l.b16 %v6346
      %v6628 = vunpack.c.l.b16 %v6347
      %v6629 = vunpack.c.l.b16 %v6348
      %v6630 = vunpack.c.l.b16 %v6349
      %v6631 = vunpack.c.l.b16 %v6350
      %v6632 = vunpack.c.l.b16 %v6351
      %v6633 = vunpack.c.l.b16 %v6352
      %v6634 = vunpack.c.l.b16 %v6353
      %v6635 = vunpack.c.l.b16 %v6354
      %v6636 = vunpack.c.l.b16 %v6355
      %v6637 = vunpack.c.l.b16 %v6356
      %v6638 = vunpack.c.l.b16 %v6357
      %v6639 = vunpack.c.l.b16 %v6358
      %v6640 = vunpack.c.l.b16 %v6359
      %v6641 = vunpack.c.l.b16 %v6360
      %v6642 = vunpack.c.l.b16 %v6361
      %v6643 = vunpack.c.l.b16 %v6362
      %v6644 = vunpack.c.l.b16 %v6363
      %v6645 = vunpack.c.l.b16 %v6364
      %v6646 = vunpack.c.l.b16 %v6365
      %v6647 = vunpack.c.l.b16 %v6366
      %v6648 = vpack.c.b16 %v6617, %v6616
      %v6649 = vpack.c.b16 %v6619, %v6618
      %v6650 = vpack.c.b16 %v6621, %v6620
      %v6651 = vpack.c.b16 %v6623, %v6622
      %v6652 = vpack.c.b16 %v6625, %v6624
      %v6653 = vpack.c.b16 %v6627, %v6626
      %v6654 = vpack.c.b16 %v6629, %v6628
      %v6655 = vpack.c.b16 %v6631, %v6630
      %v6656 = vpack.c.b16 %v6633, %v6632
      %v6657 = vpack.c.b16 %v6635, %v6634
      %v6658 = vpack.c.b16 %v6637, %v6636
      %v6659 = vpack.c.b16 %v6639, %v6638
      %v6660 = vpack.c.b16 %v6641, %v6640
      %v6661 = vpack.c.b16 %v6643, %v6642
      %v6662 = vpack.c.b16 %v6645, %v6644
      %v6663 = vpack.c.b16 %v6647, %v6646
      %6680 = vmatprep.subr.bf16.mxu0 0
      %6681 = vmatpush1.bf16.msra.mxu0 %v6648
      %6682 = vmatprep.subr.bf16.mxu0 0
      %6683 = vmatpush1.bf16.msra.mxu0 %v6649
      %6684 = vmatprep.subr.bf16.mxu0 0
      %6685 = vmatpush1.bf16.msra.mxu0 %v6650
      %6686 = vmatprep.subr.bf16.mxu0 0
      %6687 = vmatpush1.bf16.msra.mxu0 %v6651
      %6688 = vmatprep.subr.bf16.mxu0 0
      %6689 = vmatpush1.bf16.msra.mxu0 %v6652
      %6690 = vmatprep.subr.bf16.mxu0 0
      %6691 = vmatpush1.bf16.msra.mxu0 %v6653
      %6692 = vmatprep.subr.bf16.mxu0 0
      %6693 = vmatpush1.bf16.msra.mxu0 %v6654
      %6694 = vmatprep.subr.bf16.mxu0 0
      %6695 = vmatpush1.bf16.msra.mxu0 %v6655
      %6696 = vmatprep.subr.bf16.mxu0 0
      %6697 = vmatpush1.bf16.msra.mxu0 %v6656
      %6698 = vmatprep.subr.bf16.mxu0 0
      %6699 = vmatpush1.bf16.msra.mxu0 %v6657
      %6700 = vmatprep.subr.bf16.mxu0 0
      %6701 = vmatpush1.bf16.msra.mxu0 %v6658
      %6702 = vmatprep.subr.bf16.mxu0 0
      %6703 = vmatpush1.bf16.msra.mxu0 %v6659
      %6704 = vmatprep.subr.bf16.mxu0 0
      %6705 = vmatpush1.bf16.msra.mxu0 %v6660
      %6706 = vmatprep.subr.bf16.mxu0 0
      %6707 = vmatpush1.bf16.msra.mxu0 %v6661
      %6708 = vmatprep.subr.bf16.mxu0 0
      %6709 = vmatpush1.bf16.msra.mxu0 %v6662
      %6710 = vmatprep.subr.bf16.mxu0 0
      %6711 = vmatpush1.bf16.msra.mxu0 %v6663
      %6712 = vmatprep.mubr.bf16.mxu0 %v6334
      %6713 = vmatmul.mubr.bf16.gmra.mrb[0].mxu0 %v6333
      %v6714 = vpop.f32.mrb[0].mxu0
      %v6715 = vadd.f32 %v6579, %v6714
      %v6716 = vpop.f32.mrb[0].mxu0
      %v6717 = vpop.f32.mrb[0].mxu0
      %v6718 = vpop.f32.mrb[0].mxu0
      %6719 = vdwg.mxu0
      %s6720 = scalar_lea.vmem %s19, 8
      %v6721 = vld [vmem:[%s6720] sm:$0xf]
      %v6723 = vsel %vm2716, %v6721, 0
      %6725 = vmatprep.subr.bf16.mxu0 %v6287
      %6726 = vmatpush1.bf16.msra.mxu0 %v6286
      %6727 = vmatprep.subr.bf16.mxu0 0
      %6728 = vmatpush1.bf16.msra.mxu0 0
      %6729 = vmatprep.subr.bf16.mxu0 0
      %6730 = vmatpush1.bf16.msra.mxu0 0
      %6731 = vmatprep.subr.bf16.mxu0 0
      %6732 = vmatpush1.bf16.msra.mxu0 0
      %6733 = vmatprep.subr.bf16.mxu0 0
      %6734 = vmatpush1.bf16.msra.mxu0 0
      %6735 = vmatprep.subr.bf16.mxu0 0
      %6736 = vmatpush1.bf16.msra.mxu0 0
      %6737 = vmatprep.subr.bf16.mxu0 0
      %6738 = vmatpush1.bf16.msra.mxu0 0
      %6739 = vmatprep.subr.bf16.mxu0 0
      %6740 = vmatpush1.bf16.msra.mxu0 0
      %6741 = vmatprep.subr.bf16.mxu0 0
      %6742 = vmatpush1.bf16.msra.mxu0 0
      %6743 = vmatprep.subr.bf16.mxu0 0
      %6744 = vmatpush1.bf16.msra.mxu0 0
      %6745 = vmatprep.subr.bf16.mxu0 0
      %6746 = vmatpush1.bf16.msra.mxu0 0
      %6747 = vmatprep.subr.bf16.mxu0 0
      %6748 = vmatpush1.bf16.msra.mxu0 0
      %6749 = vmatprep.subr.bf16.mxu0 0
      %6750 = vmatpush1.bf16.msra.mxu0 0
      %6751 = vmatprep.subr.bf16.mxu0 0
      %6752 = vmatpush1.bf16.msra.mxu0 0
      %6753 = vmatprep.subr.bf16.mxu0 0
      %6754 = vmatpush1.bf16.msra.mxu0 0
      %6755 = vmatprep.subr.bf16.mxu0 0
      %6756 = vmatpush1.bf16.msra.mxu0 0
      %6757 = vmatprep.mubr.bf16.mxu0 0
      %6758 = vmatmul.mubr.bf16.gmra.mrb[0].mxu0 %v6723
      %v6759 = vpop.f32.mrb[0].mxu0
      %v6760 = vadd.f32 0.0, %v6759
      %v6761 = vpop.f32.mrb[0].mxu0
      %v6762 = vadd.f32 0.0, %v6761
      %v6763 = vpop.f32.mrb[0].mxu0
      %v6764 = vpop.f32.mrb[0].mxu0
      %6765 = vdwg.mxu0
      %v6766 = vpack.c.bf16 %v6760, %v6760
      %v6767 = vpack.c.bf16 %v6762, %v6762
      %s6768 = scalar_lea.vmem %s20, 256
      %v6769 = vld [vmem:[%s6768] sm:$0xf]
      %v6770 = vld [vmem:[%s6768 + $0x4] sm:$0xf]
      %v6771 = vld [vmem:[%s6768 + $0x8] sm:$0xf]
      %v6772 = vld [vmem:[%s6768 + $0xc] sm:$0xf]
      %v6773 = vld [vmem:[%s6768 + $0x10] sm:$0xf]
      %v6774 = vld [vmem:[%s6768 + $0x14] sm:$0xf]
      %v6775 = vld [vmem:[%s6768 + $0x18] sm:$0xf]
      %v6776 = vld [vmem:[%s6768 + $0x1c] sm:$0xf]
      %v6777 = vld [vmem:[%s6768 + $0x20] sm:$0xf]
      %v6778 = vld [vmem:[%s6768 + $0x24] sm:$0xf]
      %v6779 = vld [vmem:[%s6768 + $0x28] sm:$0xf]
      %v6780 = vld [vmem:[%s6768 + $0x2c] sm:$0xf]
      %v6781 = vld [vmem:[%s6768 + $0x30] sm:$0xf]
      %v6782 = vld [vmem:[%s6768 + $0x34] sm:$0xf]
      %v6783 = vld [vmem:[%s6768 + $0x38] sm:$0xf]
      %v6784 = vld [vmem:[%s6768 + $0x3c] sm:$0xf]
      %v6785 = vld [vmem:[%s6768 + $0x40] sm:$0xf]
      %v6786 = vld [vmem:[%s6768 + $0x44] sm:$0xf]
      %v6787 = vld [vmem:[%s6768 + $0x48] sm:$0xf]
      %v6788 = vld [vmem:[%s6768 + $0x4c] sm:$0xf]
      %v6789 = vld [vmem:[%s6768 + $0x50] sm:$0xf]
      %v6790 = vld [vmem:[%s6768 + $0x54] sm:$0xf]
      %v6791 = vld [vmem:[%s6768 + $0x58] sm:$0xf]
      %v6792 = vld [vmem:[%s6768 + $0x5c] sm:$0xf]
      %v6793 = vld [vmem:[%s6768 + $0x60] sm:$0xf]
      %v6794 = vld [vmem:[%s6768 + $0x64] sm:$0xf]
      %v6795 = vld [vmem:[%s6768 + $0x68] sm:$0xf]
      %v6796 = vld [vmem:[%s6768 + $0x6c] sm:$0xf]
      %v6797 = vld [vmem:[%s6768 + $0x70] sm:$0xf]
      %v6798 = vld [vmem:[%s6768 + $0x74] sm:$0xf]
      %v6799 = vld [vmem:[%s6768 + $0x78] sm:$0xf]
      %v6800 = vld [vmem:[%s6768 + $0x7c] sm:$0xf]
      %v6833 = vunpack.c.l.b16 %v6769
      %v6834 = vunpack.c.l.b16 %v6770
      %v6835 = vunpack.c.l.b16 %v6771
      %v6836 = vunpack.c.l.b16 %v6772
      %v6837 = vunpack.c.l.b16 %v6773
      %v6838 = vunpack.c.l.b16 %v6774
      %v6839 = vunpack.c.l.b16 %v6775
      %v6840 = vunpack.c.l.b16 %v6776
      %v6841 = vunpack.c.l.b16 %v6777
      %v6842 = vunpack.c.l.b16 %v6778
      %v6843 = vunpack.c.l.b16 %v6779
      %v6844 = vunpack.c.l.b16 %v6780
      %v6845 = vunpack.c.l.b16 %v6781
      %v6846 = vunpack.c.l.b16 %v6782
      %v6847 = vunpack.c.l.b16 %v6783
      %v6848 = vunpack.c.l.b16 %v6784
      %v6849 = vunpack.c.l.b16 %v6785
      %v6850 = vunpack.c.l.b16 %v6786
      %v6851 = vunpack.c.l.b16 %v6787
      %v6852 = vunpack.c.l.b16 %v6788
      %v6853 = vunpack.c.l.b16 %v6789
      %v6854 = vunpack.c.l.b16 %v6790
      %v6855 = vunpack.c.l.b16 %v6791
      %v6856 = vunpack.c.l.b16 %v6792
      %v6857 = vunpack.c.l.b16 %v6793
      %v6858 = vunpack.c.l.b16 %v6794
      %v6859 = vunpack.c.l.b16 %v6795
      %v6860 = vunpack.c.l.b16 %v6796
      %v6861 = vunpack.c.l.b16 %v6797
      %v6862 = vunpack.c.l.b16 %v6798
      %v6863 = vunpack.c.l.b16 %v6799
      %v6864 = vunpack.c.l.b16 %v6800
      %v6865 = vpack.c.b16 %v6834, %v6833
      %v6866 = vpack.c.b16 %v6836, %v6835
      %v6867 = vpack.c.b16 %v6838, %v6837
      %v6868 = vpack.c.b16 %v6840, %v6839
      %v6869 = vpack.c.b16 %v6842, %v6841
      %v6870 = vpack.c.b16 %v6844, %v6843
      %v6871 = vpack.c.b16 %v6846, %v6845
      %v6872 = vpack.c.b16 %v6848, %v6847
      %v6873 = vpack.c.b16 %v6850, %v6849
      %v6874 = vpack.c.b16 %v6852, %v6851
      %v6875 = vpack.c.b16 %v6854, %v6853
      %v6876 = vpack.c.b16 %v6856, %v6855
      %v6877 = vpack.c.b16 %v6858, %v6857
      %v6878 = vpack.c.b16 %v6860, %v6859
      %v6879 = vpack.c.b16 %v6862, %v6861
      %v6880 = vpack.c.b16 %v6864, %v6863
      %6897 = vmatprep.subr.bf16.mxu0 0
      %6898 = vmatpush1.bf16.msra.mxu0 %v6865
      %6899 = vmatprep.subr.bf16.mxu0 0
      %6900 = vmatpush1.bf16.msra.mxu0 %v6866
      %6901 = vmatprep.subr.bf16.mxu0 0
      %6902 = vmatpush1.bf16.msra.mxu0 %v6867
      %6903 = vmatprep.subr.bf16.mxu0 0
      %6904 = vmatpush1.bf16.msra.mxu0 %v6868
      %6905 = vmatprep.subr.bf16.mxu0 0
      %6906 = vmatpush1.bf16.msra.mxu0 %v6869
      %6907 = vmatprep.subr.bf16.mxu0 0
      %6908 = vmatpush1.bf16.msra.mxu0 %v6870
      %6909 = vmatprep.subr.bf16.mxu0 0
      %6910 = vmatpush1.bf16.msra.mxu0 %v6871
      %6911 = vmatprep.subr.bf16.mxu0 0
      %6912 = vmatpush1.bf16.msra.mxu0 %v6872
      %6913 = vmatprep.subr.bf16.mxu0 0
      %6914 = vmatpush1.bf16.msra.mxu0 %v6873
      %6915 = vmatprep.subr.bf16.mxu0 0
      %6916 = vmatpush1.bf16.msra.mxu0 %v6874
      %6917 = vmatprep.subr.bf16.mxu0 0
      %6918 = vmatpush1.bf16.msra.mxu0 %v6875
      %6919 = vmatprep.subr.bf16.mxu0 0
      %6920 = vmatpush1.bf16.msra.mxu0 %v6876
      %6921 = vmatprep.subr.bf16.mxu0 0
      %6922 = vmatpush1.bf16.msra.mxu0 %v6877
      %6923 = vmatprep.subr.bf16.mxu0 0
      %6924 = vmatpush1.bf16.msra.mxu0 %v6878
      %6925 = vmatprep.subr.bf16.mxu0 0
      %6926 = vmatpush1.bf16.msra.mxu0 %v6879
      %6927 = vmatprep.subr.bf16.mxu0 0
      %6928 = vmatpush1.bf16.msra.mxu0 %v6880
      %6929 = vmatprep.mubr.bf16.mxu0 %v6767
      %6930 = vmatmul.mubr.bf16.gmra.mrb[0].mxu0 %v6766
      %v6931 = vpop.f32.mrb[0].mxu0
      %v6932 = vadd.f32 0.0, %v6931
      %v6933 = vpop.f32.mrb[0].mxu0
      %v6934 = vpop.f32.mrb[0].mxu0
      %v6935 = vpop.f32.mrb[0].mxu0
      %6936 = vdwg.mxu0
      %v6937 = vadd.f32 %v6715, %v6932
      %v6938 = vld [vmem:[%s21] sm:$0x1]
      %v6940 = vlaneseq
      %v6941 = vshrl.u32 %v6940, 7
      %v6942 = vsub.s32 0, %v6941
      %v6943 = vrot.slane %v6938, %v6942
      %v6945 = vadd.f32 %v6937, %v6943
      %v6946 = vpack.c.bf16 %v6945, %v6945
      %v6947 = vld [vmem:[%s22] sm:$0x3]
      %vm6948 = vcmask 64512
      %v6950 = vsel %vm6948, %v6947, 0
      %vm6952 = vcmask 1043456
      %v6954 = vsel %vm6952, %v3578, 0
      %v6957 = vsel %vm6952, %v3579, 0
      %6959 = vmatprep.subr.bf16.mxu0 %v6957
      %6960 = vmatpush1.bf16.msra.mxu0 %v6954
      %6961 = vmatprep.subr.bf16.mxu0 0
      %6962 = vmatpush1.bf16.msra.mxu0 0
      %6963 = vmatprep.subr.bf16.mxu0 0
      %6964 = vmatpush1.bf16.msra.mxu0 0
      %6965 = vmatprep.subr.bf16.mxu0 0
      %6966 = vmatpush1.bf16.msra.mxu0 0
      %6967 = vmatprep.subr.bf16.mxu0 0
      %6968 = vmatpush1.bf16.msra.mxu0 0
      %6969 = vmatprep.subr.bf16.mxu0 0
      %6970 = vmatpush1.bf16.msra.mxu0 0
      %6971 = vmatprep.subr.bf16.mxu0 0
      %6972 = vmatpush1.bf16.msra.mxu0 0
      %6973 = vmatprep.subr.bf16.mxu0 0
      %6974 = vmatpush1.bf16.msra.mxu0 0
      %6975 = vmatprep.subr.bf16.mxu0 0
      %6976 = vmatpush1.bf16.msra.mxu0 0
      %6977 = vmatprep.subr.bf16.mxu0 0
      %6978 = vmatpush1.bf16.msra.mxu0 0
      %6979 = vmatprep.subr.bf16.mxu0 0
      %6980 = vmatpush1.bf16.msra.mxu0 0
      %6981 = vmatprep.subr.bf16.mxu0 0
      %6982 = vmatpush1.bf16.msra.mxu0 0
      %6983 = vmatprep.subr.bf16.mxu0 0
      %6984 = vmatpush1.bf16.msra.mxu0 0
      %6985 = vmatprep.subr.bf16.mxu0 0
      %6986 = vmatpush1.bf16.msra.mxu0 0
      %6987 = vmatprep.subr.bf16.mxu0 0
      %6988 = vmatpush1.bf16.msra.mxu0 0
      %6989 = vmatprep.subr.bf16.mxu0 0
      %6990 = vmatpush1.bf16.msra.mxu0 0
      %6991 = vmatprep.mubr.bf16.mxu0 0
      %6992 = vmatmul.mubr.bf16.gmra.mrb[0].mxu0 %v6950
      %v6993 = vpop.f32.mrb[0].mxu0
      %v6994 = vadd.f32 0.0, %v6993
      %v6995 = vpop.f32.mrb[0].mxu0
      %v6996 = vadd.f32 0.0, %v6995
      %v6997 = vpop.f32.mrb[0].mxu0
      %v6998 = vpop.f32.mrb[0].mxu0
      %6999 = vdwg.mxu0
      %v7001 = vsel %vm6952, %v6946, 0
      %7003 = vmatprep.subr.bf16.mxu0 0
      %7004 = vmatpush1.bf16.msra.mxu0 %v7001
      %7005 = vmatprep.subr.bf16.mxu0 0
      %7006 = vmatpush1.bf16.msra.mxu0 0
      %7007 = vmatprep.subr.bf16.mxu0 0
      %7008 = vmatpush1.bf16.msra.mxu0 0
      %7009 = vmatprep.subr.bf16.mxu0 0
      %7010 = vmatpush1.bf16.msra.mxu0 0
      %7011 = vmatprep.subr.bf16.mxu0 0
      %7012 = vmatpush1.bf16.msra.mxu0 0
      %7013 = vmatprep.subr.bf16.mxu0 0
      %7014 = vmatpush1.bf16.msra.mxu0 0
      %7015 = vmatprep.subr.bf16.mxu0 0
      %7016 = vmatpush1.bf16.msra.mxu0 0
      %7017 = vmatprep.subr.bf16.mxu0 0
      %7018 = vmatpush1.bf16.msra.mxu0 0
      %7019 = vmatprep.subr.bf16.mxu0 0
      %7020 = vmatpush1.bf16.msra.mxu0 0
      %7021 = vmatprep.subr.bf16.mxu0 0
      %7022 = vmatpush1.bf16.msra.mxu0 0
      %7023 = vmatprep.subr.bf16.mxu0 0
      %7024 = vmatpush1.bf16.msra.mxu0 0
      %7025 = vmatprep.subr.bf16.mxu0 0
      %7026 = vmatpush1.bf16.msra.mxu0 0
      %7027 = vmatprep.subr.bf16.mxu0 0
      %7028 = vmatpush1.bf16.msra.mxu0 0
      %7029 = vmatprep.subr.bf16.mxu0 0
      %7030 = vmatpush1.bf16.msra.mxu0 0
      %7031 = vmatprep.subr.bf16.mxu0 0
      %7032 = vmatpush1.bf16.msra.mxu0 0
      %7033 = vmatprep.subr.bf16.mxu0 0
      %7034 = vmatpush1.bf16.msra.mxu0 0
      %7035 = vmatprep.mubr.bf16.mxu0 0
      %7036 = vmatmul.mubr.bf16.gmra.mrb[0].mxu0 %v6950
      %v7037 = vpop.f32.mrb[0].mxu0
      %v7038 = vadd.f32 0.0, %v7037
      %v7039 = vpop.f32.mrb[0].mxu0
      %v7040 = vpop.f32.mrb[0].mxu0
      %v7041 = vpop.f32.mrb[0].mxu0
      %7042 = vdwg.mxu0
      %v7043 = vpack.c.bf16 %v6994, %v6994
      %v7044 = vpack.c.bf16 %v6996, %v6996
      %v7045 = vld [vmem:[%s23] sm:$0xf]
      %v7046 = vld [vmem:[%s23 + $0x4] sm:$0xf]
      %v7047 = vld [vmem:[%s23 + $0x8] sm:$0xf]
      %v7048 = vld [vmem:[%s23 + $0xc] sm:$0xf]
      %v7049 = vld [vmem:[%s23 + $0x10] sm:$0xf]
      %v7050 = vld [vmem:[%s23 + $0x14] sm:$0xf]
      %v7051 = vld [vmem:[%s23 + $0x18] sm:$0xf]
      %v7052 = vld [vmem:[%s23 + $0x1c] sm:$0xf]
      %v7053 = vld [vmem:[%s23 + $0x20] sm:$0xf]
      %v7054 = vld [vmem:[%s23 + $0x24] sm:$0xf]
      %v7055 = vld [vmem:[%s23 + $0x28] sm:$0xf]
      %v7056 = vld [vmem:[%s23 + $0x2c] sm:$0xf]
      %v7057 = vld [vmem:[%s23 + $0x30] sm:$0xf]
      %v7058 = vld [vmem:[%s23 + $0x34] sm:$0xf]
      %v7059 = vld [vmem:[%s23 + $0x38] sm:$0xf]
      %v7060 = vld [vmem:[%s23 + $0x3c] sm:$0xf]
      %v7061 = vld [vmem:[%s23 + $0x40] sm:$0xf]
      %v7062 = vld [vmem:[%s23 + $0x44] sm:$0xf]
      %v7063 = vld [vmem:[%s23 + $0x48] sm:$0xf]
      %v7064 = vld [vmem:[%s23 + $0x4c] sm:$0xf]
      %v7065 = vld [vmem:[%s23 + $0x50] sm:$0xf]
      %v7066 = vld [vmem:[%s23 + $0x54] sm:$0xf]
      %v7067 = vld [vmem:[%s23 + $0x58] sm:$0xf]
      %v7068 = vld [vmem:[%s23 + $0x5c] sm:$0xf]
      %v7069 = vld [vmem:[%s23 + $0x60] sm:$0xf]
      %v7070 = vld [vmem:[%s23 + $0x64] sm:$0xf]
      %v7071 = vld [vmem:[%s23 + $0x68] sm:$0xf]
      %v7072 = vld [vmem:[%s23 + $0x6c] sm:$0xf]
      %v7073 = vld [vmem:[%s23 + $0x70] sm:$0xf]
      %v7074 = vld [vmem:[%s23 + $0x74] sm:$0xf]
      %v7075 = vld [vmem:[%s23 + $0x78] sm:$0xf]
      %v7076 = vld [vmem:[%s23 + $0x7c] sm:$0xf]
      %v7077 = vpack.c.bf16 %v7038, %v7038
      %v7078 = vld [vmem:[%s24] sm:$0xf]
      %v7079 = vld [vmem:[%s24 + $0x4] sm:$0xf]
      %v7080 = vld [vmem:[%s24 + $0x8] sm:$0xf]
      %v7081 = vld [vmem:[%s24 + $0xc] sm:$0xf]
      %v7082 = vld [vmem:[%s24 + $0x10] sm:$0xf]
      %v7083 = vld [vmem:[%s24 + $0x14] sm:$0xf]
      %v7084 = vld [vmem:[%s24 + $0x18] sm:$0xf]
      %v7085 = vld [vmem:[%s24 + $0x1c] sm:$0xf]
      %v7086 = vld [vmem:[%s24 + $0x20] sm:$0xf]
      %v7087 = vld [vmem:[%s24 + $0x24] sm:$0xf]
      %v7088 = vld [vmem:[%s24 + $0x28] sm:$0xf]
      %v7089 = vld [vmem:[%s24 + $0x2c] sm:$0xf]
      %v7090 = vld [vmem:[%s24 + $0x30] sm:$0xf]
      %v7091 = vld [vmem:[%s24 + $0x34] sm:$0xf]
      %v7092 = vld [vmem:[%s24 + $0x38] sm:$0xf]
      %v7093 = vld [vmem:[%s24 + $0x3c] sm:$0xf]
      %v7110 = vunpack.c.l.b16 %v7078
      %v7111 = vunpack.c.l.b16 %v7079
      %v7112 = vunpack.c.l.b16 %v7080
      %v7113 = vunpack.c.l.b16 %v7081
      %v7114 = vunpack.c.l.b16 %v7082
      %v7115 = vunpack.c.l.b16 %v7083
      %v7116 = vunpack.c.l.b16 %v7084
      %v7117 = vunpack.c.l.b16 %v7085
      %v7118 = vunpack.c.l.b16 %v7086
      %v7119 = vunpack.c.l.b16 %v7087
      %v7120 = vunpack.c.l.b16 %v7088
      %v7121 = vunpack.c.l.b16 %v7089
      %v7122 = vunpack.c.l.b16 %v7090
      %v7123 = vunpack.c.l.b16 %v7091
      %v7124 = vunpack.c.l.b16 %v7092
      %v7125 = vunpack.c.l.b16 %v7093
      %v7126 = vpack.c.b16 %v7111, %v7110
      %v7127 = vpack.c.b16 %v7113, %v7112
      %v7128 = vpack.c.b16 %v7115, %v7114
      %v7129 = vpack.c.b16 %v7117, %v7116
      %v7130 = vpack.c.b16 %v7119, %v7118
      %v7131 = vpack.c.b16 %v7121, %v7120
      %v7132 = vpack.c.b16 %v7123, %v7122
      %v7133 = vpack.c.b16 %v7125, %v7124
      %7142 = vmatprep.subr.bf16.mxu0 0
      %7143 = vmatpush1.bf16.msra.mxu0 %v7126
      %7144 = vmatprep.subr.bf16.mxu0 0
      %7145 = vmatpush1.bf16.msra.mxu0 %v7127
      %7146 = vmatprep.subr.bf16.mxu0 0
      %7147 = vmatpush1.bf16.msra.mxu0 %v7128
      %7148 = vmatprep.subr.bf16.mxu0 0
      %7149 = vmatpush1.bf16.msra.mxu0 %v7129
      %7150 = vmatprep.subr.bf16.mxu0 0
      %7151 = vmatpush1.bf16.msra.mxu0 %v7130
      %7152 = vmatprep.subr.bf16.mxu0 0
      %7153 = vmatpush1.bf16.msra.mxu0 %v7131
      %7154 = vmatprep.subr.bf16.mxu0 0
      %7155 = vmatpush1.bf16.msra.mxu0 %v7132
      %7156 = vmatprep.subr.bf16.mxu0 0
      %7157 = vmatpush1.bf16.msra.mxu0 %v7133
      %7158 = vmatprep.subr.bf16.mxu0 0
      %7159 = vmatpush1.bf16.msra.mxu0 0
      %7160 = vmatprep.subr.bf16.mxu0 0
      %7161 = vmatpush1.bf16.msra.mxu0 0
      %7162 = vmatprep.subr.bf16.mxu0 0
      %7163 = vmatpush1.bf16.msra.mxu0 0
      %7164 = vmatprep.subr.bf16.mxu0 0
      %7165 = vmatpush1.bf16.msra.mxu0 0
      %7166 = vmatprep.subr.bf16.mxu0 0
      %7167 = vmatpush1.bf16.msra.mxu0 0
      %7168 = vmatprep.subr.bf16.mxu0 0
      %7169 = vmatpush1.bf16.msra.mxu0 0
      %7170 = vmatprep.subr.bf16.mxu0 0
      %7171 = vmatpush1.bf16.msra.mxu0 0
      %7172 = vmatprep.subr.bf16.mxu0 0
      %7173 = vmatpush1.bf16.msra.mxu0 0
      %7174 = vmatprep.mubr.bf16.mxu0 0
      %7175 = vmatmul.mubr.bf16.gmra.mrb[0].mxu0 %v7077
      %v7176 = vpop.f32.mrb[0].mxu0
      %v7177 = vadd.f32 0.0, %v7176
      %v7178 = vpop.f32.mrb[0].mxu0
      %v7179 = vpop.f32.mrb[0].mxu0
      %v7180 = vpop.f32.mrb[0].mxu0
      %7181 = vdwg.mxu0
      %v7214 = vunpack.c.l.b16 %v7045
      %v7215 = vunpack.c.l.b16 %v7046
      %v7216 = vunpack.c.l.b16 %v7047
      %v7217 = vunpack.c.l.b16 %v7048
      %v7218 = vunpack.c.l.b16 %v7049
      %v7219 = vunpack.c.l.b16 %v7050
      %v7220 = vunpack.c.l.b16 %v7051
      %v7221 = vunpack.c.l.b16 %v7052
      %v7222 = vunpack.c.l.b16 %v7053
      %v7223 = vunpack.c.l.b16 %v7054
      %v7224 = vunpack.c.l.b16 %v7055
      %v7225 = vunpack.c.l.b16 %v7056
      %v7226 = vunpack.c.l.b16 %v7057
      %v7227 = vunpack.c.l.b16 %v7058
      %v7228 = vunpack.c.l.b16 %v7059
      %v7229 = vunpack.c.l.b16 %v7060
      %v7230 = vunpack.c.l.b16 %v7061
      %v7231 = vunpack.c.l.b16 %v7062
      %v7232 = vunpack.c.l.b16 %v7063
      %v7233 = vunpack.c.l.b16 %v7064
      %v7234 = vunpack.c.l.b16 %v7065
      %v7235 = vunpack.c.l.b16 %v7066
      %v7236 = vunpack.c.l.b16 %v7067
      %v7237 = vunpack.c.l.b16 %v7068
      %v7238 = vunpack.c.l.b16 %v7069
      %v7239 = vunpack.c.l.b16 %v7070
      %v7240 = vunpack.c.l.b16 %v7071
      %v7241 = vunpack.c.l.b16 %v7072
      %v7242 = vunpack.c.l.b16 %v7073
      %v7243 = vunpack.c.l.b16 %v7074
      %v7244 = vunpack.c.l.b16 %v7075
      %v7245 = vunpack.c.l.b16 %v7076
      %v7246 = vpack.c.b16 %v7215, %v7214
      %v7247 = vpack.c.b16 %v7217, %v7216
      %v7248 = vpack.c.b16 %v7219, %v7218
      %v7249 = vpack.c.b16 %v7221, %v7220
      %v7250 = vpack.c.b16 %v7223, %v7222
      %v7251 = vpack.c.b16 %v7225, %v7224
      %v7252 = vpack.c.b16 %v7227, %v7226
      %v7253 = vpack.c.b16 %v7229, %v7228
      %v7254 = vpack.c.b16 %v7231, %v7230
      %v7255 = vpack.c.b16 %v7233, %v7232
      %v7256 = vpack.c.b16 %v7235, %v7234
      %v7257 = vpack.c.b16 %v7237, %v7236
      %v7258 = vpack.c.b16 %v7239, %v7238
      %v7259 = vpack.c.b16 %v7241, %v7240
      %v7260 = vpack.c.b16 %v7243, %v7242
      %v7261 = vpack.c.b16 %v7245, %v7244
      %7278 = vmatprep.subr.bf16.mxu0 0
      %7279 = vmatpush1.bf16.msra.mxu0 %v7246
      %7280 = vmatprep.subr.bf16.mxu0 0
      %7281 = vmatpush1.bf16.msra.mxu0 %v7247
      %7282 = vmatprep.subr.bf16.mxu0 0
      %7283 = vmatpush1.bf16.msra.mxu0 %v7248
      %7284 = vmatprep.subr.bf16.mxu0 0
      %7285 = vmatpush1.bf16.msra.mxu0 %v7249
      %7286 = vmatprep.subr.bf16.mxu0 0
      %7287 = vmatpush1.bf16.msra.mxu0 %v7250
      %7288 = vmatprep.subr.bf16.mxu0 0
      %7289 = vmatpush1.bf16.msra.mxu0 %v7251
      %7290 = vmatprep.subr.bf16.mxu0 0
      %7291 = vmatpush1.bf16.msra.mxu0 %v7252
      %7292 = vmatprep.subr.bf16.mxu0 0
      %7293 = vmatpush1.bf16.msra.mxu0 %v7253
      %7294 = vmatprep.subr.bf16.mxu0 0
      %7295 = vmatpush1.bf16.msra.mxu0 %v7254
      %7296 = vmatprep.subr.bf16.mxu0 0
      %7297 = vmatpush1.bf16.msra.mxu0 %v7255
      %7298 = vmatprep.subr.bf16.mxu0 0
      %7299 = vmatpush1.bf16.msra.mxu0 %v7256
      %7300 = vmatprep.subr.bf16.mxu0 0
      %7301 = vmatpush1.bf16.msra.mxu0 %v7257
      %7302 = vmatprep.subr.bf16.mxu0 0
      %7303 = vmatpush1.bf16.msra.mxu0 %v7258
      %7304 = vmatprep.subr.bf16.mxu0 0
      %7305 = vmatpush1.bf16.msra.mxu0 %v7259
      %7306 = vmatprep.subr.bf16.mxu0 0
      %7307 = vmatpush1.bf16.msra.mxu0 %v7260
      %7308 = vmatprep.subr.bf16.mxu0 0
      %7309 = vmatpush1.bf16.msra.mxu0 %v7261
      %7310 = vmatprep.mubr.bf16.mxu0 %v7044
      %7311 = vmatmul.mubr.bf16.gmra.mrb[0].mxu0 %v7043
      %v7312 = vpop.f32.mrb[0].mxu0
      %v7313 = vadd.f32 %v7177, %v7312
      %v7314 = vpop.f32.mrb[0].mxu0
      %v7315 = vpop.f32.mrb[0].mxu0
      %v7316 = vpop.f32.mrb[0].mxu0
      %7317 = vdwg.mxu0
      %v7318 = vld [vmem:[%s25] sm:$0x1]
      %v7320 = vlaneseq
      %v7321 = vshrl.u32 %v7320, 7
      %v7322 = vsub.s32 0, %v7321
      %v7323 = vrot.slane %v7318, %v7322
      %v7325 = vadd.f32 %v7313, %v7323
      %v7326 = vsel %vm6952, %v7325, 0.0
      %7327 = vadd.xlane.f32.xlu0 %v7326
      %v7328 = vpop.xlane.xlu0 %7327
      %v7329 = vrcp.pop 128.0
      %v7330 = vmul.f32 %v7328, %v7329
      %v7331 = vsub.f32 %v7325, %v7330
      %v7332 = vmul.f32 %v7331, %v7331
      %v7333 = vsel %vm6952, %v7332, 0.0
      %7334 = vadd.xlane.f32.xlu0 %v7333
      %v7335 = vpop.xlane.xlu0 %7334
      %v7336 = vmul.f32 %v7335, %v7329
      %v7337 = vadd.f32 %v7336, 1e-05
      %v7338 = vrsqrt.pop %v7337
      %v7339 = vmul.f32 %v7331, %v7338
      %v7340 = vld [vmem:[%s26] sm:$0x1]
      %v7342 = vlaneseq
      %v7343 = vshrl.u32 %v7342, 7
      %v7344 = vsub.s32 0, %v7343
      %v7345 = vrot.slane %v7340, %v7344
      %v7347 = vmul.f32 %v7339, %v7345
      %v7348 = vld [vmem:[%s27] sm:$0x1]
      %v7350 = vlaneseq
      %v7351 = vshrl.u32 %v7350, 7
      %v7352 = vsub.s32 0, %v7351
      %v7353 = vrot.slane %v7348, %v7352
      %v7355 = vadd.f32 %v7347, %v7353
      %7356 = vst [vmem:[%s845] sm:$0xf] %v7355
      %p7357 = scmp.lt.s32.totalorder %s39, 1
      %s7358 = scalar_select %p7357, %s39, 1
      %s7359 = smul.addr %s7358, 4
      %s7360 = scalar_lea.vmem %s28, %s7359
      // Predicated region
      $region133: #{conv3_wilson_cowan_random.2} parent=131 // pred_check
        %p7361 = pneg %p650
      $region134: #{conv3_wilson_cowan_random.2} parent=131 // pred_check_branch
        %7363 = sbr.rel (%p7361) target = $region136
      $region135: #{conv3_wilson_cowan_random.2} parent=131 // pred_region
        _
      $region136: #{conv3_wilson_cowan_random.2} parent=131 // pred_fallthru
        _
    $region132: #{conv3_wilson_cowan_random.2} parent=5 // pred_fallthru
      _
    %p7364 = scmp.le.s32.totalorder 2, %s34
    // Predicated region
    $region137: #{conv3_wilson_cowan_random.2} parent=5 // pred_check
      %p7365 = pneg %p7364
    $region138: #{conv3_wilson_cowan_random.2} parent=5 // pred_check_branch
      %7367 = sbr.rel (%p7365) target = $region140
    $region139: #{conv3_wilson_cowan_random.2} parent=5 // pred_region
      %s7368 = ssub.s32 %s34, 2
      // Predicated region
      $region141: #{conv3_wilson_cowan_random.2} parent=139 // pred_check
        %p7369 = pneg %p656
      $region142: #{conv3_wilson_cowan_random.2} parent=139 // pred_check_branch
        %7371 = sbr.rel (%p7369) target = $region144
      $region143: #{conv3_wilson_cowan_random.2} parent=139 // pred_region
        %p7372 = scmp.lt.s32.totalorder %s40, 1
        %s7373 = scalar_select %p7372, %s40, 1
        %s7374 = smul.addr %s7373, 4
        %s7375 = scalar_lea.vmem %s28, %s7374
      $region144: #{conv3_wilson_cowan_random.2} parent=139 // pred_fallthru
        _
    $region140: #{conv3_wilson_cowan_random.2} parent=5 // pred_fallthru
      _
  $region6: #{conv3_wilson_cowan_random.2} parent=0 // loop_footer
    %s38 = sadd.s32 1, %s34
  $region7: #{conv3_wilson_cowan_random.2} parent=0 // loop_footer_branch
    %33 = sbr.rel target = $region3
  $region8: #{conv3_wilson_cowan_random.2} parent=0 // loop_exit
    _

</llo_original>
